<compile_context>
chip_gen: v6e
topology: v6e:2x2x1
jax: 0.10.0
libtpu: 0.0.40
codegen_flags: <defaults>
</compile_context>

<pallas_src>
import functools

import jax
import jax.numpy as jnp
from jax.experimental import pallas as pl
from jax.experimental.pallas import tpu as pltpu


_COMPUTE_DTYPE = jnp.bfloat16          # MXU input dtype (accumulation is f32)
_LANE = 128


# ----------------------------------------------------------------------------
# Small helpers
# ----------------------------------------------------------------------------
def _round_up(x, m):
    return ((x + m - 1) // m) * m


def _pad_axis(a, axis, new_size):
    """Zero-pad `axis` of `a` up to new_size (padded entries MUST stay zero)."""
    if a.shape[axis] == new_size:
        return a
    pads = [(0, 0)] * a.ndim
    pads[axis] = (0, new_size - a.shape[axis])
    return jnp.pad(a, pads)


def _pick_row_tile(ho, wo, target_rows=256):
    """Smallest divisor `th` of ho with th*wo >= target_rows (else ho).

    target_rows=256 fills the 256-wide MXU M dim on v6e/v7x and amortizes the
    ~0.35us per-grid-step overhead; on v5e it simply means >= 2 MXU passes.
    """
    for th in range(1, ho + 1):
        if ho % th == 0 and th * wo >= target_rows:
            return th
    return ho


def _vmem_limit_bytes():
    """Generation-aware VMEM limit: ~75% of physical (64 MiB v7x, 128 MiB v5e/v6e)."""
    try:
        cap = pltpu.get_tpu_info().vmem_capacity_bytes
    except Exception:
        cap = 128 * 1024 * 1024
    return min(int(0.75 * cap), 112 * 1024 * 1024)


# ----------------------------------------------------------------------------
# Kernel A: conv1 (1x1) + bn1 + relu  ->  conv2 (3x3, stride, pad=1) + bn2 + relu
# ----------------------------------------------------------------------------
def _conv1_conv2_kernel(x_ref, w1_ref, s1_ref, b1_ref, w2_ref, s2_ref, b2_ref,
                        o_ref, y1_ref, *, stride):
    """One (batch, row-tile) grid step.

    x_ref : (1, H+2, W+2, Cin)  spatially + channel padded input (resident/batch)
    w1_ref: (Cin, P)            1x1 conv1 weights
    w2_ref: (3, 3, P, P)        3x3 conv2 weights
    o_ref : (1, th, wo, P)      conv2+bn2+relu output row tile
    y1_ref: (th_in, W+2, P)     per-tile VMEM scratch for conv1+bn1+relu
    """
    rt = pl.program_id(1)
    th, wo, planes = o_ref.shape[1], o_ref.shape[2], o_ref.shape[3]
    Hp, Wp, cin = x_ref.shape[1], x_ref.shape[2], x_ref.shape[3]
    th_in = y1_ref.shape[0]
    sdt = y1_ref.dtype

    # Hoisted f32 epilogue params (broadcast_in_dim is not CSE'd -> read once).
    s1 = s1_ref[...]
    b1 = b1_ref[...]
    s2 = s2_ref[...]
    b2 = b2_ref[...]

    # ---- conv1 (1x1) + bn1 + relu for exactly the th_in rows this tile needs ----
    row0 = rt * (th * stride)                          # first padded row of tile
    xb = x_ref[0, pl.ds(row0, th_in), :, :]            # (th_in, W+2, Cin)
    y1 = jnp.dot(xb.reshape(th_in * Wp, cin), w1_ref[...],
                 preferred_element_type=jnp.float32)
    y1 = jnp.maximum(y1 * s1 + b1, 0.0)                # f32 epilogue
    y1_ref[...] = y1.reshape(th_in, Wp, planes).astype(sdt)

    # conv2's zero padding lives in y1: the spatial halo must be exactly zero
    # (bn1's bias would otherwise leak into it).  Width halo every step (the
    # scratch is reused); row halo only where this tile touches the image edge.
    zcol = jnp.zeros((th_in, 1, planes), sdt)
    y1_ref[:, 0:1, :] = zcol
    y1_ref[:, Wp - 1:Wp, :] = zcol

    @pl.when(row0 == 0)                                # global top halo row
    def _():
        y1_ref[0:1, :, :] = jnp.zeros((1, Wp, planes), sdt)

    @pl.when(row0 + th_in == Hp)                       # global bottom halo row
    def _():
        y1_ref[th_in - 1:th_in, :, :] = jnp.zeros((1, Wp, planes), sdt)

    # ---- conv2 (3x3, stride, pad=1) + bn2 + relu ----
    # 9 accumulated matmuls with K = planes; every (kh, kw) operand is read
    # straight from the scratch ref (no value-level concat / strided slices).
    acc = None
    for kh in range(3):
        for kw in range(3):
            if stride == 1:
                blk = y1_ref[kh:kh + th, kw:kw + wo, :]
            else:
                blk = y1_ref[pl.ds(kh, th, stride), pl.ds(kw, wo, stride), :]
            part = jnp.dot(blk.reshape(th * wo, planes), w2_ref[kh, kw],
                           preferred_element_type=jnp.float32)
            acc = part if acc is None else acc + part
    y2 = jnp.maximum(acc * s2 + b2, 0.0)               # f32 epilogue
    o_ref[...] = y2.reshape(1, th, wo, planes).astype(o_ref.dtype)


def _fused_conv1_conv2(xp, w1, s1, b1, w2, s2, b2, *, stride, ho, wo, th):
    n, Hp, Wp, cin_p = xp.shape
    planes_p = w1.shape[1]
    th_in = (th - 1) * stride + 3
    kernel = functools.partial(_conv1_conv2_kernel, stride=stride)
    return pl.pallas_call(
        kernel,
        out_shape=jax.ShapeDtypeStruct((n, ho, wo, planes_p), xp.dtype),
        grid=(n, ho // th),
        in_specs=[
            pl.BlockSpec((1, Hp, Wp, cin_p), lambda b, r: (b, 0, 0, 0)),
            pl.BlockSpec((cin_p, planes_p), lambda b, r: (0, 0)),
            pl.BlockSpec((1, planes_p), lambda b, r: (0, 0)),
            pl.BlockSpec((1, planes_p), lambda b, r: (0, 0)),
            pl.BlockSpec((3, 3, planes_p, planes_p), lambda b, r: (0, 0, 0, 0)),
            pl.BlockSpec((1, planes_p), lambda b, r: (0, 0)),
            pl.BlockSpec((1, planes_p), lambda b, r: (0, 0)),
        ],
        out_specs=pl.BlockSpec((1, th, wo, planes_p), lambda b, r: (b, r, 0, 0)),
        scratch_shapes=[pltpu.VMEM((th_in, Wp, planes_p), xp.dtype)],
        compiler_params=pltpu.CompilerParams(
            dimension_semantics=("parallel", "parallel"),
            vmem_limit_bytes=_vmem_limit_bytes()),
    )(xp, w1, s1, b1, w2, s2, b2)


# ----------------------------------------------------------------------------
# Kernel B: conv3 (1x1) + bn3 + shortcut (conv+bn or identity) + add + relu
# ----------------------------------------------------------------------------
def _conv3_shortcut_kernel(y2_ref, xsc_ref, w3_ref, s3_ref, b3_ref, *rest,
                           has_sc):
    """y2_ref: (1, th, wo, P); xsc_ref: (1, th, wo, Cin) (already strided)."""
    if has_sc:
        wsc_ref, ssc_ref, bsc_ref, o_ref = rest
    else:
        (o_ref,) = rest
    th, wo, planes = y2_ref.shape[1], y2_ref.shape[2], y2_ref.shape[3]
    cin = xsc_ref.shape[3]
    cout = o_ref.shape[3]

    # main branch: 1x1 conv3 + bn3
    y = jnp.dot(y2_ref[0].reshape(th * wo, planes), w3_ref[...],
                preferred_element_type=jnp.float32)
    y = y * s3_ref[...] + b3_ref[...]

    # shortcut branch (pre-strided in the wrapper; the block is already (th, wo))
    xs = xsc_ref[0].reshape(th * wo, cin)
    if has_sc:
        r = jnp.dot(xs, wsc_ref[...], preferred_element_type=jnp.float32)
        r = r * ssc_ref[...] + bsc_ref[...]
    else:
        # Identity shortcut adds the bf16-rounded x (mirrored in the reference).
        r = xs.astype(jnp.float32)

    out = jnp.maximum(y + r, 0.0)
    o_ref[...] = out.reshape(1, th, wo, cout).astype(o_ref.dtype)


def _fused_conv3_shortcut(y2, x_sc, w3, s3, b3, wsc, ssc, bsc, *,
                          has_sc, th, out_dtype):
    n, ho, wo, planes_p = y2.shape
    cin_p = x_sc.shape[3]
    cout_p = w3.shape[1]
    kernel = functools.partial(_conv3_shortcut_kernel, has_sc=has_sc)
    in_specs = [
        pl.BlockSpec((1, th, wo, planes_p), lambda b, r: (b, r, 0, 0)),
        pl.BlockSpec((1, th, wo, cin_p), lambda b, r: (b, r, 0, 0)),
        pl.BlockSpec((planes_p, cout_p), lambda b, r: (0, 0)),
        pl.BlockSpec((1, cout_p), lambda b, r: (0, 0)),
        pl.BlockSpec((1, cout_p), lambda b, r: (0, 0)),
    ]
    args = [y2, x_sc, w3, s3, b3]
    if has_sc:
        in_specs += [
            pl.BlockSpec((cin_p, cout_p), lambda b, r: (0, 0)),
            pl.BlockSpec((1, cout_p), lambda b, r: (0, 0)),
            pl.BlockSpec((1, cout_p), lambda b, r: (0, 0)),
        ]
        args += [wsc, ssc, bsc]
    return pl.pallas_call(
        kernel,
        out_shape=jax.ShapeDtypeStruct((n, ho, wo, cout_p), out_dtype),
        grid=(n, ho // th),
        in_specs=in_specs,
        out_specs=pl.BlockSpec((1, th, wo, cout_p), lambda b, r: (b, r, 0, 0)),
        compiler_params=pltpu.CompilerParams(
            dimension_semantics=("parallel", "parallel"),
            vmem_limit_bytes=_vmem_limit_bytes()),
    )(*args)


# ----------------------------------------------------------------------------
# Bottleneck forward (NCHW in / NCHW out, matching the PyTorch module)
# ----------------------------------------------------------------------------
def bottleneck_forward(x_nchw, params, *, stride=1,
                       compute_dtype=_COMPUTE_DTYPE, out_dtype=jnp.float32):
    x = jnp.transpose(x_nchw, (0, 2, 3, 1))          # NCHW -> NHWC
    n, h, w, cin = x.shape
    planes = params["w1"].shape[1]
    cout = params["w3"].shape[1]

    cin_p = _round_up(cin, _LANE)
    planes_p = _round_up(planes, _LANE)
    cout_p = _round_up(cout, _LANE)

    # Lane-dense channel pad + bf16 cast for MXU operands; BN scale/bias stay
    # f32 and their padded entries are exact zeros (so padded lanes stay zero).
    x_c = _pad_axis(x, 3, cin_p).astype(compute_dtype)          # (n, h, w, cin_p)
    xp = jnp.pad(x_c, ((0, 0), (1, 1), (1, 1), (0, 0)))         # spatial halo for conv2

    w1 = _pad_axis(_pad_axis(params["w1"], 0, cin_p), 1, planes_p).astype(compute_dtype)
    s1 = _pad_axis(params["s1"], 1, planes_p)
    b1 = _pad_axis(params["b1"], 1, planes_p)

    w2 = _pad_axis(_pad_axis(params["w2"], 2, planes_p), 3, planes_p).astype(compute_dtype)
    s2 = _pad_axis(params["s2"], 1, planes_p)
    b2 = _pad_axis(params["b2"], 1, planes_p)

    w3 = _pad_axis(_pad_axis(params["w3"], 0, planes_p), 1, cout_p).astype(compute_dtype)
    s3 = _pad_axis(params["s3"], 1, cout_p)
    b3 = _pad_axis(params["b3"], 1, cout_p)

    ho = (h + 2 - 3) // stride + 1
    wo = (w + 2 - 3) // stride + 1
    th = _pick_row_tile(ho, wo)

    # kernel A: conv1+bn1+relu -> conv2+bn2+relu (conv1 output never leaves VMEM)
    y2 = _fused_conv1_conv2(xp, w1, s1, b1, w2, s2, b2,
                            stride=stride, ho=ho, wo=wo, th=th)

    # kernel B: conv3+bn3 + shortcut + add + relu
    has_sc = (stride != 1) or (cin != cout)
    # pre-strided shortcut input: avoids 4x over-fetch and in-kernel gathers
    x_sc = x_c if stride == 1 else x_c[:, ::stride, ::stride, :]
    if has_sc:
        wsc = _pad_axis(_pad_axis(params["wsc"], 0, cin_p), 1, cout_p).astype(compute_dtype)
        ssc = _pad_axis(params["ssc"], 1, cout_p)
        bsc = _pad_axis(params["bsc"], 1, cout_p)
    else:
        wsc = ssc = bsc = None
    out_p = _fused_conv3_shortcut(y2, x_sc, w3, s3, b3, wsc, ssc, bsc,
                                  has_sc=has_sc, th=th, out_dtype=out_dtype)

    out = out_p if cout_p == cout else out_p[..., :cout]   # no-op for ResNet couts
    return jnp.transpose(out, (0, 3, 1, 2))                # NHWC -> NCHW


# ----------------------------------------------------------------------------
# Deterministic parameter init + pure-JAX reference for verification
# ----------------------------------------------------------------------------
def _bn_fold(kg, kb, km, kv, c, eps=1e-5):
    gamma = jax.random.uniform(kg, (c,), jnp.float32, 0.5, 1.5)
    beta = jax.random.normal(kb, (c,), jnp.float32) * 0.1
    mean = jax.random.normal(km, (c,), jnp.float32) * 0.1
    var = jax.random.uniform(kv, (c,), jnp.float32, 0.5, 1.5)
    scale = gamma / jnp.sqrt(var + eps)
    bias = beta - mean * scale
    return scale.reshape(1, c), bias.reshape(1, c)


def make_params(key, in_planes, planes, expansion=4):
    cout = expansion * planes
    ks = jax.random.split(key, 20)
    params = {
        "w1": jax.random.normal(ks[0], (in_planes, planes), jnp.float32) * 0.5,
        "w2": jax.random.normal(ks[1], (3, 3, planes, planes), jnp.float32) * 0.3,
        "w3": jax.random.normal(ks[2], (planes, cout), jnp.float32) * 0.5,
        "wsc": jax.random.normal(ks[3], (in_planes, cout), jnp.float32) * 0.5,
    }
    params["s1"], params["b1"] = _bn_fold(ks[4], ks[5], ks[6], ks[7], planes)
    params["s2"], params["b2"] = _bn_fold(ks[8], ks[9], ks[10], ks[11], planes)
    params["s3"], params["b3"] = _bn_fold(ks[12], ks[13], ks[14], ks[15], cout)
    params["ssc"], params["bsc"] = _bn_fold(ks[16], ks[17], ks[18], ks[19], cout)
    return params


def reference_forward(x_nchw, params, *, stride=1, cdt=_COMPUTE_DTYPE):
    """Pure-JAX reference mirroring the kernel's bf16-operand / f32-accum math."""
    dn = ("NHWC", "HWIO", "NHWC")
    x = jnp.transpose(x_nchw, (0, 2, 3, 1)).astype(cdt)
    cin = x.shape[-1]
    cout = params["w3"].shape[1]

    y = jax.lax.conv_general_dilated(
        x, params["w1"][None, None].astype(cdt), (1, 1), "VALID",
        dimension_numbers=dn, preferred_element_type=jnp.float32)
    y = jnp.maximum(y * params["s1"][0] + params["b1"][0], 0.0).astype(cdt)
    y = jax.lax.conv_general_dilated(
        y, params["w2"].astype(cdt), (stride, stride), ((1, 1), (1, 1)),
        dimension_numbers=dn, preferred_element_type=jnp.float32)
    y = jnp.maximum(y * params["s2"][0] + params["b2"][0], 0.0).astype(cdt)
    y = jax.lax.conv_general_dilated(
        y, params["w3"][None, None].astype(cdt), (1, 1), "VALID",
        dimension_numbers=dn, preferred_element_type=jnp.float32)
    y = y * params["s3"][0] + params["b3"][0]

    if stride != 1 or cin != cout:
        sc = jax.lax.conv_general_dilated(
            x, params["wsc"][None, None].astype(cdt), (stride, stride), "VALID",
            dimension_numbers=dn, preferred_element_type=jnp.float32)
        sc = sc * params["ssc"][0] + params["bsc"][0]
    else:
        sc = x.astype(jnp.float32)
    out = jnp.maximum(y + sc, 0.0)
    return jnp.transpose(out, (0, 3, 1, 2))


# ----------------------------------------------------------------------------
if __name__ == "__main__":
    key = jax.random.PRNGKey(0)
    k_x1, k_p1, k_x2, k_p2 = jax.random.split(key, 4)

    # Config 1: projection shortcut (in_planes != expansion*planes), stride=1
    in_planes, planes, stride = 4, 4, 1
    x1 = jax.random.normal(k_x1, (2, in_planes, 16, 16), jnp.float32)   # NCHW
    p1 = make_params(k_p1, in_planes, planes)
    out1 = jax.block_until_ready(bottleneck_forward(x1, p1, stride=stride))
    ref1 = jax.block_until_ready(reference_forward(x1, p1, stride=stride))
    assert out1.shape == (2, 4 * planes, 16, 16), out1.shape
    assert jnp.allclose(out1, ref1, rtol=5e-2, atol=5e-2), (
        float(jnp.max(jnp.abs(out1 - ref1))))

    # Config 2: identity shortcut (in_planes == expansion*planes), stride=1
    in_planes2, planes2 = 16, 4
    x2 = jax.random.normal(k_x2, (2, in_planes2, 16, 16), jnp.float32)  # NCHW
    p2 = make_params(k_p2, in_planes2, planes2)
    out2 = jax.block_until_ready(bottleneck_forward(x2, p2, stride=1))
    ref2 = jax.block_until_ready(reference_forward(x2, p2, stride=1))
    assert out2.shape == (2, 4 * planes2, 16, 16), out2.shape
    assert jnp.allclose(out2, ref2, rtol=5e-2, atol=5e-2), (
        float(jnp.max(jnp.abs(out2 - ref2))))

    print("KERNEL_OK")
</pallas_src>

<mosaic_0001>
module attributes {stable_mosaic.version = 11 : i64} {
  func.func @_conv1_conv2_kernel(%arg0: i32, %arg1: i32, %arg2: memref<1x18x18x128xbf16, #tpu.memory_space<vmem>>, %arg3: memref<128x128xbf16, #tpu.memory_space<vmem>>, %arg4: memref<1x128xf32, #tpu.memory_space<vmem>>, %arg5: memref<1x128xf32, #tpu.memory_space<vmem>>, %arg6: memref<3x3x128x128xbf16, #tpu.memory_space<vmem>>, %arg7: memref<1x128xf32, #tpu.memory_space<vmem>>, %arg8: memref<1x128xf32, #tpu.memory_space<vmem>>, %arg9: memref<1x16x16x128xbf16, #tpu.memory_space<vmem>>, %arg10: memref<18x18x128xbf16, #tpu.memory_space<vmem>>) attributes {dimension_semantics = [#tpu.dimension_semantics<parallel>, #tpu.dimension_semantics<parallel>], iteration_bounds = array<i64: 2, 1>, scalar_prefetch = 0 : i64, scratch_operands = 1 : i64, tpu.core_type = #tpu.core_type<tc>, window_params = [{transform_indices = @transform_0, window_bounds = array<i64: 1, 18, 18, 128>}, {pipeline_mode = #tpu.pipeline_mode<synchronous>, transform_indices = @transform_1, window_bounds = array<i64: 128, 128>}, {pipeline_mode = #tpu.pipeline_mode<synchronous>, transform_indices = @transform_2, window_bounds = array<i64: 1, 128>}, {pipeline_mode = #tpu.pipeline_mode<synchronous>, transform_indices = @transform_3, window_bounds = array<i64: 1, 128>}, {pipeline_mode = #tpu.pipeline_mode<synchronous>, transform_indices = @transform_4, window_bounds = array<i64: 3, 3, 128, 128>}, {pipeline_mode = #tpu.pipeline_mode<synchronous>, transform_indices = @transform_5, window_bounds = array<i64: 1, 128>}, {pipeline_mode = #tpu.pipeline_mode<synchronous>, transform_indices = @transform_6, window_bounds = array<i64: 1, 128>}, {transform_indices = @transform_7, window_bounds = array<i64: 1, 16, 16, 128>}]} {
    %c0 = arith.constant 0 : index
    %c0_0 = arith.constant 0 : index
    %0 = vector.load %arg4[%c0, %c0_0] : memref<1x128xf32, #tpu.memory_space<vmem>>, vector<1x128xf32>
    %c0_1 = arith.constant 0 : index
    %c0_2 = arith.constant 0 : index
    %1 = vector.load %arg5[%c0_1, %c0_2] : memref<1x128xf32, #tpu.memory_space<vmem>>, vector<1x128xf32>
    %c0_3 = arith.constant 0 : index
    %c0_4 = arith.constant 0 : index
    %2 = vector.load %arg7[%c0_3, %c0_4] : memref<1x128xf32, #tpu.memory_space<vmem>>, vector<1x128xf32>
    %c0_5 = arith.constant 0 : index
    %c0_6 = arith.constant 0 : index
    %3 = vector.load %arg8[%c0_5, %c0_6] : memref<1x128xf32, #tpu.memory_space<vmem>>, vector<1x128xf32>
    %c16_i32 = arith.constant 16 : i32
    %4 = arith.muli %arg1, %c16_i32 : i32
    %c0_7 = arith.constant 0 : index
    %5 = arith.index_cast %4 : i32 to index
    %c0_8 = arith.constant 0 : index
    %c0_9 = arith.constant 0 : index
    %6 = vector.load %arg2[%c0_7, %5, %c0_8, %c0_9] : memref<1x18x18x128xbf16, #tpu.memory_space<vmem>>, vector<1x18x18x128xbf16>
    %7 = vector.shape_cast %6 : vector<1x18x18x128xbf16> to vector<18x18x128xbf16>
    %8 = vector.shape_cast %7 : vector<18x18x128xbf16> to vector<324x128xbf16>
    %c0_10 = arith.constant 0 : index
    %c0_11 = arith.constant 0 : index
    %9 = vector.load %arg3[%c0_10, %c0_11] : memref<128x128xbf16, #tpu.memory_space<vmem>>, vector<128x128xbf16>
    %cst = arith.constant dense<0.000000e+00> : vector<324x128xf32>
    %10 = tpu.matmul %8, %9, %cst {dimension_numbers = #tpu.dot_dimension_numbers<[1], [0], [0], [1], [0, 0, 1, 1], [], []>} : vector<324x128xbf16>, vector<128x128xbf16>, vector<324x128xf32> -> vector<324x128xf32>
    %11 = vector.broadcast %0 : vector<1x128xf32> to vector<324x128xf32>
    %12 = arith.mulf %10, %11 : vector<324x128xf32>
    %13 = vector.broadcast %1 : vector<1x128xf32> to vector<324x128xf32>
    %14 = arith.addf %12, %13 : vector<324x128xf32>
    %cst_12 = arith.constant 0.000000e+00 : f32
    %15 = vector.broadcast %cst_12 : f32 to vector<324x128xf32>
    %16 = arith.maximumf %14, %15 : vector<324x128xf32>
    %17 = vector.shape_cast %16 : vector<324x128xf32> to vector<18x18x128xf32>
    %18 = arith.truncf %17 : vector<18x18x128xf32> to vector<18x18x128xbf16>
    %c0_13 = arith.constant 0 : index
    %c0_14 = arith.constant 0 : index
    %c0_15 = arith.constant 0 : index
    %19 = vector.load %arg10[%c0_13, %c0_14, %c0_15] : memref<18x18x128xbf16, #tpu.memory_space<vmem>>, vector<18x18x128xbf16>
    tpu.vector_store %arg10[%c0_13, %c0_14, %c0_15], %18 {strides = array<i32>} : memref<18x18x128xbf16, #tpu.memory_space<vmem>>, vector<18x18x128xbf16>,
    %cst_16 = arith.constant 0.000000e+00 : bf16
    %20 = vector.broadcast %cst_16 : bf16 to vector<18x1x128xbf16>
    %c0_17 = arith.constant 0 : index
    %c0_18 = arith.constant 0 : index
    %c0_19 = arith.constant 0 : index
    %21 = vector.load %arg10[%c0_17, %c0_18, %c0_19] : memref<18x18x128xbf16, #tpu.memory_space<vmem>>, vector<18x1x128xbf16>
    tpu.vector_store %arg10[%c0_17, %c0_18, %c0_19], %20 {strides = array<i32>} : memref<18x18x128xbf16, #tpu.memory_space<vmem>>, vector<18x1x128xbf16>,
    %c0_20 = arith.constant 0 : index
    %c17 = arith.constant 17 : index
    %c0_21 = arith.constant 0 : index
    %22 = vector.load %arg10[%c0_20, %c17, %c0_21] : memref<18x18x128xbf16, #tpu.memory_space<vmem>>, vector<18x1x128xbf16>
    tpu.vector_store %arg10[%c0_20, %c17, %c0_21], %20 {strides = array<i32>} : memref<18x18x128xbf16, #tpu.memory_space<vmem>>, vector<18x1x128xbf16>,
    %c0_i32 = arith.constant 0 : i32
    %23 = arith.cmpi eq, %4, %c0_i32 : i32
    %24 = arith.extui %23 : i1 to i32
    %c0_i32_22 = arith.constant 0 : i32
    %25 = arith.cmpi ne, %24, %c0_i32_22 : i32
    scf.if %25 {
      %cst_100 = arith.constant 0.000000e+00 : bf16
      %92 = vector.broadcast %cst_100 : bf16 to vector<1x18x128xbf16>
      %c0_101 = arith.constant 0 : index
      %c0_102 = arith.constant 0 : index
      %c0_103 = arith.constant 0 : index
      %93 = vector.load %arg10[%c0_101, %c0_102, %c0_103] : memref<18x18x128xbf16, #tpu.memory_space<vmem>>, vector<1x18x128xbf16>
      tpu.vector_store %arg10[%c0_101, %c0_102, %c0_103], %92 {strides = array<i32>} : memref<18x18x128xbf16, #tpu.memory_space<vmem>>, vector<1x18x128xbf16>,
    } else {
    }
    %c18_i32 = arith.constant 18 : i32
    %26 = arith.addi %4, %c18_i32 : i32
    %c18_i32_23 = arith.constant 18 : i32
    %27 = arith.cmpi eq, %26, %c18_i32_23 : i32
    %28 = arith.extui %27 : i1 to i32
    %c0_i32_24 = arith.constant 0 : i32
    %29 = arith.cmpi ne, %28, %c0_i32_24 : i32
    scf.if %29 {
      %cst_100 = arith.constant 0.000000e+00 : bf16
      %92 = vector.broadcast %cst_100 : bf16 to vector<1x18x128xbf16>
      %c17_101 = arith.constant 17 : index
      %c0_102 = arith.constant 0 : index
      %c0_103 = arith.constant 0 : index
      %93 = vector.load %arg10[%c17_101, %c0_102, %c0_103] : memref<18x18x128xbf16, #tpu.memory_space<vmem>>, vector<1x18x128xbf16>
      tpu.vector_store %arg10[%c17_101, %c0_102, %c0_103], %92 {strides = array<i32>} : memref<18x18x128xbf16, #tpu.memory_space<vmem>>, vector<1x18x128xbf16>,
    } else {
    }
    %c0_25 = arith.constant 0 : index
    %c0_26 = arith.constant 0 : index
    %c0_27 = arith.constant 0 : index
    %30 = vector.load %arg10[%c0_25, %c0_26, %c0_27] : memref<18x18x128xbf16, #tpu.memory_space<vmem>>, vector<16x16x128xbf16>
    %31 = vector.shape_cast %30 : vector<16x16x128xbf16> to vector<256x128xbf16>
    %c0_28 = arith.constant 0 : index
    %c0_29 = arith.constant 0 : index
    %c0_30 = arith.constant 0 : index
    %c0_31 = arith.constant 0 : index
    %32 = vector.load %arg6[%c0_28, %c0_29, %c0_30, %c0_31] : memref<3x3x128x128xbf16, #tpu.memory_space<vmem>>, vector<1x1x128x128xbf16>
    %33 = vector.shape_cast %32 : vector<1x1x128x128xbf16> to vector<128x128xbf16>
    %cst_32 = arith.constant dense<0.000000e+00> : vector<256x128xf32>
    %34 = tpu.matmul %31, %33, %cst_32 {dimension_numbers = #tpu.dot_dimension_numbers<[1], [0], [0], [1], [0, 0, 1, 1], [], []>} : vector<256x128xbf16>, vector<128x128xbf16>, vector<256x128xf32> -> vector<256x128xf32>
    %c0_33 = arith.constant 0 : index
    %c1 = arith.constant 1 : index
    %c0_34 = arith.constant 0 : index
    %35 = vector.load %arg10[%c0_33, %c1, %c0_34] : memref<18x18x128xbf16, #tpu.memory_space<vmem>>, vector<16x16x128xbf16>
    %36 = vector.shape_cast %35 : vector<16x16x128xbf16> to vector<256x128xbf16>
    %c0_35 = arith.constant 0 : index
    %c1_36 = arith.constant 1 : index
    %c0_37 = arith.constant 0 : index
    %c0_38 = arith.constant 0 : index
    %37 = vector.load %arg6[%c0_35, %c1_36, %c0_37, %c0_38] : memref<3x3x128x128xbf16, #tpu.memory_space<vmem>>, vector<1x1x128x128xbf16>
    %38 = vector.shape_cast %37 : vector<1x1x128x128xbf16> to vector<128x128xbf16>
    %cst_39 = arith.constant dense<0.000000e+00> : vector<256x128xf32>
    %39 = tpu.matmul %36, %38, %cst_39 {dimension_numbers = #tpu.dot_dimension_numbers<[1], [0], [0], [1], [0, 0, 1, 1], [], []>} : vector<256x128xbf16>, vector<128x128xbf16>, vector<256x128xf32> -> vector<256x128xf32>
    %40 = arith.addf %34, %39 : vector<256x128xf32>
    %c0_40 = arith.constant 0 : index
    %c2 = arith.constant 2 : index
    %c0_41 = arith.constant 0 : index
    %41 = vector.load %arg10[%c0_40, %c2, %c0_41] : memref<18x18x128xbf16, #tpu.memory_space<vmem>>, vector<16x16x128xbf16>
    %42 = vector.shape_cast %41 : vector<16x16x128xbf16> to vector<256x128xbf16>
    %c0_42 = arith.constant 0 : index
    %c2_43 = arith.constant 2 : index
    %c0_44 = arith.constant 0 : index
    %c0_45 = arith.constant 0 : index
    %43 = vector.load %arg6[%c0_42, %c2_43, %c0_44, %c0_45] : memref<3x3x128x128xbf16, #tpu.memory_space<vmem>>, vector<1x1x128x128xbf16>
    %44 = vector.shape_cast %43 : vector<1x1x128x128xbf16> to vector<128x128xbf16>
    %cst_46 = arith.constant dense<0.000000e+00> : vector<256x128xf32>
    %45 = tpu.matmul %42, %44, %cst_46 {dimension_numbers = #tpu.dot_dimension_numbers<[1], [0], [0], [1], [0, 0, 1, 1], [], []>} : vector<256x128xbf16>, vector<128x128xbf16>, vector<256x128xf32> -> vector<256x128xf32>
    %46 = arith.addf %40, %45 : vector<256x128xf32>
    %c1_47 = arith.constant 1 : index
    %c0_48 = arith.constant 0 : index
    %c0_49 = arith.constant 0 : index
    %47 = vector.load %arg10[%c1_47, %c0_48, %c0_49] : memref<18x18x128xbf16, #tpu.memory_space<vmem>>, vector<16x16x128xbf16>
    %48 = vector.shape_cast %47 : vector<16x16x128xbf16> to vector<256x128xbf16>
    %c1_50 = arith.constant 1 : index
    %c0_51 = arith.constant 0 : index
    %c0_52 = arith.constant 0 : index
    %c0_53 = arith.constant 0 : index
    %49 = vector.load %arg6[%c1_50, %c0_51, %c0_52, %c0_53] : memref<3x3x128x128xbf16, #tpu.memory_space<vmem>>, vector<1x1x128x128xbf16>
    %50 = vector.shape_cast %49 : vector<1x1x128x128xbf16> to vector<128x128xbf16>
    %cst_54 = arith.constant dense<0.000000e+00> : vector<256x128xf32>
    %51 = tpu.matmul %48, %50, %cst_54 {dimension_numbers = #tpu.dot_dimension_numbers<[1], [0], [0], [1], [0, 0, 1, 1], [], []>} : vector<256x128xbf16>, vector<128x128xbf16>, vector<256x128xf32> -> vector<256x128xf32>
    %52 = arith.addf %46, %51 : vector<256x128xf32>
    %c1_55 = arith.constant 1 : index
    %c1_56 = arith.constant 1 : index
    %c0_57 = arith.constant 0 : index
    %53 = vector.load %arg10[%c1_55, %c1_56, %c0_57] : memref<18x18x128xbf16, #tpu.memory_space<vmem>>, vector<16x16x128xbf16>
    %54 = vector.shape_cast %53 : vector<16x16x128xbf16> to vector<256x128xbf16>
    %c1_58 = arith.constant 1 : index
    %c1_59 = arith.constant 1 : index
    %c0_60 = arith.constant 0 : index
    %c0_61 = arith.constant 0 : index
    %55 = vector.load %arg6[%c1_58, %c1_59, %c0_60, %c0_61] : memref<3x3x128x128xbf16, #tpu.memory_space<vmem>>, vector<1x1x128x128xbf16>
    %56 = vector.shape_cast %55 : vector<1x1x128x128xbf16> to vector<128x128xbf16>
    %cst_62 = arith.constant dense<0.000000e+00> : vector<256x128xf32>
    %57 = tpu.matmul %54, %56, %cst_62 {dimension_numbers = #tpu.dot_dimension_numbers<[1], [0], [0], [1], [0, 0, 1, 1], [], []>} : vector<256x128xbf16>, vector<128x128xbf16>, vector<256x128xf32> -> vector<256x128xf32>
    %58 = arith.addf %52, %57 : vector<256x128xf32>
    %c1_63 = arith.constant 1 : index
    %c2_64 = arith.constant 2 : index
    %c0_65 = arith.constant 0 : index
    %59 = vector.load %arg10[%c1_63, %c2_64, %c0_65] : memref<18x18x128xbf16, #tpu.memory_space<vmem>>, vector<16x16x128xbf16>
    %60 = vector.shape_cast %59 : vector<16x16x128xbf16> to vector<256x128xbf16>
    %c1_66 = arith.constant 1 : index
    %c2_67 = arith.constant 2 : index
    %c0_68 = arith.constant 0 : index
    %c0_69 = arith.constant 0 : index
    %61 = vector.load %arg6[%c1_66, %c2_67, %c0_68, %c0_69] : memref<3x3x128x128xbf16, #tpu.memory_space<vmem>>, vector<1x1x128x128xbf16>
    %62 = vector.shape_cast %61 : vector<1x1x128x128xbf16> to vector<128x128xbf16>
    %cst_70 = arith.constant dense<0.000000e+00> : vector<256x128xf32>
    %63 = tpu.matmul %60, %62, %cst_70 {dimension_numbers = #tpu.dot_dimension_numbers<[1], [0], [0], [1], [0, 0, 1, 1], [], []>} : vector<256x128xbf16>, vector<128x128xbf16>, vector<256x128xf32> -> vector<256x128xf32>
    %64 = arith.addf %58, %63 : vector<256x128xf32>
    %c2_71 = arith.constant 2 : index
    %c0_72 = arith.constant 0 : index
    %c0_73 = arith.constant 0 : index
    %65 = vector.load %arg10[%c2_71, %c0_72, %c0_73] : memref<18x18x128xbf16, #tpu.memory_space<vmem>>, vector<16x16x128xbf16>
    %66 = vector.shape_cast %65 : vector<16x16x128xbf16> to vector<256x128xbf16>
    %c2_74 = arith.constant 2 : index
    %c0_75 = arith.constant 0 : index
    %c0_76 = arith.constant 0 : index
    %c0_77 = arith.constant 0 : index
    %67 = vector.load %arg6[%c2_74, %c0_75, %c0_76, %c0_77] : memref<3x3x128x128xbf16, #tpu.memory_space<vmem>>, vector<1x1x128x128xbf16>
    %68 = vector.shape_cast %67 : vector<1x1x128x128xbf16> to vector<128x128xbf16>
    %cst_78 = arith.constant dense<0.000000e+00> : vector<256x128xf32>
    %69 = tpu.matmul %66, %68, %cst_78 {dimension_numbers = #tpu.dot_dimension_numbers<[1], [0], [0], [1], [0, 0, 1, 1], [], []>} : vector<256x128xbf16>, vector<128x128xbf16>, vector<256x128xf32> -> vector<256x128xf32>
    %70 = arith.addf %64, %69 : vector<256x128xf32>
    %c2_79 = arith.constant 2 : index
    %c1_80 = arith.constant 1 : index
    %c0_81 = arith.constant 0 : index
    %71 = vector.load %arg10[%c2_79, %c1_80, %c0_81] : memref<18x18x128xbf16, #tpu.memory_space<vmem>>, vector<16x16x128xbf16>
    %72 = vector.shape_cast %71 : vector<16x16x128xbf16> to vector<256x128xbf16>
    %c2_82 = arith.constant 2 : index
    %c1_83 = arith.constant 1 : index
    %c0_84 = arith.constant 0 : index
    %c0_85 = arith.constant 0 : index
    %73 = vector.load %arg6[%c2_82, %c1_83, %c0_84, %c0_85] : memref<3x3x128x128xbf16, #tpu.memory_space<vmem>>, vector<1x1x128x128xbf16>
    %74 = vector.shape_cast %73 : vector<1x1x128x128xbf16> to vector<128x128xbf16>
    %cst_86 = arith.constant dense<0.000000e+00> : vector<256x128xf32>
    %75 = tpu.matmul %72, %74, %cst_86 {dimension_numbers = #tpu.dot_dimension_numbers<[1], [0], [0], [1], [0, 0, 1, 1], [], []>} : vector<256x128xbf16>, vector<128x128xbf16>, vector<256x128xf32> -> vector<256x128xf32>
    %76 = arith.addf %70, %75 : vector<256x128xf32>
    %c2_87 = arith.constant 2 : index
    %c2_88 = arith.constant 2 : index
    %c0_89 = arith.constant 0 : index
    %77 = vector.load %arg10[%c2_87, %c2_88, %c0_89] : memref<18x18x128xbf16, #tpu.memory_space<vmem>>, vector<16x16x128xbf16>
    %78 = vector.shape_cast %77 : vector<16x16x128xbf16> to vector<256x128xbf16>
    %c2_90 = arith.constant 2 : index
    %c2_91 = arith.constant 2 : index
    %c0_92 = arith.constant 0 : index
    %c0_93 = arith.constant 0 : index
    %79 = vector.load %arg6[%c2_90, %c2_91, %c0_92, %c0_93] : memref<3x3x128x128xbf16, #tpu.memory_space<vmem>>, vector<1x1x128x128xbf16>
    %80 = vector.shape_cast %79 : vector<1x1x128x128xbf16> to vector<128x128xbf16>
    %cst_94 = arith.constant dense<0.000000e+00> : vector<256x128xf32>
    %81 = tpu.matmul %78, %80, %cst_94 {dimension_numbers = #tpu.dot_dimension_numbers<[1], [0], [0], [1], [0, 0, 1, 1], [], []>} : vector<256x128xbf16>, vector<128x128xbf16>, vector<256x128xf32> -> vector<256x128xf32>
    %82 = arith.addf %76, %81 : vector<256x128xf32>
    %83 = vector.broadcast %2 : vector<1x128xf32> to vector<256x128xf32>
    %84 = arith.mulf %82, %83 : vector<256x128xf32>
    %85 = vector.broadcast %3 : vector<1x128xf32> to vector<256x128xf32>
    %86 = arith.addf %84, %85 : vector<256x128xf32>
    %cst_95 = arith.constant 0.000000e+00 : f32
    %87 = vector.broadcast %cst_95 : f32 to vector<256x128xf32>
    %88 = arith.maximumf %86, %87 : vector<256x128xf32>
    %89 = vector.shape_cast %88 : vector<256x128xf32> to vector<1x16x16x128xf32>
    %90 = arith.truncf %89 : vector<1x16x16x128xf32> to vector<1x16x16x128xbf16>
    %c0_96 = arith.constant 0 : index
    %c0_97 = arith.constant 0 : index
    %c0_98 = arith.constant 0 : index
    %c0_99 = arith.constant 0 : index
    %91 = vector.load %arg9[%c0_96, %c0_97, %c0_98, %c0_99] : memref<1x16x16x128xbf16, #tpu.memory_space<vmem>>, vector<1x16x16x128xbf16>
    tpu.vector_store %arg9[%c0_96, %c0_97, %c0_98, %c0_99], %90 {strides = array<i32>} : memref<1x16x16x128xbf16, #tpu.memory_space<vmem>>, vector<1x16x16x128xbf16>,
    return
  }
  func.func @transform_0(%arg0: i32, %arg1: i32) -> (i32, i32, i32, i32) {
    %c0_i32 = arith.constant 0 : i32
    %c0_i32_0 = arith.constant 0 : i32
    %c0_i32_1 = arith.constant 0 : i32
    %c0_i32_2 = arith.constant 0 : i32
    return %arg0, %c0_i32, %c0_i32_0, %c0_i32_1 : i32, i32, i32, i32
  }
  func.func @transform_1(%arg0: i32, %arg1: i32) -> (i32, i32) {
    %c0_i32 = arith.constant 0 : i32
    %c0_i32_0 = arith.constant 0 : i32
    %c0_i32_1 = arith.constant 0 : i32
    return %c0_i32, %c0_i32_0 : i32, i32
  }
  func.func @transform_2(%arg0: i32, %arg1: i32) -> (i32, i32) {
    %c0_i32 = arith.constant 0 : i32
    %c0_i32_0 = arith.constant 0 : i32
    %c0_i32_1 = arith.constant 0 : i32
    return %c0_i32, %c0_i32_0 : i32, i32
  }
  func.func @transform_3(%arg0: i32, %arg1: i32) -> (i32, i32) {
    %c0_i32 = arith.constant 0 : i32
    %c0_i32_0 = arith.constant 0 : i32
    %c0_i32_1 = arith.constant 0 : i32
    return %c0_i32, %c0_i32_0 : i32, i32
  }
  func.func @transform_4(%arg0: i32, %arg1: i32) -> (i32, i32, i32, i32) {
    %c0_i32 = arith.constant 0 : i32
    %c0_i32_0 = arith.constant 0 : i32
    %c0_i32_1 = arith.constant 0 : i32
    %c0_i32_2 = arith.constant 0 : i32
    %c0_i32_3 = arith.constant 0 : i32
    return %c0_i32, %c0_i32_0, %c0_i32_1, %c0_i32_2 : i32, i32, i32, i32
  }
  func.func @transform_5(%arg0: i32, %arg1: i32) -> (i32, i32) {
    %c0_i32 = arith.constant 0 : i32
    %c0_i32_0 = arith.constant 0 : i32
    %c0_i32_1 = arith.constant 0 : i32
    return %c0_i32, %c0_i32_0 : i32, i32
  }
  func.func @transform_6(%arg0: i32, %arg1: i32) -> (i32, i32) {
    %c0_i32 = arith.constant 0 : i32
    %c0_i32_0 = arith.constant 0 : i32
    %c0_i32_1 = arith.constant 0 : i32
    return %c0_i32, %c0_i32_0 : i32, i32
  }
  func.func @transform_7(%arg0: i32, %arg1: i32) -> (i32, i32, i32, i32) {
    %c0_i32 = arith.constant 0 : i32
    %c0_i32_0 = arith.constant 0 : i32
    %c0_i32_1 = arith.constant 0 : i32
    return %arg0, %arg1, %c0_i32, %c0_i32_0 : i32, i32, i32, i32
  }
}

</mosaic_0001>

<llo_original>
// kernel: tpu_custom_call.1
$region0: #{tpu_custom_call.1}
  #allocation0 [shape = 'u32[]', space=smem, size = 0x4, offset = 0x4, fixed_abs, tag = 'smem constant byte address 0x4 - core index']
  #allocation1 [shape = 'u32[144,128]{1,0:T(1,128)}', space=vmem, size = 0x12000, scoped, tag = 'internal scratch']
  #allocation2 [shape = 'bf16[18,18,128]{2,1,0:T(8,128)(2,1)}', space=vmem, size = 0x1b000, scoped, tag = 'scratch operand']
  %s0 = inlined_call_operand.vmem [shape: bf16[2,18,18,128], index: 0, kind: input, shape index: {}]
  %s1 = inlined_call_operand.vmem [shape: bf16[128,128], index: 1, kind: input, shape index: {}]
  %s2 = inlined_call_operand.vmem [shape: f32[1,128], index: 2, kind: input, shape index: {}]
  %s3 = inlined_call_operand.vmem [shape: f32[1,128], index: 3, kind: input, shape index: {}]
  %s4 = inlined_call_operand.vmem [shape: bf16[3,3,128,128], index: 4, kind: input, shape index: {}]
  %s5 = inlined_call_operand.vmem [shape: f32[1,128], index: 5, kind: input, shape index: {}]
  %s6 = inlined_call_operand.vmem [shape: f32[1,128], index: 6, kind: input, shape index: {}]
  %s7 = inlined_call_operand.hbm [shape: bf16[2,16,16,128], index: 7, kind: output, shape index: {}]
  %s8 = sld [smem:[#allocation0]]
  $region69: #{tpu_custom_call.1} parent=0
    _
  %s10 = ssub.s32 1, %s8
  %s11 = scalar_select 0, %s10, %s8
  $region1: #{tpu_custom_call.1} parent=0
    #allocation3 [shape = 'u8[131072]{0}', space=vmem, size = 0x20000, scoped, tag = 'output window, operand 0']
    #allocation4 [shape = 's32[2]{0}', space=sflag, size = 0x8, scoped, tag = 'scoped memory for tpu_custom_call.1']
    %12 = vsyncpa [#allocation4], 0
    %s13 = scalar_lea.sflag [#allocation4], 1
    %14 = vsyncpa %s13, 0
    loop: start=0, step=1, limit=4
    $region2: #{tpu_custom_call.1} parent=1 // loop_pre_header
      _
    $region3: #{tpu_custom_call.1} parent=1 // loop_header
      %s16 = sphi 0, %s20
      %p17 = scmp.ge.s32.totalorder %s16, 4
      %s23 = sphi 0, %s35
      %s24 = sphi 0, %s31
      %s25 = sphi 0, %s23
      %s26 = sphi 0, %s24
      %s27 = sphi 0, %s25
      %s28 = sphi 0, %s26
      %s38 = sphi 0, %s40
      %s41 = sphi 0, %s38
      %s42 = sphi 0, %s41
      %s58 = sphi 0, %s42
      %s62 = sphi 0, %s62
      %s64 = sphi 0, %s62
      %s65 = sphi 0, %s64
      %s79 = sphi 0, %s65
      %s83 = sphi 0, %s83
      %s85 = sphi 0, %s83
      %s86 = sphi 0, %s85
      %s100 = sphi 0, %s86
      %s104 = sphi 0, %s104
      %s106 = sphi 0, %s104
      %s107 = sphi 0, %s106
      %s121 = sphi 0, %s107
      %s125 = sphi 0, %s125
      %s127 = sphi 0, %s125
      %s128 = sphi 0, %s127
      %s142 = sphi 0, %s128
      %s146 = sphi 0, %s146
      %s148 = sphi 0, %s146
      %s149 = sphi 0, %s148
      %s163 = sphi 0, %s149
      %s167 = sphi 0, %s167
      %s169 = sphi 0, %s167
      %s170 = sphi 0, %s169
      %s184 = sphi 0, %s170
      %s192 = sphi 0, %s194
      %s195 = sphi 0, %s192
      %s196 = sphi 0, %s195
      %s212 = sphi 0, %s196
    $region4: #{tpu_custom_call.1} parent=1 // loop_header_branch
      %19 = sbr.rel (%p17) target = $region8
    $region5: #{tpu_custom_call.1} parent=1 // loop_body
      %s21 = ssub.s32 %s16, 1
      %s22 = ssub.s32 %s16, 2
      %s29 = sadd.s32 1, %s24
      %p30 = scmp.ge.s32.totalorder %s29, 1
      %s31 = scalar_select %p30, 0, %s29
      %s32 = sadd.s32 1, %s23
      %s33 = scalar_select %p30, %s32, %s23
      %p34 = scmp.ge.s32.totalorder %s33, 2
      %s35 = scalar_select %p34, 0, %s33
      %s36 = ssub.s32 %s23, %s35
      %p37 = scmp.eq.s32.totalorder %s36, 0
      %s39 = sadd.s32 %s38, 1
      %s40 = scalar_select %p37, %s38, %s39
      %p43 = pneg %p37
      %p44 = scmp.eq.s32.totalorder %s16, 1
      %p45 = por %p43, %p44
      %p46 = scmp.ne.s32.totalorder %s38, %s41
      %p47 = scmp.eq.s32.totalorder %s16, 0
      %p48 = por %p46, %p47
      %p49 = scmp.ne.s32.totalorder %s38, %s41
      %p50 = scmp.eq.s32.totalorder %s21, 1
      %p51 = por %p49, %p50
      %p52 = scmp.ne.s32.totalorder %s41, %s42
      %p53 = scmp.eq.s32.totalorder %s21, 0
      %p54 = por %p52, %p53
      %p55 = scmp.ne.s32.totalorder %s41, %s42
      %p56 = scmp.eq.s32.totalorder %s22, 1
      %p57 = por %p55, %p56
      %p59 = scmp.ne.s32.totalorder %s42, %s58
      %p60 = scmp.eq.s32.totalorder %s22, 0
      %p61 = por %p59, %p60
      %s63 = sadd.s32 %s62, 1
      %p66 = scmp.eq.s32.totalorder %s16, 1
      %p67 = scmp.ne.s32.totalorder %s62, %s64
      %p68 = scmp.eq.s32.totalorder %s16, 0
      %p69 = por %p67, %p68
      %p70 = scmp.ne.s32.totalorder %s62, %s64
      %p71 = scmp.eq.s32.totalorder %s21, 1
      %p72 = por %p70, %p71
      %p73 = scmp.ne.s32.totalorder %s64, %s65
      %p74 = scmp.eq.s32.totalorder %s21, 0
      %p75 = por %p73, %p74
      %p76 = scmp.ne.s32.totalorder %s64, %s65
      %p77 = scmp.eq.s32.totalorder %s22, 1
      %p78 = por %p76, %p77
      %p80 = scmp.ne.s32.totalorder %s65, %s79
      %p81 = scmp.eq.s32.totalorder %s22, 0
      %p82 = por %p80, %p81
      %s84 = sadd.s32 %s83, 1
      %p87 = scmp.eq.s32.totalorder %s16, 1
      %p88 = scmp.ne.s32.totalorder %s83, %s85
      %p89 = scmp.eq.s32.totalorder %s16, 0
      %p90 = por %p88, %p89
      %p91 = scmp.ne.s32.totalorder %s83, %s85
      %p92 = scmp.eq.s32.totalorder %s21, 1
      %p93 = por %p91, %p92
      %p94 = scmp.ne.s32.totalorder %s85, %s86
      %p95 = scmp.eq.s32.totalorder %s21, 0
      %p96 = por %p94, %p95
      %p97 = scmp.ne.s32.totalorder %s85, %s86
      %p98 = scmp.eq.s32.totalorder %s22, 1
      %p99 = por %p97, %p98
      %p101 = scmp.ne.s32.totalorder %s86, %s100
      %p102 = scmp.eq.s32.totalorder %s22, 0
      %p103 = por %p101, %p102
      %s105 = sadd.s32 %s104, 1
      %p108 = scmp.eq.s32.totalorder %s16, 1
      %p109 = scmp.ne.s32.totalorder %s104, %s106
      %p110 = scmp.eq.s32.totalorder %s16, 0
      %p111 = por %p109, %p110
      %p112 = scmp.ne.s32.totalorder %s104, %s106
      %p113 = scmp.eq.s32.totalorder %s21, 1
      %p114 = por %p112, %p113
      %p115 = scmp.ne.s32.totalorder %s106, %s107
      %p116 = scmp.eq.s32.totalorder %s21, 0
      %p117 = por %p115, %p116
      %p118 = scmp.ne.s32.totalorder %s106, %s107
      %p119 = scmp.eq.s32.totalorder %s22, 1
      %p120 = por %p118, %p119
      %p122 = scmp.ne.s32.totalorder %s107, %s121
      %p123 = scmp.eq.s32.totalorder %s22, 0
      %p124 = por %p122, %p123
      %s126 = sadd.s32 %s125, 1
      %p129 = scmp.eq.s32.totalorder %s16, 1
      %p130 = scmp.ne.s32.totalorder %s125, %s127
      %p131 = scmp.eq.s32.totalorder %s16, 0
      %p132 = por %p130, %p131
      %p133 = scmp.ne.s32.totalorder %s125, %s127
      %p134 = scmp.eq.s32.totalorder %s21, 1
      %p135 = por %p133, %p134
      %p136 = scmp.ne.s32.totalorder %s127, %s128
      %p137 = scmp.eq.s32.totalorder %s21, 0
      %p138 = por %p136, %p137
      %p139 = scmp.ne.s32.totalorder %s127, %s128
      %p140 = scmp.eq.s32.totalorder %s22, 1
      %p141 = por %p139, %p140
      %p143 = scmp.ne.s32.totalorder %s128, %s142
      %p144 = scmp.eq.s32.totalorder %s22, 0
      %p145 = por %p143, %p144
      %s147 = sadd.s32 %s146, 1
      %p150 = scmp.eq.s32.totalorder %s16, 1
      %p151 = scmp.ne.s32.totalorder %s146, %s148
      %p152 = scmp.eq.s32.totalorder %s16, 0
      %p153 = por %p151, %p152
      %p154 = scmp.ne.s32.totalorder %s146, %s148
      %p155 = scmp.eq.s32.totalorder %s21, 1
      %p156 = por %p154, %p155
      %p157 = scmp.ne.s32.totalorder %s148, %s149
      %p158 = scmp.eq.s32.totalorder %s21, 0
      %p159 = por %p157, %p158
      %p160 = scmp.ne.s32.totalorder %s148, %s149
      %p161 = scmp.eq.s32.totalorder %s22, 1
      %p162 = por %p160, %p161
      %p164 = scmp.ne.s32.totalorder %s149, %s163
      %p165 = scmp.eq.s32.totalorder %s22, 0
      %p166 = por %p164, %p165
      %s168 = sadd.s32 %s167, 1
      %p171 = scmp.eq.s32.totalorder %s16, 1
      %p172 = scmp.ne.s32.totalorder %s167, %s169
      %p173 = scmp.eq.s32.totalorder %s16, 0
      %p174 = por %p172, %p173
      %p175 = scmp.ne.s32.totalorder %s167, %s169
      %p176 = scmp.eq.s32.totalorder %s21, 1
      %p177 = por %p175, %p176
      %p178 = scmp.ne.s32.totalorder %s169, %s170
      %p179 = scmp.eq.s32.totalorder %s21, 0
      %p180 = por %p178, %p179
      %p181 = scmp.ne.s32.totalorder %s169, %s170
      %p182 = scmp.eq.s32.totalorder %s22, 1
      %p183 = por %p181, %p182
      %p185 = scmp.ne.s32.totalorder %s170, %s184
      %p186 = scmp.eq.s32.totalorder %s22, 0
      %p187 = por %p185, %p186
      %s188 = ssub.s32 %s23, %s35
      %s189 = ssub.s32 %s24, %s31
      %s190 = sor.u32 %s188, %s189
      %p191 = scmp.eq.s32.totalorder %s190, 0
      %s193 = sadd.s32 %s192, 1
      %s194 = scalar_select %p191, %s192, %s193
      %p197 = pneg %p191
      %p198 = scmp.eq.s32.totalorder %s16, 1
      %p199 = por %p197, %p198
      %p200 = scmp.ne.s32.totalorder %s192, %s195
      %p201 = scmp.eq.s32.totalorder %s16, 0
      %p202 = por %p200, %p201
      %p203 = scmp.ne.s32.totalorder %s192, %s195
      %p204 = scmp.eq.s32.totalorder %s21, 1
      %p205 = por %p203, %p204
      %p206 = scmp.ne.s32.totalorder %s195, %s196
      %p207 = scmp.eq.s32.totalorder %s21, 0
      %p208 = por %p206, %p207
      %p209 = scmp.ne.s32.totalorder %s195, %s196
      %p210 = scmp.eq.s32.totalorder %s22, 1
      %p211 = por %p209, %p210
      %p213 = scmp.ne.s32.totalorder %s196, %s212
      %p214 = scmp.eq.s32.totalorder %s22, 0
      %p215 = por %p213, %p214
      %p216 = scmp.le.s32.totalorder 1, %s16
      %p217 = scmp.lt.s32.totalorder %s16, 3
      %p218 = pnand %p216, %p217
      %p219 = pneg %p218
      // Predicated region
      $region9: #{tpu_custom_call.1} parent=5 // pred_check
        _
      $region10: #{tpu_custom_call.1} parent=5 // pred_check_branch
        %221 = sbr.rel (%p218) target = $region12
      $region11: #{tpu_custom_call.1} parent=5 // pred_region
        %s222 = ssub.s32 %s16, 1
        // Predicated region
        $region13: #{tpu_custom_call.1} parent=11 // pred_check
          %p223 = pneg %p75
        $region14: #{tpu_custom_call.1} parent=11 // pred_check_branch
          %225 = sbr.rel (%p223) target = $region16
        $region15: #{tpu_custom_call.1} parent=11 // pred_region
          _
        $region16: #{tpu_custom_call.1} parent=11 // pred_fallthru
          _
        // Predicated region
        $region17: #{tpu_custom_call.1} parent=11 // pred_check
          %p226 = pneg %p96
        $region18: #{tpu_custom_call.1} parent=11 // pred_check_branch
          %228 = sbr.rel (%p226) target = $region20
        $region19: #{tpu_custom_call.1} parent=11 // pred_region
          _
        $region20: #{tpu_custom_call.1} parent=11 // pred_fallthru
          _
        // Predicated region
        $region21: #{tpu_custom_call.1} parent=11 // pred_check
          %p229 = pneg %p117
        $region22: #{tpu_custom_call.1} parent=11 // pred_check_branch
          %231 = sbr.rel (%p229) target = $region24
        $region23: #{tpu_custom_call.1} parent=11 // pred_region
          _
        $region24: #{tpu_custom_call.1} parent=11 // pred_fallthru
          _
        // Predicated region
        $region25: #{tpu_custom_call.1} parent=11 // pred_check
          %p232 = pneg %p138
        $region26: #{tpu_custom_call.1} parent=11 // pred_check_branch
          %234 = sbr.rel (%p232) target = $region28
        $region27: #{tpu_custom_call.1} parent=11 // pred_region
          _
        $region28: #{tpu_custom_call.1} parent=11 // pred_fallthru
          _
        // Predicated region
        $region29: #{tpu_custom_call.1} parent=11 // pred_check
          %p235 = pneg %p159
        $region30: #{tpu_custom_call.1} parent=11 // pred_check_branch
          %237 = sbr.rel (%p235) target = $region32
        $region31: #{tpu_custom_call.1} parent=11 // pred_region
          _
        $region32: #{tpu_custom_call.1} parent=11 // pred_fallthru
          _
        // Predicated region
        $region33: #{tpu_custom_call.1} parent=11 // pred_check
          %p238 = pneg %p180
        $region34: #{tpu_custom_call.1} parent=11 // pred_check_branch
          %240 = sbr.rel (%p238) target = $region36
        $region35: #{tpu_custom_call.1} parent=11 // pred_region
          _
        $region36: #{tpu_custom_call.1} parent=11 // pred_fallthru
          _
      $region12: #{tpu_custom_call.1} parent=5 // pred_fallthru
        _
      %p241 = scmp.lt.s32.totalorder %s16, 2
      // Predicated region
      $region37: #{tpu_custom_call.1} parent=5 // pred_check
        %p242 = pneg %p241
      $region38: #{tpu_custom_call.1} parent=5 // pred_check_branch
        %244 = sbr.rel (%p242) target = $region40
      $region39: #{tpu_custom_call.1} parent=5 // pred_region
        // Predicated region
        $region41: #{tpu_custom_call.1} parent=39 // pred_check
          %p245 = pneg %p48
        $region42: #{tpu_custom_call.1} parent=39 // pred_check_branch
          %247 = sbr.rel (%p245) target = $region44
        $region43: #{tpu_custom_call.1} parent=39 // pred_region
          %p248 = scmp.lt.s32.totalorder %s23, 1
          %s249 = scalar_select %p248, %s23, 1
          %s250 = smul.addr %s249, 54
          %s251 = smul.addr %s250, 4
          %s252 = scalar_lea.vmem %s0, %s251
        $region44: #{tpu_custom_call.1} parent=39 // pred_fallthru
          _
      $region40: #{tpu_custom_call.1} parent=5 // pred_fallthru
        _
      %p253 = scmp.le.s32.totalorder 1, %s16
      %p254 = scmp.lt.s32.totalorder %s16, 3
      %p255 = pnand %p253, %p254
      %p256 = pneg %p255
      // Predicated region
      $region45: #{tpu_custom_call.1} parent=5 // pred_check
        _
      $region46: #{tpu_custom_call.1} parent=5 // pred_check_branch
        %258 = sbr.rel (%p255) target = $region48
      $region47: #{tpu_custom_call.1} parent=5 // pred_region
        %s259 = ssub.s32 %s16, 1
        %p260 = scmp.lt.s32.totalorder %s25, 1
        %s261 = scalar_select %p260, %s25, 1
        %s262 = smul.addr %s261, 54
        %s263 = smul.addr %s262, 4
        %s264 = scalar_lea.vmem %s0, %s263
        %p265 = pneg %p54
        %p266 = pneg %p51
        %p267 = pneg %p75
        %p268 = pneg %p72
        %p269 = pneg %p96
        %p270 = pneg %p93
        %p271 = pneg %p117
        %p272 = pneg %p114
        %p273 = pneg %p138
        %p274 = pneg %p135
        %p275 = pneg %p159
        %p276 = pneg %p156
        %p277 = pneg %p180
        %p278 = pneg %p177
        %p279 = pneg %p208
        %p280 = pneg %p205
        %s281 = sand.u32 %s195, 1
        %s282 = scalar_lea.sflag [#allocation4], %s281
        %s283 = sand.u32 %s195, 1
        %s284 = smul.addr %s283, 128
        %s285 = scalar_lea.vmem [#allocation3], %s284
        %p286 = scmp.lt.s32.totalorder %s25, 1
        %s287 = scalar_select %p286, %s25, 1
        %s288 = smul.addr %s287, 54
        %s289 = smul.addr %s288, 4
        %s290 = scalar_lea.vmem %s0, %s289
        %s291 = smul.u32 16, %s26
        %v293 = vld [vmem:[%s2] sm:$0x1]
        %v294 = vld [vmem:[%s3] sm:$0x1]
        %v295 = vld [vmem:[%s5] sm:$0x1]
        %v296 = vld [vmem:[%s6] sm:$0x1]
        %s297 = smul.u32 %s26, 16
        %s298 = smul.u32 %s297, 3
        %s299 = smul.addr %s298, 4
        %s300 = scalar_lea.vmem %s290, %s299
        %v301 = vld [vmem:[%s300] sm:$0xf]
        %v302 = vld [vmem:[%s300 + $0x4] sm:$0xf]
        %v303 = vld [vmem:[%s300 + $0x8] sm:$0x1]
        %v304 = vld [vmem:[%s300 + $0xc] sm:$0xf]
        %v305 = vld [vmem:[%s300 + $0x10] sm:$0xf]
        %v306 = vld [vmem:[%s300 + $0x14] sm:$0x1]
        %v307 = vld [vmem:[%s300 + $0x18] sm:$0xf]
        %v308 = vld [vmem:[%s300 + $0x1c] sm:$0xf]
        %v309 = vld [vmem:[%s300 + $0x20] sm:$0x1]
        %v310 = vld [vmem:[%s300 + $0x24] sm:$0xf]
        %v311 = vld [vmem:[%s300 + $0x28] sm:$0xf]
        %v312 = vld [vmem:[%s300 + $0x2c] sm:$0x1]
        %v313 = vld [vmem:[%s300 + $0x30] sm:$0xf]
        %v314 = vld [vmem:[%s300 + $0x34] sm:$0xf]
        %v315 = vld [vmem:[%s300 + $0x38] sm:$0x1]
        %v316 = vld [vmem:[%s300 + $0x3c] sm:$0xf]
        %v317 = vld [vmem:[%s300 + $0x40] sm:$0xf]
        %v318 = vld [vmem:[%s300 + $0x44] sm:$0x1]
        %v319 = vld [vmem:[%s300 + $0x48] sm:$0xf]
        %v320 = vld [vmem:[%s300 + $0x4c] sm:$0xf]
        %v321 = vld [vmem:[%s300 + $0x50] sm:$0x1]
        %v322 = vld [vmem:[%s300 + $0x54] sm:$0xf]
        %v323 = vld [vmem:[%s300 + $0x58] sm:$0xf]
        %v324 = vld [vmem:[%s300 + $0x5c] sm:$0x1]
        %v325 = vld [vmem:[%s300 + $0x60] sm:$0xf]
        %v326 = vld [vmem:[%s300 + $0x64] sm:$0xf]
        %v327 = vld [vmem:[%s300 + $0x68] sm:$0x1]
        %v328 = vld [vmem:[%s300 + $0x6c] sm:$0xf]
        %v329 = vld [vmem:[%s300 + $0x70] sm:$0xf]
        %v330 = vld [vmem:[%s300 + $0x74] sm:$0x1]
        %v331 = vld [vmem:[%s300 + $0x78] sm:$0xf]
        %v332 = vld [vmem:[%s300 + $0x7c] sm:$0xf]
        %v333 = vld [vmem:[%s300 + $0x80] sm:$0x1]
        %v334 = vld [vmem:[%s300 + $0x84] sm:$0xf]
        %v335 = vld [vmem:[%s300 + $0x88] sm:$0xf]
        %v336 = vld [vmem:[%s300 + $0x8c] sm:$0x1]
        %v337 = vld [vmem:[%s300 + $0x90] sm:$0xf]
        %v338 = vld [vmem:[%s300 + $0x94] sm:$0xf]
        %v339 = vld [vmem:[%s300 + $0x98] sm:$0x1]
        %v340 = vld [vmem:[%s300 + $0x9c] sm:$0xf]
        %v341 = vld [vmem:[%s300 + $0xa0] sm:$0xf]
        %v342 = vld [vmem:[%s300 + $0xa4] sm:$0x1]
        %v343 = vld [vmem:[%s300 + $0xa8] sm:$0xf]
        %v344 = vld [vmem:[%s300 + $0xac] sm:$0xf]
        %v345 = vld [vmem:[%s300 + $0xb0] sm:$0x1]
        %v346 = vld [vmem:[%s300 + $0xb4] sm:$0xf]
        %v347 = vld [vmem:[%s300 + $0xb8] sm:$0xf]
        %v348 = vld [vmem:[%s300 + $0xbc] sm:$0x1]
        %v349 = vld [vmem:[%s300 + $0xc0] sm:$0xf]
        %v350 = vld [vmem:[%s300 + $0xc4] sm:$0xf]
        %v351 = vld [vmem:[%s300 + $0xc8] sm:$0x1]
        %v352 = vld [vmem:[%s300 + $0xcc] sm:$0xf]
        %v353 = vld [vmem:[%s300 + $0xd0] sm:$0xf]
        %v354 = vld [vmem:[%s300 + $0xd4] sm:$0x1]
        %v410 = vunpack.c.l.s4 1966171168
        %v411 = vunpack.c.0.s8 %v410
        %v412 = vlaneseq
        %v413 = vshrl.u32 %v412, 7
        %v414 = vsub.s32 %v411, %v413
        %v415 = vrot.slane %v301, %v414
        %v416 = vcombine.high %v415, %v415
        %v418 = vunpack.c.l.s4 1966171168
        %v419 = vunpack.c.0.s8 %v418
        %v420 = vlaneseq
        %v421 = vshrl.u32 %v420, 7
        %v422 = vsub.s32 %v419, %v421
        %v423 = vrot.slane %v415, %v422
        %v425 = vunpack.c.l.s4 1966171168
        %v426 = vunpack.c.0.s8 %v425
        %v427 = vlaneseq
        %v428 = vshrl.u32 %v427, 7
        %v429 = vsub.s32 %v426, %v428
        %v430 = vrot.slane %v416, %v429
        %v431 = vcombine.high %v423, %v423
        %v432 = vcombine.high %v430, %v430
        %v434 = vunpack.c.l.s4 1966171168
        %v435 = vunpack.c.0.s8 %v434
        %v436 = vlaneseq
        %v437 = vshrl.u32 %v436, 7
        %v438 = vsub.s32 %v435, %v437
        %v439 = vrot.slane %v302, %v438
        %v440 = vcombine.high %v439, %v439
        %v442 = vunpack.c.l.s4 1966171168
        %v443 = vunpack.c.0.s8 %v442
        %v444 = vlaneseq
        %v445 = vshrl.u32 %v444, 7
        %v446 = vsub.s32 %v443, %v445
        %v447 = vrot.slane %v439, %v446
        %v449 = vunpack.c.l.s4 1966171168
        %v450 = vunpack.c.0.s8 %v449
        %v451 = vlaneseq
        %v452 = vshrl.u32 %v451, 7
        %v453 = vsub.s32 %v450, %v452
        %v454 = vrot.slane %v440, %v453
        %v455 = vcombine.high %v447, %v447
        %v456 = vcombine.high %v454, %v454
        %v458 = vunpack.c.l.s4 1966171168
        %v459 = vunpack.c.0.s8 %v458
        %v460 = vlaneseq
        %v461 = vshrl.u32 %v460, 7
        %v462 = vsub.s32 %v459, %v461
        %v463 = vrot.slane %v303, %v462
        %v465 = vunpack.c.l.s4 1966171168
        %v466 = vunpack.c.0.s8 %v465
        %v467 = vlaneseq
        %v468 = vshrl.u32 %v467, 7
        %v469 = vsub.s32 %v466, %v468
        %v470 = vrot.slane %v463, %v469
        %v472 = vunpack.c.l.s4 1966171168
        %v473 = vunpack.c.0.s8 %v472
        %v474 = vlaneseq
        %v475 = vshrl.u32 %v474, 7
        %v476 = vsub.s32 %v473, %v475
        %v477 = vrot.slane %v304, %v476
        %v478 = vcombine.high %v477, %v477
        %v480 = vunpack.c.l.s4 1966171168
        %v481 = vunpack.c.0.s8 %v480
        %v482 = vlaneseq
        %v483 = vshrl.u32 %v482, 7
        %v484 = vsub.s32 %v481, %v483
        %v485 = vrot.slane %v477, %v484
        %v487 = vunpack.c.l.s4 1966171168
        %v488 = vunpack.c.0.s8 %v487
        %v489 = vlaneseq
        %v490 = vshrl.u32 %v489, 7
        %v491 = vsub.s32 %v488, %v490
        %v492 = vrot.slane %v478, %v491
        %v493 = vcombine.high %v485, %v485
        %v494 = vcombine.high %v492, %v492
        %v496 = vunpack.c.l.s4 1966171168
        %v497 = vunpack.c.0.s8 %v496
        %v498 = vlaneseq
        %v499 = vshrl.u32 %v498, 7
        %v500 = vsub.s32 %v497, %v499
        %v501 = vrot.slane %v305, %v500
        %v502 = vcombine.high %v501, %v501
        %v504 = vunpack.c.l.s4 1966171168
        %v505 = vunpack.c.0.s8 %v504
        %v506 = vlaneseq
        %v507 = vshrl.u32 %v506, 7
        %v508 = vsub.s32 %v505, %v507
        %v509 = vrot.slane %v501, %v508
        %v511 = vunpack.c.l.s4 1966171168
        %v512 = vunpack.c.0.s8 %v511
        %v513 = vlaneseq
        %v514 = vshrl.u32 %v513, 7
        %v515 = vsub.s32 %v512, %v514
        %v516 = vrot.slane %v502, %v515
        %v517 = vcombine.high %v509, %v509
        %v518 = vcombine.high %v516, %v516
        %v520 = vunpack.c.l.s4 1966171168
        %v521 = vunpack.c.0.s8 %v520
        %v522 = vlaneseq
        %v523 = vshrl.u32 %v522, 7
        %v524 = vsub.s32 %v521, %v523
        %v525 = vrot.slane %v306, %v524
        %v527 = vunpack.c.l.s4 1966171168
        %v528 = vunpack.c.0.s8 %v527
        %v529 = vlaneseq
        %v530 = vshrl.u32 %v529, 7
        %v531 = vsub.s32 %v528, %v530
        %v532 = vrot.slane %v525, %v531
        %v534 = vunpack.c.l.s4 1966171168
        %v535 = vunpack.c.0.s8 %v534
        %v536 = vlaneseq
        %v537 = vshrl.u32 %v536, 7
        %v538 = vsub.s32 %v535, %v537
        %v539 = vrot.slane %v307, %v538
        %v540 = vcombine.high %v539, %v539
        %v542 = vunpack.c.l.s4 1966171168
        %v543 = vunpack.c.0.s8 %v542
        %v544 = vlaneseq
        %v545 = vshrl.u32 %v544, 7
        %v546 = vsub.s32 %v543, %v545
        %v547 = vrot.slane %v539, %v546
        %v549 = vunpack.c.l.s4 1966171168
        %v550 = vunpack.c.0.s8 %v549
        %v551 = vlaneseq
        %v552 = vshrl.u32 %v551, 7
        %v553 = vsub.s32 %v550, %v552
        %v554 = vrot.slane %v540, %v553
        %v555 = vcombine.high %v547, %v547
        %v556 = vcombine.high %v554, %v554
        %v558 = vunpack.c.l.s4 1966171168
        %v559 = vunpack.c.0.s8 %v558
        %v560 = vlaneseq
        %v561 = vshrl.u32 %v560, 7
        %v562 = vsub.s32 %v559, %v561
        %v563 = vrot.slane %v308, %v562
        %v564 = vcombine.high %v563, %v563
        %v566 = vunpack.c.l.s4 1966171168
        %v567 = vunpack.c.0.s8 %v566
        %v568 = vlaneseq
        %v569 = vshrl.u32 %v568, 7
        %v570 = vsub.s32 %v567, %v569
        %v571 = vrot.slane %v563, %v570
        %v573 = vunpack.c.l.s4 1966171168
        %v574 = vunpack.c.0.s8 %v573
        %v575 = vlaneseq
        %v576 = vshrl.u32 %v575, 7
        %v577 = vsub.s32 %v574, %v576
        %v578 = vrot.slane %v564, %v577
        %v579 = vcombine.high %v571, %v571
        %v580 = vcombine.high %v578, %v578
        %v582 = vunpack.c.l.s4 1966171168
        %v583 = vunpack.c.0.s8 %v582
        %v584 = vlaneseq
        %v585 = vshrl.u32 %v584, 7
        %v586 = vsub.s32 %v583, %v585
        %v587 = vrot.slane %v309, %v586
        %v589 = vunpack.c.l.s4 1966171168
        %v590 = vunpack.c.0.s8 %v589
        %v591 = vlaneseq
        %v592 = vshrl.u32 %v591, 7
        %v593 = vsub.s32 %v590, %v592
        %v594 = vrot.slane %v587, %v593
        %v596 = vunpack.c.l.s4 1966171168
        %v597 = vunpack.c.0.s8 %v596
        %v598 = vlaneseq
        %v599 = vshrl.u32 %v598, 7
        %v600 = vsub.s32 %v597, %v599
        %v601 = vrot.slane %v310, %v600
        %v602 = vcombine.high %v601, %v601
        %v604 = vunpack.c.l.s4 1966171168
        %v605 = vunpack.c.0.s8 %v604
        %v606 = vlaneseq
        %v607 = vshrl.u32 %v606, 7
        %v608 = vsub.s32 %v605, %v607
        %v609 = vrot.slane %v601, %v608
        %v611 = vunpack.c.l.s4 1966171168
        %v612 = vunpack.c.0.s8 %v611
        %v613 = vlaneseq
        %v614 = vshrl.u32 %v613, 7
        %v615 = vsub.s32 %v612, %v614
        %v616 = vrot.slane %v602, %v615
        %v617 = vcombine.high %v609, %v609
        %v618 = vcombine.high %v616, %v616
        %v620 = vunpack.c.l.s4 1966171168
        %v621 = vunpack.c.0.s8 %v620
        %v622 = vlaneseq
        %v623 = vshrl.u32 %v622, 7
        %v624 = vsub.s32 %v621, %v623
        %v625 = vrot.slane %v311, %v624
        %v626 = vcombine.high %v625, %v625
        %v628 = vunpack.c.l.s4 1966171168
        %v629 = vunpack.c.0.s8 %v628
        %v630 = vlaneseq
        %v631 = vshrl.u32 %v630, 7
        %v632 = vsub.s32 %v629, %v631
        %v633 = vrot.slane %v625, %v632
        %v635 = vunpack.c.l.s4 1966171168
        %v636 = vunpack.c.0.s8 %v635
        %v637 = vlaneseq
        %v638 = vshrl.u32 %v637, 7
        %v639 = vsub.s32 %v636, %v638
        %v640 = vrot.slane %v626, %v639
        %v641 = vcombine.high %v633, %v633
        %v642 = vcombine.high %v640, %v640
        %v644 = vunpack.c.l.s4 1966171168
        %v645 = vunpack.c.0.s8 %v644
        %v646 = vlaneseq
        %v647 = vshrl.u32 %v646, 7
        %v648 = vsub.s32 %v645, %v647
        %v649 = vrot.slane %v312, %v648
        %v651 = vunpack.c.l.s4 1966171168
        %v652 = vunpack.c.0.s8 %v651
        %v653 = vlaneseq
        %v654 = vshrl.u32 %v653, 7
        %v655 = vsub.s32 %v652, %v654
        %v656 = vrot.slane %v649, %v655
        %v658 = vunpack.c.l.s4 1966171168
        %v659 = vunpack.c.0.s8 %v658
        %v660 = vlaneseq
        %v661 = vshrl.u32 %v660, 7
        %v662 = vsub.s32 %v659, %v661
        %v663 = vrot.slane %v313, %v662
        %v664 = vcombine.high %v663, %v663
        %v666 = vunpack.c.l.s4 1966171168
        %v667 = vunpack.c.0.s8 %v666
        %v668 = vlaneseq
        %v669 = vshrl.u32 %v668, 7
        %v670 = vsub.s32 %v667, %v669
        %v671 = vrot.slane %v663, %v670
        %v673 = vunpack.c.l.s4 1966171168
        %v674 = vunpack.c.0.s8 %v673
        %v675 = vlaneseq
        %v676 = vshrl.u32 %v675, 7
        %v677 = vsub.s32 %v674, %v676
        %v678 = vrot.slane %v664, %v677
        %v679 = vcombine.high %v671, %v671
        %v680 = vcombine.high %v678, %v678
        %v682 = vunpack.c.l.s4 1966171168
        %v683 = vunpack.c.0.s8 %v682
        %v684 = vlaneseq
        %v685 = vshrl.u32 %v684, 7
        %v686 = vsub.s32 %v683, %v685
        %v687 = vrot.slane %v314, %v686
        %v688 = vcombine.high %v687, %v687
        %v690 = vunpack.c.l.s4 1966171168
        %v691 = vunpack.c.0.s8 %v690
        %v692 = vlaneseq
        %v693 = vshrl.u32 %v692, 7
        %v694 = vsub.s32 %v691, %v693
        %v695 = vrot.slane %v687, %v694
        %v697 = vunpack.c.l.s4 1966171168
        %v698 = vunpack.c.0.s8 %v697
        %v699 = vlaneseq
        %v700 = vshrl.u32 %v699, 7
        %v701 = vsub.s32 %v698, %v700
        %v702 = vrot.slane %v688, %v701
        %v703 = vcombine.high %v695, %v695
        %v704 = vcombine.high %v702, %v702
        %v706 = vunpack.c.l.s4 1966171168
        %v707 = vunpack.c.0.s8 %v706
        %v708 = vlaneseq
        %v709 = vshrl.u32 %v708, 7
        %v710 = vsub.s32 %v707, %v709
        %v711 = vrot.slane %v315, %v710
        %v713 = vunpack.c.l.s4 1966171168
        %v714 = vunpack.c.0.s8 %v713
        %v715 = vlaneseq
        %v716 = vshrl.u32 %v715, 7
        %v717 = vsub.s32 %v714, %v716
        %v718 = vrot.slane %v711, %v717
        %v720 = vunpack.c.l.s4 1966171168
        %v721 = vunpack.c.0.s8 %v720
        %v722 = vlaneseq
        %v723 = vshrl.u32 %v722, 7
        %v724 = vsub.s32 %v721, %v723
        %v725 = vrot.slane %v316, %v724
        %v726 = vcombine.high %v725, %v725
        %v728 = vunpack.c.l.s4 1966171168
        %v729 = vunpack.c.0.s8 %v728
        %v730 = vlaneseq
        %v731 = vshrl.u32 %v730, 7
        %v732 = vsub.s32 %v729, %v731
        %v733 = vrot.slane %v725, %v732
        %v735 = vunpack.c.l.s4 1966171168
        %v736 = vunpack.c.0.s8 %v735
        %v737 = vlaneseq
        %v738 = vshrl.u32 %v737, 7
        %v739 = vsub.s32 %v736, %v738
        %v740 = vrot.slane %v726, %v739
        %v741 = vcombine.high %v733, %v733
        %v742 = vcombine.high %v740, %v740
        %v744 = vunpack.c.l.s4 1966171168
        %v745 = vunpack.c.0.s8 %v744
        %v746 = vlaneseq
        %v747 = vshrl.u32 %v746, 7
        %v748 = vsub.s32 %v745, %v747
        %v749 = vrot.slane %v317, %v748
        %v750 = vcombine.high %v749, %v749
        %v752 = vunpack.c.l.s4 1966171168
        %v753 = vunpack.c.0.s8 %v752
        %v754 = vlaneseq
        %v755 = vshrl.u32 %v754, 7
        %v756 = vsub.s32 %v753, %v755
        %v757 = vrot.slane %v749, %v756
        %v759 = vunpack.c.l.s4 1966171168
        %v760 = vunpack.c.0.s8 %v759
        %v761 = vlaneseq
        %v762 = vshrl.u32 %v761, 7
        %v763 = vsub.s32 %v760, %v762
        %v764 = vrot.slane %v750, %v763
        %v765 = vcombine.high %v757, %v757
        %v766 = vcombine.high %v764, %v764
        %v768 = vunpack.c.l.s4 1966171168
        %v769 = vunpack.c.0.s8 %v768
        %v770 = vlaneseq
        %v771 = vshrl.u32 %v770, 7
        %v772 = vsub.s32 %v769, %v771
        %v773 = vrot.slane %v318, %v772
        %v775 = vunpack.c.l.s4 1966171168
        %v776 = vunpack.c.0.s8 %v775
        %v777 = vlaneseq
        %v778 = vshrl.u32 %v777, 7
        %v779 = vsub.s32 %v776, %v778
        %v780 = vrot.slane %v773, %v779
        %v782 = vunpack.c.l.s4 1966171168
        %v783 = vunpack.c.0.s8 %v782
        %v784 = vlaneseq
        %v785 = vshrl.u32 %v784, 7
        %v786 = vsub.s32 %v783, %v785
        %v787 = vrot.slane %v319, %v786
        %v788 = vcombine.high %v787, %v787
        %v790 = vunpack.c.l.s4 1966171168
        %v791 = vunpack.c.0.s8 %v790
        %v792 = vlaneseq
        %v793 = vshrl.u32 %v792, 7
        %v794 = vsub.s32 %v791, %v793
        %v795 = vrot.slane %v787, %v794
        %v797 = vunpack.c.l.s4 1966171168
        %v798 = vunpack.c.0.s8 %v797
        %v799 = vlaneseq
        %v800 = vshrl.u32 %v799, 7
        %v801 = vsub.s32 %v798, %v800
        %v802 = vrot.slane %v788, %v801
        %v803 = vcombine.high %v795, %v795
        %v804 = vcombine.high %v802, %v802
        %v806 = vunpack.c.l.s4 1966171168
        %v807 = vunpack.c.0.s8 %v806
        %v808 = vlaneseq
        %v809 = vshrl.u32 %v808, 7
        %v810 = vsub.s32 %v807, %v809
        %v811 = vrot.slane %v320, %v810
        %v812 = vcombine.high %v811, %v811
        %v814 = vunpack.c.l.s4 1966171168
        %v815 = vunpack.c.0.s8 %v814
        %v816 = vlaneseq
        %v817 = vshrl.u32 %v816, 7
        %v818 = vsub.s32 %v815, %v817
        %v819 = vrot.slane %v811, %v818
        %v821 = vunpack.c.l.s4 1966171168
        %v822 = vunpack.c.0.s8 %v821
        %v823 = vlaneseq
        %v824 = vshrl.u32 %v823, 7
        %v825 = vsub.s32 %v822, %v824
        %v826 = vrot.slane %v812, %v825
        %v827 = vcombine.high %v819, %v819
        %v828 = vcombine.high %v826, %v826
        %v830 = vunpack.c.l.s4 1966171168
        %v831 = vunpack.c.0.s8 %v830
        %v832 = vlaneseq
        %v833 = vshrl.u32 %v832, 7
        %v834 = vsub.s32 %v831, %v833
        %v835 = vrot.slane %v321, %v834
        %v837 = vunpack.c.l.s4 1966171168
        %v838 = vunpack.c.0.s8 %v837
        %v839 = vlaneseq
        %v840 = vshrl.u32 %v839, 7
        %v841 = vsub.s32 %v838, %v840
        %v842 = vrot.slane %v835, %v841
        %v844 = vunpack.c.l.s4 1966171168
        %v845 = vunpack.c.0.s8 %v844
        %v846 = vlaneseq
        %v847 = vshrl.u32 %v846, 7
        %v848 = vsub.s32 %v845, %v847
        %v849 = vrot.slane %v322, %v848
        %v850 = vcombine.high %v849, %v849
        %v852 = vunpack.c.l.s4 1966171168
        %v853 = vunpack.c.0.s8 %v852
        %v854 = vlaneseq
        %v855 = vshrl.u32 %v854, 7
        %v856 = vsub.s32 %v853, %v855
        %v857 = vrot.slane %v849, %v856
        %v859 = vunpack.c.l.s4 1966171168
        %v860 = vunpack.c.0.s8 %v859
        %v861 = vlaneseq
        %v862 = vshrl.u32 %v861, 7
        %v863 = vsub.s32 %v860, %v862
        %v864 = vrot.slane %v850, %v863
        %v865 = vcombine.high %v857, %v857
        %v866 = vcombine.high %v864, %v864
        %v868 = vunpack.c.l.s4 1966171168
        %v869 = vunpack.c.0.s8 %v868
        %v870 = vlaneseq
        %v871 = vshrl.u32 %v870, 7
        %v872 = vsub.s32 %v869, %v871
        %v873 = vrot.slane %v323, %v872
        %v874 = vcombine.high %v873, %v873
        %v876 = vunpack.c.l.s4 1966171168
        %v877 = vunpack.c.0.s8 %v876
        %v878 = vlaneseq
        %v879 = vshrl.u32 %v878, 7
        %v880 = vsub.s32 %v877, %v879
        %v881 = vrot.slane %v873, %v880
        %v883 = vunpack.c.l.s4 1966171168
        %v884 = vunpack.c.0.s8 %v883
        %v885 = vlaneseq
        %v886 = vshrl.u32 %v885, 7
        %v887 = vsub.s32 %v884, %v886
        %v888 = vrot.slane %v874, %v887
        %v889 = vcombine.high %v881, %v881
        %v890 = vcombine.high %v888, %v888
        %v892 = vunpack.c.l.s4 1966171168
        %v893 = vunpack.c.0.s8 %v892
        %v894 = vlaneseq
        %v895 = vshrl.u32 %v894, 7
        %v896 = vsub.s32 %v893, %v895
        %v897 = vrot.slane %v324, %v896
        %v899 = vunpack.c.l.s4 1966171168
        %v900 = vunpack.c.0.s8 %v899
        %v901 = vlaneseq
        %v902 = vshrl.u32 %v901, 7
        %v903 = vsub.s32 %v900, %v902
        %v904 = vrot.slane %v897, %v903
        %v906 = vunpack.c.l.s4 1966171168
        %v907 = vunpack.c.0.s8 %v906
        %v908 = vlaneseq
        %v909 = vshrl.u32 %v908, 7
        %v910 = vsub.s32 %v907, %v909
        %v911 = vrot.slane %v325, %v910
        %v912 = vcombine.high %v911, %v911
        %v914 = vunpack.c.l.s4 1966171168
        %v915 = vunpack.c.0.s8 %v914
        %v916 = vlaneseq
        %v917 = vshrl.u32 %v916, 7
        %v918 = vsub.s32 %v915, %v917
        %v919 = vrot.slane %v911, %v918
        %v921 = vunpack.c.l.s4 1966171168
        %v922 = vunpack.c.0.s8 %v921
        %v923 = vlaneseq
        %v924 = vshrl.u32 %v923, 7
        %v925 = vsub.s32 %v922, %v924
        %v926 = vrot.slane %v912, %v925
        %v927 = vcombine.high %v919, %v919
        %v928 = vcombine.high %v926, %v926
        %v930 = vunpack.c.l.s4 1966171168
        %v931 = vunpack.c.0.s8 %v930
        %v932 = vlaneseq
        %v933 = vshrl.u32 %v932, 7
        %v934 = vsub.s32 %v931, %v933
        %v935 = vrot.slane %v326, %v934
        %v936 = vcombine.high %v935, %v935
        %v938 = vunpack.c.l.s4 1966171168
        %v939 = vunpack.c.0.s8 %v938
        %v940 = vlaneseq
        %v941 = vshrl.u32 %v940, 7
        %v942 = vsub.s32 %v939, %v941
        %v943 = vrot.slane %v935, %v942
        %v945 = vunpack.c.l.s4 1966171168
        %v946 = vunpack.c.0.s8 %v945
        %v947 = vlaneseq
        %v948 = vshrl.u32 %v947, 7
        %v949 = vsub.s32 %v946, %v948
        %v950 = vrot.slane %v936, %v949
        %v951 = vcombine.high %v943, %v943
        %v952 = vcombine.high %v950, %v950
        %v954 = vunpack.c.l.s4 1966171168
        %v955 = vunpack.c.0.s8 %v954
        %v956 = vlaneseq
        %v957 = vshrl.u32 %v956, 7
        %v958 = vsub.s32 %v955, %v957
        %v959 = vrot.slane %v327, %v958
        %v961 = vunpack.c.l.s4 1966171168
        %v962 = vunpack.c.0.s8 %v961
        %v963 = vlaneseq
        %v964 = vshrl.u32 %v963, 7
        %v965 = vsub.s32 %v962, %v964
        %v966 = vrot.slane %v959, %v965
        %v968 = vunpack.c.l.s4 1966171168
        %v969 = vunpack.c.0.s8 %v968
        %v970 = vlaneseq
        %v971 = vshrl.u32 %v970, 7
        %v972 = vsub.s32 %v969, %v971
        %v973 = vrot.slane %v328, %v972
        %v974 = vcombine.high %v973, %v973
        %v976 = vunpack.c.l.s4 1966171168
        %v977 = vunpack.c.0.s8 %v976
        %v978 = vlaneseq
        %v979 = vshrl.u32 %v978, 7
        %v980 = vsub.s32 %v977, %v979
        %v981 = vrot.slane %v973, %v980
        %v983 = vunpack.c.l.s4 1966171168
        %v984 = vunpack.c.0.s8 %v983
        %v985 = vlaneseq
        %v986 = vshrl.u32 %v985, 7
        %v987 = vsub.s32 %v984, %v986
        %v988 = vrot.slane %v974, %v987
        %v989 = vcombine.high %v981, %v981
        %v990 = vcombine.high %v988, %v988
        %v992 = vunpack.c.l.s4 1966171168
        %v993 = vunpack.c.0.s8 %v992
        %v994 = vlaneseq
        %v995 = vshrl.u32 %v994, 7
        %v996 = vsub.s32 %v993, %v995
        %v997 = vrot.slane %v329, %v996
        %v998 = vcombine.high %v997, %v997
        %v1000 = vunpack.c.l.s4 1966171168
        %v1001 = vunpack.c.0.s8 %v1000
        %v1002 = vlaneseq
        %v1003 = vshrl.u32 %v1002, 7
        %v1004 = vsub.s32 %v1001, %v1003
        %v1005 = vrot.slane %v997, %v1004
        %v1007 = vunpack.c.l.s4 1966171168
        %v1008 = vunpack.c.0.s8 %v1007
        %v1009 = vlaneseq
        %v1010 = vshrl.u32 %v1009, 7
        %v1011 = vsub.s32 %v1008, %v1010
        %v1012 = vrot.slane %v998, %v1011
        %v1013 = vcombine.high %v1005, %v1005
        %v1014 = vcombine.high %v1012, %v1012
        %v1016 = vunpack.c.l.s4 1966171168
        %v1017 = vunpack.c.0.s8 %v1016
        %v1018 = vlaneseq
        %v1019 = vshrl.u32 %v1018, 7
        %v1020 = vsub.s32 %v1017, %v1019
        %v1021 = vrot.slane %v330, %v1020
        %v1023 = vunpack.c.l.s4 1966171168
        %v1024 = vunpack.c.0.s8 %v1023
        %v1025 = vlaneseq
        %v1026 = vshrl.u32 %v1025, 7
        %v1027 = vsub.s32 %v1024, %v1026
        %v1028 = vrot.slane %v1021, %v1027
        %v1030 = vunpack.c.l.s4 1966171168
        %v1031 = vunpack.c.0.s8 %v1030
        %v1032 = vlaneseq
        %v1033 = vshrl.u32 %v1032, 7
        %v1034 = vsub.s32 %v1031, %v1033
        %v1035 = vrot.slane %v331, %v1034
        %v1036 = vcombine.high %v1035, %v1035
        %v1038 = vunpack.c.l.s4 1966171168
        %v1039 = vunpack.c.0.s8 %v1038
        %v1040 = vlaneseq
        %v1041 = vshrl.u32 %v1040, 7
        %v1042 = vsub.s32 %v1039, %v1041
        %v1043 = vrot.slane %v1035, %v1042
        %v1045 = vunpack.c.l.s4 1966171168
        %v1046 = vunpack.c.0.s8 %v1045
        %v1047 = vlaneseq
        %v1048 = vshrl.u32 %v1047, 7
        %v1049 = vsub.s32 %v1046, %v1048
        %v1050 = vrot.slane %v1036, %v1049
        %v1051 = vcombine.high %v1043, %v1043
        %v1052 = vcombine.high %v1050, %v1050
        %v1054 = vunpack.c.l.s4 1966171168
        %v1055 = vunpack.c.0.s8 %v1054
        %v1056 = vlaneseq
        %v1057 = vshrl.u32 %v1056, 7
        %v1058 = vsub.s32 %v1055, %v1057
        %v1059 = vrot.slane %v332, %v1058
        %v1060 = vcombine.high %v1059, %v1059
        %v1062 = vunpack.c.l.s4 1966171168
        %v1063 = vunpack.c.0.s8 %v1062
        %v1064 = vlaneseq
        %v1065 = vshrl.u32 %v1064, 7
        %v1066 = vsub.s32 %v1063, %v1065
        %v1067 = vrot.slane %v1059, %v1066
        %v1069 = vunpack.c.l.s4 1966171168
        %v1070 = vunpack.c.0.s8 %v1069
        %v1071 = vlaneseq
        %v1072 = vshrl.u32 %v1071, 7
        %v1073 = vsub.s32 %v1070, %v1072
        %v1074 = vrot.slane %v1060, %v1073
        %v1075 = vcombine.high %v1067, %v1067
        %v1076 = vcombine.high %v1074, %v1074
        %v1078 = vunpack.c.l.s4 1966171168
        %v1079 = vunpack.c.0.s8 %v1078
        %v1080 = vlaneseq
        %v1081 = vshrl.u32 %v1080, 7
        %v1082 = vsub.s32 %v1079, %v1081
        %v1083 = vrot.slane %v333, %v1082
        %v1085 = vunpack.c.l.s4 1966171168
        %v1086 = vunpack.c.0.s8 %v1085
        %v1087 = vlaneseq
        %v1088 = vshrl.u32 %v1087, 7
        %v1089 = vsub.s32 %v1086, %v1088
        %v1090 = vrot.slane %v1083, %v1089
        %v1092 = vunpack.c.l.s4 1966171168
        %v1093 = vunpack.c.0.s8 %v1092
        %v1094 = vlaneseq
        %v1095 = vshrl.u32 %v1094, 7
        %v1096 = vsub.s32 %v1093, %v1095
        %v1097 = vrot.slane %v334, %v1096
        %v1098 = vcombine.high %v1097, %v1097
        %v1100 = vunpack.c.l.s4 1966171168
        %v1101 = vunpack.c.0.s8 %v1100
        %v1102 = vlaneseq
        %v1103 = vshrl.u32 %v1102, 7
        %v1104 = vsub.s32 %v1101, %v1103
        %v1105 = vrot.slane %v1097, %v1104
        %v1107 = vunpack.c.l.s4 1966171168
        %v1108 = vunpack.c.0.s8 %v1107
        %v1109 = vlaneseq
        %v1110 = vshrl.u32 %v1109, 7
        %v1111 = vsub.s32 %v1108, %v1110
        %v1112 = vrot.slane %v1098, %v1111
        %v1113 = vcombine.high %v1105, %v1105
        %v1114 = vcombine.high %v1112, %v1112
        %v1116 = vunpack.c.l.s4 1966171168
        %v1117 = vunpack.c.0.s8 %v1116
        %v1118 = vlaneseq
        %v1119 = vshrl.u32 %v1118, 7
        %v1120 = vsub.s32 %v1117, %v1119
        %v1121 = vrot.slane %v335, %v1120
        %v1122 = vcombine.high %v1121, %v1121
        %v1124 = vunpack.c.l.s4 1966171168
        %v1125 = vunpack.c.0.s8 %v1124
        %v1126 = vlaneseq
        %v1127 = vshrl.u32 %v1126, 7
        %v1128 = vsub.s32 %v1125, %v1127
        %v1129 = vrot.slane %v1121, %v1128
        %v1131 = vunpack.c.l.s4 1966171168
        %v1132 = vunpack.c.0.s8 %v1131
        %v1133 = vlaneseq
        %v1134 = vshrl.u32 %v1133, 7
        %v1135 = vsub.s32 %v1132, %v1134
        %v1136 = vrot.slane %v1122, %v1135
        %v1137 = vcombine.high %v1129, %v1129
        %v1138 = vcombine.high %v1136, %v1136
        %v1140 = vunpack.c.l.s4 1966171168
        %v1141 = vunpack.c.0.s8 %v1140
        %v1142 = vlaneseq
        %v1143 = vshrl.u32 %v1142, 7
        %v1144 = vsub.s32 %v1141, %v1143
        %v1145 = vrot.slane %v336, %v1144
        %v1147 = vunpack.c.l.s4 1966171168
        %v1148 = vunpack.c.0.s8 %v1147
        %v1149 = vlaneseq
        %v1150 = vshrl.u32 %v1149, 7
        %v1151 = vsub.s32 %v1148, %v1150
        %v1152 = vrot.slane %v1145, %v1151
        %v1154 = vunpack.c.l.s4 1966171168
        %v1155 = vunpack.c.0.s8 %v1154
        %v1156 = vlaneseq
        %v1157 = vshrl.u32 %v1156, 7
        %v1158 = vsub.s32 %v1155, %v1157
        %v1159 = vrot.slane %v337, %v1158
        %v1160 = vcombine.high %v1159, %v1159
        %v1162 = vunpack.c.l.s4 1966171168
        %v1163 = vunpack.c.0.s8 %v1162
        %v1164 = vlaneseq
        %v1165 = vshrl.u32 %v1164, 7
        %v1166 = vsub.s32 %v1163, %v1165
        %v1167 = vrot.slane %v1159, %v1166
        %v1169 = vunpack.c.l.s4 1966171168
        %v1170 = vunpack.c.0.s8 %v1169
        %v1171 = vlaneseq
        %v1172 = vshrl.u32 %v1171, 7
        %v1173 = vsub.s32 %v1170, %v1172
        %v1174 = vrot.slane %v1160, %v1173
        %v1175 = vcombine.high %v1167, %v1167
        %v1176 = vcombine.high %v1174, %v1174
        %v1178 = vunpack.c.l.s4 1966171168
        %v1179 = vunpack.c.0.s8 %v1178
        %v1180 = vlaneseq
        %v1181 = vshrl.u32 %v1180, 7
        %v1182 = vsub.s32 %v1179, %v1181
        %v1183 = vrot.slane %v338, %v1182
        %v1184 = vcombine.high %v1183, %v1183
        %v1186 = vunpack.c.l.s4 1966171168
        %v1187 = vunpack.c.0.s8 %v1186
        %v1188 = vlaneseq
        %v1189 = vshrl.u32 %v1188, 7
        %v1190 = vsub.s32 %v1187, %v1189
        %v1191 = vrot.slane %v1183, %v1190
        %v1193 = vunpack.c.l.s4 1966171168
        %v1194 = vunpack.c.0.s8 %v1193
        %v1195 = vlaneseq
        %v1196 = vshrl.u32 %v1195, 7
        %v1197 = vsub.s32 %v1194, %v1196
        %v1198 = vrot.slane %v1184, %v1197
        %v1199 = vcombine.high %v1191, %v1191
        %v1200 = vcombine.high %v1198, %v1198
        %v1202 = vunpack.c.l.s4 1966171168
        %v1203 = vunpack.c.0.s8 %v1202
        %v1204 = vlaneseq
        %v1205 = vshrl.u32 %v1204, 7
        %v1206 = vsub.s32 %v1203, %v1205
        %v1207 = vrot.slane %v339, %v1206
        %v1209 = vunpack.c.l.s4 1966171168
        %v1210 = vunpack.c.0.s8 %v1209
        %v1211 = vlaneseq
        %v1212 = vshrl.u32 %v1211, 7
        %v1213 = vsub.s32 %v1210, %v1212
        %v1214 = vrot.slane %v1207, %v1213
        %v1216 = vunpack.c.l.s4 1966171168
        %v1217 = vunpack.c.0.s8 %v1216
        %v1218 = vlaneseq
        %v1219 = vshrl.u32 %v1218, 7
        %v1220 = vsub.s32 %v1217, %v1219
        %v1221 = vrot.slane %v340, %v1220
        %v1222 = vcombine.high %v1221, %v1221
        %v1224 = vunpack.c.l.s4 1966171168
        %v1225 = vunpack.c.0.s8 %v1224
        %v1226 = vlaneseq
        %v1227 = vshrl.u32 %v1226, 7
        %v1228 = vsub.s32 %v1225, %v1227
        %v1229 = vrot.slane %v1221, %v1228
        %v1231 = vunpack.c.l.s4 1966171168
        %v1232 = vunpack.c.0.s8 %v1231
        %v1233 = vlaneseq
        %v1234 = vshrl.u32 %v1233, 7
        %v1235 = vsub.s32 %v1232, %v1234
        %v1236 = vrot.slane %v1222, %v1235
        %v1237 = vcombine.high %v1229, %v1229
        %v1238 = vcombine.high %v1236, %v1236
        %v1240 = vunpack.c.l.s4 1966171168
        %v1241 = vunpack.c.0.s8 %v1240
        %v1242 = vlaneseq
        %v1243 = vshrl.u32 %v1242, 7
        %v1244 = vsub.s32 %v1241, %v1243
        %v1245 = vrot.slane %v341, %v1244
        %v1246 = vcombine.high %v1245, %v1245
        %v1248 = vunpack.c.l.s4 1966171168
        %v1249 = vunpack.c.0.s8 %v1248
        %v1250 = vlaneseq
        %v1251 = vshrl.u32 %v1250, 7
        %v1252 = vsub.s32 %v1249, %v1251
        %v1253 = vrot.slane %v1245, %v1252
        %v1255 = vunpack.c.l.s4 1966171168
        %v1256 = vunpack.c.0.s8 %v1255
        %v1257 = vlaneseq
        %v1258 = vshrl.u32 %v1257, 7
        %v1259 = vsub.s32 %v1256, %v1258
        %v1260 = vrot.slane %v1246, %v1259
        %v1261 = vcombine.high %v1253, %v1253
        %v1262 = vcombine.high %v1260, %v1260
        %v1264 = vunpack.c.l.s4 1966171168
        %v1265 = vunpack.c.0.s8 %v1264
        %v1266 = vlaneseq
        %v1267 = vshrl.u32 %v1266, 7
        %v1268 = vsub.s32 %v1265, %v1267
        %v1269 = vrot.slane %v342, %v1268
        %v1271 = vunpack.c.l.s4 1966171168
        %v1272 = vunpack.c.0.s8 %v1271
        %v1273 = vlaneseq
        %v1274 = vshrl.u32 %v1273, 7
        %v1275 = vsub.s32 %v1272, %v1274
        %v1276 = vrot.slane %v1269, %v1275
        %v1278 = vunpack.c.l.s4 1966171168
        %v1279 = vunpack.c.0.s8 %v1278
        %v1280 = vlaneseq
        %v1281 = vshrl.u32 %v1280, 7
        %v1282 = vsub.s32 %v1279, %v1281
        %v1283 = vrot.slane %v343, %v1282
        %v1284 = vcombine.high %v1283, %v1283
        %v1286 = vunpack.c.l.s4 1966171168
        %v1287 = vunpack.c.0.s8 %v1286
        %v1288 = vlaneseq
        %v1289 = vshrl.u32 %v1288, 7
        %v1290 = vsub.s32 %v1287, %v1289
        %v1291 = vrot.slane %v1283, %v1290
        %v1293 = vunpack.c.l.s4 1966171168
        %v1294 = vunpack.c.0.s8 %v1293
        %v1295 = vlaneseq
        %v1296 = vshrl.u32 %v1295, 7
        %v1297 = vsub.s32 %v1294, %v1296
        %v1298 = vrot.slane %v1284, %v1297
        %v1299 = vcombine.high %v1291, %v1291
        %v1300 = vcombine.high %v1298, %v1298
        %v1302 = vunpack.c.l.s4 1966171168
        %v1303 = vunpack.c.0.s8 %v1302
        %v1304 = vlaneseq
        %v1305 = vshrl.u32 %v1304, 7
        %v1306 = vsub.s32 %v1303, %v1305
        %v1307 = vrot.slane %v344, %v1306
        %v1308 = vcombine.high %v1307, %v1307
        %v1310 = vunpack.c.l.s4 1966171168
        %v1311 = vunpack.c.0.s8 %v1310
        %v1312 = vlaneseq
        %v1313 = vshrl.u32 %v1312, 7
        %v1314 = vsub.s32 %v1311, %v1313
        %v1315 = vrot.slane %v1307, %v1314
        %v1317 = vunpack.c.l.s4 1966171168
        %v1318 = vunpack.c.0.s8 %v1317
        %v1319 = vlaneseq
        %v1320 = vshrl.u32 %v1319, 7
        %v1321 = vsub.s32 %v1318, %v1320
        %v1322 = vrot.slane %v1308, %v1321
        %v1323 = vcombine.high %v1315, %v1315
        %v1324 = vcombine.high %v1322, %v1322
        %v1326 = vunpack.c.l.s4 1966171168
        %v1327 = vunpack.c.0.s8 %v1326
        %v1328 = vlaneseq
        %v1329 = vshrl.u32 %v1328, 7
        %v1330 = vsub.s32 %v1327, %v1329
        %v1331 = vrot.slane %v345, %v1330
        %v1333 = vunpack.c.l.s4 1966171168
        %v1334 = vunpack.c.0.s8 %v1333
        %v1335 = vlaneseq
        %v1336 = vshrl.u32 %v1335, 7
        %v1337 = vsub.s32 %v1334, %v1336
        %v1338 = vrot.slane %v1331, %v1337
        %v1340 = vunpack.c.l.s4 1966171168
        %v1341 = vunpack.c.0.s8 %v1340
        %v1342 = vlaneseq
        %v1343 = vshrl.u32 %v1342, 7
        %v1344 = vsub.s32 %v1341, %v1343
        %v1345 = vrot.slane %v346, %v1344
        %v1346 = vcombine.high %v1345, %v1345
        %v1348 = vunpack.c.l.s4 1966171168
        %v1349 = vunpack.c.0.s8 %v1348
        %v1350 = vlaneseq
        %v1351 = vshrl.u32 %v1350, 7
        %v1352 = vsub.s32 %v1349, %v1351
        %v1353 = vrot.slane %v1345, %v1352
        %v1355 = vunpack.c.l.s4 1966171168
        %v1356 = vunpack.c.0.s8 %v1355
        %v1357 = vlaneseq
        %v1358 = vshrl.u32 %v1357, 7
        %v1359 = vsub.s32 %v1356, %v1358
        %v1360 = vrot.slane %v1346, %v1359
        %v1361 = vcombine.high %v1353, %v1353
        %v1362 = vcombine.high %v1360, %v1360
        %v1364 = vunpack.c.l.s4 1966171168
        %v1365 = vunpack.c.0.s8 %v1364
        %v1366 = vlaneseq
        %v1367 = vshrl.u32 %v1366, 7
        %v1368 = vsub.s32 %v1365, %v1367
        %v1369 = vrot.slane %v347, %v1368
        %v1370 = vcombine.high %v1369, %v1369
        %v1372 = vunpack.c.l.s4 1966171168
        %v1373 = vunpack.c.0.s8 %v1372
        %v1374 = vlaneseq
        %v1375 = vshrl.u32 %v1374, 7
        %v1376 = vsub.s32 %v1373, %v1375
        %v1377 = vrot.slane %v1369, %v1376
        %v1379 = vunpack.c.l.s4 1966171168
        %v1380 = vunpack.c.0.s8 %v1379
        %v1381 = vlaneseq
        %v1382 = vshrl.u32 %v1381, 7
        %v1383 = vsub.s32 %v1380, %v1382
        %v1384 = vrot.slane %v1370, %v1383
        %v1385 = vcombine.high %v1377, %v1377
        %v1386 = vcombine.high %v1384, %v1384
        %v1388 = vunpack.c.l.s4 1966171168
        %v1389 = vunpack.c.0.s8 %v1388
        %v1390 = vlaneseq
        %v1391 = vshrl.u32 %v1390, 7
        %v1392 = vsub.s32 %v1389, %v1391
        %v1393 = vrot.slane %v348, %v1392
        %v1395 = vunpack.c.l.s4 1966171168
        %v1396 = vunpack.c.0.s8 %v1395
        %v1397 = vlaneseq
        %v1398 = vshrl.u32 %v1397, 7
        %v1399 = vsub.s32 %v1396, %v1398
        %v1400 = vrot.slane %v1393, %v1399
        %v1402 = vunpack.c.l.s4 1966171168
        %v1403 = vunpack.c.0.s8 %v1402
        %v1404 = vlaneseq
        %v1405 = vshrl.u32 %v1404, 7
        %v1406 = vsub.s32 %v1403, %v1405
        %v1407 = vrot.slane %v349, %v1406
        %v1408 = vcombine.high %v1407, %v1407
        %v1410 = vunpack.c.l.s4 1966171168
        %v1411 = vunpack.c.0.s8 %v1410
        %v1412 = vlaneseq
        %v1413 = vshrl.u32 %v1412, 7
        %v1414 = vsub.s32 %v1411, %v1413
        %v1415 = vrot.slane %v1407, %v1414
        %v1417 = vunpack.c.l.s4 1966171168
        %v1418 = vunpack.c.0.s8 %v1417
        %v1419 = vlaneseq
        %v1420 = vshrl.u32 %v1419, 7
        %v1421 = vsub.s32 %v1418, %v1420
        %v1422 = vrot.slane %v1408, %v1421
        %v1423 = vcombine.high %v1415, %v1415
        %v1424 = vcombine.high %v1422, %v1422
        %v1426 = vunpack.c.l.s4 1966171168
        %v1427 = vunpack.c.0.s8 %v1426
        %v1428 = vlaneseq
        %v1429 = vshrl.u32 %v1428, 7
        %v1430 = vsub.s32 %v1427, %v1429
        %v1431 = vrot.slane %v350, %v1430
        %v1432 = vcombine.high %v1431, %v1431
        %v1434 = vunpack.c.l.s4 1966171168
        %v1435 = vunpack.c.0.s8 %v1434
        %v1436 = vlaneseq
        %v1437 = vshrl.u32 %v1436, 7
        %v1438 = vsub.s32 %v1435, %v1437
        %v1439 = vrot.slane %v1431, %v1438
        %v1441 = vunpack.c.l.s4 1966171168
        %v1442 = vunpack.c.0.s8 %v1441
        %v1443 = vlaneseq
        %v1444 = vshrl.u32 %v1443, 7
        %v1445 = vsub.s32 %v1442, %v1444
        %v1446 = vrot.slane %v1432, %v1445
        %v1447 = vcombine.high %v1439, %v1439
        %v1448 = vcombine.high %v1446, %v1446
        %v1450 = vunpack.c.l.s4 1966171168
        %v1451 = vunpack.c.0.s8 %v1450
        %v1452 = vlaneseq
        %v1453 = vshrl.u32 %v1452, 7
        %v1454 = vsub.s32 %v1451, %v1453
        %v1455 = vrot.slane %v351, %v1454
        %v1457 = vunpack.c.l.s4 1966171168
        %v1458 = vunpack.c.0.s8 %v1457
        %v1459 = vlaneseq
        %v1460 = vshrl.u32 %v1459, 7
        %v1461 = vsub.s32 %v1458, %v1460
        %v1462 = vrot.slane %v1455, %v1461
        %v1464 = vunpack.c.l.s4 1966171168
        %v1465 = vunpack.c.0.s8 %v1464
        %v1466 = vlaneseq
        %v1467 = vshrl.u32 %v1466, 7
        %v1468 = vsub.s32 %v1465, %v1467
        %v1469 = vrot.slane %v352, %v1468
        %v1470 = vcombine.high %v1469, %v1469
        %v1472 = vunpack.c.l.s4 1966171168
        %v1473 = vunpack.c.0.s8 %v1472
        %v1474 = vlaneseq
        %v1475 = vshrl.u32 %v1474, 7
        %v1476 = vsub.s32 %v1473, %v1475
        %v1477 = vrot.slane %v1469, %v1476
        %v1479 = vunpack.c.l.s4 1966171168
        %v1480 = vunpack.c.0.s8 %v1479
        %v1481 = vlaneseq
        %v1482 = vshrl.u32 %v1481, 7
        %v1483 = vsub.s32 %v1480, %v1482
        %v1484 = vrot.slane %v1470, %v1483
        %v1485 = vcombine.high %v1477, %v1477
        %v1486 = vcombine.high %v1484, %v1484
        %v1488 = vunpack.c.l.s4 1966171168
        %v1489 = vunpack.c.0.s8 %v1488
        %v1490 = vlaneseq
        %v1491 = vshrl.u32 %v1490, 7
        %v1492 = vsub.s32 %v1489, %v1491
        %v1493 = vrot.slane %v353, %v1492
        %v1494 = vcombine.high %v1493, %v1493
        %v1496 = vunpack.c.l.s4 1966171168
        %v1497 = vunpack.c.0.s8 %v1496
        %v1498 = vlaneseq
        %v1499 = vshrl.u32 %v1498, 7
        %v1500 = vsub.s32 %v1497, %v1499
        %v1501 = vrot.slane %v1493, %v1500
        %v1503 = vunpack.c.l.s4 1966171168
        %v1504 = vunpack.c.0.s8 %v1503
        %v1505 = vlaneseq
        %v1506 = vshrl.u32 %v1505, 7
        %v1507 = vsub.s32 %v1504, %v1506
        %v1508 = vrot.slane %v1494, %v1507
        %v1509 = vcombine.high %v1501, %v1501
        %v1510 = vcombine.high %v1508, %v1508
        %v1512 = vunpack.c.l.s4 1966171168
        %v1513 = vunpack.c.0.s8 %v1512
        %v1514 = vlaneseq
        %v1515 = vshrl.u32 %v1514, 7
        %v1516 = vsub.s32 %v1513, %v1515
        %v1517 = vrot.slane %v354, %v1516
        %v1519 = vunpack.c.l.s4 1966171168
        %v1520 = vunpack.c.0.s8 %v1519
        %v1521 = vlaneseq
        %v1522 = vshrl.u32 %v1521, 7
        %v1523 = vsub.s32 %v1520, %v1522
        %v1524 = vrot.slane %v1517, %v1523
        %v1525 = vld [vmem:[%s1] sm:$0xf]
        %v1526 = vld [vmem:[%s1 + $0x4] sm:$0xf]
        %v1527 = vld [vmem:[%s1 + $0x8] sm:$0xf]
        %v1528 = vld [vmem:[%s1 + $0xc] sm:$0xf]
        %v1529 = vld [vmem:[%s1 + $0x10] sm:$0xf]
        %v1530 = vld [vmem:[%s1 + $0x14] sm:$0xf]
        %v1531 = vld [vmem:[%s1 + $0x18] sm:$0xf]
        %v1532 = vld [vmem:[%s1 + $0x1c] sm:$0xf]
        %v1533 = vld [vmem:[%s1 + $0x20] sm:$0xf]
        %v1534 = vld [vmem:[%s1 + $0x24] sm:$0xf]
        %v1535 = vld [vmem:[%s1 + $0x28] sm:$0xf]
        %v1536 = vld [vmem:[%s1 + $0x2c] sm:$0xf]
        %v1537 = vld [vmem:[%s1 + $0x30] sm:$0xf]
        %v1538 = vld [vmem:[%s1 + $0x34] sm:$0xf]
        %v1539 = vld [vmem:[%s1 + $0x38] sm:$0xf]
        %v1540 = vld [vmem:[%s1 + $0x3c] sm:$0xf]
        %v1541 = vcombine.low %v423, %v430
        %v1542 = vcombine.low %v431, %v432
        %v1543 = vcombine.low %v447, %v454
        %v1544 = vcombine.low %v455, %v456
        %v1546 = vunpack.c.l.s4 1966171168
        %v1547 = vunpack.c.0.s8 %v1546
        %v1548 = vlaneseq
        %v1549 = vshrl.u32 %v1548, 7
        %v1550 = vsub.s32 %v1547, %v1549
        %v1551 = vrot.slane %v1541, %v1550
        %v1553 = vunpack.c.l.s4 1966171168
        %v1554 = vunpack.c.0.s8 %v1553
        %v1555 = vlaneseq
        %v1556 = vshrl.u32 %v1555, 7
        %v1557 = vsub.s32 %v1554, %v1556
        %v1558 = vrot.slane %v1542, %v1557
        %v1560 = vunpack.c.l.s4 1966171168
        %v1561 = vunpack.c.0.s8 %v1560
        %v1562 = vlaneseq
        %v1563 = vshrl.u32 %v1562, 7
        %v1564 = vsub.s32 %v1561, %v1563
        %v1565 = vrot.slane %v1543, %v1564
        %v1567 = vunpack.c.l.s4 1966171168
        %v1568 = vunpack.c.0.s8 %v1567
        %v1569 = vlaneseq
        %v1570 = vshrl.u32 %v1569, 7
        %v1571 = vsub.s32 %v1568, %v1570
        %v1572 = vrot.slane %v1544, %v1571
        %v1573 = vcombine.low %v1551, %v1558
        %v1574 = vcombine.low %v1565, %v1572
        %v1576 = vunpack.c.l.s4 1966171168
        %v1577 = vunpack.c.0.s8 %v1576
        %v1578 = vlaneseq
        %v1579 = vshrl.u32 %v1578, 7
        %v1580 = vsub.s32 %v1577, %v1579
        %v1581 = vrot.slane %v1573, %v1580
        %v1583 = vunpack.c.l.s4 1966171168
        %v1584 = vunpack.c.0.s8 %v1583
        %v1585 = vlaneseq
        %v1586 = vshrl.u32 %v1585, 7
        %v1587 = vsub.s32 %v1584, %v1586
        %v1588 = vrot.slane %v1574, %v1587
        %v1589 = vcombine.low %v1581, %v1588
        %v1590 = vcombine.low %v470, %v485
        %v1591 = vcombine.low %v492, %v493
        %v1592 = vcombine.low %v494, %v509
        %v1593 = vcombine.low %v516, %v517
        %v1595 = vunpack.c.l.s4 1966171168
        %v1596 = vunpack.c.0.s8 %v1595
        %v1597 = vlaneseq
        %v1598 = vshrl.u32 %v1597, 7
        %v1599 = vsub.s32 %v1596, %v1598
        %v1600 = vrot.slane %v1590, %v1599
        %v1602 = vunpack.c.l.s4 1966171168
        %v1603 = vunpack.c.0.s8 %v1602
        %v1604 = vlaneseq
        %v1605 = vshrl.u32 %v1604, 7
        %v1606 = vsub.s32 %v1603, %v1605
        %v1607 = vrot.slane %v1591, %v1606
        %v1609 = vunpack.c.l.s4 1966171168
        %v1610 = vunpack.c.0.s8 %v1609
        %v1611 = vlaneseq
        %v1612 = vshrl.u32 %v1611, 7
        %v1613 = vsub.s32 %v1610, %v1612
        %v1614 = vrot.slane %v1592, %v1613
        %v1616 = vunpack.c.l.s4 1966171168
        %v1617 = vunpack.c.0.s8 %v1616
        %v1618 = vlaneseq
        %v1619 = vshrl.u32 %v1618, 7
        %v1620 = vsub.s32 %v1617, %v1619
        %v1621 = vrot.slane %v1593, %v1620
        %v1622 = vcombine.low %v1600, %v1607
        %v1623 = vcombine.low %v1614, %v1621
        %v1625 = vunpack.c.l.s4 1966171168
        %v1626 = vunpack.c.0.s8 %v1625
        %v1627 = vlaneseq
        %v1628 = vshrl.u32 %v1627, 7
        %v1629 = vsub.s32 %v1626, %v1628
        %v1630 = vrot.slane %v1622, %v1629
        %v1632 = vunpack.c.l.s4 1966171168
        %v1633 = vunpack.c.0.s8 %v1632
        %v1634 = vlaneseq
        %v1635 = vshrl.u32 %v1634, 7
        %v1636 = vsub.s32 %v1633, %v1635
        %v1637 = vrot.slane %v1623, %v1636
        %v1638 = vcombine.low %v1630, %v1637
        %v1639 = vcombine.low %v518, %v532
        %v1640 = vcombine.low %v547, %v554
        %v1641 = vcombine.low %v555, %v556
        %v1642 = vcombine.low %v571, %v578
        %v1644 = vunpack.c.l.s4 1966171168
        %v1645 = vunpack.c.0.s8 %v1644
        %v1646 = vlaneseq
        %v1647 = vshrl.u32 %v1646, 7
        %v1648 = vsub.s32 %v1645, %v1647
        %v1649 = vrot.slane %v1639, %v1648
        %v1651 = vunpack.c.l.s4 1966171168
        %v1652 = vunpack.c.0.s8 %v1651
        %v1653 = vlaneseq
        %v1654 = vshrl.u32 %v1653, 7
        %v1655 = vsub.s32 %v1652, %v1654
        %v1656 = vrot.slane %v1640, %v1655
        %v1658 = vunpack.c.l.s4 1966171168
        %v1659 = vunpack.c.0.s8 %v1658
        %v1660 = vlaneseq
        %v1661 = vshrl.u32 %v1660, 7
        %v1662 = vsub.s32 %v1659, %v1661
        %v1663 = vrot.slane %v1641, %v1662
        %v1665 = vunpack.c.l.s4 1966171168
        %v1666 = vunpack.c.0.s8 %v1665
        %v1667 = vlaneseq
        %v1668 = vshrl.u32 %v1667, 7
        %v1669 = vsub.s32 %v1666, %v1668
        %v1670 = vrot.slane %v1642, %v1669
        %v1671 = vcombine.low %v1649, %v1656
        %v1672 = vcombine.low %v1663, %v1670
        %v1674 = vunpack.c.l.s4 1966171168
        %v1675 = vunpack.c.0.s8 %v1674
        %v1676 = vlaneseq
        %v1677 = vshrl.u32 %v1676, 7
        %v1678 = vsub.s32 %v1675, %v1677
        %v1679 = vrot.slane %v1671, %v1678
        %v1681 = vunpack.c.l.s4 1966171168
        %v1682 = vunpack.c.0.s8 %v1681
        %v1683 = vlaneseq
        %v1684 = vshrl.u32 %v1683, 7
        %v1685 = vsub.s32 %v1682, %v1684
        %v1686 = vrot.slane %v1672, %v1685
        %v1687 = vcombine.low %v1679, %v1686
        %v1688 = vcombine.low %v579, %v580
        %v1689 = vcombine.low %v594, %v609
        %v1690 = vcombine.low %v616, %v617
        %v1691 = vcombine.low %v618, %v633
        %v1693 = vunpack.c.l.s4 1966171168
        %v1694 = vunpack.c.0.s8 %v1693
        %v1695 = vlaneseq
        %v1696 = vshrl.u32 %v1695, 7
        %v1697 = vsub.s32 %v1694, %v1696
        %v1698 = vrot.slane %v1688, %v1697
        %v1700 = vunpack.c.l.s4 1966171168
        %v1701 = vunpack.c.0.s8 %v1700
        %v1702 = vlaneseq
        %v1703 = vshrl.u32 %v1702, 7
        %v1704 = vsub.s32 %v1701, %v1703
        %v1705 = vrot.slane %v1689, %v1704
        %v1707 = vunpack.c.l.s4 1966171168
        %v1708 = vunpack.c.0.s8 %v1707
        %v1709 = vlaneseq
        %v1710 = vshrl.u32 %v1709, 7
        %v1711 = vsub.s32 %v1708, %v1710
        %v1712 = vrot.slane %v1690, %v1711
        %v1714 = vunpack.c.l.s4 1966171168
        %v1715 = vunpack.c.0.s8 %v1714
        %v1716 = vlaneseq
        %v1717 = vshrl.u32 %v1716, 7
        %v1718 = vsub.s32 %v1715, %v1717
        %v1719 = vrot.slane %v1691, %v1718
        %v1720 = vcombine.low %v1698, %v1705
        %v1721 = vcombine.low %v1712, %v1719
        %v1723 = vunpack.c.l.s4 1966171168
        %v1724 = vunpack.c.0.s8 %v1723
        %v1725 = vlaneseq
        %v1726 = vshrl.u32 %v1725, 7
        %v1727 = vsub.s32 %v1724, %v1726
        %v1728 = vrot.slane %v1720, %v1727
        %v1730 = vunpack.c.l.s4 1966171168
        %v1731 = vunpack.c.0.s8 %v1730
        %v1732 = vlaneseq
        %v1733 = vshrl.u32 %v1732, 7
        %v1734 = vsub.s32 %v1731, %v1733
        %v1735 = vrot.slane %v1721, %v1734
        %v1736 = vcombine.low %v1728, %v1735
        %v1737 = vcombine.low %v640, %v641
        %v1738 = vcombine.low %v642, %v656
        %v1739 = vcombine.low %v671, %v678
        %v1740 = vcombine.low %v679, %v680
        %v1742 = vunpack.c.l.s4 1966171168
        %v1743 = vunpack.c.0.s8 %v1742
        %v1744 = vlaneseq
        %v1745 = vshrl.u32 %v1744, 7
        %v1746 = vsub.s32 %v1743, %v1745
        %v1747 = vrot.slane %v1737, %v1746
        %v1749 = vunpack.c.l.s4 1966171168
        %v1750 = vunpack.c.0.s8 %v1749
        %v1751 = vlaneseq
        %v1752 = vshrl.u32 %v1751, 7
        %v1753 = vsub.s32 %v1750, %v1752
        %v1754 = vrot.slane %v1738, %v1753
        %v1756 = vunpack.c.l.s4 1966171168
        %v1757 = vunpack.c.0.s8 %v1756
        %v1758 = vlaneseq
        %v1759 = vshrl.u32 %v1758, 7
        %v1760 = vsub.s32 %v1757, %v1759
        %v1761 = vrot.slane %v1739, %v1760
        %v1763 = vunpack.c.l.s4 1966171168
        %v1764 = vunpack.c.0.s8 %v1763
        %v1765 = vlaneseq
        %v1766 = vshrl.u32 %v1765, 7
        %v1767 = vsub.s32 %v1764, %v1766
        %v1768 = vrot.slane %v1740, %v1767
        %v1769 = vcombine.low %v1747, %v1754
        %v1770 = vcombine.low %v1761, %v1768
        %v1772 = vunpack.c.l.s4 1966171168
        %v1773 = vunpack.c.0.s8 %v1772
        %v1774 = vlaneseq
        %v1775 = vshrl.u32 %v1774, 7
        %v1776 = vsub.s32 %v1773, %v1775
        %v1777 = vrot.slane %v1769, %v1776
        %v1779 = vunpack.c.l.s4 1966171168
        %v1780 = vunpack.c.0.s8 %v1779
        %v1781 = vlaneseq
        %v1782 = vshrl.u32 %v1781, 7
        %v1783 = vsub.s32 %v1780, %v1782
        %v1784 = vrot.slane %v1770, %v1783
        %v1785 = vcombine.low %v1777, %v1784
        %v1786 = vcombine.low %v695, %v702
        %v1787 = vcombine.low %v703, %v704
        %v1788 = vcombine.low %v718, %v733
        %v1789 = vcombine.low %v740, %v741
        %v1791 = vunpack.c.l.s4 1966171168
        %v1792 = vunpack.c.0.s8 %v1791
        %v1793 = vlaneseq
        %v1794 = vshrl.u32 %v1793, 7
        %v1795 = vsub.s32 %v1792, %v1794
        %v1796 = vrot.slane %v1786, %v1795
        %v1798 = vunpack.c.l.s4 1966171168
        %v1799 = vunpack.c.0.s8 %v1798
        %v1800 = vlaneseq
        %v1801 = vshrl.u32 %v1800, 7
        %v1802 = vsub.s32 %v1799, %v1801
        %v1803 = vrot.slane %v1787, %v1802
        %v1805 = vunpack.c.l.s4 1966171168
        %v1806 = vunpack.c.0.s8 %v1805
        %v1807 = vlaneseq
        %v1808 = vshrl.u32 %v1807, 7
        %v1809 = vsub.s32 %v1806, %v1808
        %v1810 = vrot.slane %v1788, %v1809
        %v1812 = vunpack.c.l.s4 1966171168
        %v1813 = vunpack.c.0.s8 %v1812
        %v1814 = vlaneseq
        %v1815 = vshrl.u32 %v1814, 7
        %v1816 = vsub.s32 %v1813, %v1815
        %v1817 = vrot.slane %v1789, %v1816
        %v1818 = vcombine.low %v1796, %v1803
        %v1819 = vcombine.low %v1810, %v1817
        %v1821 = vunpack.c.l.s4 1966171168
        %v1822 = vunpack.c.0.s8 %v1821
        %v1823 = vlaneseq
        %v1824 = vshrl.u32 %v1823, 7
        %v1825 = vsub.s32 %v1822, %v1824
        %v1826 = vrot.slane %v1818, %v1825
        %v1828 = vunpack.c.l.s4 1966171168
        %v1829 = vunpack.c.0.s8 %v1828
        %v1830 = vlaneseq
        %v1831 = vshrl.u32 %v1830, 7
        %v1832 = vsub.s32 %v1829, %v1831
        %v1833 = vrot.slane %v1819, %v1832
        %v1834 = vcombine.low %v1826, %v1833
        %v1835 = vcombine.low %v742, %v757
        %v1836 = vcombine.low %v764, %v765
        %v1837 = vcombine.low %v766, %v780
        %v1838 = vcombine.low %v795, %v802
        %v1840 = vunpack.c.l.s4 1966171168
        %v1841 = vunpack.c.0.s8 %v1840
        %v1842 = vlaneseq
        %v1843 = vshrl.u32 %v1842, 7
        %v1844 = vsub.s32 %v1841, %v1843
        %v1845 = vrot.slane %v1835, %v1844
        %v1847 = vunpack.c.l.s4 1966171168
        %v1848 = vunpack.c.0.s8 %v1847
        %v1849 = vlaneseq
        %v1850 = vshrl.u32 %v1849, 7
        %v1851 = vsub.s32 %v1848, %v1850
        %v1852 = vrot.slane %v1836, %v1851
        %v1854 = vunpack.c.l.s4 1966171168
        %v1855 = vunpack.c.0.s8 %v1854
        %v1856 = vlaneseq
        %v1857 = vshrl.u32 %v1856, 7
        %v1858 = vsub.s32 %v1855, %v1857
        %v1859 = vrot.slane %v1837, %v1858
        %v1861 = vunpack.c.l.s4 1966171168
        %v1862 = vunpack.c.0.s8 %v1861
        %v1863 = vlaneseq
        %v1864 = vshrl.u32 %v1863, 7
        %v1865 = vsub.s32 %v1862, %v1864
        %v1866 = vrot.slane %v1838, %v1865
        %v1867 = vcombine.low %v1845, %v1852
        %v1868 = vcombine.low %v1859, %v1866
        %v1870 = vunpack.c.l.s4 1966171168
        %v1871 = vunpack.c.0.s8 %v1870
        %v1872 = vlaneseq
        %v1873 = vshrl.u32 %v1872, 7
        %v1874 = vsub.s32 %v1871, %v1873
        %v1875 = vrot.slane %v1867, %v1874
        %v1877 = vunpack.c.l.s4 1966171168
        %v1878 = vunpack.c.0.s8 %v1877
        %v1879 = vlaneseq
        %v1880 = vshrl.u32 %v1879, 7
        %v1881 = vsub.s32 %v1878, %v1880
        %v1882 = vrot.slane %v1868, %v1881
        %v1883 = vcombine.low %v1875, %v1882
        %v1884 = vcombine.low %v803, %v804
        %v1885 = vcombine.low %v819, %v826
        %v1886 = vcombine.low %v827, %v828
        %v1887 = vcombine.low %v842, %v857
        %v1889 = vunpack.c.l.s4 1966171168
        %v1890 = vunpack.c.0.s8 %v1889
        %v1891 = vlaneseq
        %v1892 = vshrl.u32 %v1891, 7
        %v1893 = vsub.s32 %v1890, %v1892
        %v1894 = vrot.slane %v1884, %v1893
        %v1896 = vunpack.c.l.s4 1966171168
        %v1897 = vunpack.c.0.s8 %v1896
        %v1898 = vlaneseq
        %v1899 = vshrl.u32 %v1898, 7
        %v1900 = vsub.s32 %v1897, %v1899
        %v1901 = vrot.slane %v1885, %v1900
        %v1903 = vunpack.c.l.s4 1966171168
        %v1904 = vunpack.c.0.s8 %v1903
        %v1905 = vlaneseq
        %v1906 = vshrl.u32 %v1905, 7
        %v1907 = vsub.s32 %v1904, %v1906
        %v1908 = vrot.slane %v1886, %v1907
        %v1910 = vunpack.c.l.s4 1966171168
        %v1911 = vunpack.c.0.s8 %v1910
        %v1912 = vlaneseq
        %v1913 = vshrl.u32 %v1912, 7
        %v1914 = vsub.s32 %v1911, %v1913
        %v1915 = vrot.slane %v1887, %v1914
        %v1916 = vcombine.low %v1894, %v1901
        %v1917 = vcombine.low %v1908, %v1915
        %v1919 = vunpack.c.l.s4 1966171168
        %v1920 = vunpack.c.0.s8 %v1919
        %v1921 = vlaneseq
        %v1922 = vshrl.u32 %v1921, 7
        %v1923 = vsub.s32 %v1920, %v1922
        %v1924 = vrot.slane %v1916, %v1923
        %v1926 = vunpack.c.l.s4 1966171168
        %v1927 = vunpack.c.0.s8 %v1926
        %v1928 = vlaneseq
        %v1929 = vshrl.u32 %v1928, 7
        %v1930 = vsub.s32 %v1927, %v1929
        %v1931 = vrot.slane %v1917, %v1930
        %v1932 = vcombine.low %v1924, %v1931
        %v1933 = vcombine.low %v864, %v865
        %v1934 = vcombine.low %v866, %v881
        %v1935 = vcombine.low %v888, %v889
        %v1936 = vcombine.low %v890, %v904
        %v1938 = vunpack.c.l.s4 1966171168
        %v1939 = vunpack.c.0.s8 %v1938
        %v1940 = vlaneseq
        %v1941 = vshrl.u32 %v1940, 7
        %v1942 = vsub.s32 %v1939, %v1941
        %v1943 = vrot.slane %v1933, %v1942
        %v1945 = vunpack.c.l.s4 1966171168
        %v1946 = vunpack.c.0.s8 %v1945
        %v1947 = vlaneseq
        %v1948 = vshrl.u32 %v1947, 7
        %v1949 = vsub.s32 %v1946, %v1948
        %v1950 = vrot.slane %v1934, %v1949
        %v1952 = vunpack.c.l.s4 1966171168
        %v1953 = vunpack.c.0.s8 %v1952
        %v1954 = vlaneseq
        %v1955 = vshrl.u32 %v1954, 7
        %v1956 = vsub.s32 %v1953, %v1955
        %v1957 = vrot.slane %v1935, %v1956
        %v1959 = vunpack.c.l.s4 1966171168
        %v1960 = vunpack.c.0.s8 %v1959
        %v1961 = vlaneseq
        %v1962 = vshrl.u32 %v1961, 7
        %v1963 = vsub.s32 %v1960, %v1962
        %v1964 = vrot.slane %v1936, %v1963
        %v1965 = vcombine.low %v1943, %v1950
        %v1966 = vcombine.low %v1957, %v1964
        %v1968 = vunpack.c.l.s4 1966171168
        %v1969 = vunpack.c.0.s8 %v1968
        %v1970 = vlaneseq
        %v1971 = vshrl.u32 %v1970, 7
        %v1972 = vsub.s32 %v1969, %v1971
        %v1973 = vrot.slane %v1965, %v1972
        %v1975 = vunpack.c.l.s4 1966171168
        %v1976 = vunpack.c.0.s8 %v1975
        %v1977 = vlaneseq
        %v1978 = vshrl.u32 %v1977, 7
        %v1979 = vsub.s32 %v1976, %v1978
        %v1980 = vrot.slane %v1966, %v1979
        %v1981 = vcombine.low %v1973, %v1980
        %v1982 = vcombine.low %v919, %v926
        %v1983 = vcombine.low %v927, %v928
        %v1984 = vcombine.low %v943, %v950
        %v1985 = vcombine.low %v951, %v952
        %v1987 = vunpack.c.l.s4 1966171168
        %v1988 = vunpack.c.0.s8 %v1987
        %v1989 = vlaneseq
        %v1990 = vshrl.u32 %v1989, 7
        %v1991 = vsub.s32 %v1988, %v1990
        %v1992 = vrot.slane %v1982, %v1991
        %v1994 = vunpack.c.l.s4 1966171168
        %v1995 = vunpack.c.0.s8 %v1994
        %v1996 = vlaneseq
        %v1997 = vshrl.u32 %v1996, 7
        %v1998 = vsub.s32 %v1995, %v1997
        %v1999 = vrot.slane %v1983, %v1998
        %v2001 = vunpack.c.l.s4 1966171168
        %v2002 = vunpack.c.0.s8 %v2001
        %v2003 = vlaneseq
        %v2004 = vshrl.u32 %v2003, 7
        %v2005 = vsub.s32 %v2002, %v2004
        %v2006 = vrot.slane %v1984, %v2005
        %v2008 = vunpack.c.l.s4 1966171168
        %v2009 = vunpack.c.0.s8 %v2008
        %v2010 = vlaneseq
        %v2011 = vshrl.u32 %v2010, 7
        %v2012 = vsub.s32 %v2009, %v2011
        %v2013 = vrot.slane %v1985, %v2012
        %v2014 = vcombine.low %v1992, %v1999
        %v2015 = vcombine.low %v2006, %v2013
        %v2017 = vunpack.c.l.s4 1966171168
        %v2018 = vunpack.c.0.s8 %v2017
        %v2019 = vlaneseq
        %v2020 = vshrl.u32 %v2019, 7
        %v2021 = vsub.s32 %v2018, %v2020
        %v2022 = vrot.slane %v2014, %v2021
        %v2024 = vunpack.c.l.s4 1966171168
        %v2025 = vunpack.c.0.s8 %v2024
        %v2026 = vlaneseq
        %v2027 = vshrl.u32 %v2026, 7
        %v2028 = vsub.s32 %v2025, %v2027
        %v2029 = vrot.slane %v2015, %v2028
        %v2030 = vcombine.low %v2022, %v2029
        %v2031 = vcombine.low %v966, %v981
        %v2032 = vcombine.low %v988, %v989
        %v2033 = vcombine.low %v990, %v1005
        %v2034 = vcombine.low %v1012, %v1013
        %v2036 = vunpack.c.l.s4 1966171168
        %v2037 = vunpack.c.0.s8 %v2036
        %v2038 = vlaneseq
        %v2039 = vshrl.u32 %v2038, 7
        %v2040 = vsub.s32 %v2037, %v2039
        %v2041 = vrot.slane %v2031, %v2040
        %v2043 = vunpack.c.l.s4 1966171168
        %v2044 = vunpack.c.0.s8 %v2043
        %v2045 = vlaneseq
        %v2046 = vshrl.u32 %v2045, 7
        %v2047 = vsub.s32 %v2044, %v2046
        %v2048 = vrot.slane %v2032, %v2047
        %v2050 = vunpack.c.l.s4 1966171168
        %v2051 = vunpack.c.0.s8 %v2050
        %v2052 = vlaneseq
        %v2053 = vshrl.u32 %v2052, 7
        %v2054 = vsub.s32 %v2051, %v2053
        %v2055 = vrot.slane %v2033, %v2054
        %v2057 = vunpack.c.l.s4 1966171168
        %v2058 = vunpack.c.0.s8 %v2057
        %v2059 = vlaneseq
        %v2060 = vshrl.u32 %v2059, 7
        %v2061 = vsub.s32 %v2058, %v2060
        %v2062 = vrot.slane %v2034, %v2061
        %v2063 = vcombine.low %v2041, %v2048
        %v2064 = vcombine.low %v2055, %v2062
        %v2066 = vunpack.c.l.s4 1966171168
        %v2067 = vunpack.c.0.s8 %v2066
        %v2068 = vlaneseq
        %v2069 = vshrl.u32 %v2068, 7
        %v2070 = vsub.s32 %v2067, %v2069
        %v2071 = vrot.slane %v2063, %v2070
        %v2073 = vunpack.c.l.s4 1966171168
        %v2074 = vunpack.c.0.s8 %v2073
        %v2075 = vlaneseq
        %v2076 = vshrl.u32 %v2075, 7
        %v2077 = vsub.s32 %v2074, %v2076
        %v2078 = vrot.slane %v2064, %v2077
        %v2079 = vcombine.low %v2071, %v2078
        %v2080 = vcombine.low %v1014, %v1028
        %v2081 = vcombine.low %v1043, %v1050
        %v2082 = vcombine.low %v1051, %v1052
        %v2083 = vcombine.low %v1067, %v1074
        %v2085 = vunpack.c.l.s4 1966171168
        %v2086 = vunpack.c.0.s8 %v2085
        %v2087 = vlaneseq
        %v2088 = vshrl.u32 %v2087, 7
        %v2089 = vsub.s32 %v2086, %v2088
        %v2090 = vrot.slane %v2080, %v2089
        %v2092 = vunpack.c.l.s4 1966171168
        %v2093 = vunpack.c.0.s8 %v2092
        %v2094 = vlaneseq
        %v2095 = vshrl.u32 %v2094, 7
        %v2096 = vsub.s32 %v2093, %v2095
        %v2097 = vrot.slane %v2081, %v2096
        %v2099 = vunpack.c.l.s4 1966171168
        %v2100 = vunpack.c.0.s8 %v2099
        %v2101 = vlaneseq
        %v2102 = vshrl.u32 %v2101, 7
        %v2103 = vsub.s32 %v2100, %v2102
        %v2104 = vrot.slane %v2082, %v2103
        %v2106 = vunpack.c.l.s4 1966171168
        %v2107 = vunpack.c.0.s8 %v2106
        %v2108 = vlaneseq
        %v2109 = vshrl.u32 %v2108, 7
        %v2110 = vsub.s32 %v2107, %v2109
        %v2111 = vrot.slane %v2083, %v2110
        %v2112 = vcombine.low %v2090, %v2097
        %v2113 = vcombine.low %v2104, %v2111
        %v2115 = vunpack.c.l.s4 1966171168
        %v2116 = vunpack.c.0.s8 %v2115
        %v2117 = vlaneseq
        %v2118 = vshrl.u32 %v2117, 7
        %v2119 = vsub.s32 %v2116, %v2118
        %v2120 = vrot.slane %v2112, %v2119
        %v2122 = vunpack.c.l.s4 1966171168
        %v2123 = vunpack.c.0.s8 %v2122
        %v2124 = vlaneseq
        %v2125 = vshrl.u32 %v2124, 7
        %v2126 = vsub.s32 %v2123, %v2125
        %v2127 = vrot.slane %v2113, %v2126
        %v2128 = vcombine.low %v2120, %v2127
        %v2129 = vcombine.low %v1075, %v1076
        %v2130 = vcombine.low %v1090, %v1105
        %v2131 = vcombine.low %v1112, %v1113
        %v2132 = vcombine.low %v1114, %v1129
        %v2134 = vunpack.c.l.s4 1966171168
        %v2135 = vunpack.c.0.s8 %v2134
        %v2136 = vlaneseq
        %v2137 = vshrl.u32 %v2136, 7
        %v2138 = vsub.s32 %v2135, %v2137
        %v2139 = vrot.slane %v2129, %v2138
        %v2141 = vunpack.c.l.s4 1966171168
        %v2142 = vunpack.c.0.s8 %v2141
        %v2143 = vlaneseq
        %v2144 = vshrl.u32 %v2143, 7
        %v2145 = vsub.s32 %v2142, %v2144
        %v2146 = vrot.slane %v2130, %v2145
        %v2148 = vunpack.c.l.s4 1966171168
        %v2149 = vunpack.c.0.s8 %v2148
        %v2150 = vlaneseq
        %v2151 = vshrl.u32 %v2150, 7
        %v2152 = vsub.s32 %v2149, %v2151
        %v2153 = vrot.slane %v2131, %v2152
        %v2155 = vunpack.c.l.s4 1966171168
        %v2156 = vunpack.c.0.s8 %v2155
        %v2157 = vlaneseq
        %v2158 = vshrl.u32 %v2157, 7
        %v2159 = vsub.s32 %v2156, %v2158
        %v2160 = vrot.slane %v2132, %v2159
        %v2161 = vcombine.low %v2139, %v2146
        %v2162 = vcombine.low %v2153, %v2160
        %v2164 = vunpack.c.l.s4 1966171168
        %v2165 = vunpack.c.0.s8 %v2164
        %v2166 = vlaneseq
        %v2167 = vshrl.u32 %v2166, 7
        %v2168 = vsub.s32 %v2165, %v2167
        %v2169 = vrot.slane %v2161, %v2168
        %v2171 = vunpack.c.l.s4 1966171168
        %v2172 = vunpack.c.0.s8 %v2171
        %v2173 = vlaneseq
        %v2174 = vshrl.u32 %v2173, 7
        %v2175 = vsub.s32 %v2172, %v2174
        %v2176 = vrot.slane %v2162, %v2175
        %v2177 = vcombine.low %v2169, %v2176
        %v2178 = vcombine.low %v1136, %v1137
        %v2179 = vcombine.low %v1138, %v1152
        %v2180 = vcombine.low %v1167, %v1174
        %v2181 = vcombine.low %v1175, %v1176
        %v2183 = vunpack.c.l.s4 1966171168
        %v2184 = vunpack.c.0.s8 %v2183
        %v2185 = vlaneseq
        %v2186 = vshrl.u32 %v2185, 7
        %v2187 = vsub.s32 %v2184, %v2186
        %v2188 = vrot.slane %v2178, %v2187
        %v2190 = vunpack.c.l.s4 1966171168
        %v2191 = vunpack.c.0.s8 %v2190
        %v2192 = vlaneseq
        %v2193 = vshrl.u32 %v2192, 7
        %v2194 = vsub.s32 %v2191, %v2193
        %v2195 = vrot.slane %v2179, %v2194
        %v2197 = vunpack.c.l.s4 1966171168
        %v2198 = vunpack.c.0.s8 %v2197
        %v2199 = vlaneseq
        %v2200 = vshrl.u32 %v2199, 7
        %v2201 = vsub.s32 %v2198, %v2200
        %v2202 = vrot.slane %v2180, %v2201
        %v2204 = vunpack.c.l.s4 1966171168
        %v2205 = vunpack.c.0.s8 %v2204
        %v2206 = vlaneseq
        %v2207 = vshrl.u32 %v2206, 7
        %v2208 = vsub.s32 %v2205, %v2207
        %v2209 = vrot.slane %v2181, %v2208
        %v2210 = vcombine.low %v2188, %v2195
        %v2211 = vcombine.low %v2202, %v2209
        %v2213 = vunpack.c.l.s4 1966171168
        %v2214 = vunpack.c.0.s8 %v2213
        %v2215 = vlaneseq
        %v2216 = vshrl.u32 %v2215, 7
        %v2217 = vsub.s32 %v2214, %v2216
        %v2218 = vrot.slane %v2210, %v2217
        %v2220 = vunpack.c.l.s4 1966171168
        %v2221 = vunpack.c.0.s8 %v2220
        %v2222 = vlaneseq
        %v2223 = vshrl.u32 %v2222, 7
        %v2224 = vsub.s32 %v2221, %v2223
        %v2225 = vrot.slane %v2211, %v2224
        %v2226 = vcombine.low %v2218, %v2225
        %v2227 = vcombine.low %v1191, %v1198
        %v2228 = vcombine.low %v1199, %v1200
        %v2229 = vcombine.low %v1214, %v1229
        %v2230 = vcombine.low %v1236, %v1237
        %v2232 = vunpack.c.l.s4 1966171168
        %v2233 = vunpack.c.0.s8 %v2232
        %v2234 = vlaneseq
        %v2235 = vshrl.u32 %v2234, 7
        %v2236 = vsub.s32 %v2233, %v2235
        %v2237 = vrot.slane %v2227, %v2236
        %v2239 = vunpack.c.l.s4 1966171168
        %v2240 = vunpack.c.0.s8 %v2239
        %v2241 = vlaneseq
        %v2242 = vshrl.u32 %v2241, 7
        %v2243 = vsub.s32 %v2240, %v2242
        %v2244 = vrot.slane %v2228, %v2243
        %v2246 = vunpack.c.l.s4 1966171168
        %v2247 = vunpack.c.0.s8 %v2246
        %v2248 = vlaneseq
        %v2249 = vshrl.u32 %v2248, 7
        %v2250 = vsub.s32 %v2247, %v2249
        %v2251 = vrot.slane %v2229, %v2250
        %v2253 = vunpack.c.l.s4 1966171168
        %v2254 = vunpack.c.0.s8 %v2253
        %v2255 = vlaneseq
        %v2256 = vshrl.u32 %v2255, 7
        %v2257 = vsub.s32 %v2254, %v2256
        %v2258 = vrot.slane %v2230, %v2257
        %v2259 = vcombine.low %v2237, %v2244
        %v2260 = vcombine.low %v2251, %v2258
        %v2262 = vunpack.c.l.s4 1966171168
        %v2263 = vunpack.c.0.s8 %v2262
        %v2264 = vlaneseq
        %v2265 = vshrl.u32 %v2264, 7
        %v2266 = vsub.s32 %v2263, %v2265
        %v2267 = vrot.slane %v2259, %v2266
        %v2269 = vunpack.c.l.s4 1966171168
        %v2270 = vunpack.c.0.s8 %v2269
        %v2271 = vlaneseq
        %v2272 = vshrl.u32 %v2271, 7
        %v2273 = vsub.s32 %v2270, %v2272
        %v2274 = vrot.slane %v2260, %v2273
        %v2275 = vcombine.low %v2267, %v2274
        %v2276 = vcombine.low %v1238, %v1253
        %v2277 = vcombine.low %v1260, %v1261
        %v2278 = vcombine.low %v1262, %v1276
        %v2279 = vcombine.low %v1291, %v1298
        %v2281 = vunpack.c.l.s4 1966171168
        %v2282 = vunpack.c.0.s8 %v2281
        %v2283 = vlaneseq
        %v2284 = vshrl.u32 %v2283, 7
        %v2285 = vsub.s32 %v2282, %v2284
        %v2286 = vrot.slane %v2276, %v2285
        %v2288 = vunpack.c.l.s4 1966171168
        %v2289 = vunpack.c.0.s8 %v2288
        %v2290 = vlaneseq
        %v2291 = vshrl.u32 %v2290, 7
        %v2292 = vsub.s32 %v2289, %v2291
        %v2293 = vrot.slane %v2277, %v2292
        %v2295 = vunpack.c.l.s4 1966171168
        %v2296 = vunpack.c.0.s8 %v2295
        %v2297 = vlaneseq
        %v2298 = vshrl.u32 %v2297, 7
        %v2299 = vsub.s32 %v2296, %v2298
        %v2300 = vrot.slane %v2278, %v2299
        %v2302 = vunpack.c.l.s4 1966171168
        %v2303 = vunpack.c.0.s8 %v2302
        %v2304 = vlaneseq
        %v2305 = vshrl.u32 %v2304, 7
        %v2306 = vsub.s32 %v2303, %v2305
        %v2307 = vrot.slane %v2279, %v2306
        %v2308 = vcombine.low %v2286, %v2293
        %v2309 = vcombine.low %v2300, %v2307
        %v2311 = vunpack.c.l.s4 1966171168
        %v2312 = vunpack.c.0.s8 %v2311
        %v2313 = vlaneseq
        %v2314 = vshrl.u32 %v2313, 7
        %v2315 = vsub.s32 %v2312, %v2314
        %v2316 = vrot.slane %v2308, %v2315
        %v2318 = vunpack.c.l.s4 1966171168
        %v2319 = vunpack.c.0.s8 %v2318
        %v2320 = vlaneseq
        %v2321 = vshrl.u32 %v2320, 7
        %v2322 = vsub.s32 %v2319, %v2321
        %v2323 = vrot.slane %v2309, %v2322
        %v2324 = vcombine.low %v2316, %v2323
        %v2325 = vcombine.low %v1299, %v1300
        %v2326 = vcombine.low %v1315, %v1322
        %v2327 = vcombine.low %v1323, %v1324
        %v2328 = vcombine.low %v1338, %v1353
        %v2330 = vunpack.c.l.s4 1966171168
        %v2331 = vunpack.c.0.s8 %v2330
        %v2332 = vlaneseq
        %v2333 = vshrl.u32 %v2332, 7
        %v2334 = vsub.s32 %v2331, %v2333
        %v2335 = vrot.slane %v2325, %v2334
        %v2337 = vunpack.c.l.s4 1966171168
        %v2338 = vunpack.c.0.s8 %v2337
        %v2339 = vlaneseq
        %v2340 = vshrl.u32 %v2339, 7
        %v2341 = vsub.s32 %v2338, %v2340
        %v2342 = vrot.slane %v2326, %v2341
        %v2344 = vunpack.c.l.s4 1966171168
        %v2345 = vunpack.c.0.s8 %v2344
        %v2346 = vlaneseq
        %v2347 = vshrl.u32 %v2346, 7
        %v2348 = vsub.s32 %v2345, %v2347
        %v2349 = vrot.slane %v2327, %v2348
        %v2351 = vunpack.c.l.s4 1966171168
        %v2352 = vunpack.c.0.s8 %v2351
        %v2353 = vlaneseq
        %v2354 = vshrl.u32 %v2353, 7
        %v2355 = vsub.s32 %v2352, %v2354
        %v2356 = vrot.slane %v2328, %v2355
        %v2357 = vcombine.low %v2335, %v2342
        %v2358 = vcombine.low %v2349, %v2356
        %v2360 = vunpack.c.l.s4 1966171168
        %v2361 = vunpack.c.0.s8 %v2360
        %v2362 = vlaneseq
        %v2363 = vshrl.u32 %v2362, 7
        %v2364 = vsub.s32 %v2361, %v2363
        %v2365 = vrot.slane %v2357, %v2364
        %v2367 = vunpack.c.l.s4 1966171168
        %v2368 = vunpack.c.0.s8 %v2367
        %v2369 = vlaneseq
        %v2370 = vshrl.u32 %v2369, 7
        %v2371 = vsub.s32 %v2368, %v2370
        %v2372 = vrot.slane %v2358, %v2371
        %v2373 = vcombine.low %v2365, %v2372
        %v2374 = vcombine.low %v1360, %v1361
        %v2375 = vcombine.low %v1362, %v1377
        %v2376 = vcombine.low %v1384, %v1385
        %v2377 = vcombine.low %v1386, %v1400
        %v2379 = vunpack.c.l.s4 1966171168
        %v2380 = vunpack.c.0.s8 %v2379
        %v2381 = vlaneseq
        %v2382 = vshrl.u32 %v2381, 7
        %v2383 = vsub.s32 %v2380, %v2382
        %v2384 = vrot.slane %v2374, %v2383
        %v2386 = vunpack.c.l.s4 1966171168
        %v2387 = vunpack.c.0.s8 %v2386
        %v2388 = vlaneseq
        %v2389 = vshrl.u32 %v2388, 7
        %v2390 = vsub.s32 %v2387, %v2389
        %v2391 = vrot.slane %v2375, %v2390
        %v2393 = vunpack.c.l.s4 1966171168
        %v2394 = vunpack.c.0.s8 %v2393
        %v2395 = vlaneseq
        %v2396 = vshrl.u32 %v2395, 7
        %v2397 = vsub.s32 %v2394, %v2396
        %v2398 = vrot.slane %v2376, %v2397
        %v2400 = vunpack.c.l.s4 1966171168
        %v2401 = vunpack.c.0.s8 %v2400
        %v2402 = vlaneseq
        %v2403 = vshrl.u32 %v2402, 7
        %v2404 = vsub.s32 %v2401, %v2403
        %v2405 = vrot.slane %v2377, %v2404
        %v2406 = vcombine.low %v2384, %v2391
        %v2407 = vcombine.low %v2398, %v2405
        %v2409 = vunpack.c.l.s4 1966171168
        %v2410 = vunpack.c.0.s8 %v2409
        %v2411 = vlaneseq
        %v2412 = vshrl.u32 %v2411, 7
        %v2413 = vsub.s32 %v2410, %v2412
        %v2414 = vrot.slane %v2406, %v2413
        %v2416 = vunpack.c.l.s4 1966171168
        %v2417 = vunpack.c.0.s8 %v2416
        %v2418 = vlaneseq
        %v2419 = vshrl.u32 %v2418, 7
        %v2420 = vsub.s32 %v2417, %v2419
        %v2421 = vrot.slane %v2407, %v2420
        %v2422 = vcombine.low %v2414, %v2421
        %v2423 = vcombine.low %v1415, %v1422
        %v2424 = vcombine.low %v1423, %v1424
        %v2425 = vcombine.low %v1439, %v1446
        %v2426 = vcombine.low %v1447, %v1448
        %v2428 = vunpack.c.l.s4 1966171168
        %v2429 = vunpack.c.0.s8 %v2428
        %v2430 = vlaneseq
        %v2431 = vshrl.u32 %v2430, 7
        %v2432 = vsub.s32 %v2429, %v2431
        %v2433 = vrot.slane %v2423, %v2432
        %v2435 = vunpack.c.l.s4 1966171168
        %v2436 = vunpack.c.0.s8 %v2435
        %v2437 = vlaneseq
        %v2438 = vshrl.u32 %v2437, 7
        %v2439 = vsub.s32 %v2436, %v2438
        %v2440 = vrot.slane %v2424, %v2439
        %v2442 = vunpack.c.l.s4 1966171168
        %v2443 = vunpack.c.0.s8 %v2442
        %v2444 = vlaneseq
        %v2445 = vshrl.u32 %v2444, 7
        %v2446 = vsub.s32 %v2443, %v2445
        %v2447 = vrot.slane %v2425, %v2446
        %v2449 = vunpack.c.l.s4 1966171168
        %v2450 = vunpack.c.0.s8 %v2449
        %v2451 = vlaneseq
        %v2452 = vshrl.u32 %v2451, 7
        %v2453 = vsub.s32 %v2450, %v2452
        %v2454 = vrot.slane %v2426, %v2453
        %v2455 = vcombine.low %v2433, %v2440
        %v2456 = vcombine.low %v2447, %v2454
        %v2458 = vunpack.c.l.s4 1966171168
        %v2459 = vunpack.c.0.s8 %v2458
        %v2460 = vlaneseq
        %v2461 = vshrl.u32 %v2460, 7
        %v2462 = vsub.s32 %v2459, %v2461
        %v2463 = vrot.slane %v2455, %v2462
        %v2465 = vunpack.c.l.s4 1966171168
        %v2466 = vunpack.c.0.s8 %v2465
        %v2467 = vlaneseq
        %v2468 = vshrl.u32 %v2467, 7
        %v2469 = vsub.s32 %v2466, %v2468
        %v2470 = vrot.slane %v2456, %v2469
        %v2471 = vcombine.low %v2463, %v2470
        %v2472 = vcombine.low %v1462, %v1477
        %v2473 = vcombine.low %v1484, %v1485
        %v2474 = vcombine.low %v1486, %v1501
        %v2475 = vcombine.low %v1508, %v1509
        %v2477 = vunpack.c.l.s4 1966171168
        %v2478 = vunpack.c.0.s8 %v2477
        %v2479 = vlaneseq
        %v2480 = vshrl.u32 %v2479, 7
        %v2481 = vsub.s32 %v2478, %v2480
        %v2482 = vrot.slane %v2472, %v2481
        %v2484 = vunpack.c.l.s4 1966171168
        %v2485 = vunpack.c.0.s8 %v2484
        %v2486 = vlaneseq
        %v2487 = vshrl.u32 %v2486, 7
        %v2488 = vsub.s32 %v2485, %v2487
        %v2489 = vrot.slane %v2473, %v2488
        %v2491 = vunpack.c.l.s4 1966171168
        %v2492 = vunpack.c.0.s8 %v2491
        %v2493 = vlaneseq
        %v2494 = vshrl.u32 %v2493, 7
        %v2495 = vsub.s32 %v2492, %v2494
        %v2496 = vrot.slane %v2474, %v2495
        %v2498 = vunpack.c.l.s4 1966171168
        %v2499 = vunpack.c.0.s8 %v2498
        %v2500 = vlaneseq
        %v2501 = vshrl.u32 %v2500, 7
        %v2502 = vsub.s32 %v2499, %v2501
        %v2503 = vrot.slane %v2475, %v2502
        %v2504 = vcombine.low %v2482, %v2489
        %v2505 = vcombine.low %v2496, %v2503
        %v2507 = vunpack.c.l.s4 1966171168
        %v2508 = vunpack.c.0.s8 %v2507
        %v2509 = vlaneseq
        %v2510 = vshrl.u32 %v2509, 7
        %v2511 = vsub.s32 %v2508, %v2510
        %v2512 = vrot.slane %v2504, %v2511
        %v2514 = vunpack.c.l.s4 1966171168
        %v2515 = vunpack.c.0.s8 %v2514
        %v2516 = vlaneseq
        %v2517 = vshrl.u32 %v2516, 7
        %v2518 = vsub.s32 %v2515, %v2517
        %v2519 = vrot.slane %v2505, %v2518
        %v2520 = vcombine.low %v2512, %v2519
        %v2521 = vcombine.low %v1510, %v1524
        %v2523 = vunpack.c.l.s4 1966171168
        %v2524 = vunpack.c.0.s8 %v2523
        %v2525 = vlaneseq
        %v2526 = vshrl.u32 %v2525, 7
        %v2527 = vsub.s32 %v2524, %v2526
        %v2528 = vrot.slane %v2521, %v2527
        %v2530 = vunpack.c.l.s4 1966171168
        %v2531 = vunpack.c.0.s8 %v2530
        %v2532 = vlaneseq
        %v2533 = vshrl.u32 %v2532, 7
        %v2534 = vsub.s32 %v2531, %v2533
        %v2535 = vrot.slane %v2528, %v2534
        %v2573 = vunpack.c.l.b16 %v1525
        %v2574 = vunpack.c.l.b16 %v1526
        %v2575 = vunpack.c.l.b16 %v1527
        %v2576 = vunpack.c.l.b16 %v1528
        %v2577 = vunpack.c.l.b16 %v1529
        %v2578 = vunpack.c.l.b16 %v1530
        %v2579 = vunpack.c.l.b16 %v1531
        %v2580 = vunpack.c.l.b16 %v1532
        %v2581 = vunpack.c.l.b16 %v1533
        %v2582 = vunpack.c.l.b16 %v1534
        %v2583 = vunpack.c.l.b16 %v1535
        %v2584 = vunpack.c.l.b16 %v1536
        %v2585 = vunpack.c.l.b16 %v1537
        %v2586 = vunpack.c.l.b16 %v1538
        %v2587 = vunpack.c.l.b16 %v1539
        %v2588 = vunpack.c.l.b16 %v1540
        %v2589 = vpack.c.b16 %v2574, %v2573
        %v2590 = vpack.c.b16 %v2576, %v2575
        %v2591 = vpack.c.b16 %v2578, %v2577
        %v2592 = vpack.c.b16 %v2580, %v2579
        %v2593 = vpack.c.b16 %v2582, %v2581
        %v2594 = vpack.c.b16 %v2584, %v2583
        %v2595 = vpack.c.b16 %v2586, %v2585
        %v2596 = vpack.c.b16 %v2588, %v2587
        %2605 = vmatprep.subr.bf16.mxu0 0
        %2606 = vmatpush1.bf16.msra.mxu0 %v2596
        %2607 = vmatprep.subr.bf16.mxu0 0
        %2608 = vmatpush1.bf16.msra.mxu0 %v2595
        %2609 = vmatprep.subr.bf16.mxu0 0
        %2610 = vmatpush1.bf16.msra.mxu0 %v2594
        %2611 = vmatprep.subr.bf16.mxu0 0
        %2612 = vmatpush1.bf16.msra.mxu0 %v2593
        %2613 = vmatprep.subr.bf16.mxu0 0
        %2614 = vmatpush1.bf16.msra.mxu0 %v2592
        %2615 = vmatprep.subr.bf16.mxu0 0
        %2616 = vmatpush1.bf16.msra.mxu0 %v2591
        %2617 = vmatprep.subr.bf16.mxu0 0
        %2618 = vmatpush1.bf16.msra.mxu0 %v2590
        %2619 = vmatprep.subr.bf16.mxu0 0
        %2620 = vmatpush1.bf16.msra.mxu0 %v2589
        %2621 = vmatprep.subr.bf16.mxu0 0
        %2622 = vmatpush2.bf16.msra.mxu0 0
        %2623 = vmatprep.subr.bf16.mxu0 0
        %2624 = vmatpush2.bf16.msra.mxu0 0
        %2625 = vmatprep.subr.bf16.mxu0 0
        %2626 = vmatpush2.bf16.msra.mxu0 0
        %2627 = vmatprep.subr.bf16.mxu0 0
        %2628 = vmatpush2.bf16.msra.mxu0 0
        %2629 = vmatprep.subr.bf16.mxu0 0
        %2630 = vmatpush2.bf16.msra.mxu0 0
        %2631 = vmatprep.subr.bf16.mxu0 0
        %2632 = vmatpush2.bf16.msra.mxu0 0
        %2633 = vmatprep.subr.bf16.mxu0 0
        %2634 = vmatpush2.bf16.msra.mxu0 0
        %2635 = vmatprep.subr.bf16.mxu0 0
        %2636 = vmatpush2.bf16.msra.mxu0 0
        %2637 = vmatprep.mubr.bf16.mxu0 0
        %2638 = vmatmul.mubr.bf16.gmra.mxu0 %v1589
        %v2639 = vpop.f32.mrf.mxu0
        %v2640 = vadd.f32 0.0, %v2639
        %v2641 = vpop.f32.mrf.mxu0
        %v2642 = vpop.f32.mrf.mxu0
        %v2643 = vadd.f32 0.0, %v2642
        %v2644 = vpop.f32.mrf.mxu0
        %2645 = vmatprep.mubr.bf16.mxu0 0
        %2646 = vmatmul.mubr.bf16.gmra.mxu0 %v1638
        %v2647 = vpop.f32.mrf.mxu0
        %v2648 = vadd.f32 0.0, %v2647
        %v2649 = vpop.f32.mrf.mxu0
        %v2650 = vpop.f32.mrf.mxu0
        %v2651 = vadd.f32 0.0, %v2650
        %v2652 = vpop.f32.mrf.mxu0
        %2653 = vmatprep.mubr.bf16.mxu0 0
        %2654 = vmatmul.mubr.bf16.gmra.mxu0 %v1687
        %v2655 = vpop.f32.mrf.mxu0
        %v2656 = vadd.f32 0.0, %v2655
        %v2657 = vpop.f32.mrf.mxu0
        %v2658 = vpop.f32.mrf.mxu0
        %v2659 = vadd.f32 0.0, %v2658
        %v2660 = vpop.f32.mrf.mxu0
        %2661 = vmatprep.mubr.bf16.mxu0 0
        %2662 = vmatmul.mubr.bf16.gmra.mxu0 %v1736
        %v2663 = vpop.f32.mrf.mxu0
        %v2664 = vadd.f32 0.0, %v2663
        %v2665 = vpop.f32.mrf.mxu0
        %v2666 = vpop.f32.mrf.mxu0
        %v2667 = vadd.f32 0.0, %v2666
        %v2668 = vpop.f32.mrf.mxu0
        %2669 = vmatprep.mubr.bf16.mxu0 0
        %2670 = vmatmul.mubr.bf16.gmra.mxu0 %v1785
        %v2671 = vpop.f32.mrf.mxu0
        %v2672 = vadd.f32 0.0, %v2671
        %v2673 = vpop.f32.mrf.mxu0
        %v2674 = vpop.f32.mrf.mxu0
        %v2675 = vadd.f32 0.0, %v2674
        %v2676 = vpop.f32.mrf.mxu0
        %2677 = vmatprep.mubr.bf16.mxu0 0
        %2678 = vmatmul.mubr.bf16.gmra.mxu0 %v1834
        %v2679 = vpop.f32.mrf.mxu0
        %v2680 = vadd.f32 0.0, %v2679
        %v2681 = vpop.f32.mrf.mxu0
        %v2682 = vpop.f32.mrf.mxu0
        %v2683 = vadd.f32 0.0, %v2682
        %v2684 = vpop.f32.mrf.mxu0
        %2685 = vmatprep.mubr.bf16.mxu0 0
        %2686 = vmatmul.mubr.bf16.gmra.mxu0 %v1883
        %v2687 = vpop.f32.mrf.mxu0
        %v2688 = vadd.f32 0.0, %v2687
        %v2689 = vpop.f32.mrf.mxu0
        %v2690 = vpop.f32.mrf.mxu0
        %v2691 = vadd.f32 0.0, %v2690
        %v2692 = vpop.f32.mrf.mxu0
        %2693 = vmatprep.mubr.bf16.mxu0 0
        %2694 = vmatmul.mubr.bf16.gmra.mxu0 %v1932
        %v2695 = vpop.f32.mrf.mxu0
        %v2696 = vadd.f32 0.0, %v2695
        %v2697 = vpop.f32.mrf.mxu0
        %v2698 = vpop.f32.mrf.mxu0
        %v2699 = vadd.f32 0.0, %v2698
        %v2700 = vpop.f32.mrf.mxu0
        %2701 = vmatprep.mubr.bf16.mxu0 0
        %2702 = vmatmul.mubr.bf16.gmra.mxu0 %v1981
        %v2703 = vpop.f32.mrf.mxu0
        %v2704 = vadd.f32 0.0, %v2703
        %v2705 = vpop.f32.mrf.mxu0
        %v2706 = vpop.f32.mrf.mxu0
        %v2707 = vadd.f32 0.0, %v2706
        %v2708 = vpop.f32.mrf.mxu0
        %2709 = vmatprep.mubr.bf16.mxu0 0
        %2710 = vmatmul.mubr.bf16.gmra.mxu0 %v2030
        %v2711 = vpop.f32.mrf.mxu0
        %v2712 = vadd.f32 0.0, %v2711
        %v2713 = vpop.f32.mrf.mxu0
        %v2714 = vpop.f32.mrf.mxu0
        %v2715 = vadd.f32 0.0, %v2714
        %v2716 = vpop.f32.mrf.mxu0
        %2717 = vmatprep.mubr.bf16.mxu0 0
        %2718 = vmatmul.mubr.bf16.gmra.mxu0 %v2079
        %v2719 = vpop.f32.mrf.mxu0
        %v2720 = vadd.f32 0.0, %v2719
        %v2721 = vpop.f32.mrf.mxu0
        %v2722 = vpop.f32.mrf.mxu0
        %v2723 = vadd.f32 0.0, %v2722
        %v2724 = vpop.f32.mrf.mxu0
        %2725 = vmatprep.mubr.bf16.mxu0 0
        %2726 = vmatmul.mubr.bf16.gmra.mxu0 %v2128
        %v2727 = vpop.f32.mrf.mxu0
        %v2728 = vadd.f32 0.0, %v2727
        %v2729 = vpop.f32.mrf.mxu0
        %v2730 = vpop.f32.mrf.mxu0
        %v2731 = vadd.f32 0.0, %v2730
        %v2732 = vpop.f32.mrf.mxu0
        %2733 = vmatprep.mubr.bf16.mxu0 0
        %2734 = vmatmul.mubr.bf16.gmra.mxu0 %v2177
        %v2735 = vpop.f32.mrf.mxu0
        %v2736 = vadd.f32 0.0, %v2735
        %v2737 = vpop.f32.mrf.mxu0
        %v2738 = vpop.f32.mrf.mxu0
        %v2739 = vadd.f32 0.0, %v2738
        %v2740 = vpop.f32.mrf.mxu0
        %2741 = vmatprep.mubr.bf16.mxu0 0
        %2742 = vmatmul.mubr.bf16.gmra.mxu0 %v2226
        %v2743 = vpop.f32.mrf.mxu0
        %v2744 = vadd.f32 0.0, %v2743
        %v2745 = vpop.f32.mrf.mxu0
        %v2746 = vpop.f32.mrf.mxu0
        %v2747 = vadd.f32 0.0, %v2746
        %v2748 = vpop.f32.mrf.mxu0
        %2749 = vmatprep.mubr.bf16.mxu0 0
        %2750 = vmatmul.mubr.bf16.gmra.mxu0 %v2275
        %v2751 = vpop.f32.mrf.mxu0
        %v2752 = vadd.f32 0.0, %v2751
        %v2753 = vpop.f32.mrf.mxu0
        %v2754 = vpop.f32.mrf.mxu0
        %v2755 = vadd.f32 0.0, %v2754
        %v2756 = vpop.f32.mrf.mxu0
        %2757 = vmatprep.mubr.bf16.mxu0 0
        %2758 = vmatmul.mubr.bf16.gmra.mxu0 %v2324
        %v2759 = vpop.f32.mrf.mxu0
        %v2760 = vadd.f32 0.0, %v2759
        %v2761 = vpop.f32.mrf.mxu0
        %v2762 = vpop.f32.mrf.mxu0
        %v2763 = vadd.f32 0.0, %v2762
        %v2764 = vpop.f32.mrf.mxu0
        %2765 = vmatprep.mubr.bf16.mxu0 0
        %2766 = vmatmul.mubr.bf16.gmra.mxu0 %v2373
        %v2767 = vpop.f32.mrf.mxu0
        %v2768 = vadd.f32 0.0, %v2767
        %v2769 = vpop.f32.mrf.mxu0
        %v2770 = vpop.f32.mrf.mxu0
        %v2771 = vadd.f32 0.0, %v2770
        %v2772 = vpop.f32.mrf.mxu0
        %2773 = vmatprep.mubr.bf16.mxu0 0
        %2774 = vmatmul.mubr.bf16.gmra.mxu0 %v2422
        %v2775 = vpop.f32.mrf.mxu0
        %v2776 = vadd.f32 0.0, %v2775
        %v2777 = vpop.f32.mrf.mxu0
        %v2778 = vpop.f32.mrf.mxu0
        %v2779 = vadd.f32 0.0, %v2778
        %v2780 = vpop.f32.mrf.mxu0
        %2781 = vmatprep.mubr.bf16.mxu0 0
        %2782 = vmatmul.mubr.bf16.gmra.mxu0 %v2471
        %v2783 = vpop.f32.mrf.mxu0
        %v2784 = vadd.f32 0.0, %v2783
        %v2785 = vpop.f32.mrf.mxu0
        %v2786 = vpop.f32.mrf.mxu0
        %v2787 = vadd.f32 0.0, %v2786
        %v2788 = vpop.f32.mrf.mxu0
        %2789 = vmatprep.mubr.bf16.mxu0 0
        %2790 = vmatmul.mubr.bf16.gmra.mxu0 %v2520
        %v2791 = vpop.f32.mrf.mxu0
        %v2792 = vadd.f32 0.0, %v2791
        %v2793 = vpop.f32.mrf.mxu0
        %v2794 = vpop.f32.mrf.mxu0
        %v2795 = vadd.f32 0.0, %v2794
        %v2796 = vpop.f32.mrf.mxu0
        %2797 = vmatprep.mubr.bf16.mxu0 0
        %2798 = vmatmul.mubr.bf16.gmra.mxu0 %v2535
        %v2799 = vpop.f32.mrf.mxu0
        %v2800 = vadd.f32 0.0, %v2799
        %v2801 = vpop.f32.mrf.mxu0
        %v2802 = vpop.f32.mrf.mxu0
        %v2803 = vpop.f32.mrf.mxu0
        %2804 = vdwg.mxu0
        %v2806 = vlaneseq
        %v2807 = vshrl.u32 %v2806, 7
        %v2808 = vsub.s32 0, %v2807
        %v2809 = vrot.slane %v293, %v2808
        %v2811 = vmul.f32 %v2640, %v2809
        %v2812 = vmul.f32 %v2643, %v2809
        %v2813 = vmul.f32 %v2648, %v2809
        %v2814 = vmul.f32 %v2651, %v2809
        %v2815 = vmul.f32 %v2656, %v2809
        %v2816 = vmul.f32 %v2659, %v2809
        %v2817 = vmul.f32 %v2664, %v2809
        %v2818 = vmul.f32 %v2667, %v2809
        %v2819 = vmul.f32 %v2672, %v2809
        %v2820 = vmul.f32 %v2675, %v2809
        %v2821 = vmul.f32 %v2680, %v2809
        %v2822 = vmul.f32 %v2683, %v2809
        %v2823 = vmul.f32 %v2688, %v2809
        %v2824 = vmul.f32 %v2691, %v2809
        %v2825 = vmul.f32 %v2696, %v2809
        %v2826 = vmul.f32 %v2699, %v2809
        %v2827 = vmul.f32 %v2704, %v2809
        %v2828 = vmul.f32 %v2707, %v2809
        %v2829 = vmul.f32 %v2712, %v2809
        %v2830 = vmul.f32 %v2715, %v2809
        %v2831 = vmul.f32 %v2720, %v2809
        %v2832 = vmul.f32 %v2723, %v2809
        %v2833 = vmul.f32 %v2728, %v2809
        %v2834 = vmul.f32 %v2731, %v2809
        %v2835 = vmul.f32 %v2736, %v2809
        %v2836 = vmul.f32 %v2739, %v2809
        %v2837 = vmul.f32 %v2744, %v2809
        %v2838 = vmul.f32 %v2747, %v2809
        %v2839 = vmul.f32 %v2752, %v2809
        %v2840 = vmul.f32 %v2755, %v2809
        %v2841 = vmul.f32 %v2760, %v2809
        %v2842 = vmul.f32 %v2763, %v2809
        %v2843 = vmul.f32 %v2768, %v2809
        %v2844 = vmul.f32 %v2771, %v2809
        %v2845 = vmul.f32 %v2776, %v2809
        %v2846 = vmul.f32 %v2779, %v2809
        %v2847 = vmul.f32 %v2784, %v2809
        %v2848 = vmul.f32 %v2787, %v2809
        %v2849 = vmul.f32 %v2792, %v2809
        %v2850 = vmul.f32 %v2795, %v2809
        %v2851 = vmul.f32 %v2800, %v2809
        %v2853 = vlaneseq
        %v2854 = vshrl.u32 %v2853, 7
        %v2855 = vsub.s32 0, %v2854
        %v2856 = vrot.slane %v294, %v2855
        %v2858 = vadd.f32 %v2811, %v2856
        %v2859 = vadd.f32 %v2812, %v2856
        %v2860 = vadd.f32 %v2813, %v2856
        %v2861 = vadd.f32 %v2814, %v2856
        %v2862 = vadd.f32 %v2815, %v2856
        %v2863 = vadd.f32 %v2816, %v2856
        %v2864 = vadd.f32 %v2817, %v2856
        %v2865 = vadd.f32 %v2818, %v2856
        %v2866 = vadd.f32 %v2819, %v2856
        %v2867 = vadd.f32 %v2820, %v2856
        %v2868 = vadd.f32 %v2821, %v2856
        %v2869 = vadd.f32 %v2822, %v2856
        %v2870 = vadd.f32 %v2823, %v2856
        %v2871 = vadd.f32 %v2824, %v2856
        %v2872 = vadd.f32 %v2825, %v2856
        %v2873 = vadd.f32 %v2826, %v2856
        %v2874 = vadd.f32 %v2827, %v2856
        %v2875 = vadd.f32 %v2828, %v2856
        %v2876 = vadd.f32 %v2829, %v2856
        %v2877 = vadd.f32 %v2830, %v2856
        %v2878 = vadd.f32 %v2831, %v2856
        %v2879 = vadd.f32 %v2832, %v2856
        %v2880 = vadd.f32 %v2833, %v2856
        %v2881 = vadd.f32 %v2834, %v2856
        %v2882 = vadd.f32 %v2835, %v2856
        %v2883 = vadd.f32 %v2836, %v2856
        %v2884 = vadd.f32 %v2837, %v2856
        %v2885 = vadd.f32 %v2838, %v2856
        %v2886 = vadd.f32 %v2839, %v2856
        %v2887 = vadd.f32 %v2840, %v2856
        %v2888 = vadd.f32 %v2841, %v2856
        %v2889 = vadd.f32 %v2842, %v2856
        %v2890 = vadd.f32 %v2843, %v2856
        %v2891 = vadd.f32 %v2844, %v2856
        %v2892 = vadd.f32 %v2845, %v2856
        %v2893 = vadd.f32 %v2846, %v2856
        %v2894 = vadd.f32 %v2847, %v2856
        %v2895 = vadd.f32 %v2848, %v2856
        %v2896 = vadd.f32 %v2849, %v2856
        %v2897 = vadd.f32 %v2850, %v2856
        %v2898 = vadd.f32 %v2851, %v2856
        %v2899 = vmax.f32 %v2858, 0.0
        %v2900 = vmax.f32 %v2859, 0.0
        %v2901 = vmax.f32 %v2860, 0.0
        %v2902 = vmax.f32 %v2861, 0.0
        %v2903 = vmax.f32 %v2862, 0.0
        %v2904 = vmax.f32 %v2863, 0.0
        %v2905 = vmax.f32 %v2864, 0.0
        %v2906 = vmax.f32 %v2865, 0.0
        %v2907 = vmax.f32 %v2866, 0.0
        %v2908 = vmax.f32 %v2867, 0.0
        %v2909 = vmax.f32 %v2868, 0.0
        %v2910 = vmax.f32 %v2869, 0.0
        %v2911 = vmax.f32 %v2870, 0.0
        %v2912 = vmax.f32 %v2871, 0.0
        %v2913 = vmax.f32 %v2872, 0.0
        %v2914 = vmax.f32 %v2873, 0.0
        %v2915 = vmax.f32 %v2874, 0.0
        %v2916 = vmax.f32 %v2875, 0.0
        %v2917 = vmax.f32 %v2876, 0.0
        %v2918 = vmax.f32 %v2877, 0.0
        %v2919 = vmax.f32 %v2878, 0.0
        %v2920 = vmax.f32 %v2879, 0.0
        %v2921 = vmax.f32 %v2880, 0.0
        %v2922 = vmax.f32 %v2881, 0.0
        %v2923 = vmax.f32 %v2882, 0.0
        %v2924 = vmax.f32 %v2883, 0.0
        %v2925 = vmax.f32 %v2884, 0.0
        %v2926 = vmax.f32 %v2885, 0.0
        %v2927 = vmax.f32 %v2886, 0.0
        %v2928 = vmax.f32 %v2887, 0.0
        %v2929 = vmax.f32 %v2888, 0.0
        %v2930 = vmax.f32 %v2889, 0.0
        %v2931 = vmax.f32 %v2890, 0.0
        %v2932 = vmax.f32 %v2891, 0.0
        %v2933 = vmax.f32 %v2892, 0.0
        %v2934 = vmax.f32 %v2893, 0.0
        %v2935 = vmax.f32 %v2894, 0.0
        %v2936 = vmax.f32 %v2895, 0.0
        %v2937 = vmax.f32 %v2896, 0.0
        %v2938 = vmax.f32 %v2897, 0.0
        %v2939 = vmax.f32 %v2898, 0.0
        %v2981 = vcombine.high %v2899, %v2899
        %v2983 = vunpack.c.l.s4 1983009808
        %v2984 = vunpack.c.0.s8 %v2983
        %v2985 = vlaneseq
        %v2986 = vshrl.u32 %v2985, 7
        %v2987 = vsub.s32 %v2984, %v2986
        %v2988 = vrot.slane %v2899, %v2987
        %v2990 = vunpack.c.l.s4 1983009808
        %v2991 = vunpack.c.0.s8 %v2990
        %v2992 = vlaneseq
        %v2993 = vshrl.u32 %v2992, 7
        %v2994 = vsub.s32 %v2991, %v2993
        %v2995 = vrot.slane %v2981, %v2994
        %v2996 = vcombine.high %v2988, %v2988
        %v2997 = vcombine.high %v2995, %v2995
        %v2998 = vcombine.high %v2900, %v2900
        %v3000 = vunpack.c.l.s4 1983009808
        %v3001 = vunpack.c.0.s8 %v3000
        %v3002 = vlaneseq
        %v3003 = vshrl.u32 %v3002, 7
        %v3004 = vsub.s32 %v3001, %v3003
        %v3005 = vrot.slane %v2900, %v3004
        %v3007 = vunpack.c.l.s4 1983009808
        %v3008 = vunpack.c.0.s8 %v3007
        %v3009 = vlaneseq
        %v3010 = vshrl.u32 %v3009, 7
        %v3011 = vsub.s32 %v3008, %v3010
        %v3012 = vrot.slane %v2998, %v3011
        %v3013 = vcombine.high %v3005, %v3005
        %v3014 = vcombine.high %v3012, %v3012
        %v3015 = vcombine.high %v2901, %v2901
        %v3017 = vunpack.c.l.s4 1983009808
        %v3018 = vunpack.c.0.s8 %v3017
        %v3019 = vlaneseq
        %v3020 = vshrl.u32 %v3019, 7
        %v3021 = vsub.s32 %v3018, %v3020
        %v3022 = vrot.slane %v2901, %v3021
        %v3024 = vunpack.c.l.s4 1983009808
        %v3025 = vunpack.c.0.s8 %v3024
        %v3026 = vlaneseq
        %v3027 = vshrl.u32 %v3026, 7
        %v3028 = vsub.s32 %v3025, %v3027
        %v3029 = vrot.slane %v3015, %v3028
        %v3030 = vcombine.high %v3022, %v3022
        %v3031 = vcombine.high %v3029, %v3029
        %v3032 = vcombine.high %v2902, %v2902
        %v3034 = vunpack.c.l.s4 1983009808
        %v3035 = vunpack.c.0.s8 %v3034
        %v3036 = vlaneseq
        %v3037 = vshrl.u32 %v3036, 7
        %v3038 = vsub.s32 %v3035, %v3037
        %v3039 = vrot.slane %v2902, %v3038
        %v3041 = vunpack.c.l.s4 1983009808
        %v3042 = vunpack.c.0.s8 %v3041
        %v3043 = vlaneseq
        %v3044 = vshrl.u32 %v3043, 7
        %v3045 = vsub.s32 %v3042, %v3044
        %v3046 = vrot.slane %v3032, %v3045
        %v3047 = vcombine.high %v3039, %v3039
        %v3048 = vcombine.high %v3046, %v3046
        %v3049 = vcombine.high %v2903, %v2903
        %v3051 = vunpack.c.l.s4 1983009808
        %v3052 = vunpack.c.0.s8 %v3051
        %v3053 = vlaneseq
        %v3054 = vshrl.u32 %v3053, 7
        %v3055 = vsub.s32 %v3052, %v3054
        %v3056 = vrot.slane %v2903, %v3055
        %v3058 = vunpack.c.l.s4 1983009808
        %v3059 = vunpack.c.0.s8 %v3058
        %v3060 = vlaneseq
        %v3061 = vshrl.u32 %v3060, 7
        %v3062 = vsub.s32 %v3059, %v3061
        %v3063 = vrot.slane %v3049, %v3062
        %v3064 = vcombine.high %v3056, %v3056
        %v3065 = vcombine.high %v3063, %v3063
        %v3066 = vcombine.high %v2904, %v2904
        %v3068 = vunpack.c.l.s4 1983009808
        %v3069 = vunpack.c.0.s8 %v3068
        %v3070 = vlaneseq
        %v3071 = vshrl.u32 %v3070, 7
        %v3072 = vsub.s32 %v3069, %v3071
        %v3073 = vrot.slane %v2904, %v3072
        %v3075 = vunpack.c.l.s4 1983009808
        %v3076 = vunpack.c.0.s8 %v3075
        %v3077 = vlaneseq
        %v3078 = vshrl.u32 %v3077, 7
        %v3079 = vsub.s32 %v3076, %v3078
        %v3080 = vrot.slane %v3066, %v3079
        %v3081 = vcombine.high %v3073, %v3073
        %v3082 = vcombine.high %v3080, %v3080
        %v3083 = vcombine.high %v2905, %v2905
        %v3085 = vunpack.c.l.s4 1983009808
        %v3086 = vunpack.c.0.s8 %v3085
        %v3087 = vlaneseq
        %v3088 = vshrl.u32 %v3087, 7
        %v3089 = vsub.s32 %v3086, %v3088
        %v3090 = vrot.slane %v2905, %v3089
        %v3092 = vunpack.c.l.s4 1983009808
        %v3093 = vunpack.c.0.s8 %v3092
        %v3094 = vlaneseq
        %v3095 = vshrl.u32 %v3094, 7
        %v3096 = vsub.s32 %v3093, %v3095
        %v3097 = vrot.slane %v3083, %v3096
        %v3098 = vcombine.high %v3090, %v3090
        %v3099 = vcombine.high %v3097, %v3097
        %v3100 = vcombine.high %v2906, %v2906
        %v3102 = vunpack.c.l.s4 1983009808
        %v3103 = vunpack.c.0.s8 %v3102
        %v3104 = vlaneseq
        %v3105 = vshrl.u32 %v3104, 7
        %v3106 = vsub.s32 %v3103, %v3105
        %v3107 = vrot.slane %v2906, %v3106
        %v3109 = vunpack.c.l.s4 1983009808
        %v3110 = vunpack.c.0.s8 %v3109
        %v3111 = vlaneseq
        %v3112 = vshrl.u32 %v3111, 7
        %v3113 = vsub.s32 %v3110, %v3112
        %v3114 = vrot.slane %v3100, %v3113
        %v3115 = vcombine.high %v3107, %v3107
        %v3116 = vcombine.high %v3114, %v3114
        %v3117 = vcombine.high %v2907, %v2907
        %v3119 = vunpack.c.l.s4 1983009808
        %v3120 = vunpack.c.0.s8 %v3119
        %v3121 = vlaneseq
        %v3122 = vshrl.u32 %v3121, 7
        %v3123 = vsub.s32 %v3120, %v3122
        %v3124 = vrot.slane %v2907, %v3123
        %v3126 = vunpack.c.l.s4 1983009808
        %v3127 = vunpack.c.0.s8 %v3126
        %v3128 = vlaneseq
        %v3129 = vshrl.u32 %v3128, 7
        %v3130 = vsub.s32 %v3127, %v3129
        %v3131 = vrot.slane %v3117, %v3130
        %v3132 = vcombine.high %v3124, %v3124
        %v3133 = vcombine.high %v3131, %v3131
        %v3134 = vcombine.high %v2908, %v2908
        %v3136 = vunpack.c.l.s4 1983009808
        %v3137 = vunpack.c.0.s8 %v3136
        %v3138 = vlaneseq
        %v3139 = vshrl.u32 %v3138, 7
        %v3140 = vsub.s32 %v3137, %v3139
        %v3141 = vrot.slane %v2908, %v3140
        %v3143 = vunpack.c.l.s4 1983009808
        %v3144 = vunpack.c.0.s8 %v3143
        %v3145 = vlaneseq
        %v3146 = vshrl.u32 %v3145, 7
        %v3147 = vsub.s32 %v3144, %v3146
        %v3148 = vrot.slane %v3134, %v3147
        %v3149 = vcombine.high %v3141, %v3141
        %v3150 = vcombine.high %v3148, %v3148
        %v3151 = vcombine.high %v2909, %v2909
        %v3153 = vunpack.c.l.s4 1983009808
        %v3154 = vunpack.c.0.s8 %v3153
        %v3155 = vlaneseq
        %v3156 = vshrl.u32 %v3155, 7
        %v3157 = vsub.s32 %v3154, %v3156
        %v3158 = vrot.slane %v2909, %v3157
        %v3160 = vunpack.c.l.s4 1983009808
        %v3161 = vunpack.c.0.s8 %v3160
        %v3162 = vlaneseq
        %v3163 = vshrl.u32 %v3162, 7
        %v3164 = vsub.s32 %v3161, %v3163
        %v3165 = vrot.slane %v3151, %v3164
        %v3166 = vcombine.high %v3158, %v3158
        %v3167 = vcombine.high %v3165, %v3165
        %v3168 = vcombine.high %v2910, %v2910
        %v3170 = vunpack.c.l.s4 1983009808
        %v3171 = vunpack.c.0.s8 %v3170
        %v3172 = vlaneseq
        %v3173 = vshrl.u32 %v3172, 7
        %v3174 = vsub.s32 %v3171, %v3173
        %v3175 = vrot.slane %v2910, %v3174
        %v3177 = vunpack.c.l.s4 1983009808
        %v3178 = vunpack.c.0.s8 %v3177
        %v3179 = vlaneseq
        %v3180 = vshrl.u32 %v3179, 7
        %v3181 = vsub.s32 %v3178, %v3180
        %v3182 = vrot.slane %v3168, %v3181
        %v3183 = vcombine.high %v3175, %v3175
        %v3184 = vcombine.high %v3182, %v3182
        %v3185 = vcombine.high %v2911, %v2911
        %v3187 = vunpack.c.l.s4 1983009808
        %v3188 = vunpack.c.0.s8 %v3187
        %v3189 = vlaneseq
        %v3190 = vshrl.u32 %v3189, 7
        %v3191 = vsub.s32 %v3188, %v3190
        %v3192 = vrot.slane %v2911, %v3191
        %v3194 = vunpack.c.l.s4 1983009808
        %v3195 = vunpack.c.0.s8 %v3194
        %v3196 = vlaneseq
        %v3197 = vshrl.u32 %v3196, 7
        %v3198 = vsub.s32 %v3195, %v3197
        %v3199 = vrot.slane %v3185, %v3198
        %v3200 = vcombine.high %v3192, %v3192
        %v3201 = vcombine.high %v3199, %v3199
        %v3202 = vcombine.high %v2912, %v2912
        %v3204 = vunpack.c.l.s4 1983009808
        %v3205 = vunpack.c.0.s8 %v3204
        %v3206 = vlaneseq
        %v3207 = vshrl.u32 %v3206, 7
        %v3208 = vsub.s32 %v3205, %v3207
        %v3209 = vrot.slane %v2912, %v3208
        %v3211 = vunpack.c.l.s4 1983009808
        %v3212 = vunpack.c.0.s8 %v3211
        %v3213 = vlaneseq
        %v3214 = vshrl.u32 %v3213, 7
        %v3215 = vsub.s32 %v3212, %v3214
        %v3216 = vrot.slane %v3202, %v3215
        %v3217 = vcombine.high %v3209, %v3209
        %v3218 = vcombine.high %v3216, %v3216
        %v3219 = vcombine.high %v2913, %v2913
        %v3221 = vunpack.c.l.s4 1983009808
        %v3222 = vunpack.c.0.s8 %v3221
        %v3223 = vlaneseq
        %v3224 = vshrl.u32 %v3223, 7
        %v3225 = vsub.s32 %v3222, %v3224
        %v3226 = vrot.slane %v2913, %v3225
        %v3228 = vunpack.c.l.s4 1983009808
        %v3229 = vunpack.c.0.s8 %v3228
        %v3230 = vlaneseq
        %v3231 = vshrl.u32 %v3230, 7
        %v3232 = vsub.s32 %v3229, %v3231
        %v3233 = vrot.slane %v3219, %v3232
        %v3234 = vcombine.high %v3226, %v3226
        %v3235 = vcombine.high %v3233, %v3233
        %v3236 = vcombine.high %v2914, %v2914
        %v3238 = vunpack.c.l.s4 1983009808
        %v3239 = vunpack.c.0.s8 %v3238
        %v3240 = vlaneseq
        %v3241 = vshrl.u32 %v3240, 7
        %v3242 = vsub.s32 %v3239, %v3241
        %v3243 = vrot.slane %v2914, %v3242
        %v3245 = vunpack.c.l.s4 1983009808
        %v3246 = vunpack.c.0.s8 %v3245
        %v3247 = vlaneseq
        %v3248 = vshrl.u32 %v3247, 7
        %v3249 = vsub.s32 %v3246, %v3248
        %v3250 = vrot.slane %v3236, %v3249
        %v3251 = vcombine.high %v3243, %v3243
        %v3252 = vcombine.high %v3250, %v3250
        %v3253 = vcombine.high %v2915, %v2915
        %v3255 = vunpack.c.l.s4 1983009808
        %v3256 = vunpack.c.0.s8 %v3255
        %v3257 = vlaneseq
        %v3258 = vshrl.u32 %v3257, 7
        %v3259 = vsub.s32 %v3256, %v3258
        %v3260 = vrot.slane %v2915, %v3259
        %v3262 = vunpack.c.l.s4 1983009808
        %v3263 = vunpack.c.0.s8 %v3262
        %v3264 = vlaneseq
        %v3265 = vshrl.u32 %v3264, 7
        %v3266 = vsub.s32 %v3263, %v3265
        %v3267 = vrot.slane %v3253, %v3266
        %v3268 = vcombine.high %v3260, %v3260
        %v3269 = vcombine.high %v3267, %v3267
        %v3270 = vcombine.high %v2916, %v2916
        %v3272 = vunpack.c.l.s4 1983009808
        %v3273 = vunpack.c.0.s8 %v3272
        %v3274 = vlaneseq
        %v3275 = vshrl.u32 %v3274, 7
        %v3276 = vsub.s32 %v3273, %v3275
        %v3277 = vrot.slane %v2916, %v3276
        %v3279 = vunpack.c.l.s4 1983009808
        %v3280 = vunpack.c.0.s8 %v3279
        %v3281 = vlaneseq
        %v3282 = vshrl.u32 %v3281, 7
        %v3283 = vsub.s32 %v3280, %v3282
        %v3284 = vrot.slane %v3270, %v3283
        %v3285 = vcombine.high %v3277, %v3277
        %v3286 = vcombine.high %v3284, %v3284
        %v3287 = vcombine.high %v2917, %v2917
        %v3289 = vunpack.c.l.s4 1983009808
        %v3290 = vunpack.c.0.s8 %v3289
        %v3291 = vlaneseq
        %v3292 = vshrl.u32 %v3291, 7
        %v3293 = vsub.s32 %v3290, %v3292
        %v3294 = vrot.slane %v2917, %v3293
        %v3296 = vunpack.c.l.s4 1983009808
        %v3297 = vunpack.c.0.s8 %v3296
        %v3298 = vlaneseq
        %v3299 = vshrl.u32 %v3298, 7
        %v3300 = vsub.s32 %v3297, %v3299
        %v3301 = vrot.slane %v3287, %v3300
        %v3302 = vcombine.high %v3294, %v3294
        %v3303 = vcombine.high %v3301, %v3301
        %v3304 = vcombine.high %v2918, %v2918
        %v3306 = vunpack.c.l.s4 1983009808
        %v3307 = vunpack.c.0.s8 %v3306
        %v3308 = vlaneseq
        %v3309 = vshrl.u32 %v3308, 7
        %v3310 = vsub.s32 %v3307, %v3309
        %v3311 = vrot.slane %v2918, %v3310
        %v3313 = vunpack.c.l.s4 1983009808
        %v3314 = vunpack.c.0.s8 %v3313
        %v3315 = vlaneseq
        %v3316 = vshrl.u32 %v3315, 7
        %v3317 = vsub.s32 %v3314, %v3316
        %v3318 = vrot.slane %v3304, %v3317
        %v3319 = vcombine.high %v3311, %v3311
        %v3320 = vcombine.high %v3318, %v3318
        %v3321 = vcombine.high %v2919, %v2919
        %v3323 = vunpack.c.l.s4 1983009808
        %v3324 = vunpack.c.0.s8 %v3323
        %v3325 = vlaneseq
        %v3326 = vshrl.u32 %v3325, 7
        %v3327 = vsub.s32 %v3324, %v3326
        %v3328 = vrot.slane %v2919, %v3327
        %v3330 = vunpack.c.l.s4 1983009808
        %v3331 = vunpack.c.0.s8 %v3330
        %v3332 = vlaneseq
        %v3333 = vshrl.u32 %v3332, 7
        %v3334 = vsub.s32 %v3331, %v3333
        %v3335 = vrot.slane %v3321, %v3334
        %v3336 = vcombine.high %v3328, %v3328
        %v3337 = vcombine.high %v3335, %v3335
        %v3338 = vcombine.high %v2920, %v2920
        %v3340 = vunpack.c.l.s4 1983009808
        %v3341 = vunpack.c.0.s8 %v3340
        %v3342 = vlaneseq
        %v3343 = vshrl.u32 %v3342, 7
        %v3344 = vsub.s32 %v3341, %v3343
        %v3345 = vrot.slane %v2920, %v3344
        %v3347 = vunpack.c.l.s4 1983009808
        %v3348 = vunpack.c.0.s8 %v3347
        %v3349 = vlaneseq
        %v3350 = vshrl.u32 %v3349, 7
        %v3351 = vsub.s32 %v3348, %v3350
        %v3352 = vrot.slane %v3338, %v3351
        %v3353 = vcombine.high %v3345, %v3345
        %v3354 = vcombine.high %v3352, %v3352
        %v3355 = vcombine.high %v2921, %v2921
        %v3357 = vunpack.c.l.s4 1983009808
        %v3358 = vunpack.c.0.s8 %v3357
        %v3359 = vlaneseq
        %v3360 = vshrl.u32 %v3359, 7
        %v3361 = vsub.s32 %v3358, %v3360
        %v3362 = vrot.slane %v2921, %v3361
        %v3364 = vunpack.c.l.s4 1983009808
        %v3365 = vunpack.c.0.s8 %v3364
        %v3366 = vlaneseq
        %v3367 = vshrl.u32 %v3366, 7
        %v3368 = vsub.s32 %v3365, %v3367
        %v3369 = vrot.slane %v3355, %v3368
        %v3370 = vcombine.high %v3362, %v3362
        %v3371 = vcombine.high %v3369, %v3369
        %v3372 = vcombine.high %v2922, %v2922
        %v3374 = vunpack.c.l.s4 1983009808
        %v3375 = vunpack.c.0.s8 %v3374
        %v3376 = vlaneseq
        %v3377 = vshrl.u32 %v3376, 7
        %v3378 = vsub.s32 %v3375, %v3377
        %v3379 = vrot.slane %v2922, %v3378
        %v3381 = vunpack.c.l.s4 1983009808
        %v3382 = vunpack.c.0.s8 %v3381
        %v3383 = vlaneseq
        %v3384 = vshrl.u32 %v3383, 7
        %v3385 = vsub.s32 %v3382, %v3384
        %v3386 = vrot.slane %v3372, %v3385
        %v3387 = vcombine.high %v3379, %v3379
        %v3388 = vcombine.high %v3386, %v3386
        %v3389 = vcombine.high %v2923, %v2923
        %v3391 = vunpack.c.l.s4 1983009808
        %v3392 = vunpack.c.0.s8 %v3391
        %v3393 = vlaneseq
        %v3394 = vshrl.u32 %v3393, 7
        %v3395 = vsub.s32 %v3392, %v3394
        %v3396 = vrot.slane %v2923, %v3395
        %v3398 = vunpack.c.l.s4 1983009808
        %v3399 = vunpack.c.0.s8 %v3398
        %v3400 = vlaneseq
        %v3401 = vshrl.u32 %v3400, 7
        %v3402 = vsub.s32 %v3399, %v3401
        %v3403 = vrot.slane %v3389, %v3402
        %v3404 = vcombine.high %v3396, %v3396
        %v3405 = vcombine.high %v3403, %v3403
        %v3406 = vcombine.high %v2924, %v2924
        %v3408 = vunpack.c.l.s4 1983009808
        %v3409 = vunpack.c.0.s8 %v3408
        %v3410 = vlaneseq
        %v3411 = vshrl.u32 %v3410, 7
        %v3412 = vsub.s32 %v3409, %v3411
        %v3413 = vrot.slane %v2924, %v3412
        %v3415 = vunpack.c.l.s4 1983009808
        %v3416 = vunpack.c.0.s8 %v3415
        %v3417 = vlaneseq
        %v3418 = vshrl.u32 %v3417, 7
        %v3419 = vsub.s32 %v3416, %v3418
        %v3420 = vrot.slane %v3406, %v3419
        %v3421 = vcombine.high %v3413, %v3413
        %v3422 = vcombine.high %v3420, %v3420
        %v3423 = vcombine.high %v2925, %v2925
        %v3425 = vunpack.c.l.s4 1983009808
        %v3426 = vunpack.c.0.s8 %v3425
        %v3427 = vlaneseq
        %v3428 = vshrl.u32 %v3427, 7
        %v3429 = vsub.s32 %v3426, %v3428
        %v3430 = vrot.slane %v2925, %v3429
        %v3432 = vunpack.c.l.s4 1983009808
        %v3433 = vunpack.c.0.s8 %v3432
        %v3434 = vlaneseq
        %v3435 = vshrl.u32 %v3434, 7
        %v3436 = vsub.s32 %v3433, %v3435
        %v3437 = vrot.slane %v3423, %v3436
        %v3438 = vcombine.high %v3430, %v3430
        %v3439 = vcombine.high %v3437, %v3437
        %v3440 = vcombine.high %v2926, %v2926
        %v3442 = vunpack.c.l.s4 1983009808
        %v3443 = vunpack.c.0.s8 %v3442
        %v3444 = vlaneseq
        %v3445 = vshrl.u32 %v3444, 7
        %v3446 = vsub.s32 %v3443, %v3445
        %v3447 = vrot.slane %v2926, %v3446
        %v3449 = vunpack.c.l.s4 1983009808
        %v3450 = vunpack.c.0.s8 %v3449
        %v3451 = vlaneseq
        %v3452 = vshrl.u32 %v3451, 7
        %v3453 = vsub.s32 %v3450, %v3452
        %v3454 = vrot.slane %v3440, %v3453
        %v3455 = vcombine.high %v3447, %v3447
        %v3456 = vcombine.high %v3454, %v3454
        %v3457 = vcombine.high %v2927, %v2927
        %v3459 = vunpack.c.l.s4 1983009808
        %v3460 = vunpack.c.0.s8 %v3459
        %v3461 = vlaneseq
        %v3462 = vshrl.u32 %v3461, 7
        %v3463 = vsub.s32 %v3460, %v3462
        %v3464 = vrot.slane %v2927, %v3463
        %v3466 = vunpack.c.l.s4 1983009808
        %v3467 = vunpack.c.0.s8 %v3466
        %v3468 = vlaneseq
        %v3469 = vshrl.u32 %v3468, 7
        %v3470 = vsub.s32 %v3467, %v3469
        %v3471 = vrot.slane %v3457, %v3470
        %v3472 = vcombine.high %v3464, %v3464
        %v3473 = vcombine.high %v3471, %v3471
        %v3474 = vcombine.high %v2928, %v2928
        %v3476 = vunpack.c.l.s4 1983009808
        %v3477 = vunpack.c.0.s8 %v3476
        %v3478 = vlaneseq
        %v3479 = vshrl.u32 %v3478, 7
        %v3480 = vsub.s32 %v3477, %v3479
        %v3481 = vrot.slane %v2928, %v3480
        %v3483 = vunpack.c.l.s4 1983009808
        %v3484 = vunpack.c.0.s8 %v3483
        %v3485 = vlaneseq
        %v3486 = vshrl.u32 %v3485, 7
        %v3487 = vsub.s32 %v3484, %v3486
        %v3488 = vrot.slane %v3474, %v3487
        %v3489 = vcombine.high %v3481, %v3481
        %v3490 = vcombine.high %v3488, %v3488
        %v3491 = vcombine.high %v2929, %v2929
        %v3493 = vunpack.c.l.s4 1983009808
        %v3494 = vunpack.c.0.s8 %v3493
        %v3495 = vlaneseq
        %v3496 = vshrl.u32 %v3495, 7
        %v3497 = vsub.s32 %v3494, %v3496
        %v3498 = vrot.slane %v2929, %v3497
        %v3500 = vunpack.c.l.s4 1983009808
        %v3501 = vunpack.c.0.s8 %v3500
        %v3502 = vlaneseq
        %v3503 = vshrl.u32 %v3502, 7
        %v3504 = vsub.s32 %v3501, %v3503
        %v3505 = vrot.slane %v3491, %v3504
        %v3506 = vcombine.high %v3498, %v3498
        %v3507 = vcombine.high %v3505, %v3505
        %v3508 = vcombine.high %v2930, %v2930
        %v3510 = vunpack.c.l.s4 1983009808
        %v3511 = vunpack.c.0.s8 %v3510
        %v3512 = vlaneseq
        %v3513 = vshrl.u32 %v3512, 7
        %v3514 = vsub.s32 %v3511, %v3513
        %v3515 = vrot.slane %v2930, %v3514
        %v3517 = vunpack.c.l.s4 1983009808
        %v3518 = vunpack.c.0.s8 %v3517
        %v3519 = vlaneseq
        %v3520 = vshrl.u32 %v3519, 7
        %v3521 = vsub.s32 %v3518, %v3520
        %v3522 = vrot.slane %v3508, %v3521
        %v3523 = vcombine.high %v3515, %v3515
        %v3524 = vcombine.high %v3522, %v3522
        %v3525 = vcombine.high %v2931, %v2931
        %v3527 = vunpack.c.l.s4 1983009808
        %v3528 = vunpack.c.0.s8 %v3527
        %v3529 = vlaneseq
        %v3530 = vshrl.u32 %v3529, 7
        %v3531 = vsub.s32 %v3528, %v3530
        %v3532 = vrot.slane %v2931, %v3531
        %v3534 = vunpack.c.l.s4 1983009808
        %v3535 = vunpack.c.0.s8 %v3534
        %v3536 = vlaneseq
        %v3537 = vshrl.u32 %v3536, 7
        %v3538 = vsub.s32 %v3535, %v3537
        %v3539 = vrot.slane %v3525, %v3538
        %v3540 = vcombine.high %v3532, %v3532
        %v3541 = vcombine.high %v3539, %v3539
        %v3542 = vcombine.high %v2932, %v2932
        %v3544 = vunpack.c.l.s4 1983009808
        %v3545 = vunpack.c.0.s8 %v3544
        %v3546 = vlaneseq
        %v3547 = vshrl.u32 %v3546, 7
        %v3548 = vsub.s32 %v3545, %v3547
        %v3549 = vrot.slane %v2932, %v3548
        %v3551 = vunpack.c.l.s4 1983009808
        %v3552 = vunpack.c.0.s8 %v3551
        %v3553 = vlaneseq
        %v3554 = vshrl.u32 %v3553, 7
        %v3555 = vsub.s32 %v3552, %v3554
        %v3556 = vrot.slane %v3542, %v3555
        %v3557 = vcombine.high %v3549, %v3549
        %v3558 = vcombine.high %v3556, %v3556
        %v3559 = vcombine.high %v2933, %v2933
        %v3561 = vunpack.c.l.s4 1983009808
        %v3562 = vunpack.c.0.s8 %v3561
        %v3563 = vlaneseq
        %v3564 = vshrl.u32 %v3563, 7
        %v3565 = vsub.s32 %v3562, %v3564
        %v3566 = vrot.slane %v2933, %v3565
        %v3568 = vunpack.c.l.s4 1983009808
        %v3569 = vunpack.c.0.s8 %v3568
        %v3570 = vlaneseq
        %v3571 = vshrl.u32 %v3570, 7
        %v3572 = vsub.s32 %v3569, %v3571
        %v3573 = vrot.slane %v3559, %v3572
        %v3574 = vcombine.high %v3566, %v3566
        %v3575 = vcombine.high %v3573, %v3573
        %v3576 = vcombine.high %v2934, %v2934
        %v3578 = vunpack.c.l.s4 1983009808
        %v3579 = vunpack.c.0.s8 %v3578
        %v3580 = vlaneseq
        %v3581 = vshrl.u32 %v3580, 7
        %v3582 = vsub.s32 %v3579, %v3581
        %v3583 = vrot.slane %v2934, %v3582
        %v3585 = vunpack.c.l.s4 1983009808
        %v3586 = vunpack.c.0.s8 %v3585
        %v3587 = vlaneseq
        %v3588 = vshrl.u32 %v3587, 7
        %v3589 = vsub.s32 %v3586, %v3588
        %v3590 = vrot.slane %v3576, %v3589
        %v3591 = vcombine.high %v3583, %v3583
        %v3592 = vcombine.high %v3590, %v3590
        %v3593 = vcombine.high %v2935, %v2935
        %v3595 = vunpack.c.l.s4 1983009808
        %v3596 = vunpack.c.0.s8 %v3595
        %v3597 = vlaneseq
        %v3598 = vshrl.u32 %v3597, 7
        %v3599 = vsub.s32 %v3596, %v3598
        %v3600 = vrot.slane %v2935, %v3599
        %v3602 = vunpack.c.l.s4 1983009808
        %v3603 = vunpack.c.0.s8 %v3602
        %v3604 = vlaneseq
        %v3605 = vshrl.u32 %v3604, 7
        %v3606 = vsub.s32 %v3603, %v3605
        %v3607 = vrot.slane %v3593, %v3606
        %v3608 = vcombine.high %v3600, %v3600
        %v3609 = vcombine.high %v3607, %v3607
        %v3610 = vcombine.high %v2936, %v2936
        %v3612 = vunpack.c.l.s4 1983009808
        %v3613 = vunpack.c.0.s8 %v3612
        %v3614 = vlaneseq
        %v3615 = vshrl.u32 %v3614, 7
        %v3616 = vsub.s32 %v3613, %v3615
        %v3617 = vrot.slane %v2936, %v3616
        %v3619 = vunpack.c.l.s4 1983009808
        %v3620 = vunpack.c.0.s8 %v3619
        %v3621 = vlaneseq
        %v3622 = vshrl.u32 %v3621, 7
        %v3623 = vsub.s32 %v3620, %v3622
        %v3624 = vrot.slane %v3610, %v3623
        %v3625 = vcombine.high %v3617, %v3617
        %v3626 = vcombine.high %v3624, %v3624
        %v3627 = vcombine.high %v2937, %v2937
        %v3629 = vunpack.c.l.s4 1983009808
        %v3630 = vunpack.c.0.s8 %v3629
        %v3631 = vlaneseq
        %v3632 = vshrl.u32 %v3631, 7
        %v3633 = vsub.s32 %v3630, %v3632
        %v3634 = vrot.slane %v2937, %v3633
        %v3636 = vunpack.c.l.s4 1983009808
        %v3637 = vunpack.c.0.s8 %v3636
        %v3638 = vlaneseq
        %v3639 = vshrl.u32 %v3638, 7
        %v3640 = vsub.s32 %v3637, %v3639
        %v3641 = vrot.slane %v3627, %v3640
        %v3642 = vcombine.high %v3634, %v3634
        %v3643 = vcombine.high %v3641, %v3641
        %v3644 = vcombine.high %v2938, %v2938
        %v3646 = vunpack.c.l.s4 1983009808
        %v3647 = vunpack.c.0.s8 %v3646
        %v3648 = vlaneseq
        %v3649 = vshrl.u32 %v3648, 7
        %v3650 = vsub.s32 %v3647, %v3649
        %v3651 = vrot.slane %v2938, %v3650
        %v3653 = vunpack.c.l.s4 1983009808
        %v3654 = vunpack.c.0.s8 %v3653
        %v3655 = vlaneseq
        %v3656 = vshrl.u32 %v3655, 7
        %v3657 = vsub.s32 %v3654, %v3656
        %v3658 = vrot.slane %v3644, %v3657
        %v3659 = vcombine.high %v3651, %v3651
        %v3660 = vcombine.high %v3658, %v3658
        %v3662 = vunpack.c.l.s4 1983009808
        %v3663 = vunpack.c.0.s8 %v3662
        %v3664 = vlaneseq
        %v3665 = vshrl.u32 %v3664, 7
        %v3666 = vsub.s32 %v3663, %v3665
        %v3667 = vrot.slane %v2939, %v3666
        %v3668 = vcombine.high %v3667, %v3667
        %v3669 = vcombine.low %v2988, %v2996
        %v3670 = vcombine.low %v2995, %v2997
        %v3672 = vunpack.c.l.s4 1983009808
        %v3673 = vunpack.c.0.s8 %v3672
        %v3674 = vlaneseq
        %v3675 = vshrl.u32 %v3674, 7
        %v3676 = vsub.s32 %v3673, %v3675
        %v3677 = vrot.slane %v3669, %v3676
        %v3679 = vunpack.c.l.s4 1983009808
        %v3680 = vunpack.c.0.s8 %v3679
        %v3681 = vlaneseq
        %v3682 = vshrl.u32 %v3681, 7
        %v3683 = vsub.s32 %v3680, %v3682
        %v3684 = vrot.slane %v3670, %v3683
        %v3685 = vcombine.low %v3677, %v3684
        %v3686 = vcombine.low %v3005, %v3013
        %v3687 = vcombine.low %v3012, %v3014
        %v3689 = vunpack.c.l.s4 1983009808
        %v3690 = vunpack.c.0.s8 %v3689
        %v3691 = vlaneseq
        %v3692 = vshrl.u32 %v3691, 7
        %v3693 = vsub.s32 %v3690, %v3692
        %v3694 = vrot.slane %v3686, %v3693
        %v3696 = vunpack.c.l.s4 1983009808
        %v3697 = vunpack.c.0.s8 %v3696
        %v3698 = vlaneseq
        %v3699 = vshrl.u32 %v3698, 7
        %v3700 = vsub.s32 %v3697, %v3699
        %v3701 = vrot.slane %v3687, %v3700
        %v3702 = vcombine.low %v3694, %v3701
        %v3704 = vunpack.c.l.s4 1983009808
        %v3705 = vunpack.c.0.s8 %v3704
        %v3706 = vlaneseq
        %v3707 = vshrl.u32 %v3706, 7
        %v3708 = vsub.s32 %v3705, %v3707
        %v3709 = vrot.slane %v3022, %v3708
        %v3710 = vcombine.low %v3030, %v3029
        %v3711 = vcombine.low %v3031, %v3039
        %v3713 = vunpack.c.l.s4 1983009808
        %v3714 = vunpack.c.0.s8 %v3713
        %v3715 = vlaneseq
        %v3716 = vshrl.u32 %v3715, 7
        %v3717 = vsub.s32 %v3714, %v3716
        %v3718 = vrot.slane %v3710, %v3717
        %v3720 = vunpack.c.l.s4 1983009808
        %v3721 = vunpack.c.0.s8 %v3720
        %v3722 = vlaneseq
        %v3723 = vshrl.u32 %v3722, 7
        %v3724 = vsub.s32 %v3721, %v3723
        %v3725 = vrot.slane %v3711, %v3724
        %v3726 = vcombine.low %v3718, %v3725
        %v3727 = vcombine.low %v3047, %v3046
        %v3728 = vcombine.low %v3048, %v3056
        %v3730 = vunpack.c.l.s4 1983009808
        %v3731 = vunpack.c.0.s8 %v3730
        %v3732 = vlaneseq
        %v3733 = vshrl.u32 %v3732, 7
        %v3734 = vsub.s32 %v3731, %v3733
        %v3735 = vrot.slane %v3727, %v3734
        %v3737 = vunpack.c.l.s4 1983009808
        %v3738 = vunpack.c.0.s8 %v3737
        %v3739 = vlaneseq
        %v3740 = vshrl.u32 %v3739, 7
        %v3741 = vsub.s32 %v3738, %v3740
        %v3742 = vrot.slane %v3728, %v3741
        %v3743 = vcombine.low %v3735, %v3742
        %v3745 = vunpack.c.l.s4 1983009808
        %v3746 = vunpack.c.0.s8 %v3745
        %v3747 = vlaneseq
        %v3748 = vshrl.u32 %v3747, 7
        %v3749 = vsub.s32 %v3746, %v3748
        %v3750 = vrot.slane %v3064, %v3749
        %v3751 = vcombine.low %v3063, %v3065
        %v3752 = vcombine.low %v3073, %v3081
        %v3754 = vunpack.c.l.s4 1983009808
        %v3755 = vunpack.c.0.s8 %v3754
        %v3756 = vlaneseq
        %v3757 = vshrl.u32 %v3756, 7
        %v3758 = vsub.s32 %v3755, %v3757
        %v3759 = vrot.slane %v3751, %v3758
        %v3761 = vunpack.c.l.s4 1983009808
        %v3762 = vunpack.c.0.s8 %v3761
        %v3763 = vlaneseq
        %v3764 = vshrl.u32 %v3763, 7
        %v3765 = vsub.s32 %v3762, %v3764
        %v3766 = vrot.slane %v3752, %v3765
        %v3767 = vcombine.low %v3759, %v3766
        %v3768 = vcombine.low %v3080, %v3082
        %v3769 = vcombine.low %v3090, %v3098
        %v3771 = vunpack.c.l.s4 1983009808
        %v3772 = vunpack.c.0.s8 %v3771
        %v3773 = vlaneseq
        %v3774 = vshrl.u32 %v3773, 7
        %v3775 = vsub.s32 %v3772, %v3774
        %v3776 = vrot.slane %v3768, %v3775
        %v3778 = vunpack.c.l.s4 1983009808
        %v3779 = vunpack.c.0.s8 %v3778
        %v3780 = vlaneseq
        %v3781 = vshrl.u32 %v3780, 7
        %v3782 = vsub.s32 %v3779, %v3781
        %v3783 = vrot.slane %v3769, %v3782
        %v3784 = vcombine.low %v3776, %v3783
        %v3786 = vunpack.c.l.s4 1983009808
        %v3787 = vunpack.c.0.s8 %v3786
        %v3788 = vlaneseq
        %v3789 = vshrl.u32 %v3788, 7
        %v3790 = vsub.s32 %v3787, %v3789
        %v3791 = vrot.slane %v3097, %v3790
        %v3792 = vcombine.low %v3099, %v3107
        %v3793 = vcombine.low %v3115, %v3114
        %v3795 = vunpack.c.l.s4 1983009808
        %v3796 = vunpack.c.0.s8 %v3795
        %v3797 = vlaneseq
        %v3798 = vshrl.u32 %v3797, 7
        %v3799 = vsub.s32 %v3796, %v3798
        %v3800 = vrot.slane %v3792, %v3799
        %v3802 = vunpack.c.l.s4 1983009808
        %v3803 = vunpack.c.0.s8 %v3802
        %v3804 = vlaneseq
        %v3805 = vshrl.u32 %v3804, 7
        %v3806 = vsub.s32 %v3803, %v3805
        %v3807 = vrot.slane %v3793, %v3806
        %v3808 = vcombine.low %v3800, %v3807
        %v3809 = vcombine.low %v3116, %v3124
        %v3810 = vcombine.low %v3132, %v3131
        %v3812 = vunpack.c.l.s4 1983009808
        %v3813 = vunpack.c.0.s8 %v3812
        %v3814 = vlaneseq
        %v3815 = vshrl.u32 %v3814, 7
        %v3816 = vsub.s32 %v3813, %v3815
        %v3817 = vrot.slane %v3809, %v3816
        %v3819 = vunpack.c.l.s4 1983009808
        %v3820 = vunpack.c.0.s8 %v3819
        %v3821 = vlaneseq
        %v3822 = vshrl.u32 %v3821, 7
        %v3823 = vsub.s32 %v3820, %v3822
        %v3824 = vrot.slane %v3810, %v3823
        %v3825 = vcombine.low %v3817, %v3824
        %v3827 = vunpack.c.l.s4 1983009808
        %v3828 = vunpack.c.0.s8 %v3827
        %v3829 = vlaneseq
        %v3830 = vshrl.u32 %v3829, 7
        %v3831 = vsub.s32 %v3828, %v3830
        %v3832 = vrot.slane %v3133, %v3831
        %v3833 = vcombine.low %v3141, %v3149
        %v3834 = vcombine.low %v3148, %v3150
        %v3836 = vunpack.c.l.s4 1983009808
        %v3837 = vunpack.c.0.s8 %v3836
        %v3838 = vlaneseq
        %v3839 = vshrl.u32 %v3838, 7
        %v3840 = vsub.s32 %v3837, %v3839
        %v3841 = vrot.slane %v3833, %v3840
        %v3843 = vunpack.c.l.s4 1983009808
        %v3844 = vunpack.c.0.s8 %v3843
        %v3845 = vlaneseq
        %v3846 = vshrl.u32 %v3845, 7
        %v3847 = vsub.s32 %v3844, %v3846
        %v3848 = vrot.slane %v3834, %v3847
        %v3849 = vcombine.low %v3841, %v3848
        %v3850 = vcombine.low %v3158, %v3166
        %v3851 = vcombine.low %v3165, %v3167
        %v3853 = vunpack.c.l.s4 1983009808
        %v3854 = vunpack.c.0.s8 %v3853
        %v3855 = vlaneseq
        %v3856 = vshrl.u32 %v3855, 7
        %v3857 = vsub.s32 %v3854, %v3856
        %v3858 = vrot.slane %v3850, %v3857
        %v3860 = vunpack.c.l.s4 1983009808
        %v3861 = vunpack.c.0.s8 %v3860
        %v3862 = vlaneseq
        %v3863 = vshrl.u32 %v3862, 7
        %v3864 = vsub.s32 %v3861, %v3863
        %v3865 = vrot.slane %v3851, %v3864
        %v3866 = vcombine.low %v3858, %v3865
        %v3868 = vunpack.c.l.s4 1983009808
        %v3869 = vunpack.c.0.s8 %v3868
        %v3870 = vlaneseq
        %v3871 = vshrl.u32 %v3870, 7
        %v3872 = vsub.s32 %v3869, %v3871
        %v3873 = vrot.slane %v3175, %v3872
        %v3874 = vcombine.low %v3183, %v3182
        %v3875 = vcombine.low %v3184, %v3192
        %v3877 = vunpack.c.l.s4 1983009808
        %v3878 = vunpack.c.0.s8 %v3877
        %v3879 = vlaneseq
        %v3880 = vshrl.u32 %v3879, 7
        %v3881 = vsub.s32 %v3878, %v3880
        %v3882 = vrot.slane %v3874, %v3881
        %v3884 = vunpack.c.l.s4 1983009808
        %v3885 = vunpack.c.0.s8 %v3884
        %v3886 = vlaneseq
        %v3887 = vshrl.u32 %v3886, 7
        %v3888 = vsub.s32 %v3885, %v3887
        %v3889 = vrot.slane %v3875, %v3888
        %v3890 = vcombine.low %v3882, %v3889
        %v3891 = vcombine.low %v3200, %v3199
        %v3892 = vcombine.low %v3201, %v3209
        %v3894 = vunpack.c.l.s4 1983009808
        %v3895 = vunpack.c.0.s8 %v3894
        %v3896 = vlaneseq
        %v3897 = vshrl.u32 %v3896, 7
        %v3898 = vsub.s32 %v3895, %v3897
        %v3899 = vrot.slane %v3891, %v3898
        %v3901 = vunpack.c.l.s4 1983009808
        %v3902 = vunpack.c.0.s8 %v3901
        %v3903 = vlaneseq
        %v3904 = vshrl.u32 %v3903, 7
        %v3905 = vsub.s32 %v3902, %v3904
        %v3906 = vrot.slane %v3892, %v3905
        %v3907 = vcombine.low %v3899, %v3906
        %v3909 = vunpack.c.l.s4 1983009808
        %v3910 = vunpack.c.0.s8 %v3909
        %v3911 = vlaneseq
        %v3912 = vshrl.u32 %v3911, 7
        %v3913 = vsub.s32 %v3910, %v3912
        %v3914 = vrot.slane %v3217, %v3913
        %v3915 = vcombine.low %v3216, %v3218
        %v3916 = vcombine.low %v3226, %v3234
        %v3918 = vunpack.c.l.s4 1983009808
        %v3919 = vunpack.c.0.s8 %v3918
        %v3920 = vlaneseq
        %v3921 = vshrl.u32 %v3920, 7
        %v3922 = vsub.s32 %v3919, %v3921
        %v3923 = vrot.slane %v3915, %v3922
        %v3925 = vunpack.c.l.s4 1983009808
        %v3926 = vunpack.c.0.s8 %v3925
        %v3927 = vlaneseq
        %v3928 = vshrl.u32 %v3927, 7
        %v3929 = vsub.s32 %v3926, %v3928
        %v3930 = vrot.slane %v3916, %v3929
        %v3931 = vcombine.low %v3923, %v3930
        %v3932 = vcombine.low %v3233, %v3235
        %v3933 = vcombine.low %v3243, %v3251
        %v3935 = vunpack.c.l.s4 1983009808
        %v3936 = vunpack.c.0.s8 %v3935
        %v3937 = vlaneseq
        %v3938 = vshrl.u32 %v3937, 7
        %v3939 = vsub.s32 %v3936, %v3938
        %v3940 = vrot.slane %v3932, %v3939
        %v3942 = vunpack.c.l.s4 1983009808
        %v3943 = vunpack.c.0.s8 %v3942
        %v3944 = vlaneseq
        %v3945 = vshrl.u32 %v3944, 7
        %v3946 = vsub.s32 %v3943, %v3945
        %v3947 = vrot.slane %v3933, %v3946
        %v3948 = vcombine.low %v3940, %v3947
        %v3950 = vunpack.c.l.s4 1983009808
        %v3951 = vunpack.c.0.s8 %v3950
        %v3952 = vlaneseq
        %v3953 = vshrl.u32 %v3952, 7
        %v3954 = vsub.s32 %v3951, %v3953
        %v3955 = vrot.slane %v3250, %v3954
        %v3956 = vcombine.low %v3252, %v3260
        %v3957 = vcombine.low %v3268, %v3267
        %v3959 = vunpack.c.l.s4 1983009808
        %v3960 = vunpack.c.0.s8 %v3959
        %v3961 = vlaneseq
        %v3962 = vshrl.u32 %v3961, 7
        %v3963 = vsub.s32 %v3960, %v3962
        %v3964 = vrot.slane %v3956, %v3963
        %v3966 = vunpack.c.l.s4 1983009808
        %v3967 = vunpack.c.0.s8 %v3966
        %v3968 = vlaneseq
        %v3969 = vshrl.u32 %v3968, 7
        %v3970 = vsub.s32 %v3967, %v3969
        %v3971 = vrot.slane %v3957, %v3970
        %v3972 = vcombine.low %v3964, %v3971
        %v3973 = vcombine.low %v3269, %v3277
        %v3974 = vcombine.low %v3285, %v3284
        %v3976 = vunpack.c.l.s4 1983009808
        %v3977 = vunpack.c.0.s8 %v3976
        %v3978 = vlaneseq
        %v3979 = vshrl.u32 %v3978, 7
        %v3980 = vsub.s32 %v3977, %v3979
        %v3981 = vrot.slane %v3973, %v3980
        %v3983 = vunpack.c.l.s4 1983009808
        %v3984 = vunpack.c.0.s8 %v3983
        %v3985 = vlaneseq
        %v3986 = vshrl.u32 %v3985, 7
        %v3987 = vsub.s32 %v3984, %v3986
        %v3988 = vrot.slane %v3974, %v3987
        %v3989 = vcombine.low %v3981, %v3988
        %v3991 = vunpack.c.l.s4 1983009808
        %v3992 = vunpack.c.0.s8 %v3991
        %v3993 = vlaneseq
        %v3994 = vshrl.u32 %v3993, 7
        %v3995 = vsub.s32 %v3992, %v3994
        %v3996 = vrot.slane %v3286, %v3995
        %v3997 = vcombine.low %v3294, %v3302
        %v3998 = vcombine.low %v3301, %v3303
        %v4000 = vunpack.c.l.s4 1983009808
        %v4001 = vunpack.c.0.s8 %v4000
        %v4002 = vlaneseq
        %v4003 = vshrl.u32 %v4002, 7
        %v4004 = vsub.s32 %v4001, %v4003
        %v4005 = vrot.slane %v3997, %v4004
        %v4007 = vunpack.c.l.s4 1983009808
        %v4008 = vunpack.c.0.s8 %v4007
        %v4009 = vlaneseq
        %v4010 = vshrl.u32 %v4009, 7
        %v4011 = vsub.s32 %v4008, %v4010
        %v4012 = vrot.slane %v3998, %v4011
        %v4013 = vcombine.low %v4005, %v4012
        %v4014 = vcombine.low %v3311, %v3319
        %v4015 = vcombine.low %v3318, %v3320
        %v4017 = vunpack.c.l.s4 1983009808
        %v4018 = vunpack.c.0.s8 %v4017
        %v4019 = vlaneseq
        %v4020 = vshrl.u32 %v4019, 7
        %v4021 = vsub.s32 %v4018, %v4020
        %v4022 = vrot.slane %v4014, %v4021
        %v4024 = vunpack.c.l.s4 1983009808
        %v4025 = vunpack.c.0.s8 %v4024
        %v4026 = vlaneseq
        %v4027 = vshrl.u32 %v4026, 7
        %v4028 = vsub.s32 %v4025, %v4027
        %v4029 = vrot.slane %v4015, %v4028
        %v4030 = vcombine.low %v4022, %v4029
        %v4032 = vunpack.c.l.s4 1983009808
        %v4033 = vunpack.c.0.s8 %v4032
        %v4034 = vlaneseq
        %v4035 = vshrl.u32 %v4034, 7
        %v4036 = vsub.s32 %v4033, %v4035
        %v4037 = vrot.slane %v3328, %v4036
        %v4038 = vcombine.low %v3336, %v3335
        %v4039 = vcombine.low %v3337, %v3345
        %v4041 = vunpack.c.l.s4 1983009808
        %v4042 = vunpack.c.0.s8 %v4041
        %v4043 = vlaneseq
        %v4044 = vshrl.u32 %v4043, 7
        %v4045 = vsub.s32 %v4042, %v4044
        %v4046 = vrot.slane %v4038, %v4045
        %v4048 = vunpack.c.l.s4 1983009808
        %v4049 = vunpack.c.0.s8 %v4048
        %v4050 = vlaneseq
        %v4051 = vshrl.u32 %v4050, 7
        %v4052 = vsub.s32 %v4049, %v4051
        %v4053 = vrot.slane %v4039, %v4052
        %v4054 = vcombine.low %v4046, %v4053
        %v4055 = vcombine.low %v3353, %v3352
        %v4056 = vcombine.low %v3354, %v3362
        %v4058 = vunpack.c.l.s4 1983009808
        %v4059 = vunpack.c.0.s8 %v4058
        %v4060 = vlaneseq
        %v4061 = vshrl.u32 %v4060, 7
        %v4062 = vsub.s32 %v4059, %v4061
        %v4063 = vrot.slane %v4055, %v4062
        %v4065 = vunpack.c.l.s4 1983009808
        %v4066 = vunpack.c.0.s8 %v4065
        %v4067 = vlaneseq
        %v4068 = vshrl.u32 %v4067, 7
        %v4069 = vsub.s32 %v4066, %v4068
        %v4070 = vrot.slane %v4056, %v4069
        %v4071 = vcombine.low %v4063, %v4070
        %v4073 = vunpack.c.l.s4 1983009808
        %v4074 = vunpack.c.0.s8 %v4073
        %v4075 = vlaneseq
        %v4076 = vshrl.u32 %v4075, 7
        %v4077 = vsub.s32 %v4074, %v4076
        %v4078 = vrot.slane %v3370, %v4077
        %v4079 = vcombine.low %v3369, %v3371
        %v4080 = vcombine.low %v3379, %v3387
        %v4082 = vunpack.c.l.s4 1983009808
        %v4083 = vunpack.c.0.s8 %v4082
        %v4084 = vlaneseq
        %v4085 = vshrl.u32 %v4084, 7
        %v4086 = vsub.s32 %v4083, %v4085
        %v4087 = vrot.slane %v4079, %v4086
        %v4089 = vunpack.c.l.s4 1983009808
        %v4090 = vunpack.c.0.s8 %v4089
        %v4091 = vlaneseq
        %v4092 = vshrl.u32 %v4091, 7
        %v4093 = vsub.s32 %v4090, %v4092
        %v4094 = vrot.slane %v4080, %v4093
        %v4095 = vcombine.low %v4087, %v4094
        %v4096 = vcombine.low %v3386, %v3388
        %v4097 = vcombine.low %v3396, %v3404
        %v4099 = vunpack.c.l.s4 1983009808
        %v4100 = vunpack.c.0.s8 %v4099
        %v4101 = vlaneseq
        %v4102 = vshrl.u32 %v4101, 7
        %v4103 = vsub.s32 %v4100, %v4102
        %v4104 = vrot.slane %v4096, %v4103
        %v4106 = vunpack.c.l.s4 1983009808
        %v4107 = vunpack.c.0.s8 %v4106
        %v4108 = vlaneseq
        %v4109 = vshrl.u32 %v4108, 7
        %v4110 = vsub.s32 %v4107, %v4109
        %v4111 = vrot.slane %v4097, %v4110
        %v4112 = vcombine.low %v4104, %v4111
        %v4114 = vunpack.c.l.s4 1983009808
        %v4115 = vunpack.c.0.s8 %v4114
        %v4116 = vlaneseq
        %v4117 = vshrl.u32 %v4116, 7
        %v4118 = vsub.s32 %v4115, %v4117
        %v4119 = vrot.slane %v3403, %v4118
        %v4120 = vcombine.low %v3405, %v3413
        %v4121 = vcombine.low %v3421, %v3420
        %v4123 = vunpack.c.l.s4 1983009808
        %v4124 = vunpack.c.0.s8 %v4123
        %v4125 = vlaneseq
        %v4126 = vshrl.u32 %v4125, 7
        %v4127 = vsub.s32 %v4124, %v4126
        %v4128 = vrot.slane %v4120, %v4127
        %v4130 = vunpack.c.l.s4 1983009808
        %v4131 = vunpack.c.0.s8 %v4130
        %v4132 = vlaneseq
        %v4133 = vshrl.u32 %v4132, 7
        %v4134 = vsub.s32 %v4131, %v4133
        %v4135 = vrot.slane %v4121, %v4134
        %v4136 = vcombine.low %v4128, %v4135
        %v4137 = vcombine.low %v3422, %v3430
        %v4138 = vcombine.low %v3438, %v3437
        %v4140 = vunpack.c.l.s4 1983009808
        %v4141 = vunpack.c.0.s8 %v4140
        %v4142 = vlaneseq
        %v4143 = vshrl.u32 %v4142, 7
        %v4144 = vsub.s32 %v4141, %v4143
        %v4145 = vrot.slane %v4137, %v4144
        %v4147 = vunpack.c.l.s4 1983009808
        %v4148 = vunpack.c.0.s8 %v4147
        %v4149 = vlaneseq
        %v4150 = vshrl.u32 %v4149, 7
        %v4151 = vsub.s32 %v4148, %v4150
        %v4152 = vrot.slane %v4138, %v4151
        %v4153 = vcombine.low %v4145, %v4152
        %v4155 = vunpack.c.l.s4 1983009808
        %v4156 = vunpack.c.0.s8 %v4155
        %v4157 = vlaneseq
        %v4158 = vshrl.u32 %v4157, 7
        %v4159 = vsub.s32 %v4156, %v4158
        %v4160 = vrot.slane %v3439, %v4159
        %v4161 = vcombine.low %v3447, %v3455
        %v4162 = vcombine.low %v3454, %v3456
        %v4164 = vunpack.c.l.s4 1983009808
        %v4165 = vunpack.c.0.s8 %v4164
        %v4166 = vlaneseq
        %v4167 = vshrl.u32 %v4166, 7
        %v4168 = vsub.s32 %v4165, %v4167
        %v4169 = vrot.slane %v4161, %v4168
        %v4171 = vunpack.c.l.s4 1983009808
        %v4172 = vunpack.c.0.s8 %v4171
        %v4173 = vlaneseq
        %v4174 = vshrl.u32 %v4173, 7
        %v4175 = vsub.s32 %v4172, %v4174
        %v4176 = vrot.slane %v4162, %v4175
        %v4177 = vcombine.low %v4169, %v4176
        %v4178 = vcombine.low %v3464, %v3472
        %v4179 = vcombine.low %v3471, %v3473
        %v4181 = vunpack.c.l.s4 1983009808
        %v4182 = vunpack.c.0.s8 %v4181
        %v4183 = vlaneseq
        %v4184 = vshrl.u32 %v4183, 7
        %v4185 = vsub.s32 %v4182, %v4184
        %v4186 = vrot.slane %v4178, %v4185
        %v4188 = vunpack.c.l.s4 1983009808
        %v4189 = vunpack.c.0.s8 %v4188
        %v4190 = vlaneseq
        %v4191 = vshrl.u32 %v4190, 7
        %v4192 = vsub.s32 %v4189, %v4191
        %v4193 = vrot.slane %v4179, %v4192
        %v4194 = vcombine.low %v4186, %v4193
        %v4196 = vunpack.c.l.s4 1983009808
        %v4197 = vunpack.c.0.s8 %v4196
        %v4198 = vlaneseq
        %v4199 = vshrl.u32 %v4198, 7
        %v4200 = vsub.s32 %v4197, %v4199
        %v4201 = vrot.slane %v3481, %v4200
        %v4202 = vcombine.low %v3489, %v3488
        %v4203 = vcombine.low %v3490, %v3498
        %v4205 = vunpack.c.l.s4 1983009808
        %v4206 = vunpack.c.0.s8 %v4205
        %v4207 = vlaneseq
        %v4208 = vshrl.u32 %v4207, 7
        %v4209 = vsub.s32 %v4206, %v4208
        %v4210 = vrot.slane %v4202, %v4209
        %v4212 = vunpack.c.l.s4 1983009808
        %v4213 = vunpack.c.0.s8 %v4212
        %v4214 = vlaneseq
        %v4215 = vshrl.u32 %v4214, 7
        %v4216 = vsub.s32 %v4213, %v4215
        %v4217 = vrot.slane %v4203, %v4216
        %v4218 = vcombine.low %v4210, %v4217
        %v4219 = vcombine.low %v3506, %v3505
        %v4220 = vcombine.low %v3507, %v3515
        %v4222 = vunpack.c.l.s4 1983009808
        %v4223 = vunpack.c.0.s8 %v4222
        %v4224 = vlaneseq
        %v4225 = vshrl.u32 %v4224, 7
        %v4226 = vsub.s32 %v4223, %v4225
        %v4227 = vrot.slane %v4219, %v4226
        %v4229 = vunpack.c.l.s4 1983009808
        %v4230 = vunpack.c.0.s8 %v4229
        %v4231 = vlaneseq
        %v4232 = vshrl.u32 %v4231, 7
        %v4233 = vsub.s32 %v4230, %v4232
        %v4234 = vrot.slane %v4220, %v4233
        %v4235 = vcombine.low %v4227, %v4234
        %v4237 = vunpack.c.l.s4 1983009808
        %v4238 = vunpack.c.0.s8 %v4237
        %v4239 = vlaneseq
        %v4240 = vshrl.u32 %v4239, 7
        %v4241 = vsub.s32 %v4238, %v4240
        %v4242 = vrot.slane %v3523, %v4241
        %v4243 = vcombine.low %v3522, %v3524
        %v4244 = vcombine.low %v3532, %v3540
        %v4246 = vunpack.c.l.s4 1983009808
        %v4247 = vunpack.c.0.s8 %v4246
        %v4248 = vlaneseq
        %v4249 = vshrl.u32 %v4248, 7
        %v4250 = vsub.s32 %v4247, %v4249
        %v4251 = vrot.slane %v4243, %v4250
        %v4253 = vunpack.c.l.s4 1983009808
        %v4254 = vunpack.c.0.s8 %v4253
        %v4255 = vlaneseq
        %v4256 = vshrl.u32 %v4255, 7
        %v4257 = vsub.s32 %v4254, %v4256
        %v4258 = vrot.slane %v4244, %v4257
        %v4259 = vcombine.low %v4251, %v4258
        %v4260 = vcombine.low %v3539, %v3541
        %v4261 = vcombine.low %v3549, %v3557
        %v4263 = vunpack.c.l.s4 1983009808
        %v4264 = vunpack.c.0.s8 %v4263
        %v4265 = vlaneseq
        %v4266 = vshrl.u32 %v4265, 7
        %v4267 = vsub.s32 %v4264, %v4266
        %v4268 = vrot.slane %v4260, %v4267
        %v4270 = vunpack.c.l.s4 1983009808
        %v4271 = vunpack.c.0.s8 %v4270
        %v4272 = vlaneseq
        %v4273 = vshrl.u32 %v4272, 7
        %v4274 = vsub.s32 %v4271, %v4273
        %v4275 = vrot.slane %v4261, %v4274
        %v4276 = vcombine.low %v4268, %v4275
        %v4278 = vunpack.c.l.s4 1983009808
        %v4279 = vunpack.c.0.s8 %v4278
        %v4280 = vlaneseq
        %v4281 = vshrl.u32 %v4280, 7
        %v4282 = vsub.s32 %v4279, %v4281
        %v4283 = vrot.slane %v3556, %v4282
        %v4284 = vcombine.low %v3558, %v3566
        %v4285 = vcombine.low %v3574, %v3573
        %v4287 = vunpack.c.l.s4 1983009808
        %v4288 = vunpack.c.0.s8 %v4287
        %v4289 = vlaneseq
        %v4290 = vshrl.u32 %v4289, 7
        %v4291 = vsub.s32 %v4288, %v4290
        %v4292 = vrot.slane %v4284, %v4291
        %v4294 = vunpack.c.l.s4 1983009808
        %v4295 = vunpack.c.0.s8 %v4294
        %v4296 = vlaneseq
        %v4297 = vshrl.u32 %v4296, 7
        %v4298 = vsub.s32 %v4295, %v4297
        %v4299 = vrot.slane %v4285, %v4298
        %v4300 = vcombine.low %v4292, %v4299
        %v4301 = vcombine.low %v3575, %v3583
        %v4302 = vcombine.low %v3591, %v3590
        %v4304 = vunpack.c.l.s4 1983009808
        %v4305 = vunpack.c.0.s8 %v4304
        %v4306 = vlaneseq
        %v4307 = vshrl.u32 %v4306, 7
        %v4308 = vsub.s32 %v4305, %v4307
        %v4309 = vrot.slane %v4301, %v4308
        %v4311 = vunpack.c.l.s4 1983009808
        %v4312 = vunpack.c.0.s8 %v4311
        %v4313 = vlaneseq
        %v4314 = vshrl.u32 %v4313, 7
        %v4315 = vsub.s32 %v4312, %v4314
        %v4316 = vrot.slane %v4302, %v4315
        %v4317 = vcombine.low %v4309, %v4316
        %v4319 = vunpack.c.l.s4 1983009808
        %v4320 = vunpack.c.0.s8 %v4319
        %v4321 = vlaneseq
        %v4322 = vshrl.u32 %v4321, 7
        %v4323 = vsub.s32 %v4320, %v4322
        %v4324 = vrot.slane %v3592, %v4323
        %v4325 = vcombine.low %v3600, %v3608
        %v4326 = vcombine.low %v3607, %v3609
        %v4328 = vunpack.c.l.s4 1983009808
        %v4329 = vunpack.c.0.s8 %v4328
        %v4330 = vlaneseq
        %v4331 = vshrl.u32 %v4330, 7
        %v4332 = vsub.s32 %v4329, %v4331
        %v4333 = vrot.slane %v4325, %v4332
        %v4335 = vunpack.c.l.s4 1983009808
        %v4336 = vunpack.c.0.s8 %v4335
        %v4337 = vlaneseq
        %v4338 = vshrl.u32 %v4337, 7
        %v4339 = vsub.s32 %v4336, %v4338
        %v4340 = vrot.slane %v4326, %v4339
        %v4341 = vcombine.low %v4333, %v4340
        %v4342 = vcombine.low %v3617, %v3625
        %v4343 = vcombine.low %v3624, %v3626
        %v4345 = vunpack.c.l.s4 1983009808
        %v4346 = vunpack.c.0.s8 %v4345
        %v4347 = vlaneseq
        %v4348 = vshrl.u32 %v4347, 7
        %v4349 = vsub.s32 %v4346, %v4348
        %v4350 = vrot.slane %v4342, %v4349
        %v4352 = vunpack.c.l.s4 1983009808
        %v4353 = vunpack.c.0.s8 %v4352
        %v4354 = vlaneseq
        %v4355 = vshrl.u32 %v4354, 7
        %v4356 = vsub.s32 %v4353, %v4355
        %v4357 = vrot.slane %v4343, %v4356
        %v4358 = vcombine.low %v4350, %v4357
        %v4360 = vunpack.c.l.s4 1983009808
        %v4361 = vunpack.c.0.s8 %v4360
        %v4362 = vlaneseq
        %v4363 = vshrl.u32 %v4362, 7
        %v4364 = vsub.s32 %v4361, %v4363
        %v4365 = vrot.slane %v3634, %v4364
        %v4366 = vcombine.low %v3642, %v3641
        %v4367 = vcombine.low %v3643, %v3651
        %v4369 = vunpack.c.l.s4 1983009808
        %v4370 = vunpack.c.0.s8 %v4369
        %v4371 = vlaneseq
        %v4372 = vshrl.u32 %v4371, 7
        %v4373 = vsub.s32 %v4370, %v4372
        %v4374 = vrot.slane %v4366, %v4373
        %v4376 = vunpack.c.l.s4 1983009808
        %v4377 = vunpack.c.0.s8 %v4376
        %v4378 = vlaneseq
        %v4379 = vshrl.u32 %v4378, 7
        %v4380 = vsub.s32 %v4377, %v4379
        %v4381 = vrot.slane %v4367, %v4380
        %v4382 = vcombine.low %v4374, %v4381
        %v4383 = vcombine.low %v3659, %v3658
        %v4384 = vcombine.low %v3660, %v3667
        %v4386 = vunpack.c.l.s4 1983009808
        %v4387 = vunpack.c.0.s8 %v4386
        %v4388 = vlaneseq
        %v4389 = vshrl.u32 %v4388, 7
        %v4390 = vsub.s32 %v4387, %v4389
        %v4391 = vrot.slane %v4383, %v4390
        %v4393 = vunpack.c.l.s4 1983009808
        %v4394 = vunpack.c.0.s8 %v4393
        %v4395 = vlaneseq
        %v4396 = vshrl.u32 %v4395, 7
        %v4397 = vsub.s32 %v4394, %v4396
        %v4398 = vrot.slane %v4384, %v4397
        %v4399 = vcombine.low %v4391, %v4398
        %v4401 = vunpack.c.l.s4 1983009808
        %v4402 = vunpack.c.0.s8 %v4401
        %v4403 = vlaneseq
        %v4404 = vshrl.u32 %v4403, 7
        %v4405 = vsub.s32 %v4402, %v4404
        %v4406 = vrot.slane %v3668, %v4405
        %v4461 = vpack.c.bf16 %v3702, %v3685
        %v4462 = vpack.c.bf16 %v3709, %v3709
        %v4463 = vpack.c.bf16 %v3743, %v3726
        %v4464 = vpack.c.bf16 %v3750, %v3750
        %v4465 = vpack.c.bf16 %v3784, %v3767
        %v4466 = vpack.c.bf16 %v3791, %v3791
        %v4467 = vpack.c.bf16 %v3825, %v3808
        %v4468 = vpack.c.bf16 %v3832, %v3832
        %v4469 = vpack.c.bf16 %v3866, %v3849
        %v4470 = vpack.c.bf16 %v3873, %v3873
        %v4471 = vpack.c.bf16 %v3907, %v3890
        %v4472 = vpack.c.bf16 %v3914, %v3914
        %v4473 = vpack.c.bf16 %v3948, %v3931
        %v4474 = vpack.c.bf16 %v3955, %v3955
        %v4475 = vpack.c.bf16 %v3989, %v3972
        %v4476 = vpack.c.bf16 %v3996, %v3996
        %v4477 = vpack.c.bf16 %v4030, %v4013
        %v4478 = vpack.c.bf16 %v4037, %v4037
        %v4479 = vpack.c.bf16 %v4071, %v4054
        %v4480 = vpack.c.bf16 %v4078, %v4078
        %v4481 = vpack.c.bf16 %v4112, %v4095
        %v4482 = vpack.c.bf16 %v4119, %v4119
        %v4483 = vpack.c.bf16 %v4153, %v4136
        %v4484 = vpack.c.bf16 %v4160, %v4160
        %v4485 = vpack.c.bf16 %v4194, %v4177
        %v4486 = vpack.c.bf16 %v4201, %v4201
        %v4487 = vpack.c.bf16 %v4235, %v4218
        %v4488 = vpack.c.bf16 %v4242, %v4242
        %v4489 = vpack.c.bf16 %v4276, %v4259
        %v4490 = vpack.c.bf16 %v4283, %v4283
        %v4491 = vpack.c.bf16 %v4317, %v4300
        %v4492 = vpack.c.bf16 %v4324, %v4324
        %v4493 = vpack.c.bf16 %v4358, %v4341
        %v4494 = vpack.c.bf16 %v4365, %v4365
        %v4495 = vpack.c.bf16 %v4399, %v4382
        %v4496 = vpack.c.bf16 %v4406, %v4406
        %v4533 = vunpack.c.l.b16 %v4461
        %v4534 = vunpack.c.h.b16 %v4461
        %v4535 = vunpack.c.l.b16 %v4462
        %v4536 = vunpack.c.l.b16 %v4463
        %v4537 = vunpack.c.h.b16 %v4463
        %v4538 = vunpack.c.l.b16 %v4464
        %v4539 = vunpack.c.l.b16 %v4465
        %v4540 = vunpack.c.h.b16 %v4465
        %v4541 = vunpack.c.l.b16 %v4466
        %v4542 = vunpack.c.l.b16 %v4467
        %v4543 = vunpack.c.h.b16 %v4467
        %v4544 = vunpack.c.l.b16 %v4468
        %v4545 = vunpack.c.l.b16 %v4469
        %v4546 = vunpack.c.h.b16 %v4469
        %v4547 = vunpack.c.l.b16 %v4470
        %v4548 = vunpack.c.l.b16 %v4471
        %v4549 = vunpack.c.h.b16 %v4471
        %v4550 = vunpack.c.l.b16 %v4472
        %v4551 = vunpack.c.l.b16 %v4473
        %v4552 = vunpack.c.h.b16 %v4473
        %v4553 = vunpack.c.l.b16 %v4474
        %v4554 = vunpack.c.l.b16 %v4475
        %v4555 = vunpack.c.h.b16 %v4475
        %v4556 = vunpack.c.l.b16 %v4476
        %v4557 = vunpack.c.l.b16 %v4477
        %v4558 = vunpack.c.h.b16 %v4477
        %v4559 = vunpack.c.l.b16 %v4478
        %v4560 = vunpack.c.l.b16 %v4479
        %v4561 = vunpack.c.h.b16 %v4479
        %v4562 = vunpack.c.l.b16 %v4480
        %v4563 = vunpack.c.l.b16 %v4481
        %v4564 = vunpack.c.h.b16 %v4481
        %v4565 = vunpack.c.l.b16 %v4482
        %v4566 = vunpack.c.l.b16 %v4483
        %v4567 = vunpack.c.h.b16 %v4483
        %v4568 = vunpack.c.l.b16 %v4484
        %v4569 = vunpack.c.l.b16 %v4485
        %v4570 = vunpack.c.h.b16 %v4485
        %v4571 = vunpack.c.l.b16 %v4486
        %v4572 = vunpack.c.l.b16 %v4487
        %v4573 = vunpack.c.h.b16 %v4487
        %v4574 = vunpack.c.l.b16 %v4488
        %v4575 = vunpack.c.l.b16 %v4489
        %v4576 = vunpack.c.h.b16 %v4489
        %v4577 = vunpack.c.l.b16 %v4490
        %v4578 = vunpack.c.l.b16 %v4491
        %v4579 = vunpack.c.h.b16 %v4491
        %v4580 = vunpack.c.l.b16 %v4492
        %v4581 = vunpack.c.l.b16 %v4493
        %v4582 = vunpack.c.h.b16 %v4493
        %v4583 = vunpack.c.l.b16 %v4494
        %v4584 = vunpack.c.l.b16 %v4495
        %v4585 = vunpack.c.h.b16 %v4495
        %v4586 = vunpack.c.l.b16 %v4496
        %v4587 = vpack.c.b16 %v4533, %v4533
        %v4588 = vpack.c.b16 %v4534, %v4534
        %v4589 = vpack.c.b16 %v4535, %v4535
        %v4590 = vpack.c.b16 %v4536, %v4536
        %v4591 = vpack.c.b16 %v4537, %v4537
        %v4592 = vpack.c.b16 %v4538, %v4538
        %v4593 = vpack.c.b16 %v4539, %v4539
        %v4594 = vpack.c.b16 %v4540, %v4540
        %v4595 = vpack.c.b16 %v4541, %v4541
        %v4596 = vpack.c.b16 %v4542, %v4542
        %v4597 = vpack.c.b16 %v4543, %v4543
        %v4598 = vpack.c.b16 %v4544, %v4544
        %v4599 = vpack.c.b16 %v4545, %v4545
        %v4600 = vpack.c.b16 %v4546, %v4546
        %v4601 = vpack.c.b16 %v4547, %v4547
        %v4602 = vpack.c.b16 %v4548, %v4548
        %v4603 = vpack.c.b16 %v4549, %v4549
        %v4604 = vpack.c.b16 %v4550, %v4550
        %v4605 = vpack.c.b16 %v4551, %v4551
        %v4606 = vpack.c.b16 %v4552, %v4552
        %v4607 = vpack.c.b16 %v4553, %v4553
        %v4608 = vpack.c.b16 %v4554, %v4554
        %v4609 = vpack.c.b16 %v4555, %v4555
        %v4610 = vpack.c.b16 %v4556, %v4556
        %v4611 = vpack.c.b16 %v4557, %v4557
        %v4612 = vpack.c.b16 %v4558, %v4558
        %v4613 = vpack.c.b16 %v4559, %v4559
        %v4614 = vpack.c.b16 %v4560, %v4560
        %v4615 = vpack.c.b16 %v4561, %v4561
        %v4616 = vpack.c.b16 %v4562, %v4562
        %v4617 = vpack.c.b16 %v4563, %v4563
        %v4618 = vpack.c.b16 %v4564, %v4564
        %v4619 = vpack.c.b16 %v4565, %v4565
        %v4620 = vpack.c.b16 %v4566, %v4566
        %v4621 = vpack.c.b16 %v4567, %v4567
        %v4622 = vpack.c.b16 %v4568, %v4568
        %v4623 = vpack.c.b16 %v4569, %v4569
        %v4624 = vpack.c.b16 %v4570, %v4570
        %v4625 = vpack.c.b16 %v4571, %v4571
        %v4626 = vpack.c.b16 %v4572, %v4572
        %v4627 = vpack.c.b16 %v4573, %v4573
        %v4628 = vpack.c.b16 %v4574, %v4574
        %v4629 = vpack.c.b16 %v4575, %v4575
        %v4630 = vpack.c.b16 %v4576, %v4576
        %v4631 = vpack.c.b16 %v4577, %v4577
        %v4632 = vpack.c.b16 %v4578, %v4578
        %v4633 = vpack.c.b16 %v4579, %v4579
        %v4634 = vpack.c.b16 %v4580, %v4580
        %v4635 = vpack.c.b16 %v4581, %v4581
        %v4636 = vpack.c.b16 %v4582, %v4582
        %v4637 = vpack.c.b16 %v4583, %v4583
        %v4638 = vpack.c.b16 %v4584, %v4584
        %v4639 = vpack.c.b16 %v4585, %v4585
        %v4640 = vpack.c.b16 %v4586, %v4586
        %4695 = vst [vmem:[#allocation2] sm:$0xf] %v4587
        %4696 = vst [vmem:[#allocation2 + $0x4] sm:$0xf] %v4588
        %4697 = vst [vmem:[#allocation2 + $0x8] sm:$0x1] %v4589
        %4698 = vst [vmem:[#allocation2 + $0xc] sm:$0xf] %v4590
        %4699 = vst [vmem:[#allocation2 + $0x10] sm:$0xf] %v4591
        %4700 = vst [vmem:[#allocation2 + $0x14] sm:$0x1] %v4592
        %4701 = vst [vmem:[#allocation2 + $0x18] sm:$0xf] %v4593
        %4702 = vst [vmem:[#allocation2 + $0x1c] sm:$0xf] %v4594
        %4703 = vst [vmem:[#allocation2 + $0x20] sm:$0x1] %v4595
        %4704 = vst [vmem:[#allocation2 + $0x24] sm:$0xf] %v4596
        %4705 = vst [vmem:[#allocation2 + $0x28] sm:$0xf] %v4597
        %4706 = vst [vmem:[#allocation2 + $0x2c] sm:$0x1] %v4598
        %4707 = vst [vmem:[#allocation2 + $0x30] sm:$0xf] %v4599
        %4708 = vst [vmem:[#allocation2 + $0x34] sm:$0xf] %v4600
        %4709 = vst [vmem:[#allocation2 + $0x38] sm:$0x1] %v4601
        %4710 = vst [vmem:[#allocation2 + $0x3c] sm:$0xf] %v4602
        %4711 = vst [vmem:[#allocation2 + $0x40] sm:$0xf] %v4603
        %4712 = vst [vmem:[#allocation2 + $0x44] sm:$0x1] %v4604
        %4713 = vst [vmem:[#allocation2 + $0x48] sm:$0xf] %v4605
        %4714 = vst [vmem:[#allocation2 + $0x4c] sm:$0xf] %v4606
        %4715 = vst [vmem:[#allocation2 + $0x50] sm:$0x1] %v4607
        %4716 = vst [vmem:[#allocation2 + $0x54] sm:$0xf] %v4608
        %4717 = vst [vmem:[#allocation2 + $0x58] sm:$0xf] %v4609
        %4718 = vst [vmem:[#allocation2 + $0x5c] sm:$0x1] %v4610
        %4719 = vst [vmem:[#allocation2 + $0x60] sm:$0xf] %v4611
        %4720 = vst [vmem:[#allocation2 + $0x64] sm:$0xf] %v4612
        %4721 = vst [vmem:[#allocation2 + $0x68] sm:$0x1] %v4613
        %4722 = vst [vmem:[#allocation2 + $0x6c] sm:$0xf] %v4614
        %4723 = vst [vmem:[#allocation2 + $0x70] sm:$0xf] %v4615
        %4724 = vst [vmem:[#allocation2 + $0x74] sm:$0x1] %v4616
        %4725 = vst [vmem:[#allocation2 + $0x78] sm:$0xf] %v4617
        %4726 = vst [vmem:[#allocation2 + $0x7c] sm:$0xf] %v4618
        %4727 = vst [vmem:[#allocation2 + $0x80] sm:$0x1] %v4619
        %4728 = vst [vmem:[#allocation2 + $0x84] sm:$0xf] %v4620
        %4729 = vst [vmem:[#allocation2 + $0x88] sm:$0xf] %v4621
        %4730 = vst [vmem:[#allocation2 + $0x8c] sm:$0x1] %v4622
        %4731 = vst [vmem:[#allocation2 + $0x90] sm:$0xf] %v4623
        %4732 = vst [vmem:[#allocation2 + $0x94] sm:$0xf] %v4624
        %4733 = vst [vmem:[#allocation2 + $0x98] sm:$0x1] %v4625
        %4734 = vst [vmem:[#allocation2 + $0x9c] sm:$0xf] %v4626
        %4735 = vst [vmem:[#allocation2 + $0xa0] sm:$0xf] %v4627
        %4736 = vst [vmem:[#allocation2 + $0xa4] sm:$0x1] %v4628
        %4737 = vst [vmem:[#allocation2 + $0xa8] sm:$0xf] %v4629
        %4738 = vst [vmem:[#allocation2 + $0xac] sm:$0xf] %v4630
        %4739 = vst [vmem:[#allocation2 + $0xb0] sm:$0x1] %v4631
        %4740 = vst [vmem:[#allocation2 + $0xb4] sm:$0xf] %v4632
        %4741 = vst [vmem:[#allocation2 + $0xb8] sm:$0xf] %v4633
        %4742 = vst [vmem:[#allocation2 + $0xbc] sm:$0x1] %v4634
        %4743 = vst [vmem:[#allocation2 + $0xc0] sm:$0xf] %v4635
        %4744 = vst [vmem:[#allocation2 + $0xc4] sm:$0xf] %v4636
        %4745 = vst [vmem:[#allocation2 + $0xc8] sm:$0x1] %v4637
        %4746 = vst [vmem:[#allocation2 + $0xcc] sm:$0xf] %v4638
        %4747 = vst [vmem:[#allocation2 + $0xd0] sm:$0xf] %v4639
        %4748 = vst [vmem:[#allocation2 + $0xd4] sm:$0x1] %v4640
        %vm4749 = vcmask 1040384
        %vm4750 = vsmask.f32 256
        %vm4751 = vmand %vm4749, %vm4750
        %v4752 = vld [vmem:[#allocation2] sm:$0x1]
        %v4753 = vsel %vm4751, 0, %v4752
        %4754 = vst [vmem:[#allocation2] sm:$0x1] %v4753
        %v4755 = vld [vmem:[#allocation2 + $0xc] sm:$0x1]
        %v4756 = vsel %vm4751, 0, %v4755
        %4757 = vst [vmem:[#allocation2 + $0xc] sm:$0x1] %v4756
        %v4758 = vld [vmem:[#allocation2 + $0x18] sm:$0x1]
        %v4759 = vsel %vm4751, 0, %v4758
        %4760 = vst [vmem:[#allocation2 + $0x18] sm:$0x1] %v4759
        %v4761 = vld [vmem:[#allocation2 + $0x24] sm:$0x1]
        %v4762 = vsel %vm4751, 0, %v4761
        %4763 = vst [vmem:[#allocation2 + $0x24] sm:$0x1] %v4762
        %v4764 = vld [vmem:[#allocation2 + $0x30] sm:$0x1]
        %v4765 = vsel %vm4751, 0, %v4764
        %4766 = vst [vmem:[#allocation2 + $0x30] sm:$0x1] %v4765
        %v4767 = vld [vmem:[#allocation2 + $0x3c] sm:$0x1]
        %v4768 = vsel %vm4751, 0, %v4767
        %4769 = vst [vmem:[#allocation2 + $0x3c] sm:$0x1] %v4768
        %v4770 = vld [vmem:[#allocation2 + $0x48] sm:$0x1]
        %v4771 = vsel %vm4751, 0, %v4770
        %4772 = vst [vmem:[#allocation2 + $0x48] sm:$0x1] %v4771
        %v4773 = vld [vmem:[#allocation2 + $0x54] sm:$0x1]
        %v4774 = vsel %vm4751, 0, %v4773
        %4775 = vst [vmem:[#allocation2 + $0x54] sm:$0x1] %v4774
        %v4776 = vld [vmem:[#allocation2 + $0x60] sm:$0x1]
        %v4777 = vsel %vm4751, 0, %v4776
        %4778 = vst [vmem:[#allocation2 + $0x60] sm:$0x1] %v4777
        %v4779 = vld [vmem:[#allocation2 + $0x6c] sm:$0x1]
        %v4780 = vsel %vm4751, 0, %v4779
        %4781 = vst [vmem:[#allocation2 + $0x6c] sm:$0x1] %v4780
        %v4782 = vld [vmem:[#allocation2 + $0x78] sm:$0x1]
        %v4783 = vsel %vm4751, 0, %v4782
        %4784 = vst [vmem:[#allocation2 + $0x78] sm:$0x1] %v4783
        %v4785 = vld [vmem:[#allocation2 + $0x84] sm:$0x1]
        %v4786 = vsel %vm4751, 0, %v4785
        %4787 = vst [vmem:[#allocation2 + $0x84] sm:$0x1] %v4786
        %v4788 = vld [vmem:[#allocation2 + $0x90] sm:$0x1]
        %v4789 = vsel %vm4751, 0, %v4788
        %4790 = vst [vmem:[#allocation2 + $0x90] sm:$0x1] %v4789
        %v4791 = vld [vmem:[#allocation2 + $0x9c] sm:$0x1]
        %v4792 = vsel %vm4751, 0, %v4791
        %4793 = vst [vmem:[#allocation2 + $0x9c] sm:$0x1] %v4792
        %v4794 = vld [vmem:[#allocation2 + $0xa8] sm:$0x1]
        %v4795 = vsel %vm4751, 0, %v4794
        %4796 = vst [vmem:[#allocation2 + $0xa8] sm:$0x1] %v4795
        %v4797 = vld [vmem:[#allocation2 + $0xb4] sm:$0x1]
        %v4798 = vsel %vm4751, 0, %v4797
        %4799 = vst [vmem:[#allocation2 + $0xb4] sm:$0x1] %v4798
        %v4800 = vld [vmem:[#allocation2 + $0xc0] sm:$0x1]
        %v4801 = vsel %vm4751, 0, %v4800
        %4802 = vst [vmem:[#allocation2 + $0xc0] sm:$0x1] %v4801
        %v4803 = vld [vmem:[#allocation2 + $0xcc] sm:$0x1]
        %v4804 = vsel %vm4751, 0, %v4803
        %4805 = vst [vmem:[#allocation2 + $0xcc] sm:$0x1] %v4804
        %vm4806 = vsmask.f32 7938
        %vm4807 = vmand %vm4749, %vm4806
        %v4808 = vld [vmem:[#allocation2 + $0x8] sm:$0x1]
        %v4809 = vsel %vm4807, 0, %v4808
        %4810 = vst [vmem:[#allocation2 + $0x8] sm:$0x1] %v4809
        %v4811 = vld [vmem:[#allocation2 + $0x14] sm:$0x1]
        %v4812 = vsel %vm4807, 0, %v4811
        %4813 = vst [vmem:[#allocation2 + $0x14] sm:$0x1] %v4812
        %v4814 = vld [vmem:[#allocation2 + $0x20] sm:$0x1]
        %v4815 = vsel %vm4807, 0, %v4814
        %4816 = vst [vmem:[#allocation2 + $0x20] sm:$0x1] %v4815
        %v4817 = vld [vmem:[#allocation2 + $0x2c] sm:$0x1]
        %v4818 = vsel %vm4807, 0, %v4817
        %4819 = vst [vmem:[#allocation2 + $0x2c] sm:$0x1] %v4818
        %v4820 = vld [vmem:[#allocation2 + $0x38] sm:$0x1]
        %v4821 = vsel %vm4807, 0, %v4820
        %4822 = vst [vmem:[#allocation2 + $0x38] sm:$0x1] %v4821
        %v4823 = vld [vmem:[#allocation2 + $0x44] sm:$0x1]
        %v4824 = vsel %vm4807, 0, %v4823
        %4825 = vst [vmem:[#allocation2 + $0x44] sm:$0x1] %v4824
        %v4826 = vld [vmem:[#allocation2 + $0x50] sm:$0x1]
        %v4827 = vsel %vm4807, 0, %v4826
        %4828 = vst [vmem:[#allocation2 + $0x50] sm:$0x1] %v4827
        %v4829 = vld [vmem:[#allocation2 + $0x5c] sm:$0x1]
        %v4830 = vsel %vm4807, 0, %v4829
        %4831 = vst [vmem:[#allocation2 + $0x5c] sm:$0x1] %v4830
        %v4832 = vld [vmem:[#allocation2 + $0x68] sm:$0x1]
        %v4833 = vsel %vm4807, 0, %v4832
        %4834 = vst [vmem:[#allocation2 + $0x68] sm:$0x1] %v4833
        %v4835 = vld [vmem:[#allocation2 + $0x74] sm:$0x1]
        %v4836 = vsel %vm4807, 0, %v4835
        %4837 = vst [vmem:[#allocation2 + $0x74] sm:$0x1] %v4836
        %v4838 = vld [vmem:[#allocation2 + $0x80] sm:$0x1]
        %v4839 = vsel %vm4807, 0, %v4838
        %4840 = vst [vmem:[#allocation2 + $0x80] sm:$0x1] %v4839
        %v4841 = vld [vmem:[#allocation2 + $0x8c] sm:$0x1]
        %v4842 = vsel %vm4807, 0, %v4841
        %4843 = vst [vmem:[#allocation2 + $0x8c] sm:$0x1] %v4842
        %v4844 = vld [vmem:[#allocation2 + $0x98] sm:$0x1]
        %v4845 = vsel %vm4807, 0, %v4844
        %4846 = vst [vmem:[#allocation2 + $0x98] sm:$0x1] %v4845
        %v4847 = vld [vmem:[#allocation2 + $0xa4] sm:$0x1]
        %v4848 = vsel %vm4807, 0, %v4847
        %4849 = vst [vmem:[#allocation2 + $0xa4] sm:$0x1] %v4848
        %v4850 = vld [vmem:[#allocation2 + $0xb0] sm:$0x1]
        %v4851 = vsel %vm4807, 0, %v4850
        %4852 = vst [vmem:[#allocation2 + $0xb0] sm:$0x1] %v4851
        %v4853 = vld [vmem:[#allocation2 + $0xbc] sm:$0x1]
        %v4854 = vsel %vm4807, 0, %v4853
        %4855 = vst [vmem:[#allocation2 + $0xbc] sm:$0x1] %v4854
        %v4856 = vld [vmem:[#allocation2 + $0xc8] sm:$0x1]
        %v4857 = vsel %vm4807, 0, %v4856
        %4858 = vst [vmem:[#allocation2 + $0xc8] sm:$0x1] %v4857
        %v4859 = vld [vmem:[#allocation2 + $0xd4] sm:$0x1]
        %v4860 = vsel %vm4807, 0, %v4859
        %4861 = vst [vmem:[#allocation2 + $0xd4] sm:$0x1] %v4860
        %p4862 = scmp.eq.s32.totalorder %s297, 0
        // Predicated region
        $region49: #{tpu_custom_call.1} parent=47 // pred_check
          %p4863 = pneg %p4862
        $region50: #{tpu_custom_call.1} parent=47 // pred_check_branch
          %4865 = sbr.rel (%p4863) target = $region52
        $region51: #{tpu_custom_call.1} parent=47 // pred_region
          %4866 = vst [vmem:[#allocation2] sm:$0xf] 0
          %4867 = vst [vmem:[#allocation2 + $0x4] sm:$0xf] 0
          %4868 = vst [vmem:[#allocation2 + $0x8] sm:$0x1] 0
        $region52: #{tpu_custom_call.1} parent=47 // pred_fallthru
          _
        %s4869 = sadd.s32 %s297, 18
        %p4870 = scmp.eq.s32.totalorder %s4869, 18
        // Predicated region
        $region53: #{tpu_custom_call.1} parent=47 // pred_check
          %p4871 = pneg %p4870
        $region54: #{tpu_custom_call.1} parent=47 // pred_check_branch
          %4873 = sbr.rel (%p4871) target = $region56
        $region55: #{tpu_custom_call.1} parent=47 // pred_region
          %s4874 = scalar_lea.vmem [#allocation2], 204
          %4875 = vst [vmem:[%s4874] sm:$0xf] 0
          %4876 = vst [vmem:[%s4874 + $0x4] sm:$0xf] 0
          %4877 = vst [vmem:[%s4874 + $0x8] sm:$0x1] 0
        $region56: #{tpu_custom_call.1} parent=47 // pred_fallthru
          _
        %v4878 = vld [vmem:[#allocation2] sm:$0xf]
        %v4879 = vld [vmem:[#allocation2 + $0x4] sm:$0xf]
        %v4880 = vld [vmem:[#allocation2 + $0xc] sm:$0xf]
        %v4881 = vld [vmem:[#allocation2 + $0x10] sm:$0xf]
        %v4882 = vld [vmem:[#allocation2 + $0x18] sm:$0xf]
        %v4883 = vld [vmem:[#allocation2 + $0x1c] sm:$0xf]
        %v4884 = vld [vmem:[#allocation2 + $0x24] sm:$0xf]
        %v4885 = vld [vmem:[#allocation2 + $0x28] sm:$0xf]
        %v4886 = vld [vmem:[#allocation2 + $0x30] sm:$0xf]
        %v4887 = vld [vmem:[#allocation2 + $0x34] sm:$0xf]
        %v4888 = vld [vmem:[#allocation2 + $0x3c] sm:$0xf]
        %v4889 = vld [vmem:[#allocation2 + $0x40] sm:$0xf]
        %v4890 = vld [vmem:[#allocation2 + $0x48] sm:$0xf]
        %v4891 = vld [vmem:[#allocation2 + $0x4c] sm:$0xf]
        %v4892 = vld [vmem:[#allocation2 + $0x54] sm:$0xf]
        %v4893 = vld [vmem:[#allocation2 + $0x58] sm:$0xf]
        %v4894 = vld [vmem:[#allocation2 + $0x60] sm:$0xf]
        %v4895 = vld [vmem:[#allocation2 + $0x64] sm:$0xf]
        %v4896 = vld [vmem:[#allocation2 + $0x6c] sm:$0xf]
        %v4897 = vld [vmem:[#allocation2 + $0x70] sm:$0xf]
        %v4898 = vld [vmem:[#allocation2 + $0x78] sm:$0xf]
        %v4899 = vld [vmem:[#allocation2 + $0x7c] sm:$0xf]
        %v4900 = vld [vmem:[#allocation2 + $0x84] sm:$0xf]
        %v4901 = vld [vmem:[#allocation2 + $0x88] sm:$0xf]
        %v4902 = vld [vmem:[#allocation2 + $0x90] sm:$0xf]
        %v4903 = vld [vmem:[#allocation2 + $0x94] sm:$0xf]
        %v4904 = vld [vmem:[#allocation2 + $0x9c] sm:$0xf]
        %v4905 = vld [vmem:[#allocation2 + $0xa0] sm:$0xf]
        %v4906 = vld [vmem:[#allocation2 + $0xa8] sm:$0xf]
        %v4907 = vld [vmem:[#allocation2 + $0xac] sm:$0xf]
        %v4908 = vld [vmem:[#allocation2 + $0xb4] sm:$0xf]
        %v4909 = vld [vmem:[#allocation2 + $0xb8] sm:$0xf]
        %v4910 = vld [vmem:[%s4] sm:$0xf]
        %v4911 = vld [vmem:[%s4 + $0x4] sm:$0xf]
        %v4912 = vld [vmem:[%s4 + $0x8] sm:$0xf]
        %v4913 = vld [vmem:[%s4 + $0xc] sm:$0xf]
        %v4914 = vld [vmem:[%s4 + $0x10] sm:$0xf]
        %v4915 = vld [vmem:[%s4 + $0x14] sm:$0xf]
        %v4916 = vld [vmem:[%s4 + $0x18] sm:$0xf]
        %v4917 = vld [vmem:[%s4 + $0x1c] sm:$0xf]
        %v4918 = vld [vmem:[%s4 + $0x20] sm:$0xf]
        %v4919 = vld [vmem:[%s4 + $0x24] sm:$0xf]
        %v4920 = vld [vmem:[%s4 + $0x28] sm:$0xf]
        %v4921 = vld [vmem:[%s4 + $0x2c] sm:$0xf]
        %v4922 = vld [vmem:[%s4 + $0x30] sm:$0xf]
        %v4923 = vld [vmem:[%s4 + $0x34] sm:$0xf]
        %v4924 = vld [vmem:[%s4 + $0x38] sm:$0xf]
        %v4925 = vld [vmem:[%s4 + $0x3c] sm:$0xf]
        %v4926 = vld [vmem:[#allocation2 + $0x8] sm:$0x1]
        %v4927 = vld [vmem:[#allocation2 + $0x14] sm:$0x1]
        %v4928 = vld [vmem:[#allocation2 + $0x20] sm:$0x1]
        %v4929 = vld [vmem:[#allocation2 + $0x2c] sm:$0x1]
        %v4930 = vld [vmem:[#allocation2 + $0x38] sm:$0x1]
        %v4931 = vld [vmem:[#allocation2 + $0x44] sm:$0x1]
        %v4932 = vld [vmem:[#allocation2 + $0x50] sm:$0x1]
        %v4933 = vld [vmem:[#allocation2 + $0x5c] sm:$0x1]
        %v4934 = vld [vmem:[#allocation2 + $0x68] sm:$0x1]
        %v4935 = vld [vmem:[#allocation2 + $0x74] sm:$0x1]
        %v4936 = vld [vmem:[#allocation2 + $0x80] sm:$0x1]
        %v4937 = vld [vmem:[#allocation2 + $0x8c] sm:$0x1]
        %v4938 = vld [vmem:[#allocation2 + $0x98] sm:$0x1]
        %v4939 = vld [vmem:[#allocation2 + $0xa4] sm:$0x1]
        %v4940 = vld [vmem:[#allocation2 + $0xb0] sm:$0x1]
        %v4941 = vld [vmem:[#allocation2 + $0xbc] sm:$0x1]
        %vm4942 = vsmask.f32 3328
        %vm4943 = vsmask.f32 7440
        %vm4944 = vmor %vm4942, %vm4943
        %v4946 = vshrl.u32 %v4878, 16
        %v4948 = vrot.slane %v4946, 4
        %v4949 = vshll.u32 %v4878, 16
        %v4951 = vrot.slane %v4949, 5
        %v4952 = vor.u32 %v4948, %v4951
        %v4953 = vrot.slane %v4952, 4
        %v4955 = vshll.u32 %v4879, 16
        %v4957 = vrot.slane %v4955, 5
        %v4958 = vsel %vm4944, %v4953, %v4957
        %v4959 = vshrl.u32 %v4879, 16
        %v4961 = vrot.slane %v4959, 4
        %v4962 = vor.u32 %v4961, %v4957
        %v4963 = vrot.slane %v4962, 4
        %v4965 = vshll.u32 %v4926, 16
        %v4967 = vrot.slane %v4965, 5
        %v4968 = vsel %vm4944, %v4963, %v4967
        %v4970 = vshrl.u32 %v4880, 16
        %v4972 = vrot.slane %v4970, 4
        %v4973 = vshll.u32 %v4880, 16
        %v4975 = vrot.slane %v4973, 5
        %v4976 = vor.u32 %v4972, %v4975
        %v4977 = vrot.slane %v4976, 4
        %v4979 = vshll.u32 %v4881, 16
        %v4981 = vrot.slane %v4979, 5
        %v4982 = vsel %vm4944, %v4977, %v4981
        %v4983 = vshrl.u32 %v4881, 16
        %v4985 = vrot.slane %v4983, 4
        %v4986 = vor.u32 %v4985, %v4981
        %v4987 = vrot.slane %v4986, 4
        %v4989 = vshll.u32 %v4927, 16
        %v4991 = vrot.slane %v4989, 5
        %v4992 = vsel %vm4944, %v4987, %v4991
        %v4994 = vshrl.u32 %v4882, 16
        %v4996 = vrot.slane %v4994, 4
        %v4997 = vshll.u32 %v4882, 16
        %v4999 = vrot.slane %v4997, 5
        %v5000 = vor.u32 %v4996, %v4999
        %v5001 = vrot.slane %v5000, 4
        %v5003 = vshll.u32 %v4883, 16
        %v5005 = vrot.slane %v5003, 5
        %v5006 = vsel %vm4944, %v5001, %v5005
        %v5007 = vshrl.u32 %v4883, 16
        %v5009 = vrot.slane %v5007, 4
        %v5010 = vor.u32 %v5009, %v5005
        %v5011 = vrot.slane %v5010, 4
        %v5013 = vshll.u32 %v4928, 16
        %v5015 = vrot.slane %v5013, 5
        %v5016 = vsel %vm4944, %v5011, %v5015
        %v5018 = vshrl.u32 %v4884, 16
        %v5020 = vrot.slane %v5018, 4
        %v5021 = vshll.u32 %v4884, 16
        %v5023 = vrot.slane %v5021, 5
        %v5024 = vor.u32 %v5020, %v5023
        %v5025 = vrot.slane %v5024, 4
        %v5027 = vshll.u32 %v4885, 16
        %v5029 = vrot.slane %v5027, 5
        %v5030 = vsel %vm4944, %v5025, %v5029
        %v5031 = vshrl.u32 %v4885, 16
        %v5033 = vrot.slane %v5031, 4
        %v5034 = vor.u32 %v5033, %v5029
        %v5035 = vrot.slane %v5034, 4
        %v5037 = vshll.u32 %v4929, 16
        %v5039 = vrot.slane %v5037, 5
        %v5040 = vsel %vm4944, %v5035, %v5039
        %v5042 = vshrl.u32 %v4886, 16
        %v5044 = vrot.slane %v5042, 4
        %v5045 = vshll.u32 %v4886, 16
        %v5047 = vrot.slane %v5045, 5
        %v5048 = vor.u32 %v5044, %v5047
        %v5049 = vrot.slane %v5048, 4
        %v5051 = vshll.u32 %v4887, 16
        %v5053 = vrot.slane %v5051, 5
        %v5054 = vsel %vm4944, %v5049, %v5053
        %v5055 = vshrl.u32 %v4887, 16
        %v5057 = vrot.slane %v5055, 4
        %v5058 = vor.u32 %v5057, %v5053
        %v5059 = vrot.slane %v5058, 4
        %v5061 = vshll.u32 %v4930, 16
        %v5063 = vrot.slane %v5061, 5
        %v5064 = vsel %vm4944, %v5059, %v5063
        %v5066 = vshrl.u32 %v4888, 16
        %v5068 = vrot.slane %v5066, 4
        %v5069 = vshll.u32 %v4888, 16
        %v5071 = vrot.slane %v5069, 5
        %v5072 = vor.u32 %v5068, %v5071
        %v5073 = vrot.slane %v5072, 4
        %v5075 = vshll.u32 %v4889, 16
        %v5077 = vrot.slane %v5075, 5
        %v5078 = vsel %vm4944, %v5073, %v5077
        %v5079 = vshrl.u32 %v4889, 16
        %v5081 = vrot.slane %v5079, 4
        %v5082 = vor.u32 %v5081, %v5077
        %v5083 = vrot.slane %v5082, 4
        %v5085 = vshll.u32 %v4931, 16
        %v5087 = vrot.slane %v5085, 5
        %v5088 = vsel %vm4944, %v5083, %v5087
        %v5090 = vshrl.u32 %v4890, 16
        %v5092 = vrot.slane %v5090, 4
        %v5093 = vshll.u32 %v4890, 16
        %v5095 = vrot.slane %v5093, 5
        %v5096 = vor.u32 %v5092, %v5095
        %v5097 = vrot.slane %v5096, 4
        %v5099 = vshll.u32 %v4891, 16
        %v5101 = vrot.slane %v5099, 5
        %v5102 = vsel %vm4944, %v5097, %v5101
        %v5103 = vshrl.u32 %v4891, 16
        %v5105 = vrot.slane %v5103, 4
        %v5106 = vor.u32 %v5105, %v5101
        %v5107 = vrot.slane %v5106, 4
        %v5109 = vshll.u32 %v4932, 16
        %v5111 = vrot.slane %v5109, 5
        %v5112 = vsel %vm4944, %v5107, %v5111
        %v5114 = vshrl.u32 %v4892, 16
        %v5116 = vrot.slane %v5114, 4
        %v5117 = vshll.u32 %v4892, 16
        %v5119 = vrot.slane %v5117, 5
        %v5120 = vor.u32 %v5116, %v5119
        %v5121 = vrot.slane %v5120, 4
        %v5123 = vshll.u32 %v4893, 16
        %v5125 = vrot.slane %v5123, 5
        %v5126 = vsel %vm4944, %v5121, %v5125
        %v5127 = vshrl.u32 %v4893, 16
        %v5129 = vrot.slane %v5127, 4
        %v5130 = vor.u32 %v5129, %v5125
        %v5131 = vrot.slane %v5130, 4
        %v5133 = vshll.u32 %v4933, 16
        %v5135 = vrot.slane %v5133, 5
        %v5136 = vsel %vm4944, %v5131, %v5135
        %v5138 = vshrl.u32 %v4894, 16
        %v5140 = vrot.slane %v5138, 4
        %v5141 = vshll.u32 %v4894, 16
        %v5143 = vrot.slane %v5141, 5
        %v5144 = vor.u32 %v5140, %v5143
        %v5145 = vrot.slane %v5144, 4
        %v5147 = vshll.u32 %v4895, 16
        %v5149 = vrot.slane %v5147, 5
        %v5150 = vsel %vm4944, %v5145, %v5149
        %v5151 = vshrl.u32 %v4895, 16
        %v5153 = vrot.slane %v5151, 4
        %v5154 = vor.u32 %v5153, %v5149
        %v5155 = vrot.slane %v5154, 4
        %v5157 = vshll.u32 %v4934, 16
        %v5159 = vrot.slane %v5157, 5
        %v5160 = vsel %vm4944, %v5155, %v5159
        %v5162 = vshrl.u32 %v4896, 16
        %v5164 = vrot.slane %v5162, 4
        %v5165 = vshll.u32 %v4896, 16
        %v5167 = vrot.slane %v5165, 5
        %v5168 = vor.u32 %v5164, %v5167
        %v5169 = vrot.slane %v5168, 4
        %v5171 = vshll.u32 %v4897, 16
        %v5173 = vrot.slane %v5171, 5
        %v5174 = vsel %vm4944, %v5169, %v5173
        %v5175 = vshrl.u32 %v4897, 16
        %v5177 = vrot.slane %v5175, 4
        %v5178 = vor.u32 %v5177, %v5173
        %v5179 = vrot.slane %v5178, 4
        %v5181 = vshll.u32 %v4935, 16
        %v5183 = vrot.slane %v5181, 5
        %v5184 = vsel %vm4944, %v5179, %v5183
        %v5186 = vshrl.u32 %v4898, 16
        %v5188 = vrot.slane %v5186, 4
        %v5189 = vshll.u32 %v4898, 16
        %v5191 = vrot.slane %v5189, 5
        %v5192 = vor.u32 %v5188, %v5191
        %v5193 = vrot.slane %v5192, 4
        %v5195 = vshll.u32 %v4899, 16
        %v5197 = vrot.slane %v5195, 5
        %v5198 = vsel %vm4944, %v5193, %v5197
        %v5199 = vshrl.u32 %v4899, 16
        %v5201 = vrot.slane %v5199, 4
        %v5202 = vor.u32 %v5201, %v5197
        %v5203 = vrot.slane %v5202, 4
        %v5205 = vshll.u32 %v4936, 16
        %v5207 = vrot.slane %v5205, 5
        %v5208 = vsel %vm4944, %v5203, %v5207
        %v5210 = vshrl.u32 %v4900, 16
        %v5212 = vrot.slane %v5210, 4
        %v5213 = vshll.u32 %v4900, 16
        %v5215 = vrot.slane %v5213, 5
        %v5216 = vor.u32 %v5212, %v5215
        %v5217 = vrot.slane %v5216, 4
        %v5219 = vshll.u32 %v4901, 16
        %v5221 = vrot.slane %v5219, 5
        %v5222 = vsel %vm4944, %v5217, %v5221
        %v5223 = vshrl.u32 %v4901, 16
        %v5225 = vrot.slane %v5223, 4
        %v5226 = vor.u32 %v5225, %v5221
        %v5227 = vrot.slane %v5226, 4
        %v5229 = vshll.u32 %v4937, 16
        %v5231 = vrot.slane %v5229, 5
        %v5232 = vsel %vm4944, %v5227, %v5231
        %v5234 = vshrl.u32 %v4902, 16
        %v5236 = vrot.slane %v5234, 4
        %v5237 = vshll.u32 %v4902, 16
        %v5239 = vrot.slane %v5237, 5
        %v5240 = vor.u32 %v5236, %v5239
        %v5241 = vrot.slane %v5240, 4
        %v5243 = vshll.u32 %v4903, 16
        %v5245 = vrot.slane %v5243, 5
        %v5246 = vsel %vm4944, %v5241, %v5245
        %v5247 = vshrl.u32 %v4903, 16
        %v5249 = vrot.slane %v5247, 4
        %v5250 = vor.u32 %v5249, %v5245
        %v5251 = vrot.slane %v5250, 4
        %v5253 = vshll.u32 %v4938, 16
        %v5255 = vrot.slane %v5253, 5
        %v5256 = vsel %vm4944, %v5251, %v5255
        %v5258 = vshrl.u32 %v4904, 16
        %v5260 = vrot.slane %v5258, 4
        %v5261 = vshll.u32 %v4904, 16
        %v5263 = vrot.slane %v5261, 5
        %v5264 = vor.u32 %v5260, %v5263
        %v5265 = vrot.slane %v5264, 4
        %v5267 = vshll.u32 %v4905, 16
        %v5269 = vrot.slane %v5267, 5
        %v5270 = vsel %vm4944, %v5265, %v5269
        %v5271 = vshrl.u32 %v4905, 16
        %v5273 = vrot.slane %v5271, 4
        %v5274 = vor.u32 %v5273, %v5269
        %v5275 = vrot.slane %v5274, 4
        %v5277 = vshll.u32 %v4939, 16
        %v5279 = vrot.slane %v5277, 5
        %v5280 = vsel %vm4944, %v5275, %v5279
        %v5282 = vshrl.u32 %v4906, 16
        %v5284 = vrot.slane %v5282, 4
        %v5285 = vshll.u32 %v4906, 16
        %v5287 = vrot.slane %v5285, 5
        %v5288 = vor.u32 %v5284, %v5287
        %v5289 = vrot.slane %v5288, 4
        %v5291 = vshll.u32 %v4907, 16
        %v5293 = vrot.slane %v5291, 5
        %v5294 = vsel %vm4944, %v5289, %v5293
        %v5295 = vshrl.u32 %v4907, 16
        %v5297 = vrot.slane %v5295, 4
        %v5298 = vor.u32 %v5297, %v5293
        %v5299 = vrot.slane %v5298, 4
        %v5301 = vshll.u32 %v4940, 16
        %v5303 = vrot.slane %v5301, 5
        %v5304 = vsel %vm4944, %v5299, %v5303
        %v5306 = vshrl.u32 %v4908, 16
        %v5308 = vrot.slane %v5306, 4
        %v5309 = vshll.u32 %v4908, 16
        %v5311 = vrot.slane %v5309, 5
        %v5312 = vor.u32 %v5308, %v5311
        %v5313 = vrot.slane %v5312, 4
        %v5315 = vshll.u32 %v4909, 16
        %v5317 = vrot.slane %v5315, 5
        %v5318 = vsel %vm4944, %v5313, %v5317
        %v5319 = vshrl.u32 %v4909, 16
        %v5321 = vrot.slane %v5319, 4
        %v5322 = vor.u32 %v5321, %v5317
        %v5323 = vrot.slane %v5322, 4
        %v5325 = vshll.u32 %v4941, 16
        %v5327 = vrot.slane %v5325, 5
        %v5328 = vsel %vm4944, %v5323, %v5327
        %s5329 = scalar_lea.vmem %s4, 64
        %v5330 = vld [vmem:[%s5329] sm:$0xf]
        %v5331 = vld [vmem:[%s5329 + $0x4] sm:$0xf]
        %v5332 = vld [vmem:[%s5329 + $0x8] sm:$0xf]
        %v5333 = vld [vmem:[%s5329 + $0xc] sm:$0xf]
        %v5334 = vld [vmem:[%s5329 + $0x10] sm:$0xf]
        %v5335 = vld [vmem:[%s5329 + $0x14] sm:$0xf]
        %v5336 = vld [vmem:[%s5329 + $0x18] sm:$0xf]
        %v5337 = vld [vmem:[%s5329 + $0x1c] sm:$0xf]
        %v5338 = vld [vmem:[%s5329 + $0x20] sm:$0xf]
        %v5339 = vld [vmem:[%s5329 + $0x24] sm:$0xf]
        %v5340 = vld [vmem:[%s5329 + $0x28] sm:$0xf]
        %v5341 = vld [vmem:[%s5329 + $0x2c] sm:$0xf]
        %v5342 = vld [vmem:[%s5329 + $0x30] sm:$0xf]
        %v5343 = vld [vmem:[%s5329 + $0x34] sm:$0xf]
        %v5344 = vld [vmem:[%s5329 + $0x38] sm:$0xf]
        %v5345 = vld [vmem:[%s5329 + $0x3c] sm:$0xf]
        %v5346 = vunpack.c.l.b16 %v4958
        %v5347 = vunpack.c.l.b16 %v4968
        %v5348 = vunpack.c.l.b16 %v4982
        %v5349 = vunpack.c.l.b16 %v4992
        %v5350 = vunpack.c.l.b16 %v5006
        %v5351 = vunpack.c.l.b16 %v5016
        %v5352 = vunpack.c.l.b16 %v5030
        %v5353 = vunpack.c.l.b16 %v5040
        %v5354 = vunpack.c.l.b16 %v5054
        %v5355 = vunpack.c.l.b16 %v5064
        %v5356 = vunpack.c.l.b16 %v5078
        %v5357 = vunpack.c.l.b16 %v5088
        %v5358 = vunpack.c.l.b16 %v5102
        %v5359 = vunpack.c.l.b16 %v5112
        %v5360 = vunpack.c.l.b16 %v5126
        %v5361 = vunpack.c.l.b16 %v5136
        %v5362 = vunpack.c.l.b16 %v5150
        %v5363 = vunpack.c.l.b16 %v5160
        %v5364 = vunpack.c.l.b16 %v5174
        %v5365 = vunpack.c.l.b16 %v5184
        %v5366 = vunpack.c.l.b16 %v5198
        %v5367 = vunpack.c.l.b16 %v5208
        %v5368 = vunpack.c.l.b16 %v5222
        %v5369 = vunpack.c.l.b16 %v5232
        %v5370 = vunpack.c.l.b16 %v5246
        %v5371 = vunpack.c.l.b16 %v5256
        %v5372 = vunpack.c.l.b16 %v5270
        %v5373 = vunpack.c.l.b16 %v5280
        %v5374 = vunpack.c.l.b16 %v5294
        %v5375 = vunpack.c.l.b16 %v5304
        %v5376 = vunpack.c.l.b16 %v5318
        %v5377 = vunpack.c.l.b16 %v5328
        %v5378 = vpack.c.b16 %v5347, %v5346
        %v5379 = vpack.c.b16 %v5349, %v5348
        %v5380 = vpack.c.b16 %v5351, %v5350
        %v5381 = vpack.c.b16 %v5353, %v5352
        %v5382 = vpack.c.b16 %v5355, %v5354
        %v5383 = vpack.c.b16 %v5357, %v5356
        %v5384 = vpack.c.b16 %v5359, %v5358
        %v5385 = vpack.c.b16 %v5361, %v5360
        %v5386 = vpack.c.b16 %v5363, %v5362
        %v5387 = vpack.c.b16 %v5365, %v5364
        %v5388 = vpack.c.b16 %v5367, %v5366
        %v5389 = vpack.c.b16 %v5369, %v5368
        %v5390 = vpack.c.b16 %v5371, %v5370
        %v5391 = vpack.c.b16 %v5373, %v5372
        %v5392 = vpack.c.b16 %v5375, %v5374
        %v5393 = vpack.c.b16 %v5377, %v5376
        %v5426 = vunpack.c.l.b16 %v5330
        %v5427 = vunpack.c.l.b16 %v5331
        %v5428 = vunpack.c.l.b16 %v5332
        %v5429 = vunpack.c.l.b16 %v5333
        %v5430 = vunpack.c.l.b16 %v5334
        %v5431 = vunpack.c.l.b16 %v5335
        %v5432 = vunpack.c.l.b16 %v5336
        %v5433 = vunpack.c.l.b16 %v5337
        %v5434 = vunpack.c.l.b16 %v5338
        %v5435 = vunpack.c.l.b16 %v5339
        %v5436 = vunpack.c.l.b16 %v5340
        %v5437 = vunpack.c.l.b16 %v5341
        %v5438 = vunpack.c.l.b16 %v5342
        %v5439 = vunpack.c.l.b16 %v5343
        %v5440 = vunpack.c.l.b16 %v5344
        %v5441 = vunpack.c.l.b16 %v5345
        %v5442 = vpack.c.b16 %v5427, %v5426
        %v5443 = vpack.c.b16 %v5429, %v5428
        %v5444 = vpack.c.b16 %v5431, %v5430
        %v5445 = vpack.c.b16 %v5433, %v5432
        %v5446 = vpack.c.b16 %v5435, %v5434
        %v5447 = vpack.c.b16 %v5437, %v5436
        %v5448 = vpack.c.b16 %v5439, %v5438
        %v5449 = vpack.c.b16 %v5441, %v5440
        %5458 = vmatprep.subr.bf16.mxu0 0
        %5459 = vmatpush1.bf16.msra.mxu0 %v5449
        %5460 = vmatprep.subr.bf16.mxu0 0
        %5461 = vmatpush1.bf16.msra.mxu0 %v5448
        %5462 = vmatprep.subr.bf16.mxu0 0
        %5463 = vmatpush1.bf16.msra.mxu0 %v5447
        %5464 = vmatprep.subr.bf16.mxu0 0
        %5465 = vmatpush1.bf16.msra.mxu0 %v5446
        %5466 = vmatprep.subr.bf16.mxu0 0
        %5467 = vmatpush1.bf16.msra.mxu0 %v5445
        %5468 = vmatprep.subr.bf16.mxu0 0
        %5469 = vmatpush1.bf16.msra.mxu0 %v5444
        %5470 = vmatprep.subr.bf16.mxu0 0
        %5471 = vmatpush1.bf16.msra.mxu0 %v5443
        %5472 = vmatprep.subr.bf16.mxu0 0
        %5473 = vmatpush1.bf16.msra.mxu0 %v5442
        %5474 = vmatprep.subr.bf16.mxu0 0
        %5475 = vmatpush2.bf16.msra.mxu0 0
        %5476 = vmatprep.subr.bf16.mxu0 0
        %5477 = vmatpush2.bf16.msra.mxu0 0
        %5478 = vmatprep.subr.bf16.mxu0 0
        %5479 = vmatpush2.bf16.msra.mxu0 0
        %5480 = vmatprep.subr.bf16.mxu0 0
        %5481 = vmatpush2.bf16.msra.mxu0 0
        %5482 = vmatprep.subr.bf16.mxu0 0
        %5483 = vmatpush2.bf16.msra.mxu0 0
        %5484 = vmatprep.subr.bf16.mxu0 0
        %5485 = vmatpush2.bf16.msra.mxu0 0
        %5486 = vmatprep.subr.bf16.mxu0 0
        %5487 = vmatpush2.bf16.msra.mxu0 0
        %5488 = vmatprep.subr.bf16.mxu0 0
        %5489 = vmatpush2.bf16.msra.mxu0 0
        %5490 = vmatprep.mubr.bf16.mxu0 0
        %5491 = vmatmul.mubr.bf16.gmra.mxu0 %v5378
        %v5492 = vpop.f32.mrf.mxu0
        %v5493 = vadd.f32 0.0, %v5492
        %v5494 = vpop.f32.mrf.mxu0
        %v5495 = vpop.f32.mrf.mxu0
        %v5496 = vadd.f32 0.0, %v5495
        %v5497 = vpop.f32.mrf.mxu0
        %5498 = vmatprep.mubr.bf16.mxu0 0
        %5499 = vmatmul.mubr.bf16.gmra.mxu0 %v5379
        %v5500 = vpop.f32.mrf.mxu0
        %v5501 = vadd.f32 0.0, %v5500
        %v5502 = vpop.f32.mrf.mxu0
        %v5503 = vpop.f32.mrf.mxu0
        %v5504 = vadd.f32 0.0, %v5503
        %v5505 = vpop.f32.mrf.mxu0
        %5506 = vmatprep.mubr.bf16.mxu0 0
        %5507 = vmatmul.mubr.bf16.gmra.mxu0 %v5380
        %v5508 = vpop.f32.mrf.mxu0
        %v5509 = vadd.f32 0.0, %v5508
        %v5510 = vpop.f32.mrf.mxu0
        %v5511 = vpop.f32.mrf.mxu0
        %v5512 = vadd.f32 0.0, %v5511
        %v5513 = vpop.f32.mrf.mxu0
        %5514 = vmatprep.mubr.bf16.mxu0 0
        %5515 = vmatmul.mubr.bf16.gmra.mxu0 %v5381
        %v5516 = vpop.f32.mrf.mxu0
        %v5517 = vadd.f32 0.0, %v5516
        %v5518 = vpop.f32.mrf.mxu0
        %v5519 = vpop.f32.mrf.mxu0
        %v5520 = vadd.f32 0.0, %v5519
        %v5521 = vpop.f32.mrf.mxu0
        %5522 = vmatprep.mubr.bf16.mxu0 0
        %5523 = vmatmul.mubr.bf16.gmra.mxu0 %v5382
        %v5524 = vpop.f32.mrf.mxu0
        %v5525 = vadd.f32 0.0, %v5524
        %v5526 = vpop.f32.mrf.mxu0
        %v5527 = vpop.f32.mrf.mxu0
        %v5528 = vadd.f32 0.0, %v5527
        %v5529 = vpop.f32.mrf.mxu0
        %5530 = vmatprep.mubr.bf16.mxu0 0
        %5531 = vmatmul.mubr.bf16.gmra.mxu0 %v5383
        %v5532 = vpop.f32.mrf.mxu0
        %v5533 = vadd.f32 0.0, %v5532
        %v5534 = vpop.f32.mrf.mxu0
        %v5535 = vpop.f32.mrf.mxu0
        %v5536 = vadd.f32 0.0, %v5535
        %v5537 = vpop.f32.mrf.mxu0
        %5538 = vmatprep.mubr.bf16.mxu0 0
        %5539 = vmatmul.mubr.bf16.gmra.mxu0 %v5384
        %v5540 = vpop.f32.mrf.mxu0
        %v5541 = vadd.f32 0.0, %v5540
        %v5542 = vpop.f32.mrf.mxu0
        %v5543 = vpop.f32.mrf.mxu0
        %v5544 = vadd.f32 0.0, %v5543
        %v5545 = vpop.f32.mrf.mxu0
        %5546 = vmatprep.mubr.bf16.mxu0 0
        %5547 = vmatmul.mubr.bf16.gmra.mxu0 %v5385
        %v5548 = vpop.f32.mrf.mxu0
        %v5549 = vadd.f32 0.0, %v5548
        %v5550 = vpop.f32.mrf.mxu0
        %v5551 = vpop.f32.mrf.mxu0
        %v5552 = vadd.f32 0.0, %v5551
        %v5553 = vpop.f32.mrf.mxu0
        %5554 = vmatprep.mubr.bf16.mxu0 0
        %5555 = vmatmul.mubr.bf16.gmra.mxu0 %v5386
        %v5556 = vpop.f32.mrf.mxu0
        %v5557 = vadd.f32 0.0, %v5556
        %v5558 = vpop.f32.mrf.mxu0
        %v5559 = vpop.f32.mrf.mxu0
        %v5560 = vadd.f32 0.0, %v5559
        %v5561 = vpop.f32.mrf.mxu0
        %5562 = vmatprep.mubr.bf16.mxu0 0
        %5563 = vmatmul.mubr.bf16.gmra.mxu0 %v5387
        %v5564 = vpop.f32.mrf.mxu0
        %v5565 = vadd.f32 0.0, %v5564
        %v5566 = vpop.f32.mrf.mxu0
        %v5567 = vpop.f32.mrf.mxu0
        %v5568 = vadd.f32 0.0, %v5567
        %v5569 = vpop.f32.mrf.mxu0
        %5570 = vmatprep.mubr.bf16.mxu0 0
        %5571 = vmatmul.mubr.bf16.gmra.mxu0 %v5388
        %v5572 = vpop.f32.mrf.mxu0
        %v5573 = vadd.f32 0.0, %v5572
        %v5574 = vpop.f32.mrf.mxu0
        %v5575 = vpop.f32.mrf.mxu0
        %v5576 = vadd.f32 0.0, %v5575
        %v5577 = vpop.f32.mrf.mxu0
        %5578 = vmatprep.mubr.bf16.mxu0 0
        %5579 = vmatmul.mubr.bf16.gmra.mxu0 %v5389
        %v5580 = vpop.f32.mrf.mxu0
        %v5581 = vadd.f32 0.0, %v5580
        %v5582 = vpop.f32.mrf.mxu0
        %v5583 = vpop.f32.mrf.mxu0
        %v5584 = vadd.f32 0.0, %v5583
        %v5585 = vpop.f32.mrf.mxu0
        %5586 = vmatprep.mubr.bf16.mxu0 0
        %5587 = vmatmul.mubr.bf16.gmra.mxu0 %v5390
        %v5588 = vpop.f32.mrf.mxu0
        %v5589 = vadd.f32 0.0, %v5588
        %v5590 = vpop.f32.mrf.mxu0
        %v5591 = vpop.f32.mrf.mxu0
        %v5592 = vadd.f32 0.0, %v5591
        %v5593 = vpop.f32.mrf.mxu0
        %5594 = vmatprep.mubr.bf16.mxu0 0
        %5595 = vmatmul.mubr.bf16.gmra.mxu0 %v5391
        %v5596 = vpop.f32.mrf.mxu0
        %v5597 = vadd.f32 0.0, %v5596
        %v5598 = vpop.f32.mrf.mxu0
        %v5599 = vpop.f32.mrf.mxu0
        %v5600 = vadd.f32 0.0, %v5599
        %v5601 = vpop.f32.mrf.mxu0
        %5602 = vmatprep.mubr.bf16.mxu0 0
        %5603 = vmatmul.mubr.bf16.gmra.mxu0 %v5392
        %v5604 = vpop.f32.mrf.mxu0
        %v5605 = vadd.f32 0.0, %v5604
        %v5606 = vpop.f32.mrf.mxu0
        %v5607 = vpop.f32.mrf.mxu0
        %v5608 = vadd.f32 0.0, %v5607
        %v5609 = vpop.f32.mrf.mxu0
        %5610 = vmatprep.mubr.bf16.mxu0 0
        %5611 = vmatmul.mubr.bf16.gmra.mxu0 %v5393
        %v5612 = vpop.f32.mrf.mxu0
        %v5613 = vadd.f32 0.0, %v5612
        %v5614 = vpop.f32.mrf.mxu0
        %v5615 = vpop.f32.mrf.mxu0
        %v5616 = vadd.f32 0.0, %v5615
        %v5617 = vpop.f32.mrf.mxu0
        %5618 = vdwg.mxu0
        %v5651 = vunpack.c.l.b16 %v4878
        %v5652 = vunpack.c.l.b16 %v4879
        %v5653 = vunpack.c.l.b16 %v4880
        %v5654 = vunpack.c.l.b16 %v4881
        %v5655 = vunpack.c.l.b16 %v4882
        %v5656 = vunpack.c.l.b16 %v4883
        %v5657 = vunpack.c.l.b16 %v4884
        %v5658 = vunpack.c.l.b16 %v4885
        %v5659 = vunpack.c.l.b16 %v4886
        %v5660 = vunpack.c.l.b16 %v4887
        %v5661 = vunpack.c.l.b16 %v4888
        %v5662 = vunpack.c.l.b16 %v4889
        %v5663 = vunpack.c.l.b16 %v4890
        %v5664 = vunpack.c.l.b16 %v4891
        %v5665 = vunpack.c.l.b16 %v4892
        %v5666 = vunpack.c.l.b16 %v4893
        %v5667 = vunpack.c.l.b16 %v4894
        %v5668 = vunpack.c.l.b16 %v4895
        %v5669 = vunpack.c.l.b16 %v4896
        %v5670 = vunpack.c.l.b16 %v4897
        %v5671 = vunpack.c.l.b16 %v4898
        %v5672 = vunpack.c.l.b16 %v4899
        %v5673 = vunpack.c.l.b16 %v4900
        %v5674 = vunpack.c.l.b16 %v4901
        %v5675 = vunpack.c.l.b16 %v4902
        %v5676 = vunpack.c.l.b16 %v4903
        %v5677 = vunpack.c.l.b16 %v4904
        %v5678 = vunpack.c.l.b16 %v4905
        %v5679 = vunpack.c.l.b16 %v4906
        %v5680 = vunpack.c.l.b16 %v4907
        %v5681 = vunpack.c.l.b16 %v4908
        %v5682 = vunpack.c.l.b16 %v4909
        %v5683 = vpack.c.b16 %v5652, %v5651
        %v5684 = vpack.c.b16 %v5654, %v5653
        %v5685 = vpack.c.b16 %v5656, %v5655
        %v5686 = vpack.c.b16 %v5658, %v5657
        %v5687 = vpack.c.b16 %v5660, %v5659
        %v5688 = vpack.c.b16 %v5662, %v5661
        %v5689 = vpack.c.b16 %v5664, %v5663
        %v5690 = vpack.c.b16 %v5666, %v5665
        %v5691 = vpack.c.b16 %v5668, %v5667
        %v5692 = vpack.c.b16 %v5670, %v5669
        %v5693 = vpack.c.b16 %v5672, %v5671
        %v5694 = vpack.c.b16 %v5674, %v5673
        %v5695 = vpack.c.b16 %v5676, %v5675
        %v5696 = vpack.c.b16 %v5678, %v5677
        %v5697 = vpack.c.b16 %v5680, %v5679
        %v5698 = vpack.c.b16 %v5682, %v5681
        %v5731 = vunpack.c.l.b16 %v4910
        %v5732 = vunpack.c.l.b16 %v4911
        %v5733 = vunpack.c.l.b16 %v4912
        %v5734 = vunpack.c.l.b16 %v4913
        %v5735 = vunpack.c.l.b16 %v4914
        %v5736 = vunpack.c.l.b16 %v4915
        %v5737 = vunpack.c.l.b16 %v4916
        %v5738 = vunpack.c.l.b16 %v4917
        %v5739 = vunpack.c.l.b16 %v4918
        %v5740 = vunpack.c.l.b16 %v4919
        %v5741 = vunpack.c.l.b16 %v4920
        %v5742 = vunpack.c.l.b16 %v4921
        %v5743 = vunpack.c.l.b16 %v4922
        %v5744 = vunpack.c.l.b16 %v4923
        %v5745 = vunpack.c.l.b16 %v4924
        %v5746 = vunpack.c.l.b16 %v4925
        %v5747 = vpack.c.b16 %v5732, %v5731
        %v5748 = vpack.c.b16 %v5734, %v5733
        %v5749 = vpack.c.b16 %v5736, %v5735
        %v5750 = vpack.c.b16 %v5738, %v5737
        %v5751 = vpack.c.b16 %v5740, %v5739
        %v5752 = vpack.c.b16 %v5742, %v5741
        %v5753 = vpack.c.b16 %v5744, %v5743
        %v5754 = vpack.c.b16 %v5746, %v5745
        %5763 = vmatprep.subr.bf16.mxu0 0
        %5764 = vmatpush1.bf16.msra.mxu0 %v5754
        %5765 = vmatprep.subr.bf16.mxu0 0
        %5766 = vmatpush1.bf16.msra.mxu0 %v5753
        %5767 = vmatprep.subr.bf16.mxu0 0
        %5768 = vmatpush1.bf16.msra.mxu0 %v5752
        %5769 = vmatprep.subr.bf16.mxu0 0
        %5770 = vmatpush1.bf16.msra.mxu0 %v5751
        %5771 = vmatprep.subr.bf16.mxu0 0
        %5772 = vmatpush1.bf16.msra.mxu0 %v5750
        %5773 = vmatprep.subr.bf16.mxu0 0
        %5774 = vmatpush1.bf16.msra.mxu0 %v5749
        %5775 = vmatprep.subr.bf16.mxu0 0
        %5776 = vmatpush1.bf16.msra.mxu0 %v5748
        %5777 = vmatprep.subr.bf16.mxu0 0
        %5778 = vmatpush1.bf16.msra.mxu0 %v5747
        %5779 = vmatprep.subr.bf16.mxu0 0
        %5780 = vmatpush2.bf16.msra.mxu0 0
        %5781 = vmatprep.subr.bf16.mxu0 0
        %5782 = vmatpush2.bf16.msra.mxu0 0
        %5783 = vmatprep.subr.bf16.mxu0 0
        %5784 = vmatpush2.bf16.msra.mxu0 0
        %5785 = vmatprep.subr.bf16.mxu0 0
        %5786 = vmatpush2.bf16.msra.mxu0 0
        %5787 = vmatprep.subr.bf16.mxu0 0
        %5788 = vmatpush2.bf16.msra.mxu0 0
        %5789 = vmatprep.subr.bf16.mxu0 0
        %5790 = vmatpush2.bf16.msra.mxu0 0
        %5791 = vmatprep.subr.bf16.mxu0 0
        %5792 = vmatpush2.bf16.msra.mxu0 0
        %5793 = vmatprep.subr.bf16.mxu0 0
        %5794 = vmatpush2.bf16.msra.mxu0 0
        %5795 = vmatprep.mubr.bf16.mxu0 0
        %5796 = vmatmul.mubr.bf16.gmra.mxu0 %v5683
        %v5797 = vpop.f32.mrf.mxu0
        %v5798 = vadd.f32 %v5493, %v5797
        %v5799 = vpop.f32.mrf.mxu0
        %v5800 = vpop.f32.mrf.mxu0
        %v5801 = vadd.f32 %v5496, %v5800
        %v5802 = vpop.f32.mrf.mxu0
        %5803 = vmatprep.mubr.bf16.mxu0 0
        %5804 = vmatmul.mubr.bf16.gmra.mxu0 %v5684
        %v5805 = vpop.f32.mrf.mxu0
        %v5806 = vadd.f32 %v5501, %v5805
        %v5807 = vpop.f32.mrf.mxu0
        %v5808 = vpop.f32.mrf.mxu0
        %v5809 = vadd.f32 %v5504, %v5808
        %v5810 = vpop.f32.mrf.mxu0
        %5811 = vmatprep.mubr.bf16.mxu0 0
        %5812 = vmatmul.mubr.bf16.gmra.mxu0 %v5685
        %v5813 = vpop.f32.mrf.mxu0
        %v5814 = vadd.f32 %v5509, %v5813
        %v5815 = vpop.f32.mrf.mxu0
        %v5816 = vpop.f32.mrf.mxu0
        %v5817 = vadd.f32 %v5512, %v5816
        %v5818 = vpop.f32.mrf.mxu0
        %5819 = vmatprep.mubr.bf16.mxu0 0
        %5820 = vmatmul.mubr.bf16.gmra.mxu0 %v5686
        %v5821 = vpop.f32.mrf.mxu0
        %v5822 = vadd.f32 %v5517, %v5821
        %v5823 = vpop.f32.mrf.mxu0
        %v5824 = vpop.f32.mrf.mxu0
        %v5825 = vadd.f32 %v5520, %v5824
        %v5826 = vpop.f32.mrf.mxu0
        %5827 = vmatprep.mubr.bf16.mxu0 0
        %5828 = vmatmul.mubr.bf16.gmra.mxu0 %v5687
        %v5829 = vpop.f32.mrf.mxu0
        %v5830 = vadd.f32 %v5525, %v5829
        %v5831 = vpop.f32.mrf.mxu0
        %v5832 = vpop.f32.mrf.mxu0
        %v5833 = vadd.f32 %v5528, %v5832
        %v5834 = vpop.f32.mrf.mxu0
        %5835 = vmatprep.mubr.bf16.mxu0 0
        %5836 = vmatmul.mubr.bf16.gmra.mxu0 %v5688
        %v5837 = vpop.f32.mrf.mxu0
        %v5838 = vadd.f32 %v5533, %v5837
        %v5839 = vpop.f32.mrf.mxu0
        %v5840 = vpop.f32.mrf.mxu0
        %v5841 = vadd.f32 %v5536, %v5840
        %v5842 = vpop.f32.mrf.mxu0
        %5843 = vmatprep.mubr.bf16.mxu0 0
        %5844 = vmatmul.mubr.bf16.gmra.mxu0 %v5689
        %v5845 = vpop.f32.mrf.mxu0
        %v5846 = vadd.f32 %v5541, %v5845
        %v5847 = vpop.f32.mrf.mxu0
        %v5848 = vpop.f32.mrf.mxu0
        %v5849 = vadd.f32 %v5544, %v5848
        %v5850 = vpop.f32.mrf.mxu0
        %5851 = vmatprep.mubr.bf16.mxu0 0
        %5852 = vmatmul.mubr.bf16.gmra.mxu0 %v5690
        %v5853 = vpop.f32.mrf.mxu0
        %v5854 = vadd.f32 %v5549, %v5853
        %v5855 = vpop.f32.mrf.mxu0
        %v5856 = vpop.f32.mrf.mxu0
        %v5857 = vadd.f32 %v5552, %v5856
        %v5858 = vpop.f32.mrf.mxu0
        %5859 = vmatprep.mubr.bf16.mxu0 0
        %5860 = vmatmul.mubr.bf16.gmra.mxu0 %v5691
        %v5861 = vpop.f32.mrf.mxu0
        %v5862 = vadd.f32 %v5557, %v5861
        %v5863 = vpop.f32.mrf.mxu0
        %v5864 = vpop.f32.mrf.mxu0
        %v5865 = vadd.f32 %v5560, %v5864
        %v5866 = vpop.f32.mrf.mxu0
        %5867 = vmatprep.mubr.bf16.mxu0 0
        %5868 = vmatmul.mubr.bf16.gmra.mxu0 %v5692
        %v5869 = vpop.f32.mrf.mxu0
        %v5870 = vadd.f32 %v5565, %v5869
        %v5871 = vpop.f32.mrf.mxu0
        %v5872 = vpop.f32.mrf.mxu0
        %v5873 = vadd.f32 %v5568, %v5872
        %v5874 = vpop.f32.mrf.mxu0
        %5875 = vmatprep.mubr.bf16.mxu0 0
        %5876 = vmatmul.mubr.bf16.gmra.mxu0 %v5693
        %v5877 = vpop.f32.mrf.mxu0
        %v5878 = vadd.f32 %v5573, %v5877
        %v5879 = vpop.f32.mrf.mxu0
        %v5880 = vpop.f32.mrf.mxu0
        %v5881 = vadd.f32 %v5576, %v5880
        %v5882 = vpop.f32.mrf.mxu0
        %5883 = vmatprep.mubr.bf16.mxu0 0
        %5884 = vmatmul.mubr.bf16.gmra.mxu0 %v5694
        %v5885 = vpop.f32.mrf.mxu0
        %v5886 = vadd.f32 %v5581, %v5885
        %v5887 = vpop.f32.mrf.mxu0
        %v5888 = vpop.f32.mrf.mxu0
        %v5889 = vadd.f32 %v5584, %v5888
        %v5890 = vpop.f32.mrf.mxu0
        %5891 = vmatprep.mubr.bf16.mxu0 0
        %5892 = vmatmul.mubr.bf16.gmra.mxu0 %v5695
        %v5893 = vpop.f32.mrf.mxu0
        %v5894 = vadd.f32 %v5589, %v5893
        %v5895 = vpop.f32.mrf.mxu0
        %v5896 = vpop.f32.mrf.mxu0
        %v5897 = vadd.f32 %v5592, %v5896
        %v5898 = vpop.f32.mrf.mxu0
        %5899 = vmatprep.mubr.bf16.mxu0 0
        %5900 = vmatmul.mubr.bf16.gmra.mxu0 %v5696
        %v5901 = vpop.f32.mrf.mxu0
        %v5902 = vadd.f32 %v5597, %v5901
        %v5903 = vpop.f32.mrf.mxu0
        %v5904 = vpop.f32.mrf.mxu0
        %v5905 = vadd.f32 %v5600, %v5904
        %v5906 = vpop.f32.mrf.mxu0
        %5907 = vmatprep.mubr.bf16.mxu0 0
        %5908 = vmatmul.mubr.bf16.gmra.mxu0 %v5697
        %v5909 = vpop.f32.mrf.mxu0
        %v5910 = vadd.f32 %v5605, %v5909
        %v5911 = vpop.f32.mrf.mxu0
        %v5912 = vpop.f32.mrf.mxu0
        %v5913 = vadd.f32 %v5608, %v5912
        %v5914 = vpop.f32.mrf.mxu0
        %5915 = vmatprep.mubr.bf16.mxu0 0
        %5916 = vmatmul.mubr.bf16.gmra.mxu0 %v5698
        %v5917 = vpop.f32.mrf.mxu0
        %v5918 = vadd.f32 %v5613, %v5917
        %v5919 = vpop.f32.mrf.mxu0
        %v5920 = vpop.f32.mrf.mxu0
        %v5921 = vadd.f32 %v5616, %v5920
        %v5922 = vpop.f32.mrf.mxu0
        %5923 = vdwg.mxu0
        %v5924 = vld [vmem:[#allocation2] sm:$0xe]
        %v5925 = vld [vmem:[#allocation2 + $0xc] sm:$0xe]
        %v5926 = vld [vmem:[#allocation2 + $0x18] sm:$0xe]
        %v5927 = vld [vmem:[#allocation2 + $0x24] sm:$0xe]
        %v5928 = vld [vmem:[#allocation2 + $0x30] sm:$0xe]
        %v5929 = vld [vmem:[#allocation2 + $0x3c] sm:$0xe]
        %v5930 = vld [vmem:[#allocation2 + $0x48] sm:$0xe]
        %v5931 = vld [vmem:[#allocation2 + $0x54] sm:$0xe]
        %v5932 = vld [vmem:[#allocation2 + $0x60] sm:$0xe]
        %v5933 = vld [vmem:[#allocation2 + $0x6c] sm:$0xe]
        %v5934 = vld [vmem:[#allocation2 + $0x78] sm:$0xe]
        %v5935 = vld [vmem:[#allocation2 + $0x84] sm:$0xe]
        %v5936 = vld [vmem:[#allocation2 + $0x90] sm:$0xe]
        %v5937 = vld [vmem:[#allocation2 + $0x9c] sm:$0xe]
        %v5938 = vld [vmem:[#allocation2 + $0xa8] sm:$0xe]
        %v5939 = vld [vmem:[#allocation2 + $0xb4] sm:$0xe]
        %vm5972 = vcmask 1042432
        %vm5973 = vcmask 1046532
        %vm5974 = vmor %vm5972, %vm5973
        %v5975 = vrot.slane %v5924, 5
        %v5976 = vrot.slane %v5975, 4
        %v5977 = vrot.slane %v4879, 5
        %v5978 = vsel %vm5974, %v5976, %v5977
        %v5979 = vrot.slane %v5977, 4
        %v5980 = vrot.slane %v4926, 5
        %v5981 = vsel %vm5974, %v5979, %v5980
        %v5982 = vrot.slane %v5925, 5
        %v5983 = vrot.slane %v5982, 4
        %v5984 = vrot.slane %v4881, 5
        %v5985 = vsel %vm5974, %v5983, %v5984
        %v5986 = vrot.slane %v5984, 4
        %v5987 = vrot.slane %v4927, 5
        %v5988 = vsel %vm5974, %v5986, %v5987
        %v5989 = vrot.slane %v5926, 5
        %v5990 = vrot.slane %v5989, 4
        %v5991 = vrot.slane %v4883, 5
        %v5992 = vsel %vm5974, %v5990, %v5991
        %v5993 = vrot.slane %v5991, 4
        %v5994 = vrot.slane %v4928, 5
        %v5995 = vsel %vm5974, %v5993, %v5994
        %v5996 = vrot.slane %v5927, 5
        %v5997 = vrot.slane %v5996, 4
        %v5998 = vrot.slane %v4885, 5
        %v5999 = vsel %vm5974, %v5997, %v5998
        %v6000 = vrot.slane %v5998, 4
        %v6001 = vrot.slane %v4929, 5
        %v6002 = vsel %vm5974, %v6000, %v6001
        %v6003 = vrot.slane %v5928, 5
        %v6004 = vrot.slane %v6003, 4
        %v6005 = vrot.slane %v4887, 5
        %v6006 = vsel %vm5974, %v6004, %v6005
        %v6007 = vrot.slane %v6005, 4
        %v6008 = vrot.slane %v4930, 5
        %v6009 = vsel %vm5974, %v6007, %v6008
        %v6010 = vrot.slane %v5929, 5
        %v6011 = vrot.slane %v6010, 4
        %v6012 = vrot.slane %v4889, 5
        %v6013 = vsel %vm5974, %v6011, %v6012
        %v6014 = vrot.slane %v6012, 4
        %v6015 = vrot.slane %v4931, 5
        %v6016 = vsel %vm5974, %v6014, %v6015
        %v6017 = vrot.slane %v5930, 5
        %v6018 = vrot.slane %v6017, 4
        %v6019 = vrot.slane %v4891, 5
        %v6020 = vsel %vm5974, %v6018, %v6019
        %v6021 = vrot.slane %v6019, 4
        %v6022 = vrot.slane %v4932, 5
        %v6023 = vsel %vm5974, %v6021, %v6022
        %v6024 = vrot.slane %v5931, 5
        %v6025 = vrot.slane %v6024, 4
        %v6026 = vrot.slane %v4893, 5
        %v6027 = vsel %vm5974, %v6025, %v6026
        %v6028 = vrot.slane %v6026, 4
        %v6029 = vrot.slane %v4933, 5
        %v6030 = vsel %vm5974, %v6028, %v6029
        %v6031 = vrot.slane %v5932, 5
        %v6032 = vrot.slane %v6031, 4
        %v6033 = vrot.slane %v4895, 5
        %v6034 = vsel %vm5974, %v6032, %v6033
        %v6035 = vrot.slane %v6033, 4
        %v6036 = vrot.slane %v4934, 5
        %v6037 = vsel %vm5974, %v6035, %v6036
        %v6038 = vrot.slane %v5933, 5
        %v6039 = vrot.slane %v6038, 4
        %v6040 = vrot.slane %v4897, 5
        %v6041 = vsel %vm5974, %v6039, %v6040
        %v6042 = vrot.slane %v6040, 4
        %v6043 = vrot.slane %v4935, 5
        %v6044 = vsel %vm5974, %v6042, %v6043
        %v6045 = vrot.slane %v5934, 5
        %v6046 = vrot.slane %v6045, 4
        %v6047 = vrot.slane %v4899, 5
        %v6048 = vsel %vm5974, %v6046, %v6047
        %v6049 = vrot.slane %v6047, 4
        %v6050 = vrot.slane %v4936, 5
        %v6051 = vsel %vm5974, %v6049, %v6050
        %v6052 = vrot.slane %v5935, 5
        %v6053 = vrot.slane %v6052, 4
        %v6054 = vrot.slane %v4901, 5
        %v6055 = vsel %vm5974, %v6053, %v6054
        %v6056 = vrot.slane %v6054, 4
        %v6057 = vrot.slane %v4937, 5
        %v6058 = vsel %vm5974, %v6056, %v6057
        %v6059 = vrot.slane %v5936, 5
        %v6060 = vrot.slane %v6059, 4
        %v6061 = vrot.slane %v4903, 5
        %v6062 = vsel %vm5974, %v6060, %v6061
        %v6063 = vrot.slane %v6061, 4
        %v6064 = vrot.slane %v4938, 5
        %v6065 = vsel %vm5974, %v6063, %v6064
        %v6066 = vrot.slane %v5937, 5
        %v6067 = vrot.slane %v6066, 4
        %v6068 = vrot.slane %v4905, 5
        %v6069 = vsel %vm5974, %v6067, %v6068
        %v6070 = vrot.slane %v6068, 4
        %v6071 = vrot.slane %v4939, 5
        %v6072 = vsel %vm5974, %v6070, %v6071
        %v6073 = vrot.slane %v5938, 5
        %v6074 = vrot.slane %v6073, 4
        %v6075 = vrot.slane %v4907, 5
        %v6076 = vsel %vm5974, %v6074, %v6075
        %v6077 = vrot.slane %v6075, 4
        %v6078 = vrot.slane %v4940, 5
        %v6079 = vsel %vm5974, %v6077, %v6078
        %v6080 = vrot.slane %v5939, 5
        %v6081 = vrot.slane %v6080, 4
        %v6082 = vrot.slane %v4909, 5
        %v6083 = vsel %vm5974, %v6081, %v6082
        %v6084 = vrot.slane %v6082, 4
        %v6085 = vrot.slane %v4941, 5
        %v6086 = vsel %vm5974, %v6084, %v6085
        %s6087 = scalar_lea.vmem %s4, 128
        %v6088 = vld [vmem:[%s6087] sm:$0xf]
        %v6089 = vld [vmem:[%s6087 + $0x4] sm:$0xf]
        %v6090 = vld [vmem:[%s6087 + $0x8] sm:$0xf]
        %v6091 = vld [vmem:[%s6087 + $0xc] sm:$0xf]
        %v6092 = vld [vmem:[%s6087 + $0x10] sm:$0xf]
        %v6093 = vld [vmem:[%s6087 + $0x14] sm:$0xf]
        %v6094 = vld [vmem:[%s6087 + $0x18] sm:$0xf]
        %v6095 = vld [vmem:[%s6087 + $0x1c] sm:$0xf]
        %v6096 = vld [vmem:[%s6087 + $0x20] sm:$0xf]
        %v6097 = vld [vmem:[%s6087 + $0x24] sm:$0xf]
        %v6098 = vld [vmem:[%s6087 + $0x28] sm:$0xf]
        %v6099 = vld [vmem:[%s6087 + $0x2c] sm:$0xf]
        %v6100 = vld [vmem:[%s6087 + $0x30] sm:$0xf]
        %v6101 = vld [vmem:[%s6087 + $0x34] sm:$0xf]
        %v6102 = vld [vmem:[%s6087 + $0x38] sm:$0xf]
        %v6103 = vld [vmem:[%s6087 + $0x3c] sm:$0xf]
        %v6104 = vunpack.c.l.b16 %v5978
        %v6105 = vunpack.c.l.b16 %v5981
        %v6106 = vunpack.c.l.b16 %v5985
        %v6107 = vunpack.c.l.b16 %v5988
        %v6108 = vunpack.c.l.b16 %v5992
        %v6109 = vunpack.c.l.b16 %v5995
        %v6110 = vunpack.c.l.b16 %v5999
        %v6111 = vunpack.c.l.b16 %v6002
        %v6112 = vunpack.c.l.b16 %v6006
        %v6113 = vunpack.c.l.b16 %v6009
        %v6114 = vunpack.c.l.b16 %v6013
        %v6115 = vunpack.c.l.b16 %v6016
        %v6116 = vunpack.c.l.b16 %v6020
        %v6117 = vunpack.c.l.b16 %v6023
        %v6118 = vunpack.c.l.b16 %v6027
        %v6119 = vunpack.c.l.b16 %v6030
        %v6120 = vunpack.c.l.b16 %v6034
        %v6121 = vunpack.c.l.b16 %v6037
        %v6122 = vunpack.c.l.b16 %v6041
        %v6123 = vunpack.c.l.b16 %v6044
        %v6124 = vunpack.c.l.b16 %v6048
        %v6125 = vunpack.c.l.b16 %v6051
        %v6126 = vunpack.c.l.b16 %v6055
        %v6127 = vunpack.c.l.b16 %v6058
        %v6128 = vunpack.c.l.b16 %v6062
        %v6129 = vunpack.c.l.b16 %v6065
        %v6130 = vunpack.c.l.b16 %v6069
        %v6131 = vunpack.c.l.b16 %v6072
        %v6132 = vunpack.c.l.b16 %v6076
        %v6133 = vunpack.c.l.b16 %v6079
        %v6134 = vunpack.c.l.b16 %v6083
        %v6135 = vunpack.c.l.b16 %v6086
        %v6136 = vpack.c.b16 %v6105, %v6104
        %v6137 = vpack.c.b16 %v6107, %v6106
        %v6138 = vpack.c.b16 %v6109, %v6108
        %v6139 = vpack.c.b16 %v6111, %v6110
        %v6140 = vpack.c.b16 %v6113, %v6112
        %v6141 = vpack.c.b16 %v6115, %v6114
        %v6142 = vpack.c.b16 %v6117, %v6116
        %v6143 = vpack.c.b16 %v6119, %v6118
        %v6144 = vpack.c.b16 %v6121, %v6120
        %v6145 = vpack.c.b16 %v6123, %v6122
        %v6146 = vpack.c.b16 %v6125, %v6124
        %v6147 = vpack.c.b16 %v6127, %v6126
        %v6148 = vpack.c.b16 %v6129, %v6128
        %v6149 = vpack.c.b16 %v6131, %v6130
        %v6150 = vpack.c.b16 %v6133, %v6132
        %v6151 = vpack.c.b16 %v6135, %v6134
        %v6184 = vunpack.c.l.b16 %v6088
        %v6185 = vunpack.c.l.b16 %v6089
        %v6186 = vunpack.c.l.b16 %v6090
        %v6187 = vunpack.c.l.b16 %v6091
        %v6188 = vunpack.c.l.b16 %v6092
        %v6189 = vunpack.c.l.b16 %v6093
        %v6190 = vunpack.c.l.b16 %v6094
        %v6191 = vunpack.c.l.b16 %v6095
        %v6192 = vunpack.c.l.b16 %v6096
        %v6193 = vunpack.c.l.b16 %v6097
        %v6194 = vunpack.c.l.b16 %v6098
        %v6195 = vunpack.c.l.b16 %v6099
        %v6196 = vunpack.c.l.b16 %v6100
        %v6197 = vunpack.c.l.b16 %v6101
        %v6198 = vunpack.c.l.b16 %v6102
        %v6199 = vunpack.c.l.b16 %v6103
        %v6200 = vpack.c.b16 %v6185, %v6184
        %v6201 = vpack.c.b16 %v6187, %v6186
        %v6202 = vpack.c.b16 %v6189, %v6188
        %v6203 = vpack.c.b16 %v6191, %v6190
        %v6204 = vpack.c.b16 %v6193, %v6192
        %v6205 = vpack.c.b16 %v6195, %v6194
        %v6206 = vpack.c.b16 %v6197, %v6196
        %v6207 = vpack.c.b16 %v6199, %v6198
        %6216 = vmatprep.subr.bf16.mxu0 0
        %6217 = vmatpush1.bf16.msra.mxu0 %v6207
        %6218 = vmatprep.subr.bf16.mxu0 0
        %6219 = vmatpush1.bf16.msra.mxu0 %v6206
        %6220 = vmatprep.subr.bf16.mxu0 0
        %6221 = vmatpush1.bf16.msra.mxu0 %v6205
        %6222 = vmatprep.subr.bf16.mxu0 0
        %6223 = vmatpush1.bf16.msra.mxu0 %v6204
        %6224 = vmatprep.subr.bf16.mxu0 0
        %6225 = vmatpush1.bf16.msra.mxu0 %v6203
        %6226 = vmatprep.subr.bf16.mxu0 0
        %6227 = vmatpush1.bf16.msra.mxu0 %v6202
        %6228 = vmatprep.subr.bf16.mxu0 0
        %6229 = vmatpush1.bf16.msra.mxu0 %v6201
        %6230 = vmatprep.subr.bf16.mxu0 0
        %6231 = vmatpush1.bf16.msra.mxu0 %v6200
        %6232 = vmatprep.subr.bf16.mxu0 0
        %6233 = vmatpush2.bf16.msra.mxu0 0
        %6234 = vmatprep.subr.bf16.mxu0 0
        %6235 = vmatpush2.bf16.msra.mxu0 0
        %6236 = vmatprep.subr.bf16.mxu0 0
        %6237 = vmatpush2.bf16.msra.mxu0 0
        %6238 = vmatprep.subr.bf16.mxu0 0
        %6239 = vmatpush2.bf16.msra.mxu0 0
        %6240 = vmatprep.subr.bf16.mxu0 0
        %6241 = vmatpush2.bf16.msra.mxu0 0
        %6242 = vmatprep.subr.bf16.mxu0 0
        %6243 = vmatpush2.bf16.msra.mxu0 0
        %6244 = vmatprep.subr.bf16.mxu0 0
        %6245 = vmatpush2.bf16.msra.mxu0 0
        %6246 = vmatprep.subr.bf16.mxu0 0
        %6247 = vmatpush2.bf16.msra.mxu0 0
        %6248 = vmatprep.mubr.bf16.mxu0 0
        %6249 = vmatmul.mubr.bf16.gmra.mxu0 %v6136
        %v6250 = vpop.f32.mrf.mxu0
        %v6251 = vadd.f32 0.0, %v6250
        %v6252 = vpop.f32.mrf.mxu0
        %v6253 = vpop.f32.mrf.mxu0
        %v6254 = vadd.f32 0.0, %v6253
        %v6255 = vpop.f32.mrf.mxu0
        %6256 = vmatprep.mubr.bf16.mxu0 0
        %6257 = vmatmul.mubr.bf16.gmra.mxu0 %v6137
        %v6258 = vpop.f32.mrf.mxu0
        %v6259 = vadd.f32 0.0, %v6258
        %v6260 = vpop.f32.mrf.mxu0
        %v6261 = vpop.f32.mrf.mxu0
        %v6262 = vadd.f32 0.0, %v6261
        %v6263 = vpop.f32.mrf.mxu0
        %6264 = vmatprep.mubr.bf16.mxu0 0
        %6265 = vmatmul.mubr.bf16.gmra.mxu0 %v6138
        %v6266 = vpop.f32.mrf.mxu0
        %v6267 = vadd.f32 0.0, %v6266
        %v6268 = vpop.f32.mrf.mxu0
        %v6269 = vpop.f32.mrf.mxu0
        %v6270 = vadd.f32 0.0, %v6269
        %v6271 = vpop.f32.mrf.mxu0
        %6272 = vmatprep.mubr.bf16.mxu0 0
        %6273 = vmatmul.mubr.bf16.gmra.mxu0 %v6139
        %v6274 = vpop.f32.mrf.mxu0
        %v6275 = vadd.f32 0.0, %v6274
        %v6276 = vpop.f32.mrf.mxu0
        %v6277 = vpop.f32.mrf.mxu0
        %v6278 = vadd.f32 0.0, %v6277
        %v6279 = vpop.f32.mrf.mxu0
        %6280 = vmatprep.mubr.bf16.mxu0 0
        %6281 = vmatmul.mubr.bf16.gmra.mxu0 %v6140
        %v6282 = vpop.f32.mrf.mxu0
        %v6283 = vadd.f32 0.0, %v6282
        %v6284 = vpop.f32.mrf.mxu0
        %v6285 = vpop.f32.mrf.mxu0
        %v6286 = vadd.f32 0.0, %v6285
        %v6287 = vpop.f32.mrf.mxu0
        %6288 = vmatprep.mubr.bf16.mxu0 0
        %6289 = vmatmul.mubr.bf16.gmra.mxu0 %v6141
        %v6290 = vpop.f32.mrf.mxu0
        %v6291 = vadd.f32 0.0, %v6290
        %v6292 = vpop.f32.mrf.mxu0
        %v6293 = vpop.f32.mrf.mxu0
        %v6294 = vadd.f32 0.0, %v6293
        %v6295 = vpop.f32.mrf.mxu0
        %6296 = vmatprep.mubr.bf16.mxu0 0
        %6297 = vmatmul.mubr.bf16.gmra.mxu0 %v6142
        %v6298 = vpop.f32.mrf.mxu0
        %v6299 = vadd.f32 0.0, %v6298
        %v6300 = vpop.f32.mrf.mxu0
        %v6301 = vpop.f32.mrf.mxu0
        %v6302 = vadd.f32 0.0, %v6301
        %v6303 = vpop.f32.mrf.mxu0
        %6304 = vmatprep.mubr.bf16.mxu0 0
        %6305 = vmatmul.mubr.bf16.gmra.mxu0 %v6143
        %v6306 = vpop.f32.mrf.mxu0
        %v6307 = vadd.f32 0.0, %v6306
        %v6308 = vpop.f32.mrf.mxu0
        %v6309 = vpop.f32.mrf.mxu0
        %v6310 = vadd.f32 0.0, %v6309
        %v6311 = vpop.f32.mrf.mxu0
        %6312 = vmatprep.mubr.bf16.mxu0 0
        %6313 = vmatmul.mubr.bf16.gmra.mxu0 %v6144
        %v6314 = vpop.f32.mrf.mxu0
        %v6315 = vadd.f32 0.0, %v6314
        %v6316 = vpop.f32.mrf.mxu0
        %v6317 = vpop.f32.mrf.mxu0
        %v6318 = vadd.f32 0.0, %v6317
        %v6319 = vpop.f32.mrf.mxu0
        %6320 = vmatprep.mubr.bf16.mxu0 0
        %6321 = vmatmul.mubr.bf16.gmra.mxu0 %v6145
        %v6322 = vpop.f32.mrf.mxu0
        %v6323 = vadd.f32 0.0, %v6322
        %v6324 = vpop.f32.mrf.mxu0
        %v6325 = vpop.f32.mrf.mxu0
        %v6326 = vadd.f32 0.0, %v6325
        %v6327 = vpop.f32.mrf.mxu0
        %6328 = vmatprep.mubr.bf16.mxu0 0
        %6329 = vmatmul.mubr.bf16.gmra.mxu0 %v6146
        %v6330 = vpop.f32.mrf.mxu0
        %v6331 = vadd.f32 0.0, %v6330
        %v6332 = vpop.f32.mrf.mxu0
        %v6333 = vpop.f32.mrf.mxu0
        %v6334 = vadd.f32 0.0, %v6333
        %v6335 = vpop.f32.mrf.mxu0
        %6336 = vmatprep.mubr.bf16.mxu0 0
        %6337 = vmatmul.mubr.bf16.gmra.mxu0 %v6147
        %v6338 = vpop.f32.mrf.mxu0
        %v6339 = vadd.f32 0.0, %v6338
        %v6340 = vpop.f32.mrf.mxu0
        %v6341 = vpop.f32.mrf.mxu0
        %v6342 = vadd.f32 0.0, %v6341
        %v6343 = vpop.f32.mrf.mxu0
        %6344 = vmatprep.mubr.bf16.mxu0 0
        %6345 = vmatmul.mubr.bf16.gmra.mxu0 %v6148
        %v6346 = vpop.f32.mrf.mxu0
        %v6347 = vadd.f32 0.0, %v6346
        %v6348 = vpop.f32.mrf.mxu0
        %v6349 = vpop.f32.mrf.mxu0
        %v6350 = vadd.f32 0.0, %v6349
        %v6351 = vpop.f32.mrf.mxu0
        %6352 = vmatprep.mubr.bf16.mxu0 0
        %6353 = vmatmul.mubr.bf16.gmra.mxu0 %v6149
        %v6354 = vpop.f32.mrf.mxu0
        %v6355 = vadd.f32 0.0, %v6354
        %v6356 = vpop.f32.mrf.mxu0
        %v6357 = vpop.f32.mrf.mxu0
        %v6358 = vadd.f32 0.0, %v6357
        %v6359 = vpop.f32.mrf.mxu0
        %6360 = vmatprep.mubr.bf16.mxu0 0
        %6361 = vmatmul.mubr.bf16.gmra.mxu0 %v6150
        %v6362 = vpop.f32.mrf.mxu0
        %v6363 = vadd.f32 0.0, %v6362
        %v6364 = vpop.f32.mrf.mxu0
        %v6365 = vpop.f32.mrf.mxu0
        %v6366 = vadd.f32 0.0, %v6365
        %v6367 = vpop.f32.mrf.mxu0
        %6368 = vmatprep.mubr.bf16.mxu0 0
        %6369 = vmatmul.mubr.bf16.gmra.mxu0 %v6151
        %v6370 = vpop.f32.mrf.mxu0
        %v6371 = vadd.f32 0.0, %v6370
        %v6372 = vpop.f32.mrf.mxu0
        %v6373 = vpop.f32.mrf.mxu0
        %v6374 = vadd.f32 0.0, %v6373
        %v6375 = vpop.f32.mrf.mxu0
        %6376 = vdwg.mxu0
        %v6377 = vadd.f32 %v5798, %v6251
        %v6378 = vadd.f32 %v5801, %v6254
        %v6379 = vadd.f32 %v5806, %v6259
        %v6380 = vadd.f32 %v5809, %v6262
        %v6381 = vadd.f32 %v5814, %v6267
        %v6382 = vadd.f32 %v5817, %v6270
        %v6383 = vadd.f32 %v5822, %v6275
        %v6384 = vadd.f32 %v5825, %v6278
        %v6385 = vadd.f32 %v5830, %v6283
        %v6386 = vadd.f32 %v5833, %v6286
        %v6387 = vadd.f32 %v5838, %v6291
        %v6388 = vadd.f32 %v5841, %v6294
        %v6389 = vadd.f32 %v5846, %v6299
        %v6390 = vadd.f32 %v5849, %v6302
        %v6391 = vadd.f32 %v5854, %v6307
        %v6392 = vadd.f32 %v5857, %v6310
        %v6393 = vadd.f32 %v5862, %v6315
        %v6394 = vadd.f32 %v5865, %v6318
        %v6395 = vadd.f32 %v5870, %v6323
        %v6396 = vadd.f32 %v5873, %v6326
        %v6397 = vadd.f32 %v5878, %v6331
        %v6398 = vadd.f32 %v5881, %v6334
        %v6399 = vadd.f32 %v5886, %v6339
        %v6400 = vadd.f32 %v5889, %v6342
        %v6401 = vadd.f32 %v5894, %v6347
        %v6402 = vadd.f32 %v5897, %v6350
        %v6403 = vadd.f32 %v5902, %v6355
        %v6404 = vadd.f32 %v5905, %v6358
        %v6405 = vadd.f32 %v5910, %v6363
        %v6406 = vadd.f32 %v5913, %v6366
        %v6407 = vadd.f32 %v5918, %v6371
        %v6408 = vadd.f32 %v5921, %v6374
        %s6409 = scalar_lea.vmem [#allocation2], 12
        %v6410 = vld [vmem:[%s6409] sm:$0xf]
        %v6411 = vld [vmem:[%s6409 + $0x4] sm:$0xf]
        %v6412 = vld [vmem:[%s6409 + $0xc] sm:$0xf]
        %v6413 = vld [vmem:[%s6409 + $0x10] sm:$0xf]
        %v6414 = vld [vmem:[%s6409 + $0x18] sm:$0xf]
        %v6415 = vld [vmem:[%s6409 + $0x1c] sm:$0xf]
        %v6416 = vld [vmem:[%s6409 + $0x24] sm:$0xf]
        %v6417 = vld [vmem:[%s6409 + $0x28] sm:$0xf]
        %v6418 = vld [vmem:[%s6409 + $0x30] sm:$0xf]
        %v6419 = vld [vmem:[%s6409 + $0x34] sm:$0xf]
        %v6420 = vld [vmem:[%s6409 + $0x3c] sm:$0xf]
        %v6421 = vld [vmem:[%s6409 + $0x40] sm:$0xf]
        %v6422 = vld [vmem:[%s6409 + $0x48] sm:$0xf]
        %v6423 = vld [vmem:[%s6409 + $0x4c] sm:$0xf]
        %v6424 = vld [vmem:[%s6409 + $0x54] sm:$0xf]
        %v6425 = vld [vmem:[%s6409 + $0x58] sm:$0xf]
        %v6426 = vld [vmem:[%s6409 + $0x60] sm:$0xf]
        %v6427 = vld [vmem:[%s6409 + $0x64] sm:$0xf]
        %v6428 = vld [vmem:[%s6409 + $0x6c] sm:$0xf]
        %v6429 = vld [vmem:[%s6409 + $0x70] sm:$0xf]
        %v6430 = vld [vmem:[%s6409 + $0x78] sm:$0xf]
        %v6431 = vld [vmem:[%s6409 + $0x7c] sm:$0xf]
        %v6432 = vld [vmem:[%s6409 + $0x84] sm:$0xf]
        %v6433 = vld [vmem:[%s6409 + $0x88] sm:$0xf]
        %v6434 = vld [vmem:[%s6409 + $0x90] sm:$0xf]
        %v6435 = vld [vmem:[%s6409 + $0x94] sm:$0xf]
        %v6436 = vld [vmem:[%s6409 + $0x9c] sm:$0xf]
        %v6437 = vld [vmem:[%s6409 + $0xa0] sm:$0xf]
        %v6438 = vld [vmem:[%s6409 + $0xa8] sm:$0xf]
        %v6439 = vld [vmem:[%s6409 + $0xac] sm:$0xf]
        %v6440 = vld [vmem:[%s6409 + $0xb4] sm:$0xf]
        %v6441 = vld [vmem:[%s6409 + $0xb8] sm:$0xf]
        %s6442 = scalar_lea.vmem %s4, 192
        %v6443 = vld [vmem:[%s6442] sm:$0xf]
        %v6444 = vld [vmem:[%s6442 + $0x4] sm:$0xf]
        %v6445 = vld [vmem:[%s6442 + $0x8] sm:$0xf]
        %v6446 = vld [vmem:[%s6442 + $0xc] sm:$0xf]
        %v6447 = vld [vmem:[%s6442 + $0x10] sm:$0xf]
        %v6448 = vld [vmem:[%s6442 + $0x14] sm:$0xf]
        %v6449 = vld [vmem:[%s6442 + $0x18] sm:$0xf]
        %v6450 = vld [vmem:[%s6442 + $0x1c] sm:$0xf]
        %v6451 = vld [vmem:[%s6442 + $0x20] sm:$0xf]
        %v6452 = vld [vmem:[%s6442 + $0x24] sm:$0xf]
        %v6453 = vld [vmem:[%s6442 + $0x28] sm:$0xf]
        %v6454 = vld [vmem:[%s6442 + $0x2c] sm:$0xf]
        %v6455 = vld [vmem:[%s6442 + $0x30] sm:$0xf]
        %v6456 = vld [vmem:[%s6442 + $0x34] sm:$0xf]
        %v6457 = vld [vmem:[%s6442 + $0x38] sm:$0xf]
        %v6458 = vld [vmem:[%s6442 + $0x3c] sm:$0xf]
        %v6491 = vunpack.c.l.b16 %v6410
        %v6492 = vunpack.c.l.b16 %v6411
        %v6493 = vunpack.c.l.b16 %v6412
        %v6494 = vunpack.c.l.b16 %v6413
        %v6495 = vunpack.c.l.b16 %v6414
        %v6496 = vunpack.c.l.b16 %v6415
        %v6497 = vunpack.c.l.b16 %v6416
        %v6498 = vunpack.c.l.b16 %v6417
        %v6499 = vunpack.c.l.b16 %v6418
        %v6500 = vunpack.c.l.b16 %v6419
        %v6501 = vunpack.c.l.b16 %v6420
        %v6502 = vunpack.c.l.b16 %v6421
        %v6503 = vunpack.c.l.b16 %v6422
        %v6504 = vunpack.c.l.b16 %v6423
        %v6505 = vunpack.c.l.b16 %v6424
        %v6506 = vunpack.c.l.b16 %v6425
        %v6507 = vunpack.c.l.b16 %v6426
        %v6508 = vunpack.c.l.b16 %v6427
        %v6509 = vunpack.c.l.b16 %v6428
        %v6510 = vunpack.c.l.b16 %v6429
        %v6511 = vunpack.c.l.b16 %v6430
        %v6512 = vunpack.c.l.b16 %v6431
        %v6513 = vunpack.c.l.b16 %v6432
        %v6514 = vunpack.c.l.b16 %v6433
        %v6515 = vunpack.c.l.b16 %v6434
        %v6516 = vunpack.c.l.b16 %v6435
        %v6517 = vunpack.c.l.b16 %v6436
        %v6518 = vunpack.c.l.b16 %v6437
        %v6519 = vunpack.c.l.b16 %v6438
        %v6520 = vunpack.c.l.b16 %v6439
        %v6521 = vunpack.c.l.b16 %v6440
        %v6522 = vunpack.c.l.b16 %v6441
        %v6523 = vpack.c.b16 %v6492, %v6491
        %v6524 = vpack.c.b16 %v6494, %v6493
        %v6525 = vpack.c.b16 %v6496, %v6495
        %v6526 = vpack.c.b16 %v6498, %v6497
        %v6527 = vpack.c.b16 %v6500, %v6499
        %v6528 = vpack.c.b16 %v6502, %v6501
        %v6529 = vpack.c.b16 %v6504, %v6503
        %v6530 = vpack.c.b16 %v6506, %v6505
        %v6531 = vpack.c.b16 %v6508, %v6507
        %v6532 = vpack.c.b16 %v6510, %v6509
        %v6533 = vpack.c.b16 %v6512, %v6511
        %v6534 = vpack.c.b16 %v6514, %v6513
        %v6535 = vpack.c.b16 %v6516, %v6515
        %v6536 = vpack.c.b16 %v6518, %v6517
        %v6537 = vpack.c.b16 %v6520, %v6519
        %v6538 = vpack.c.b16 %v6522, %v6521
        %v6571 = vunpack.c.l.b16 %v6443
        %v6572 = vunpack.c.l.b16 %v6444
        %v6573 = vunpack.c.l.b16 %v6445
        %v6574 = vunpack.c.l.b16 %v6446
        %v6575 = vunpack.c.l.b16 %v6447
        %v6576 = vunpack.c.l.b16 %v6448
        %v6577 = vunpack.c.l.b16 %v6449
        %v6578 = vunpack.c.l.b16 %v6450
        %v6579 = vunpack.c.l.b16 %v6451
        %v6580 = vunpack.c.l.b16 %v6452
        %v6581 = vunpack.c.l.b16 %v6453
        %v6582 = vunpack.c.l.b16 %v6454
        %v6583 = vunpack.c.l.b16 %v6455
        %v6584 = vunpack.c.l.b16 %v6456
        %v6585 = vunpack.c.l.b16 %v6457
        %v6586 = vunpack.c.l.b16 %v6458
        %v6587 = vpack.c.b16 %v6572, %v6571
        %v6588 = vpack.c.b16 %v6574, %v6573
        %v6589 = vpack.c.b16 %v6576, %v6575
        %v6590 = vpack.c.b16 %v6578, %v6577
        %v6591 = vpack.c.b16 %v6580, %v6579
        %v6592 = vpack.c.b16 %v6582, %v6581
        %v6593 = vpack.c.b16 %v6584, %v6583
        %v6594 = vpack.c.b16 %v6586, %v6585
        %6603 = vmatprep.subr.bf16.mxu0 0
        %6604 = vmatpush1.bf16.msra.mxu0 %v6594
        %6605 = vmatprep.subr.bf16.mxu0 0
        %6606 = vmatpush1.bf16.msra.mxu0 %v6593
        %6607 = vmatprep.subr.bf16.mxu0 0
        %6608 = vmatpush1.bf16.msra.mxu0 %v6592
        %6609 = vmatprep.subr.bf16.mxu0 0
        %6610 = vmatpush1.bf16.msra.mxu0 %v6591
        %6611 = vmatprep.subr.bf16.mxu0 0
        %6612 = vmatpush1.bf16.msra.mxu0 %v6590
        %6613 = vmatprep.subr.bf16.mxu0 0
        %6614 = vmatpush1.bf16.msra.mxu0 %v6589
        %6615 = vmatprep.subr.bf16.mxu0 0
        %6616 = vmatpush1.bf16.msra.mxu0 %v6588
        %6617 = vmatprep.subr.bf16.mxu0 0
        %6618 = vmatpush1.bf16.msra.mxu0 %v6587
        %6619 = vmatprep.subr.bf16.mxu0 0
        %6620 = vmatpush2.bf16.msra.mxu0 0
        %6621 = vmatprep.subr.bf16.mxu0 0
        %6622 = vmatpush2.bf16.msra.mxu0 0
        %6623 = vmatprep.subr.bf16.mxu0 0
        %6624 = vmatpush2.bf16.msra.mxu0 0
        %6625 = vmatprep.subr.bf16.mxu0 0
        %6626 = vmatpush2.bf16.msra.mxu0 0
        %6627 = vmatprep.subr.bf16.mxu0 0
        %6628 = vmatpush2.bf16.msra.mxu0 0
        %6629 = vmatprep.subr.bf16.mxu0 0
        %6630 = vmatpush2.bf16.msra.mxu0 0
        %6631 = vmatprep.subr.bf16.mxu0 0
        %6632 = vmatpush2.bf16.msra.mxu0 0
        %6633 = vmatprep.subr.bf16.mxu0 0
        %6634 = vmatpush2.bf16.msra.mxu0 0
        %6635 = vmatprep.mubr.bf16.mxu0 0
        %6636 = vmatmul.mubr.bf16.gmra.mxu0 %v6523
        %v6637 = vpop.f32.mrf.mxu0
        %v6638 = vadd.f32 0.0, %v6637
        %v6639 = vpop.f32.mrf.mxu0
        %v6640 = vpop.f32.mrf.mxu0
        %v6641 = vadd.f32 0.0, %v6640
        %v6642 = vpop.f32.mrf.mxu0
        %6643 = vmatprep.mubr.bf16.mxu0 0
        %6644 = vmatmul.mubr.bf16.gmra.mxu0 %v6524
        %v6645 = vpop.f32.mrf.mxu0
        %v6646 = vadd.f32 0.0, %v6645
        %v6647 = vpop.f32.mrf.mxu0
        %v6648 = vpop.f32.mrf.mxu0
        %v6649 = vadd.f32 0.0, %v6648
        %v6650 = vpop.f32.mrf.mxu0
        %6651 = vmatprep.mubr.bf16.mxu0 0
        %6652 = vmatmul.mubr.bf16.gmra.mxu0 %v6525
        %v6653 = vpop.f32.mrf.mxu0
        %v6654 = vadd.f32 0.0, %v6653
        %v6655 = vpop.f32.mrf.mxu0
        %v6656 = vpop.f32.mrf.mxu0
        %v6657 = vadd.f32 0.0, %v6656
        %v6658 = vpop.f32.mrf.mxu0
        %6659 = vmatprep.mubr.bf16.mxu0 0
        %6660 = vmatmul.mubr.bf16.gmra.mxu0 %v6526
        %v6661 = vpop.f32.mrf.mxu0
        %v6662 = vadd.f32 0.0, %v6661
        %v6663 = vpop.f32.mrf.mxu0
        %v6664 = vpop.f32.mrf.mxu0
        %v6665 = vadd.f32 0.0, %v6664
        %v6666 = vpop.f32.mrf.mxu0
        %6667 = vmatprep.mubr.bf16.mxu0 0
        %6668 = vmatmul.mubr.bf16.gmra.mxu0 %v6527
        %v6669 = vpop.f32.mrf.mxu0
        %v6670 = vadd.f32 0.0, %v6669
        %v6671 = vpop.f32.mrf.mxu0
        %v6672 = vpop.f32.mrf.mxu0
        %v6673 = vadd.f32 0.0, %v6672
        %v6674 = vpop.f32.mrf.mxu0
        %6675 = vmatprep.mubr.bf16.mxu0 0
        %6676 = vmatmul.mubr.bf16.gmra.mxu0 %v6528
        %v6677 = vpop.f32.mrf.mxu0
        %v6678 = vadd.f32 0.0, %v6677
        %v6679 = vpop.f32.mrf.mxu0
        %v6680 = vpop.f32.mrf.mxu0
        %v6681 = vadd.f32 0.0, %v6680
        %v6682 = vpop.f32.mrf.mxu0
        %6683 = vmatprep.mubr.bf16.mxu0 0
        %6684 = vmatmul.mubr.bf16.gmra.mxu0 %v6529
        %v6685 = vpop.f32.mrf.mxu0
        %v6686 = vadd.f32 0.0, %v6685
        %v6687 = vpop.f32.mrf.mxu0
        %v6688 = vpop.f32.mrf.mxu0
        %v6689 = vadd.f32 0.0, %v6688
        %v6690 = vpop.f32.mrf.mxu0
        %6691 = vmatprep.mubr.bf16.mxu0 0
        %6692 = vmatmul.mubr.bf16.gmra.mxu0 %v6530
        %v6693 = vpop.f32.mrf.mxu0
        %v6694 = vadd.f32 0.0, %v6693
        %v6695 = vpop.f32.mrf.mxu0
        %v6696 = vpop.f32.mrf.mxu0
        %v6697 = vadd.f32 0.0, %v6696
        %v6698 = vpop.f32.mrf.mxu0
        %6699 = vmatprep.mubr.bf16.mxu0 0
        %6700 = vmatmul.mubr.bf16.gmra.mxu0 %v6531
        %v6701 = vpop.f32.mrf.mxu0
        %v6702 = vadd.f32 0.0, %v6701
        %v6703 = vpop.f32.mrf.mxu0
        %v6704 = vpop.f32.mrf.mxu0
        %v6705 = vadd.f32 0.0, %v6704
        %v6706 = vpop.f32.mrf.mxu0
        %6707 = vmatprep.mubr.bf16.mxu0 0
        %6708 = vmatmul.mubr.bf16.gmra.mxu0 %v6532
        %v6709 = vpop.f32.mrf.mxu0
        %v6710 = vadd.f32 0.0, %v6709
        %v6711 = vpop.f32.mrf.mxu0
        %v6712 = vpop.f32.mrf.mxu0
        %v6713 = vadd.f32 0.0, %v6712
        %v6714 = vpop.f32.mrf.mxu0
        %6715 = vmatprep.mubr.bf16.mxu0 0
        %6716 = vmatmul.mubr.bf16.gmra.mxu0 %v6533
        %v6717 = vpop.f32.mrf.mxu0
        %v6718 = vadd.f32 0.0, %v6717
        %v6719 = vpop.f32.mrf.mxu0
        %v6720 = vpop.f32.mrf.mxu0
        %v6721 = vadd.f32 0.0, %v6720
        %v6722 = vpop.f32.mrf.mxu0
        %6723 = vmatprep.mubr.bf16.mxu0 0
        %6724 = vmatmul.mubr.bf16.gmra.mxu0 %v6534
        %v6725 = vpop.f32.mrf.mxu0
        %v6726 = vadd.f32 0.0, %v6725
        %v6727 = vpop.f32.mrf.mxu0
        %v6728 = vpop.f32.mrf.mxu0
        %v6729 = vadd.f32 0.0, %v6728
        %v6730 = vpop.f32.mrf.mxu0
        %6731 = vmatprep.mubr.bf16.mxu0 0
        %6732 = vmatmul.mubr.bf16.gmra.mxu0 %v6535
        %v6733 = vpop.f32.mrf.mxu0
        %v6734 = vadd.f32 0.0, %v6733
        %v6735 = vpop.f32.mrf.mxu0
        %v6736 = vpop.f32.mrf.mxu0
        %v6737 = vadd.f32 0.0, %v6736
        %v6738 = vpop.f32.mrf.mxu0
        %6739 = vmatprep.mubr.bf16.mxu0 0
        %6740 = vmatmul.mubr.bf16.gmra.mxu0 %v6536
        %v6741 = vpop.f32.mrf.mxu0
        %v6742 = vadd.f32 0.0, %v6741
        %v6743 = vpop.f32.mrf.mxu0
        %v6744 = vpop.f32.mrf.mxu0
        %v6745 = vadd.f32 0.0, %v6744
        %v6746 = vpop.f32.mrf.mxu0
        %6747 = vmatprep.mubr.bf16.mxu0 0
        %6748 = vmatmul.mubr.bf16.gmra.mxu0 %v6537
        %v6749 = vpop.f32.mrf.mxu0
        %v6750 = vadd.f32 0.0, %v6749
        %v6751 = vpop.f32.mrf.mxu0
        %v6752 = vpop.f32.mrf.mxu0
        %v6753 = vadd.f32 0.0, %v6752
        %v6754 = vpop.f32.mrf.mxu0
        %6755 = vmatprep.mubr.bf16.mxu0 0
        %6756 = vmatmul.mubr.bf16.gmra.mxu0 %v6538
        %v6757 = vpop.f32.mrf.mxu0
        %v6758 = vadd.f32 0.0, %v6757
        %v6759 = vpop.f32.mrf.mxu0
        %v6760 = vpop.f32.mrf.mxu0
        %v6761 = vadd.f32 0.0, %v6760
        %v6762 = vpop.f32.mrf.mxu0
        %6763 = vdwg.mxu0
        %v6764 = vadd.f32 %v6377, %v6638
        %v6765 = vadd.f32 %v6378, %v6641
        %v6766 = vadd.f32 %v6379, %v6646
        %v6767 = vadd.f32 %v6380, %v6649
        %v6768 = vadd.f32 %v6381, %v6654
        %v6769 = vadd.f32 %v6382, %v6657
        %v6770 = vadd.f32 %v6383, %v6662
        %v6771 = vadd.f32 %v6384, %v6665
        %v6772 = vadd.f32 %v6385, %v6670
        %v6773 = vadd.f32 %v6386, %v6673
        %v6774 = vadd.f32 %v6387, %v6678
        %v6775 = vadd.f32 %v6388, %v6681
        %v6776 = vadd.f32 %v6389, %v6686
        %v6777 = vadd.f32 %v6390, %v6689
        %v6778 = vadd.f32 %v6391, %v6694
        %v6779 = vadd.f32 %v6392, %v6697
        %v6780 = vadd.f32 %v6393, %v6702
        %v6781 = vadd.f32 %v6394, %v6705
        %v6782 = vadd.f32 %v6395, %v6710
        %v6783 = vadd.f32 %v6396, %v6713
        %v6784 = vadd.f32 %v6397, %v6718
        %v6785 = vadd.f32 %v6398, %v6721
        %v6786 = vadd.f32 %v6399, %v6726
        %v6787 = vadd.f32 %v6400, %v6729
        %v6788 = vadd.f32 %v6401, %v6734
        %v6789 = vadd.f32 %v6402, %v6737
        %v6790 = vadd.f32 %v6403, %v6742
        %v6791 = vadd.f32 %v6404, %v6745
        %v6792 = vadd.f32 %v6405, %v6750
        %v6793 = vadd.f32 %v6406, %v6753
        %v6794 = vadd.f32 %v6407, %v6758
        %v6795 = vadd.f32 %v6408, %v6761
        %v6796 = vld [vmem:[%s6409] sm:$0xf]
        %v6797 = vld [vmem:[%s6409 + $0x4] sm:$0xf]
        %v6798 = vld [vmem:[%s6409 + $0x8] sm:$0x1]
        %v6799 = vld [vmem:[%s6409 + $0xc] sm:$0xf]
        %v6800 = vld [vmem:[%s6409 + $0x10] sm:$0xf]
        %v6801 = vld [vmem:[%s6409 + $0x14] sm:$0x1]
        %v6802 = vld [vmem:[%s6409 + $0x18] sm:$0xf]
        %v6803 = vld [vmem:[%s6409 + $0x1c] sm:$0xf]
        %v6804 = vld [vmem:[%s6409 + $0x20] sm:$0x1]
        %v6805 = vld [vmem:[%s6409 + $0x24] sm:$0xf]
        %v6806 = vld [vmem:[%s6409 + $0x28] sm:$0xf]
        %v6807 = vld [vmem:[%s6409 + $0x2c] sm:$0x1]
        %v6808 = vld [vmem:[%s6409 + $0x30] sm:$0xf]
        %v6809 = vld [vmem:[%s6409 + $0x34] sm:$0xf]
        %v6810 = vld [vmem:[%s6409 + $0x38] sm:$0x1]
        %v6811 = vld [vmem:[%s6409 + $0x3c] sm:$0xf]
        %v6812 = vld [vmem:[%s6409 + $0x40] sm:$0xf]
        %v6813 = vld [vmem:[%s6409 + $0x44] sm:$0x1]
        %v6814 = vld [vmem:[%s6409 + $0x48] sm:$0xf]
        %v6815 = vld [vmem:[%s6409 + $0x4c] sm:$0xf]
        %v6816 = vld [vmem:[%s6409 + $0x50] sm:$0x1]
        %v6817 = vld [vmem:[%s6409 + $0x54] sm:$0xf]
        %v6818 = vld [vmem:[%s6409 + $0x58] sm:$0xf]
        %v6819 = vld [vmem:[%s6409 + $0x5c] sm:$0x1]
        %v6820 = vld [vmem:[%s6409 + $0x60] sm:$0xf]
        %v6821 = vld [vmem:[%s6409 + $0x64] sm:$0xf]
        %v6822 = vld [vmem:[%s6409 + $0x68] sm:$0x1]
        %v6823 = vld [vmem:[%s6409 + $0x6c] sm:$0xf]
        %v6824 = vld [vmem:[%s6409 + $0x70] sm:$0xf]
        %v6825 = vld [vmem:[%s6409 + $0x74] sm:$0x1]
        %v6826 = vld [vmem:[%s6409 + $0x78] sm:$0xf]
        %v6827 = vld [vmem:[%s6409 + $0x7c] sm:$0xf]
        %v6828 = vld [vmem:[%s6409 + $0x80] sm:$0x1]
        %v6829 = vld [vmem:[%s6409 + $0x84] sm:$0xf]
        %v6830 = vld [vmem:[%s6409 + $0x88] sm:$0xf]
        %v6831 = vld [vmem:[%s6409 + $0x8c] sm:$0x1]
        %v6832 = vld [vmem:[%s6409 + $0x90] sm:$0xf]
        %v6833 = vld [vmem:[%s6409 + $0x94] sm:$0xf]
        %v6834 = vld [vmem:[%s6409 + $0x98] sm:$0x1]
        %v6835 = vld [vmem:[%s6409 + $0x9c] sm:$0xf]
        %v6836 = vld [vmem:[%s6409 + $0xa0] sm:$0xf]
        %v6837 = vld [vmem:[%s6409 + $0xa4] sm:$0x1]
        %v6838 = vld [vmem:[%s6409 + $0xa8] sm:$0xf]
        %v6839 = vld [vmem:[%s6409 + $0xac] sm:$0xf]
        %v6840 = vld [vmem:[%s6409 + $0xb0] sm:$0x1]
        %v6841 = vld [vmem:[%s6409 + $0xb4] sm:$0xf]
        %v6842 = vld [vmem:[%s6409 + $0xb8] sm:$0xf]
        %v6843 = vld [vmem:[%s6409 + $0xbc] sm:$0x1]
        %v6845 = vshrl.u32 %v6796, 16
        %v6847 = vrot.slane %v6845, 4
        %v6848 = vshll.u32 %v6796, 16
        %v6850 = vrot.slane %v6848, 5
        %v6851 = vor.u32 %v6847, %v6850
        %v6852 = vrot.slane %v6851, 4
        %v6854 = vshll.u32 %v6797, 16
        %v6856 = vrot.slane %v6854, 5
        %v6857 = vsel %vm4944, %v6852, %v6856
        %v6858 = vshrl.u32 %v6797, 16
        %v6860 = vrot.slane %v6858, 4
        %v6861 = vor.u32 %v6860, %v6856
        %v6862 = vrot.slane %v6861, 4
        %v6864 = vshll.u32 %v6798, 16
        %v6866 = vrot.slane %v6864, 5
        %v6867 = vsel %vm4944, %v6862, %v6866
        %v6869 = vshrl.u32 %v6799, 16
        %v6871 = vrot.slane %v6869, 4
        %v6872 = vshll.u32 %v6799, 16
        %v6874 = vrot.slane %v6872, 5
        %v6875 = vor.u32 %v6871, %v6874
        %v6876 = vrot.slane %v6875, 4
        %v6878 = vshll.u32 %v6800, 16
        %v6880 = vrot.slane %v6878, 5
        %v6881 = vsel %vm4944, %v6876, %v6880
        %v6882 = vshrl.u32 %v6800, 16
        %v6884 = vrot.slane %v6882, 4
        %v6885 = vor.u32 %v6884, %v6880
        %v6886 = vrot.slane %v6885, 4
        %v6888 = vshll.u32 %v6801, 16
        %v6890 = vrot.slane %v6888, 5
        %v6891 = vsel %vm4944, %v6886, %v6890
        %v6893 = vshrl.u32 %v6802, 16
        %v6895 = vrot.slane %v6893, 4
        %v6896 = vshll.u32 %v6802, 16
        %v6898 = vrot.slane %v6896, 5
        %v6899 = vor.u32 %v6895, %v6898
        %v6900 = vrot.slane %v6899, 4
        %v6902 = vshll.u32 %v6803, 16
        %v6904 = vrot.slane %v6902, 5
        %v6905 = vsel %vm4944, %v6900, %v6904
        %v6906 = vshrl.u32 %v6803, 16
        %v6908 = vrot.slane %v6906, 4
        %v6909 = vor.u32 %v6908, %v6904
        %v6910 = vrot.slane %v6909, 4
        %v6912 = vshll.u32 %v6804, 16
        %v6914 = vrot.slane %v6912, 5
        %v6915 = vsel %vm4944, %v6910, %v6914
        %v6917 = vshrl.u32 %v6805, 16
        %v6919 = vrot.slane %v6917, 4
        %v6920 = vshll.u32 %v6805, 16
        %v6922 = vrot.slane %v6920, 5
        %v6923 = vor.u32 %v6919, %v6922
        %v6924 = vrot.slane %v6923, 4
        %v6926 = vshll.u32 %v6806, 16
        %v6928 = vrot.slane %v6926, 5
        %v6929 = vsel %vm4944, %v6924, %v6928
        %v6930 = vshrl.u32 %v6806, 16
        %v6932 = vrot.slane %v6930, 4
        %v6933 = vor.u32 %v6932, %v6928
        %v6934 = vrot.slane %v6933, 4
        %v6936 = vshll.u32 %v6807, 16
        %v6938 = vrot.slane %v6936, 5
        %v6939 = vsel %vm4944, %v6934, %v6938
        %v6941 = vshrl.u32 %v6808, 16
        %v6943 = vrot.slane %v6941, 4
        %v6944 = vshll.u32 %v6808, 16
        %v6946 = vrot.slane %v6944, 5
        %v6947 = vor.u32 %v6943, %v6946
        %v6948 = vrot.slane %v6947, 4
        %v6950 = vshll.u32 %v6809, 16
        %v6952 = vrot.slane %v6950, 5
        %v6953 = vsel %vm4944, %v6948, %v6952
        %v6954 = vshrl.u32 %v6809, 16
        %v6956 = vrot.slane %v6954, 4
        %v6957 = vor.u32 %v6956, %v6952
        %v6958 = vrot.slane %v6957, 4
        %v6960 = vshll.u32 %v6810, 16
        %v6962 = vrot.slane %v6960, 5
        %v6963 = vsel %vm4944, %v6958, %v6962
        %v6965 = vshrl.u32 %v6811, 16
        %v6967 = vrot.slane %v6965, 4
        %v6968 = vshll.u32 %v6811, 16
        %v6970 = vrot.slane %v6968, 5
        %v6971 = vor.u32 %v6967, %v6970
        %v6972 = vrot.slane %v6971, 4
        %v6974 = vshll.u32 %v6812, 16
        %v6976 = vrot.slane %v6974, 5
        %v6977 = vsel %vm4944, %v6972, %v6976
        %v6978 = vshrl.u32 %v6812, 16
        %v6980 = vrot.slane %v6978, 4
        %v6981 = vor.u32 %v6980, %v6976
        %v6982 = vrot.slane %v6981, 4
        %v6984 = vshll.u32 %v6813, 16
        %v6986 = vrot.slane %v6984, 5
        %v6987 = vsel %vm4944, %v6982, %v6986
        %v6989 = vshrl.u32 %v6814, 16
        %v6991 = vrot.slane %v6989, 4
        %v6992 = vshll.u32 %v6814, 16
        %v6994 = vrot.slane %v6992, 5
        %v6995 = vor.u32 %v6991, %v6994
        %v6996 = vrot.slane %v6995, 4
        %v6998 = vshll.u32 %v6815, 16
        %v7000 = vrot.slane %v6998, 5
        %v7001 = vsel %vm4944, %v6996, %v7000
        %v7002 = vshrl.u32 %v6815, 16
        %v7004 = vrot.slane %v7002, 4
        %v7005 = vor.u32 %v7004, %v7000
        %v7006 = vrot.slane %v7005, 4
        %v7008 = vshll.u32 %v6816, 16
        %v7010 = vrot.slane %v7008, 5
        %v7011 = vsel %vm4944, %v7006, %v7010
        %v7013 = vshrl.u32 %v6817, 16
        %v7015 = vrot.slane %v7013, 4
        %v7016 = vshll.u32 %v6817, 16
        %v7018 = vrot.slane %v7016, 5
        %v7019 = vor.u32 %v7015, %v7018
        %v7020 = vrot.slane %v7019, 4
        %v7022 = vshll.u32 %v6818, 16
        %v7024 = vrot.slane %v7022, 5
        %v7025 = vsel %vm4944, %v7020, %v7024
        %v7026 = vshrl.u32 %v6818, 16
        %v7028 = vrot.slane %v7026, 4
        %v7029 = vor.u32 %v7028, %v7024
        %v7030 = vrot.slane %v7029, 4
        %v7032 = vshll.u32 %v6819, 16
        %v7034 = vrot.slane %v7032, 5
        %v7035 = vsel %vm4944, %v7030, %v7034
        %v7037 = vshrl.u32 %v6820, 16
        %v7039 = vrot.slane %v7037, 4
        %v7040 = vshll.u32 %v6820, 16
        %v7042 = vrot.slane %v7040, 5
        %v7043 = vor.u32 %v7039, %v7042
        %v7044 = vrot.slane %v7043, 4
        %v7046 = vshll.u32 %v6821, 16
        %v7048 = vrot.slane %v7046, 5
        %v7049 = vsel %vm4944, %v7044, %v7048
        %v7050 = vshrl.u32 %v6821, 16
        %v7052 = vrot.slane %v7050, 4
        %v7053 = vor.u32 %v7052, %v7048
        %v7054 = vrot.slane %v7053, 4
        %v7056 = vshll.u32 %v6822, 16
        %v7058 = vrot.slane %v7056, 5
        %v7059 = vsel %vm4944, %v7054, %v7058
        %v7061 = vshrl.u32 %v6823, 16
        %v7063 = vrot.slane %v7061, 4
        %v7064 = vshll.u32 %v6823, 16
        %v7066 = vrot.slane %v7064, 5
        %v7067 = vor.u32 %v7063, %v7066
        %v7068 = vrot.slane %v7067, 4
        %v7070 = vshll.u32 %v6824, 16
        %v7072 = vrot.slane %v7070, 5
        %v7073 = vsel %vm4944, %v7068, %v7072
        %v7074 = vshrl.u32 %v6824, 16
        %v7076 = vrot.slane %v7074, 4
        %v7077 = vor.u32 %v7076, %v7072
        %v7078 = vrot.slane %v7077, 4
        %v7080 = vshll.u32 %v6825, 16
        %v7082 = vrot.slane %v7080, 5
        %v7083 = vsel %vm4944, %v7078, %v7082
        %v7085 = vshrl.u32 %v6826, 16
        %v7087 = vrot.slane %v7085, 4
        %v7088 = vshll.u32 %v6826, 16
        %v7090 = vrot.slane %v7088, 5
        %v7091 = vor.u32 %v7087, %v7090
        %v7092 = vrot.slane %v7091, 4
        %v7094 = vshll.u32 %v6827, 16
        %v7096 = vrot.slane %v7094, 5
        %v7097 = vsel %vm4944, %v7092, %v7096
        %v7098 = vshrl.u32 %v6827, 16
        %v7100 = vrot.slane %v7098, 4
        %v7101 = vor.u32 %v7100, %v7096
        %v7102 = vrot.slane %v7101, 4
        %v7104 = vshll.u32 %v6828, 16
        %v7106 = vrot.slane %v7104, 5
        %v7107 = vsel %vm4944, %v7102, %v7106
        %v7109 = vshrl.u32 %v6829, 16
        %v7111 = vrot.slane %v7109, 4
        %v7112 = vshll.u32 %v6829, 16
        %v7114 = vrot.slane %v7112, 5
        %v7115 = vor.u32 %v7111, %v7114
        %v7116 = vrot.slane %v7115, 4
        %v7118 = vshll.u32 %v6830, 16
        %v7120 = vrot.slane %v7118, 5
        %v7121 = vsel %vm4944, %v7116, %v7120
        %v7122 = vshrl.u32 %v6830, 16
        %v7124 = vrot.slane %v7122, 4
        %v7125 = vor.u32 %v7124, %v7120
        %v7126 = vrot.slane %v7125, 4
        %v7128 = vshll.u32 %v6831, 16
        %v7130 = vrot.slane %v7128, 5
        %v7131 = vsel %vm4944, %v7126, %v7130
        %v7133 = vshrl.u32 %v6832, 16
        %v7135 = vrot.slane %v7133, 4
        %v7136 = vshll.u32 %v6832, 16
        %v7138 = vrot.slane %v7136, 5
        %v7139 = vor.u32 %v7135, %v7138
        %v7140 = vrot.slane %v7139, 4
        %v7142 = vshll.u32 %v6833, 16
        %v7144 = vrot.slane %v7142, 5
        %v7145 = vsel %vm4944, %v7140, %v7144
        %v7146 = vshrl.u32 %v6833, 16
        %v7148 = vrot.slane %v7146, 4
        %v7149 = vor.u32 %v7148, %v7144
        %v7150 = vrot.slane %v7149, 4
        %v7152 = vshll.u32 %v6834, 16
        %v7154 = vrot.slane %v7152, 5
        %v7155 = vsel %vm4944, %v7150, %v7154
        %v7157 = vshrl.u32 %v6835, 16
        %v7159 = vrot.slane %v7157, 4
        %v7160 = vshll.u32 %v6835, 16
        %v7162 = vrot.slane %v7160, 5
        %v7163 = vor.u32 %v7159, %v7162
        %v7164 = vrot.slane %v7163, 4
        %v7166 = vshll.u32 %v6836, 16
        %v7168 = vrot.slane %v7166, 5
        %v7169 = vsel %vm4944, %v7164, %v7168
        %v7170 = vshrl.u32 %v6836, 16
        %v7172 = vrot.slane %v7170, 4
        %v7173 = vor.u32 %v7172, %v7168
        %v7174 = vrot.slane %v7173, 4
        %v7176 = vshll.u32 %v6837, 16
        %v7178 = vrot.slane %v7176, 5
        %v7179 = vsel %vm4944, %v7174, %v7178
        %v7181 = vshrl.u32 %v6838, 16
        %v7183 = vrot.slane %v7181, 4
        %v7184 = vshll.u32 %v6838, 16
        %v7186 = vrot.slane %v7184, 5
        %v7187 = vor.u32 %v7183, %v7186
        %v7188 = vrot.slane %v7187, 4
        %v7190 = vshll.u32 %v6839, 16
        %v7192 = vrot.slane %v7190, 5
        %v7193 = vsel %vm4944, %v7188, %v7192
        %v7194 = vshrl.u32 %v6839, 16
        %v7196 = vrot.slane %v7194, 4
        %v7197 = vor.u32 %v7196, %v7192
        %v7198 = vrot.slane %v7197, 4
        %v7200 = vshll.u32 %v6840, 16
        %v7202 = vrot.slane %v7200, 5
        %v7203 = vsel %vm4944, %v7198, %v7202
        %v7205 = vshrl.u32 %v6841, 16
        %v7207 = vrot.slane %v7205, 4
        %v7208 = vshll.u32 %v6841, 16
        %v7210 = vrot.slane %v7208, 5
        %v7211 = vor.u32 %v7207, %v7210
        %v7212 = vrot.slane %v7211, 4
        %v7214 = vshll.u32 %v6842, 16
        %v7216 = vrot.slane %v7214, 5
        %v7217 = vsel %vm4944, %v7212, %v7216
        %v7218 = vshrl.u32 %v6842, 16
        %v7220 = vrot.slane %v7218, 4
        %v7221 = vor.u32 %v7220, %v7216
        %v7222 = vrot.slane %v7221, 4
        %v7224 = vshll.u32 %v6843, 16
        %v7226 = vrot.slane %v7224, 5
        %v7227 = vsel %vm4944, %v7222, %v7226
        %s7228 = scalar_lea.vmem %s4, 256
        %v7229 = vld [vmem:[%s7228] sm:$0xf]
        %v7230 = vld [vmem:[%s7228 + $0x4] sm:$0xf]
        %v7231 = vld [vmem:[%s7228 + $0x8] sm:$0xf]
        %v7232 = vld [vmem:[%s7228 + $0xc] sm:$0xf]
        %v7233 = vld [vmem:[%s7228 + $0x10] sm:$0xf]
        %v7234 = vld [vmem:[%s7228 + $0x14] sm:$0xf]
        %v7235 = vld [vmem:[%s7228 + $0x18] sm:$0xf]
        %v7236 = vld [vmem:[%s7228 + $0x1c] sm:$0xf]
        %v7237 = vld [vmem:[%s7228 + $0x20] sm:$0xf]
        %v7238 = vld [vmem:[%s7228 + $0x24] sm:$0xf]
        %v7239 = vld [vmem:[%s7228 + $0x28] sm:$0xf]
        %v7240 = vld [vmem:[%s7228 + $0x2c] sm:$0xf]
        %v7241 = vld [vmem:[%s7228 + $0x30] sm:$0xf]
        %v7242 = vld [vmem:[%s7228 + $0x34] sm:$0xf]
        %v7243 = vld [vmem:[%s7228 + $0x38] sm:$0xf]
        %v7244 = vld [vmem:[%s7228 + $0x3c] sm:$0xf]
        %v7245 = vunpack.c.l.b16 %v6857
        %v7246 = vunpack.c.l.b16 %v6867
        %v7247 = vunpack.c.l.b16 %v6881
        %v7248 = vunpack.c.l.b16 %v6891
        %v7249 = vunpack.c.l.b16 %v6905
        %v7250 = vunpack.c.l.b16 %v6915
        %v7251 = vunpack.c.l.b16 %v6929
        %v7252 = vunpack.c.l.b16 %v6939
        %v7253 = vunpack.c.l.b16 %v6953
        %v7254 = vunpack.c.l.b16 %v6963
        %v7255 = vunpack.c.l.b16 %v6977
        %v7256 = vunpack.c.l.b16 %v6987
        %v7257 = vunpack.c.l.b16 %v7001
        %v7258 = vunpack.c.l.b16 %v7011
        %v7259 = vunpack.c.l.b16 %v7025
        %v7260 = vunpack.c.l.b16 %v7035
        %v7261 = vunpack.c.l.b16 %v7049
        %v7262 = vunpack.c.l.b16 %v7059
        %v7263 = vunpack.c.l.b16 %v7073
        %v7264 = vunpack.c.l.b16 %v7083
        %v7265 = vunpack.c.l.b16 %v7097
        %v7266 = vunpack.c.l.b16 %v7107
        %v7267 = vunpack.c.l.b16 %v7121
        %v7268 = vunpack.c.l.b16 %v7131
        %v7269 = vunpack.c.l.b16 %v7145
        %v7270 = vunpack.c.l.b16 %v7155
        %v7271 = vunpack.c.l.b16 %v7169
        %v7272 = vunpack.c.l.b16 %v7179
        %v7273 = vunpack.c.l.b16 %v7193
        %v7274 = vunpack.c.l.b16 %v7203
        %v7275 = vunpack.c.l.b16 %v7217
        %v7276 = vunpack.c.l.b16 %v7227
        %v7277 = vpack.c.b16 %v7246, %v7245
        %v7278 = vpack.c.b16 %v7248, %v7247
        %v7279 = vpack.c.b16 %v7250, %v7249
        %v7280 = vpack.c.b16 %v7252, %v7251
        %v7281 = vpack.c.b16 %v7254, %v7253
        %v7282 = vpack.c.b16 %v7256, %v7255
        %v7283 = vpack.c.b16 %v7258, %v7257
        %v7284 = vpack.c.b16 %v7260, %v7259
        %v7285 = vpack.c.b16 %v7262, %v7261
        %v7286 = vpack.c.b16 %v7264, %v7263
        %v7287 = vpack.c.b16 %v7266, %v7265
        %v7288 = vpack.c.b16 %v7268, %v7267
        %v7289 = vpack.c.b16 %v7270, %v7269
        %v7290 = vpack.c.b16 %v7272, %v7271
        %v7291 = vpack.c.b16 %v7274, %v7273
        %v7292 = vpack.c.b16 %v7276, %v7275
        %v7325 = vunpack.c.l.b16 %v7229
        %v7326 = vunpack.c.l.b16 %v7230
        %v7327 = vunpack.c.l.b16 %v7231
        %v7328 = vunpack.c.l.b16 %v7232
        %v7329 = vunpack.c.l.b16 %v7233
        %v7330 = vunpack.c.l.b16 %v7234
        %v7331 = vunpack.c.l.b16 %v7235
        %v7332 = vunpack.c.l.b16 %v7236
        %v7333 = vunpack.c.l.b16 %v7237
        %v7334 = vunpack.c.l.b16 %v7238
        %v7335 = vunpack.c.l.b16 %v7239
        %v7336 = vunpack.c.l.b16 %v7240
        %v7337 = vunpack.c.l.b16 %v7241
        %v7338 = vunpack.c.l.b16 %v7242
        %v7339 = vunpack.c.l.b16 %v7243
        %v7340 = vunpack.c.l.b16 %v7244
        %v7341 = vpack.c.b16 %v7326, %v7325
        %v7342 = vpack.c.b16 %v7328, %v7327
        %v7343 = vpack.c.b16 %v7330, %v7329
        %v7344 = vpack.c.b16 %v7332, %v7331
        %v7345 = vpack.c.b16 %v7334, %v7333
        %v7346 = vpack.c.b16 %v7336, %v7335
        %v7347 = vpack.c.b16 %v7338, %v7337
        %v7348 = vpack.c.b16 %v7340, %v7339
        %7357 = vmatprep.subr.bf16.mxu0 0
        %7358 = vmatpush1.bf16.msra.mxu0 %v7348
        %7359 = vmatprep.subr.bf16.mxu0 0
        %7360 = vmatpush1.bf16.msra.mxu0 %v7347
        %7361 = vmatprep.subr.bf16.mxu0 0
        %7362 = vmatpush1.bf16.msra.mxu0 %v7346
        %7363 = vmatprep.subr.bf16.mxu0 0
        %7364 = vmatpush1.bf16.msra.mxu0 %v7345
        %7365 = vmatprep.subr.bf16.mxu0 0
        %7366 = vmatpush1.bf16.msra.mxu0 %v7344
        %7367 = vmatprep.subr.bf16.mxu0 0
        %7368 = vmatpush1.bf16.msra.mxu0 %v7343
        %7369 = vmatprep.subr.bf16.mxu0 0
        %7370 = vmatpush1.bf16.msra.mxu0 %v7342
        %7371 = vmatprep.subr.bf16.mxu0 0
        %7372 = vmatpush1.bf16.msra.mxu0 %v7341
        %7373 = vmatprep.subr.bf16.mxu0 0
        %7374 = vmatpush2.bf16.msra.mxu0 0
        %7375 = vmatprep.subr.bf16.mxu0 0
        %7376 = vmatpush2.bf16.msra.mxu0 0
        %7377 = vmatprep.subr.bf16.mxu0 0
        %7378 = vmatpush2.bf16.msra.mxu0 0
        %7379 = vmatprep.subr.bf16.mxu0 0
        %7380 = vmatpush2.bf16.msra.mxu0 0
        %7381 = vmatprep.subr.bf16.mxu0 0
        %7382 = vmatpush2.bf16.msra.mxu0 0
        %7383 = vmatprep.subr.bf16.mxu0 0
        %7384 = vmatpush2.bf16.msra.mxu0 0
        %7385 = vmatprep.subr.bf16.mxu0 0
        %7386 = vmatpush2.bf16.msra.mxu0 0
        %7387 = vmatprep.subr.bf16.mxu0 0
        %7388 = vmatpush2.bf16.msra.mxu0 0
        %7389 = vmatprep.mubr.bf16.mxu0 0
        %7390 = vmatmul.mubr.bf16.gmra.mxu0 %v7277
        %v7391 = vpop.f32.mrf.mxu0
        %v7392 = vadd.f32 0.0, %v7391
        %v7393 = vpop.f32.mrf.mxu0
        %v7394 = vpop.f32.mrf.mxu0
        %v7395 = vadd.f32 0.0, %v7394
        %v7396 = vpop.f32.mrf.mxu0
        %7397 = vmatprep.mubr.bf16.mxu0 0
        %7398 = vmatmul.mubr.bf16.gmra.mxu0 %v7278
        %v7399 = vpop.f32.mrf.mxu0
        %v7400 = vadd.f32 0.0, %v7399
        %v7401 = vpop.f32.mrf.mxu0
        %v7402 = vpop.f32.mrf.mxu0
        %v7403 = vadd.f32 0.0, %v7402
        %v7404 = vpop.f32.mrf.mxu0
        %7405 = vmatprep.mubr.bf16.mxu0 0
        %7406 = vmatmul.mubr.bf16.gmra.mxu0 %v7279
        %v7407 = vpop.f32.mrf.mxu0
        %v7408 = vadd.f32 0.0, %v7407
        %v7409 = vpop.f32.mrf.mxu0
        %v7410 = vpop.f32.mrf.mxu0
        %v7411 = vadd.f32 0.0, %v7410
        %v7412 = vpop.f32.mrf.mxu0
        %7413 = vmatprep.mubr.bf16.mxu0 0
        %7414 = vmatmul.mubr.bf16.gmra.mxu0 %v7280
        %v7415 = vpop.f32.mrf.mxu0
        %v7416 = vadd.f32 0.0, %v7415
        %v7417 = vpop.f32.mrf.mxu0
        %v7418 = vpop.f32.mrf.mxu0
        %v7419 = vadd.f32 0.0, %v7418
        %v7420 = vpop.f32.mrf.mxu0
        %7421 = vmatprep.mubr.bf16.mxu0 0
        %7422 = vmatmul.mubr.bf16.gmra.mxu0 %v7281
        %v7423 = vpop.f32.mrf.mxu0
        %v7424 = vadd.f32 0.0, %v7423
        %v7425 = vpop.f32.mrf.mxu0
        %v7426 = vpop.f32.mrf.mxu0
        %v7427 = vadd.f32 0.0, %v7426
        %v7428 = vpop.f32.mrf.mxu0
        %7429 = vmatprep.mubr.bf16.mxu0 0
        %7430 = vmatmul.mubr.bf16.gmra.mxu0 %v7282
        %v7431 = vpop.f32.mrf.mxu0
        %v7432 = vadd.f32 0.0, %v7431
        %v7433 = vpop.f32.mrf.mxu0
        %v7434 = vpop.f32.mrf.mxu0
        %v7435 = vadd.f32 0.0, %v7434
        %v7436 = vpop.f32.mrf.mxu0
        %7437 = vmatprep.mubr.bf16.mxu0 0
        %7438 = vmatmul.mubr.bf16.gmra.mxu0 %v7283
        %v7439 = vpop.f32.mrf.mxu0
        %v7440 = vadd.f32 0.0, %v7439
        %v7441 = vpop.f32.mrf.mxu0
        %v7442 = vpop.f32.mrf.mxu0
        %v7443 = vadd.f32 0.0, %v7442
        %v7444 = vpop.f32.mrf.mxu0
        %7445 = vmatprep.mubr.bf16.mxu0 0
        %7446 = vmatmul.mubr.bf16.gmra.mxu0 %v7284
        %v7447 = vpop.f32.mrf.mxu0
        %v7448 = vadd.f32 0.0, %v7447
        %v7449 = vpop.f32.mrf.mxu0
        %v7450 = vpop.f32.mrf.mxu0
        %v7451 = vadd.f32 0.0, %v7450
        %v7452 = vpop.f32.mrf.mxu0
        %7453 = vmatprep.mubr.bf16.mxu0 0
        %7454 = vmatmul.mubr.bf16.gmra.mxu0 %v7285
        %v7455 = vpop.f32.mrf.mxu0
        %v7456 = vadd.f32 0.0, %v7455
        %v7457 = vpop.f32.mrf.mxu0
        %v7458 = vpop.f32.mrf.mxu0
        %v7459 = vadd.f32 0.0, %v7458
        %v7460 = vpop.f32.mrf.mxu0
        %7461 = vmatprep.mubr.bf16.mxu0 0
        %7462 = vmatmul.mubr.bf16.gmra.mxu0 %v7286
        %v7463 = vpop.f32.mrf.mxu0
        %v7464 = vadd.f32 0.0, %v7463
        %v7465 = vpop.f32.mrf.mxu0
        %v7466 = vpop.f32.mrf.mxu0
        %v7467 = vadd.f32 0.0, %v7466
        %v7468 = vpop.f32.mrf.mxu0
        %7469 = vmatprep.mubr.bf16.mxu0 0
        %7470 = vmatmul.mubr.bf16.gmra.mxu0 %v7287
        %v7471 = vpop.f32.mrf.mxu0
        %v7472 = vadd.f32 0.0, %v7471
        %v7473 = vpop.f32.mrf.mxu0
        %v7474 = vpop.f32.mrf.mxu0
        %v7475 = vadd.f32 0.0, %v7474
        %v7476 = vpop.f32.mrf.mxu0
        %7477 = vmatprep.mubr.bf16.mxu0 0
        %7478 = vmatmul.mubr.bf16.gmra.mxu0 %v7288
        %v7479 = vpop.f32.mrf.mxu0
        %v7480 = vadd.f32 0.0, %v7479
        %v7481 = vpop.f32.mrf.mxu0
        %v7482 = vpop.f32.mrf.mxu0
        %v7483 = vadd.f32 0.0, %v7482
        %v7484 = vpop.f32.mrf.mxu0
        %7485 = vmatprep.mubr.bf16.mxu0 0
        %7486 = vmatmul.mubr.bf16.gmra.mxu0 %v7289
        %v7487 = vpop.f32.mrf.mxu0
        %v7488 = vadd.f32 0.0, %v7487
        %v7489 = vpop.f32.mrf.mxu0
        %v7490 = vpop.f32.mrf.mxu0
        %v7491 = vadd.f32 0.0, %v7490
        %v7492 = vpop.f32.mrf.mxu0
        %7493 = vmatprep.mubr.bf16.mxu0 0
        %7494 = vmatmul.mubr.bf16.gmra.mxu0 %v7290
        %v7495 = vpop.f32.mrf.mxu0
        %v7496 = vadd.f32 0.0, %v7495
        %v7497 = vpop.f32.mrf.mxu0
        %v7498 = vpop.f32.mrf.mxu0
        %v7499 = vadd.f32 0.0, %v7498
        %v7500 = vpop.f32.mrf.mxu0
        %7501 = vmatprep.mubr.bf16.mxu0 0
        %7502 = vmatmul.mubr.bf16.gmra.mxu0 %v7291
        %v7503 = vpop.f32.mrf.mxu0
        %v7504 = vadd.f32 0.0, %v7503
        %v7505 = vpop.f32.mrf.mxu0
        %v7506 = vpop.f32.mrf.mxu0
        %v7507 = vadd.f32 0.0, %v7506
        %v7508 = vpop.f32.mrf.mxu0
        %7509 = vmatprep.mubr.bf16.mxu0 0
        %7510 = vmatmul.mubr.bf16.gmra.mxu0 %v7292
        %v7511 = vpop.f32.mrf.mxu0
        %v7512 = vadd.f32 0.0, %v7511
        %v7513 = vpop.f32.mrf.mxu0
        %v7514 = vpop.f32.mrf.mxu0
        %v7515 = vadd.f32 0.0, %v7514
        %v7516 = vpop.f32.mrf.mxu0
        %7517 = vdwg.mxu0
        %v7518 = vadd.f32 %v6764, %v7392
        %v7519 = vadd.f32 %v6765, %v7395
        %v7520 = vadd.f32 %v6766, %v7400
        %v7521 = vadd.f32 %v6767, %v7403
        %v7522 = vadd.f32 %v6768, %v7408
        %v7523 = vadd.f32 %v6769, %v7411
        %v7524 = vadd.f32 %v6770, %v7416
        %v7525 = vadd.f32 %v6771, %v7419
        %v7526 = vadd.f32 %v6772, %v7424
        %v7527 = vadd.f32 %v6773, %v7427
        %v7528 = vadd.f32 %v6774, %v7432
        %v7529 = vadd.f32 %v6775, %v7435
        %v7530 = vadd.f32 %v6776, %v7440
        %v7531 = vadd.f32 %v6777, %v7443
        %v7532 = vadd.f32 %v6778, %v7448
        %v7533 = vadd.f32 %v6779, %v7451
        %v7534 = vadd.f32 %v6780, %v7456
        %v7535 = vadd.f32 %v6781, %v7459
        %v7536 = vadd.f32 %v6782, %v7464
        %v7537 = vadd.f32 %v6783, %v7467
        %v7538 = vadd.f32 %v6784, %v7472
        %v7539 = vadd.f32 %v6785, %v7475
        %v7540 = vadd.f32 %v6786, %v7480
        %v7541 = vadd.f32 %v6787, %v7483
        %v7542 = vadd.f32 %v6788, %v7488
        %v7543 = vadd.f32 %v6789, %v7491
        %v7544 = vadd.f32 %v6790, %v7496
        %v7545 = vadd.f32 %v6791, %v7499
        %v7546 = vadd.f32 %v6792, %v7504
        %v7547 = vadd.f32 %v6793, %v7507
        %v7548 = vadd.f32 %v6794, %v7512
        %v7549 = vadd.f32 %v6795, %v7515
        %v7550 = vld [vmem:[%s6409] sm:$0xe]
        %v7551 = vld [vmem:[%s6409 + $0xc] sm:$0xe]
        %v7552 = vld [vmem:[%s6409 + $0x18] sm:$0xe]
        %v7553 = vld [vmem:[%s6409 + $0x24] sm:$0xe]
        %v7554 = vld [vmem:[%s6409 + $0x30] sm:$0xe]
        %v7555 = vld [vmem:[%s6409 + $0x3c] sm:$0xe]
        %v7556 = vld [vmem:[%s6409 + $0x48] sm:$0xe]
        %v7557 = vld [vmem:[%s6409 + $0x54] sm:$0xe]
        %v7558 = vld [vmem:[%s6409 + $0x60] sm:$0xe]
        %v7559 = vld [vmem:[%s6409 + $0x6c] sm:$0xe]
        %v7560 = vld [vmem:[%s6409 + $0x78] sm:$0xe]
        %v7561 = vld [vmem:[%s6409 + $0x84] sm:$0xe]
        %v7562 = vld [vmem:[%s6409 + $0x90] sm:$0xe]
        %v7563 = vld [vmem:[%s6409 + $0x9c] sm:$0xe]
        %v7564 = vld [vmem:[%s6409 + $0xa8] sm:$0xe]
        %v7565 = vld [vmem:[%s6409 + $0xb4] sm:$0xe]
        %v7614 = vrot.slane %v7550, 5
        %v7615 = vrot.slane %v7614, 4
        %v7616 = vrot.slane %v6797, 5
        %v7617 = vsel %vm5974, %v7615, %v7616
        %v7618 = vrot.slane %v7616, 4
        %v7619 = vrot.slane %v6798, 5
        %v7620 = vsel %vm5974, %v7618, %v7619
        %v7621 = vrot.slane %v7551, 5
        %v7622 = vrot.slane %v7621, 4
        %v7623 = vrot.slane %v6800, 5
        %v7624 = vsel %vm5974, %v7622, %v7623
        %v7625 = vrot.slane %v7623, 4
        %v7626 = vrot.slane %v6801, 5
        %v7627 = vsel %vm5974, %v7625, %v7626
        %v7628 = vrot.slane %v7552, 5
        %v7629 = vrot.slane %v7628, 4
        %v7630 = vrot.slane %v6803, 5
        %v7631 = vsel %vm5974, %v7629, %v7630
        %v7632 = vrot.slane %v7630, 4
        %v7633 = vrot.slane %v6804, 5
        %v7634 = vsel %vm5974, %v7632, %v7633
        %v7635 = vrot.slane %v7553, 5
        %v7636 = vrot.slane %v7635, 4
        %v7637 = vrot.slane %v6806, 5
        %v7638 = vsel %vm5974, %v7636, %v7637
        %v7639 = vrot.slane %v7637, 4
        %v7640 = vrot.slane %v6807, 5
        %v7641 = vsel %vm5974, %v7639, %v7640
        %v7642 = vrot.slane %v7554, 5
        %v7643 = vrot.slane %v7642, 4
        %v7644 = vrot.slane %v6809, 5
        %v7645 = vsel %vm5974, %v7643, %v7644
        %v7646 = vrot.slane %v7644, 4
        %v7647 = vrot.slane %v6810, 5
        %v7648 = vsel %vm5974, %v7646, %v7647
        %v7649 = vrot.slane %v7555, 5
        %v7650 = vrot.slane %v7649, 4
        %v7651 = vrot.slane %v6812, 5
        %v7652 = vsel %vm5974, %v7650, %v7651
        %v7653 = vrot.slane %v7651, 4
        %v7654 = vrot.slane %v6813, 5
        %v7655 = vsel %vm5974, %v7653, %v7654
        %v7656 = vrot.slane %v7556, 5
        %v7657 = vrot.slane %v7656, 4
        %v7658 = vrot.slane %v6815, 5
        %v7659 = vsel %vm5974, %v7657, %v7658
        %v7660 = vrot.slane %v7658, 4
        %v7661 = vrot.slane %v6816, 5
        %v7662 = vsel %vm5974, %v7660, %v7661
        %v7663 = vrot.slane %v7557, 5
        %v7664 = vrot.slane %v7663, 4
        %v7665 = vrot.slane %v6818, 5
        %v7666 = vsel %vm5974, %v7664, %v7665
        %v7667 = vrot.slane %v7665, 4
        %v7668 = vrot.slane %v6819, 5
        %v7669 = vsel %vm5974, %v7667, %v7668
        %v7670 = vrot.slane %v7558, 5
        %v7671 = vrot.slane %v7670, 4
        %v7672 = vrot.slane %v6821, 5
        %v7673 = vsel %vm5974, %v7671, %v7672
        %v7674 = vrot.slane %v7672, 4
        %v7675 = vrot.slane %v6822, 5
        %v7676 = vsel %vm5974, %v7674, %v7675
        %v7677 = vrot.slane %v7559, 5
        %v7678 = vrot.slane %v7677, 4
        %v7679 = vrot.slane %v6824, 5
        %v7680 = vsel %vm5974, %v7678, %v7679
        %v7681 = vrot.slane %v7679, 4
        %v7682 = vrot.slane %v6825, 5
        %v7683 = vsel %vm5974, %v7681, %v7682
        %v7684 = vrot.slane %v7560, 5
        %v7685 = vrot.slane %v7684, 4
        %v7686 = vrot.slane %v6827, 5
        %v7687 = vsel %vm5974, %v7685, %v7686
        %v7688 = vrot.slane %v7686, 4
        %v7689 = vrot.slane %v6828, 5
        %v7690 = vsel %vm5974, %v7688, %v7689
        %v7691 = vrot.slane %v7561, 5
        %v7692 = vrot.slane %v7691, 4
        %v7693 = vrot.slane %v6830, 5
        %v7694 = vsel %vm5974, %v7692, %v7693
        %v7695 = vrot.slane %v7693, 4
        %v7696 = vrot.slane %v6831, 5
        %v7697 = vsel %vm5974, %v7695, %v7696
        %v7698 = vrot.slane %v7562, 5
        %v7699 = vrot.slane %v7698, 4
        %v7700 = vrot.slane %v6833, 5
        %v7701 = vsel %vm5974, %v7699, %v7700
        %v7702 = vrot.slane %v7700, 4
        %v7703 = vrot.slane %v6834, 5
        %v7704 = vsel %vm5974, %v7702, %v7703
        %v7705 = vrot.slane %v7563, 5
        %v7706 = vrot.slane %v7705, 4
        %v7707 = vrot.slane %v6836, 5
        %v7708 = vsel %vm5974, %v7706, %v7707
        %v7709 = vrot.slane %v7707, 4
        %v7710 = vrot.slane %v6837, 5
        %v7711 = vsel %vm5974, %v7709, %v7710
        %v7712 = vrot.slane %v7564, 5
        %v7713 = vrot.slane %v7712, 4
        %v7714 = vrot.slane %v6839, 5
        %v7715 = vsel %vm5974, %v7713, %v7714
        %v7716 = vrot.slane %v7714, 4
        %v7717 = vrot.slane %v6840, 5
        %v7718 = vsel %vm5974, %v7716, %v7717
        %v7719 = vrot.slane %v7565, 5
        %v7720 = vrot.slane %v7719, 4
        %v7721 = vrot.slane %v6842, 5
        %v7722 = vsel %vm5974, %v7720, %v7721
        %v7723 = vrot.slane %v7721, 4
        %v7724 = vrot.slane %v6843, 5
        %v7725 = vsel %vm5974, %v7723, %v7724
        %s7726 = scalar_lea.vmem %s4, 320
        %v7727 = vld [vmem:[%s7726] sm:$0xf]
        %v7728 = vld [vmem:[%s7726 + $0x4] sm:$0xf]
        %v7729 = vld [vmem:[%s7726 + $0x8] sm:$0xf]
        %v7730 = vld [vmem:[%s7726 + $0xc] sm:$0xf]
        %v7731 = vld [vmem:[%s7726 + $0x10] sm:$0xf]
        %v7732 = vld [vmem:[%s7726 + $0x14] sm:$0xf]
        %v7733 = vld [vmem:[%s7726 + $0x18] sm:$0xf]
        %v7734 = vld [vmem:[%s7726 + $0x1c] sm:$0xf]
        %v7735 = vld [vmem:[%s7726 + $0x20] sm:$0xf]
        %v7736 = vld [vmem:[%s7726 + $0x24] sm:$0xf]
        %v7737 = vld [vmem:[%s7726 + $0x28] sm:$0xf]
        %v7738 = vld [vmem:[%s7726 + $0x2c] sm:$0xf]
        %v7739 = vld [vmem:[%s7726 + $0x30] sm:$0xf]
        %v7740 = vld [vmem:[%s7726 + $0x34] sm:$0xf]
        %v7741 = vld [vmem:[%s7726 + $0x38] sm:$0xf]
        %v7742 = vld [vmem:[%s7726 + $0x3c] sm:$0xf]
        %v7743 = vunpack.c.l.b16 %v7617
        %v7744 = vunpack.c.l.b16 %v7620
        %v7745 = vunpack.c.l.b16 %v7624
        %v7746 = vunpack.c.l.b16 %v7627
        %v7747 = vunpack.c.l.b16 %v7631
        %v7748 = vunpack.c.l.b16 %v7634
        %v7749 = vunpack.c.l.b16 %v7638
        %v7750 = vunpack.c.l.b16 %v7641
        %v7751 = vunpack.c.l.b16 %v7645
        %v7752 = vunpack.c.l.b16 %v7648
        %v7753 = vunpack.c.l.b16 %v7652
        %v7754 = vunpack.c.l.b16 %v7655
        %v7755 = vunpack.c.l.b16 %v7659
        %v7756 = vunpack.c.l.b16 %v7662
        %v7757 = vunpack.c.l.b16 %v7666
        %v7758 = vunpack.c.l.b16 %v7669
        %v7759 = vunpack.c.l.b16 %v7673
        %v7760 = vunpack.c.l.b16 %v7676
        %v7761 = vunpack.c.l.b16 %v7680
        %v7762 = vunpack.c.l.b16 %v7683
        %v7763 = vunpack.c.l.b16 %v7687
        %v7764 = vunpack.c.l.b16 %v7690
        %v7765 = vunpack.c.l.b16 %v7694
        %v7766 = vunpack.c.l.b16 %v7697
        %v7767 = vunpack.c.l.b16 %v7701
        %v7768 = vunpack.c.l.b16 %v7704
        %v7769 = vunpack.c.l.b16 %v7708
        %v7770 = vunpack.c.l.b16 %v7711
        %v7771 = vunpack.c.l.b16 %v7715
        %v7772 = vunpack.c.l.b16 %v7718
        %v7773 = vunpack.c.l.b16 %v7722
        %v7774 = vunpack.c.l.b16 %v7725
        %v7775 = vpack.c.b16 %v7744, %v7743
        %v7776 = vpack.c.b16 %v7746, %v7745
        %v7777 = vpack.c.b16 %v7748, %v7747
        %v7778 = vpack.c.b16 %v7750, %v7749
        %v7779 = vpack.c.b16 %v7752, %v7751
        %v7780 = vpack.c.b16 %v7754, %v7753
        %v7781 = vpack.c.b16 %v7756, %v7755
        %v7782 = vpack.c.b16 %v7758, %v7757
        %v7783 = vpack.c.b16 %v7760, %v7759
        %v7784 = vpack.c.b16 %v7762, %v7761
        %v7785 = vpack.c.b16 %v7764, %v7763
        %v7786 = vpack.c.b16 %v7766, %v7765
        %v7787 = vpack.c.b16 %v7768, %v7767
        %v7788 = vpack.c.b16 %v7770, %v7769
        %v7789 = vpack.c.b16 %v7772, %v7771
        %v7790 = vpack.c.b16 %v7774, %v7773
        %v7823 = vunpack.c.l.b16 %v7727
        %v7824 = vunpack.c.l.b16 %v7728
        %v7825 = vunpack.c.l.b16 %v7729
        %v7826 = vunpack.c.l.b16 %v7730
        %v7827 = vunpack.c.l.b16 %v7731
        %v7828 = vunpack.c.l.b16 %v7732
        %v7829 = vunpack.c.l.b16 %v7733
        %v7830 = vunpack.c.l.b16 %v7734
        %v7831 = vunpack.c.l.b16 %v7735
        %v7832 = vunpack.c.l.b16 %v7736
        %v7833 = vunpack.c.l.b16 %v7737
        %v7834 = vunpack.c.l.b16 %v7738
        %v7835 = vunpack.c.l.b16 %v7739
        %v7836 = vunpack.c.l.b16 %v7740
        %v7837 = vunpack.c.l.b16 %v7741
        %v7838 = vunpack.c.l.b16 %v7742
        %v7839 = vpack.c.b16 %v7824, %v7823
        %v7840 = vpack.c.b16 %v7826, %v7825
        %v7841 = vpack.c.b16 %v7828, %v7827
        %v7842 = vpack.c.b16 %v7830, %v7829
        %v7843 = vpack.c.b16 %v7832, %v7831
        %v7844 = vpack.c.b16 %v7834, %v7833
        %v7845 = vpack.c.b16 %v7836, %v7835
        %v7846 = vpack.c.b16 %v7838, %v7837
        %7855 = vmatprep.subr.bf16.mxu0 0
        %7856 = vmatpush1.bf16.msra.mxu0 %v7846
        %7857 = vmatprep.subr.bf16.mxu0 0
        %7858 = vmatpush1.bf16.msra.mxu0 %v7845
        %7859 = vmatprep.subr.bf16.mxu0 0
        %7860 = vmatpush1.bf16.msra.mxu0 %v7844
        %7861 = vmatprep.subr.bf16.mxu0 0
        %7862 = vmatpush1.bf16.msra.mxu0 %v7843
        %7863 = vmatprep.subr.bf16.mxu0 0
        %7864 = vmatpush1.bf16.msra.mxu0 %v7842
        %7865 = vmatprep.subr.bf16.mxu0 0
        %7866 = vmatpush1.bf16.msra.mxu0 %v7841
        %7867 = vmatprep.subr.bf16.mxu0 0
        %7868 = vmatpush1.bf16.msra.mxu0 %v7840
        %7869 = vmatprep.subr.bf16.mxu0 0
        %7870 = vmatpush1.bf16.msra.mxu0 %v7839
        %7871 = vmatprep.subr.bf16.mxu0 0
        %7872 = vmatpush2.bf16.msra.mxu0 0
        %7873 = vmatprep.subr.bf16.mxu0 0
        %7874 = vmatpush2.bf16.msra.mxu0 0
        %7875 = vmatprep.subr.bf16.mxu0 0
        %7876 = vmatpush2.bf16.msra.mxu0 0
        %7877 = vmatprep.subr.bf16.mxu0 0
        %7878 = vmatpush2.bf16.msra.mxu0 0
        %7879 = vmatprep.subr.bf16.mxu0 0
        %7880 = vmatpush2.bf16.msra.mxu0 0
        %7881 = vmatprep.subr.bf16.mxu0 0
        %7882 = vmatpush2.bf16.msra.mxu0 0
        %7883 = vmatprep.subr.bf16.mxu0 0
        %7884 = vmatpush2.bf16.msra.mxu0 0
        %7885 = vmatprep.subr.bf16.mxu0 0
        %7886 = vmatpush2.bf16.msra.mxu0 0
        %7887 = vmatprep.mubr.bf16.mxu0 0
        %7888 = vmatmul.mubr.bf16.gmra.mxu0 %v7775
        %v7889 = vpop.f32.mrf.mxu0
        %v7890 = vadd.f32 0.0, %v7889
        %v7891 = vpop.f32.mrf.mxu0
        %v7892 = vpop.f32.mrf.mxu0
        %v7893 = vadd.f32 0.0, %v7892
        %v7894 = vpop.f32.mrf.mxu0
        %7895 = vmatprep.mubr.bf16.mxu0 0
        %7896 = vmatmul.mubr.bf16.gmra.mxu0 %v7776
        %v7897 = vpop.f32.mrf.mxu0
        %v7898 = vadd.f32 0.0, %v7897
        %v7899 = vpop.f32.mrf.mxu0
        %v7900 = vpop.f32.mrf.mxu0
        %v7901 = vadd.f32 0.0, %v7900
        %v7902 = vpop.f32.mrf.mxu0
        %7903 = vmatprep.mubr.bf16.mxu0 0
        %7904 = vmatmul.mubr.bf16.gmra.mxu0 %v7777
        %v7905 = vpop.f32.mrf.mxu0
        %v7906 = vadd.f32 0.0, %v7905
        %v7907 = vpop.f32.mrf.mxu0
        %v7908 = vpop.f32.mrf.mxu0
        %v7909 = vadd.f32 0.0, %v7908
        %v7910 = vpop.f32.mrf.mxu0
        %7911 = vmatprep.mubr.bf16.mxu0 0
        %7912 = vmatmul.mubr.bf16.gmra.mxu0 %v7778
        %v7913 = vpop.f32.mrf.mxu0
        %v7914 = vadd.f32 0.0, %v7913
        %v7915 = vpop.f32.mrf.mxu0
        %v7916 = vpop.f32.mrf.mxu0
        %v7917 = vadd.f32 0.0, %v7916
        %v7918 = vpop.f32.mrf.mxu0
        %7919 = vmatprep.mubr.bf16.mxu0 0
        %7920 = vmatmul.mubr.bf16.gmra.mxu0 %v7779
        %v7921 = vpop.f32.mrf.mxu0
        %v7922 = vadd.f32 0.0, %v7921
        %v7923 = vpop.f32.mrf.mxu0
        %v7924 = vpop.f32.mrf.mxu0
        %v7925 = vadd.f32 0.0, %v7924
        %v7926 = vpop.f32.mrf.mxu0
        %7927 = vmatprep.mubr.bf16.mxu0 0
        %7928 = vmatmul.mubr.bf16.gmra.mxu0 %v7780
        %v7929 = vpop.f32.mrf.mxu0
        %v7930 = vadd.f32 0.0, %v7929
        %v7931 = vpop.f32.mrf.mxu0
        %v7932 = vpop.f32.mrf.mxu0
        %v7933 = vadd.f32 0.0, %v7932
        %v7934 = vpop.f32.mrf.mxu0
        %7935 = vmatprep.mubr.bf16.mxu0 0
        %7936 = vmatmul.mubr.bf16.gmra.mxu0 %v7781
        %v7937 = vpop.f32.mrf.mxu0
        %v7938 = vadd.f32 0.0, %v7937
        %v7939 = vpop.f32.mrf.mxu0
        %v7940 = vpop.f32.mrf.mxu0
        %v7941 = vadd.f32 0.0, %v7940
        %v7942 = vpop.f32.mrf.mxu0
        %7943 = vmatprep.mubr.bf16.mxu0 0
        %7944 = vmatmul.mubr.bf16.gmra.mxu0 %v7782
        %v7945 = vpop.f32.mrf.mxu0
        %v7946 = vadd.f32 0.0, %v7945
        %v7947 = vpop.f32.mrf.mxu0
        %v7948 = vpop.f32.mrf.mxu0
        %v7949 = vadd.f32 0.0, %v7948
        %v7950 = vpop.f32.mrf.mxu0
        %7951 = vmatprep.mubr.bf16.mxu0 0
        %7952 = vmatmul.mubr.bf16.gmra.mxu0 %v7783
        %v7953 = vpop.f32.mrf.mxu0
        %v7954 = vadd.f32 0.0, %v7953
        %v7955 = vpop.f32.mrf.mxu0
        %v7956 = vpop.f32.mrf.mxu0
        %v7957 = vadd.f32 0.0, %v7956
        %v7958 = vpop.f32.mrf.mxu0
        %7959 = vmatprep.mubr.bf16.mxu0 0
        %7960 = vmatmul.mubr.bf16.gmra.mxu0 %v7784
        %v7961 = vpop.f32.mrf.mxu0
        %v7962 = vadd.f32 0.0, %v7961
        %v7963 = vpop.f32.mrf.mxu0
        %v7964 = vpop.f32.mrf.mxu0
        %v7965 = vadd.f32 0.0, %v7964
        %v7966 = vpop.f32.mrf.mxu0
        %7967 = vmatprep.mubr.bf16.mxu0 0
        %7968 = vmatmul.mubr.bf16.gmra.mxu0 %v7785
        %v7969 = vpop.f32.mrf.mxu0
        %v7970 = vadd.f32 0.0, %v7969
        %v7971 = vpop.f32.mrf.mxu0
        %v7972 = vpop.f32.mrf.mxu0
        %v7973 = vadd.f32 0.0, %v7972
        %v7974 = vpop.f32.mrf.mxu0
        %7975 = vmatprep.mubr.bf16.mxu0 0
        %7976 = vmatmul.mubr.bf16.gmra.mxu0 %v7786
        %v7977 = vpop.f32.mrf.mxu0
        %v7978 = vadd.f32 0.0, %v7977
        %v7979 = vpop.f32.mrf.mxu0
        %v7980 = vpop.f32.mrf.mxu0
        %v7981 = vadd.f32 0.0, %v7980
        %v7982 = vpop.f32.mrf.mxu0
        %7983 = vmatprep.mubr.bf16.mxu0 0
        %7984 = vmatmul.mubr.bf16.gmra.mxu0 %v7787
        %v7985 = vpop.f32.mrf.mxu0
        %v7986 = vadd.f32 0.0, %v7985
        %v7987 = vpop.f32.mrf.mxu0
        %v7988 = vpop.f32.mrf.mxu0
        %v7989 = vadd.f32 0.0, %v7988
        %v7990 = vpop.f32.mrf.mxu0
        %7991 = vmatprep.mubr.bf16.mxu0 0
        %7992 = vmatmul.mubr.bf16.gmra.mxu0 %v7788
        %v7993 = vpop.f32.mrf.mxu0
        %v7994 = vadd.f32 0.0, %v7993
        %v7995 = vpop.f32.mrf.mxu0
        %v7996 = vpop.f32.mrf.mxu0
        %v7997 = vadd.f32 0.0, %v7996
        %v7998 = vpop.f32.mrf.mxu0
        %7999 = vmatprep.mubr.bf16.mxu0 0
        %8000 = vmatmul.mubr.bf16.gmra.mxu0 %v7789
        %v8001 = vpop.f32.mrf.mxu0
        %v8002 = vadd.f32 0.0, %v8001
        %v8003 = vpop.f32.mrf.mxu0
        %v8004 = vpop.f32.mrf.mxu0
        %v8005 = vadd.f32 0.0, %v8004
        %v8006 = vpop.f32.mrf.mxu0
        %8007 = vmatprep.mubr.bf16.mxu0 0
        %8008 = vmatmul.mubr.bf16.gmra.mxu0 %v7790
        %v8009 = vpop.f32.mrf.mxu0
        %v8010 = vadd.f32 0.0, %v8009
        %v8011 = vpop.f32.mrf.mxu0
        %v8012 = vpop.f32.mrf.mxu0
        %v8013 = vadd.f32 0.0, %v8012
        %v8014 = vpop.f32.mrf.mxu0
        %8015 = vdwg.mxu0
        %v8016 = vadd.f32 %v7518, %v7890
        %v8017 = vadd.f32 %v7519, %v7893
        %v8018 = vadd.f32 %v7520, %v7898
        %v8019 = vadd.f32 %v7521, %v7901
        %v8020 = vadd.f32 %v7522, %v7906
        %v8021 = vadd.f32 %v7523, %v7909
        %v8022 = vadd.f32 %v7524, %v7914
        %v8023 = vadd.f32 %v7525, %v7917
        %v8024 = vadd.f32 %v7526, %v7922
        %v8025 = vadd.f32 %v7527, %v7925
        %v8026 = vadd.f32 %v7528, %v7930
        %v8027 = vadd.f32 %v7529, %v7933
        %v8028 = vadd.f32 %v7530, %v7938
        %v8029 = vadd.f32 %v7531, %v7941
        %v8030 = vadd.f32 %v7532, %v7946
        %v8031 = vadd.f32 %v7533, %v7949
        %v8032 = vadd.f32 %v7534, %v7954
        %v8033 = vadd.f32 %v7535, %v7957
        %v8034 = vadd.f32 %v7536, %v7962
        %v8035 = vadd.f32 %v7537, %v7965
        %v8036 = vadd.f32 %v7538, %v7970
        %v8037 = vadd.f32 %v7539, %v7973
        %v8038 = vadd.f32 %v7540, %v7978
        %v8039 = vadd.f32 %v7541, %v7981
        %v8040 = vadd.f32 %v7542, %v7986
        %v8041 = vadd.f32 %v7543, %v7989
        %v8042 = vadd.f32 %v7544, %v7994
        %v8043 = vadd.f32 %v7545, %v7997
        %v8044 = vadd.f32 %v7546, %v8002
        %v8045 = vadd.f32 %v7547, %v8005
        %v8046 = vadd.f32 %v7548, %v8010
        %v8047 = vadd.f32 %v7549, %v8013
        %s8048 = scalar_lea.vmem [#allocation2], 24
        %v8049 = vld [vmem:[%s8048] sm:$0xf]
        %v8050 = vld [vmem:[%s8048 + $0x4] sm:$0xf]
        %v8051 = vld [vmem:[%s8048 + $0xc] sm:$0xf]
        %v8052 = vld [vmem:[%s8048 + $0x10] sm:$0xf]
        %v8053 = vld [vmem:[%s8048 + $0x18] sm:$0xf]
        %v8054 = vld [vmem:[%s8048 + $0x1c] sm:$0xf]
        %v8055 = vld [vmem:[%s8048 + $0x24] sm:$0xf]
        %v8056 = vld [vmem:[%s8048 + $0x28] sm:$0xf]
        %v8057 = vld [vmem:[%s8048 + $0x30] sm:$0xf]
        %v8058 = vld [vmem:[%s8048 + $0x34] sm:$0xf]
        %v8059 = vld [vmem:[%s8048 + $0x3c] sm:$0xf]
        %v8060 = vld [vmem:[%s8048 + $0x40] sm:$0xf]
        %v8061 = vld [vmem:[%s8048 + $0x48] sm:$0xf]
        %v8062 = vld [vmem:[%s8048 + $0x4c] sm:$0xf]
        %v8063 = vld [vmem:[%s8048 + $0x54] sm:$0xf]
        %v8064 = vld [vmem:[%s8048 + $0x58] sm:$0xf]
        %v8065 = vld [vmem:[%s8048 + $0x60] sm:$0xf]
        %v8066 = vld [vmem:[%s8048 + $0x64] sm:$0xf]
        %v8067 = vld [vmem:[%s8048 + $0x6c] sm:$0xf]
        %v8068 = vld [vmem:[%s8048 + $0x70] sm:$0xf]
        %v8069 = vld [vmem:[%s8048 + $0x78] sm:$0xf]
        %v8070 = vld [vmem:[%s8048 + $0x7c] sm:$0xf]
        %v8071 = vld [vmem:[%s8048 + $0x84] sm:$0xf]
        %v8072 = vld [vmem:[%s8048 + $0x88] sm:$0xf]
        %v8073 = vld [vmem:[%s8048 + $0x90] sm:$0xf]
        %v8074 = vld [vmem:[%s8048 + $0x94] sm:$0xf]
        %v8075 = vld [vmem:[%s8048 + $0x9c] sm:$0xf]
        %v8076 = vld [vmem:[%s8048 + $0xa0] sm:$0xf]
        %v8077 = vld [vmem:[%s8048 + $0xa8] sm:$0xf]
        %v8078 = vld [vmem:[%s8048 + $0xac] sm:$0xf]
        %v8079 = vld [vmem:[%s8048 + $0xb4] sm:$0xf]
        %v8080 = vld [vmem:[%s8048 + $0xb8] sm:$0xf]
        %s8081 = scalar_lea.vmem %s4, 384
        %v8082 = vld [vmem:[%s8081] sm:$0xf]
        %v8083 = vld [vmem:[%s8081 + $0x4] sm:$0xf]
        %v8084 = vld [vmem:[%s8081 + $0x8] sm:$0xf]
        %v8085 = vld [vmem:[%s8081 + $0xc] sm:$0xf]
        %v8086 = vld [vmem:[%s8081 + $0x10] sm:$0xf]
        %v8087 = vld [vmem:[%s8081 + $0x14] sm:$0xf]
        %v8088 = vld [vmem:[%s8081 + $0x18] sm:$0xf]
        %v8089 = vld [vmem:[%s8081 + $0x1c] sm:$0xf]
        %v8090 = vld [vmem:[%s8081 + $0x20] sm:$0xf]
        %v8091 = vld [vmem:[%s8081 + $0x24] sm:$0xf]
        %v8092 = vld [vmem:[%s8081 + $0x28] sm:$0xf]
        %v8093 = vld [vmem:[%s8081 + $0x2c] sm:$0xf]
        %v8094 = vld [vmem:[%s8081 + $0x30] sm:$0xf]
        %v8095 = vld [vmem:[%s8081 + $0x34] sm:$0xf]
        %v8096 = vld [vmem:[%s8081 + $0x38] sm:$0xf]
        %v8097 = vld [vmem:[%s8081 + $0x3c] sm:$0xf]
        %v8130 = vunpack.c.l.b16 %v8049
        %v8131 = vunpack.c.l.b16 %v8050
        %v8132 = vunpack.c.l.b16 %v8051
        %v8133 = vunpack.c.l.b16 %v8052
        %v8134 = vunpack.c.l.b16 %v8053
        %v8135 = vunpack.c.l.b16 %v8054
        %v8136 = vunpack.c.l.b16 %v8055
        %v8137 = vunpack.c.l.b16 %v8056
        %v8138 = vunpack.c.l.b16 %v8057
        %v8139 = vunpack.c.l.b16 %v8058
        %v8140 = vunpack.c.l.b16 %v8059
        %v8141 = vunpack.c.l.b16 %v8060
        %v8142 = vunpack.c.l.b16 %v8061
        %v8143 = vunpack.c.l.b16 %v8062
        %v8144 = vunpack.c.l.b16 %v8063
        %v8145 = vunpack.c.l.b16 %v8064
        %v8146 = vunpack.c.l.b16 %v8065
        %v8147 = vunpack.c.l.b16 %v8066
        %v8148 = vunpack.c.l.b16 %v8067
        %v8149 = vunpack.c.l.b16 %v8068
        %v8150 = vunpack.c.l.b16 %v8069
        %v8151 = vunpack.c.l.b16 %v8070
        %v8152 = vunpack.c.l.b16 %v8071
        %v8153 = vunpack.c.l.b16 %v8072
        %v8154 = vunpack.c.l.b16 %v8073
        %v8155 = vunpack.c.l.b16 %v8074
        %v8156 = vunpack.c.l.b16 %v8075
        %v8157 = vunpack.c.l.b16 %v8076
        %v8158 = vunpack.c.l.b16 %v8077
        %v8159 = vunpack.c.l.b16 %v8078
        %v8160 = vunpack.c.l.b16 %v8079
        %v8161 = vunpack.c.l.b16 %v8080
        %v8162 = vpack.c.b16 %v8131, %v8130
        %v8163 = vpack.c.b16 %v8133, %v8132
        %v8164 = vpack.c.b16 %v8135, %v8134
        %v8165 = vpack.c.b16 %v8137, %v8136
        %v8166 = vpack.c.b16 %v8139, %v8138
        %v8167 = vpack.c.b16 %v8141, %v8140
        %v8168 = vpack.c.b16 %v8143, %v8142
        %v8169 = vpack.c.b16 %v8145, %v8144
        %v8170 = vpack.c.b16 %v8147, %v8146
        %v8171 = vpack.c.b16 %v8149, %v8148
        %v8172 = vpack.c.b16 %v8151, %v8150
        %v8173 = vpack.c.b16 %v8153, %v8152
        %v8174 = vpack.c.b16 %v8155, %v8154
        %v8175 = vpack.c.b16 %v8157, %v8156
        %v8176 = vpack.c.b16 %v8159, %v8158
        %v8177 = vpack.c.b16 %v8161, %v8160
        %v8210 = vunpack.c.l.b16 %v8082
        %v8211 = vunpack.c.l.b16 %v8083
        %v8212 = vunpack.c.l.b16 %v8084
        %v8213 = vunpack.c.l.b16 %v8085
        %v8214 = vunpack.c.l.b16 %v8086
        %v8215 = vunpack.c.l.b16 %v8087
        %v8216 = vunpack.c.l.b16 %v8088
        %v8217 = vunpack.c.l.b16 %v8089
        %v8218 = vunpack.c.l.b16 %v8090
        %v8219 = vunpack.c.l.b16 %v8091
        %v8220 = vunpack.c.l.b16 %v8092
        %v8221 = vunpack.c.l.b16 %v8093
        %v8222 = vunpack.c.l.b16 %v8094
        %v8223 = vunpack.c.l.b16 %v8095
        %v8224 = vunpack.c.l.b16 %v8096
        %v8225 = vunpack.c.l.b16 %v8097
        %v8226 = vpack.c.b16 %v8211, %v8210
        %v8227 = vpack.c.b16 %v8213, %v8212
        %v8228 = vpack.c.b16 %v8215, %v8214
        %v8229 = vpack.c.b16 %v8217, %v8216
        %v8230 = vpack.c.b16 %v8219, %v8218
        %v8231 = vpack.c.b16 %v8221, %v8220
        %v8232 = vpack.c.b16 %v8223, %v8222
        %v8233 = vpack.c.b16 %v8225, %v8224
        %8242 = vmatprep.subr.bf16.mxu0 0
        %8243 = vmatpush1.bf16.msra.mxu0 %v8233
        %8244 = vmatprep.subr.bf16.mxu0 0
        %8245 = vmatpush1.bf16.msra.mxu0 %v8232
        %8246 = vmatprep.subr.bf16.mxu0 0
        %8247 = vmatpush1.bf16.msra.mxu0 %v8231
        %8248 = vmatprep.subr.bf16.mxu0 0
        %8249 = vmatpush1.bf16.msra.mxu0 %v8230
        %8250 = vmatprep.subr.bf16.mxu0 0
        %8251 = vmatpush1.bf16.msra.mxu0 %v8229
        %8252 = vmatprep.subr.bf16.mxu0 0
        %8253 = vmatpush1.bf16.msra.mxu0 %v8228
        %8254 = vmatprep.subr.bf16.mxu0 0
        %8255 = vmatpush1.bf16.msra.mxu0 %v8227
        %8256 = vmatprep.subr.bf16.mxu0 0
        %8257 = vmatpush1.bf16.msra.mxu0 %v8226
        %8258 = vmatprep.subr.bf16.mxu0 0
        %8259 = vmatpush2.bf16.msra.mxu0 0
        %8260 = vmatprep.subr.bf16.mxu0 0
        %8261 = vmatpush2.bf16.msra.mxu0 0
        %8262 = vmatprep.subr.bf16.mxu0 0
        %8263 = vmatpush2.bf16.msra.mxu0 0
        %8264 = vmatprep.subr.bf16.mxu0 0
        %8265 = vmatpush2.bf16.msra.mxu0 0
        %8266 = vmatprep.subr.bf16.mxu0 0
        %8267 = vmatpush2.bf16.msra.mxu0 0
        %8268 = vmatprep.subr.bf16.mxu0 0
        %8269 = vmatpush2.bf16.msra.mxu0 0
        %8270 = vmatprep.subr.bf16.mxu0 0
        %8271 = vmatpush2.bf16.msra.mxu0 0
        %8272 = vmatprep.subr.bf16.mxu0 0
        %8273 = vmatpush2.bf16.msra.mxu0 0
        %8274 = vmatprep.mubr.bf16.mxu0 0
        %8275 = vmatmul.mubr.bf16.gmra.mxu0 %v8162
        %v8276 = vpop.f32.mrf.mxu0
        %v8277 = vadd.f32 0.0, %v8276
        %v8278 = vpop.f32.mrf.mxu0
        %v8279 = vpop.f32.mrf.mxu0
        %v8280 = vadd.f32 0.0, %v8279
        %v8281 = vpop.f32.mrf.mxu0
        %8282 = vmatprep.mubr.bf16.mxu0 0
        %8283 = vmatmul.mubr.bf16.gmra.mxu0 %v8163
        %v8284 = vpop.f32.mrf.mxu0
        %v8285 = vadd.f32 0.0, %v8284
        %v8286 = vpop.f32.mrf.mxu0
        %v8287 = vpop.f32.mrf.mxu0
        %v8288 = vadd.f32 0.0, %v8287
        %v8289 = vpop.f32.mrf.mxu0
        %8290 = vmatprep.mubr.bf16.mxu0 0
        %8291 = vmatmul.mubr.bf16.gmra.mxu0 %v8164
        %v8292 = vpop.f32.mrf.mxu0
        %v8293 = vadd.f32 0.0, %v8292
        %v8294 = vpop.f32.mrf.mxu0
        %v8295 = vpop.f32.mrf.mxu0
        %v8296 = vadd.f32 0.0, %v8295
        %v8297 = vpop.f32.mrf.mxu0
        %8298 = vmatprep.mubr.bf16.mxu0 0
        %8299 = vmatmul.mubr.bf16.gmra.mxu0 %v8165
        %v8300 = vpop.f32.mrf.mxu0
        %v8301 = vadd.f32 0.0, %v8300
        %v8302 = vpop.f32.mrf.mxu0
        %v8303 = vpop.f32.mrf.mxu0
        %v8304 = vadd.f32 0.0, %v8303
        %v8305 = vpop.f32.mrf.mxu0
        %8306 = vmatprep.mubr.bf16.mxu0 0
        %8307 = vmatmul.mubr.bf16.gmra.mxu0 %v8166
        %v8308 = vpop.f32.mrf.mxu0
        %v8309 = vadd.f32 0.0, %v8308
        %v8310 = vpop.f32.mrf.mxu0
        %v8311 = vpop.f32.mrf.mxu0
        %v8312 = vadd.f32 0.0, %v8311
        %v8313 = vpop.f32.mrf.mxu0
        %8314 = vmatprep.mubr.bf16.mxu0 0
        %8315 = vmatmul.mubr.bf16.gmra.mxu0 %v8167
        %v8316 = vpop.f32.mrf.mxu0
        %v8317 = vadd.f32 0.0, %v8316
        %v8318 = vpop.f32.mrf.mxu0
        %v8319 = vpop.f32.mrf.mxu0
        %v8320 = vadd.f32 0.0, %v8319
        %v8321 = vpop.f32.mrf.mxu0
        %8322 = vmatprep.mubr.bf16.mxu0 0
        %8323 = vmatmul.mubr.bf16.gmra.mxu0 %v8168
        %v8324 = vpop.f32.mrf.mxu0
        %v8325 = vadd.f32 0.0, %v8324
        %v8326 = vpop.f32.mrf.mxu0
        %v8327 = vpop.f32.mrf.mxu0
        %v8328 = vadd.f32 0.0, %v8327
        %v8329 = vpop.f32.mrf.mxu0
        %8330 = vmatprep.mubr.bf16.mxu0 0
        %8331 = vmatmul.mubr.bf16.gmra.mxu0 %v8169
        %v8332 = vpop.f32.mrf.mxu0
        %v8333 = vadd.f32 0.0, %v8332
        %v8334 = vpop.f32.mrf.mxu0
        %v8335 = vpop.f32.mrf.mxu0
        %v8336 = vadd.f32 0.0, %v8335
        %v8337 = vpop.f32.mrf.mxu0
        %8338 = vmatprep.mubr.bf16.mxu0 0
        %8339 = vmatmul.mubr.bf16.gmra.mxu0 %v8170
        %v8340 = vpop.f32.mrf.mxu0
        %v8341 = vadd.f32 0.0, %v8340
        %v8342 = vpop.f32.mrf.mxu0
        %v8343 = vpop.f32.mrf.mxu0
        %v8344 = vadd.f32 0.0, %v8343
        %v8345 = vpop.f32.mrf.mxu0
        %8346 = vmatprep.mubr.bf16.mxu0 0
        %8347 = vmatmul.mubr.bf16.gmra.mxu0 %v8171
        %v8348 = vpop.f32.mrf.mxu0
        %v8349 = vadd.f32 0.0, %v8348
        %v8350 = vpop.f32.mrf.mxu0
        %v8351 = vpop.f32.mrf.mxu0
        %v8352 = vadd.f32 0.0, %v8351
        %v8353 = vpop.f32.mrf.mxu0
        %8354 = vmatprep.mubr.bf16.mxu0 0
        %8355 = vmatmul.mubr.bf16.gmra.mxu0 %v8172
        %v8356 = vpop.f32.mrf.mxu0
        %v8357 = vadd.f32 0.0, %v8356
        %v8358 = vpop.f32.mrf.mxu0
        %v8359 = vpop.f32.mrf.mxu0
        %v8360 = vadd.f32 0.0, %v8359
        %v8361 = vpop.f32.mrf.mxu0
        %8362 = vmatprep.mubr.bf16.mxu0 0
        %8363 = vmatmul.mubr.bf16.gmra.mxu0 %v8173
        %v8364 = vpop.f32.mrf.mxu0
        %v8365 = vadd.f32 0.0, %v8364
        %v8366 = vpop.f32.mrf.mxu0
        %v8367 = vpop.f32.mrf.mxu0
        %v8368 = vadd.f32 0.0, %v8367
        %v8369 = vpop.f32.mrf.mxu0
        %8370 = vmatprep.mubr.bf16.mxu0 0
        %8371 = vmatmul.mubr.bf16.gmra.mxu0 %v8174
        %v8372 = vpop.f32.mrf.mxu0
        %v8373 = vadd.f32 0.0, %v8372
        %v8374 = vpop.f32.mrf.mxu0
        %v8375 = vpop.f32.mrf.mxu0
        %v8376 = vadd.f32 0.0, %v8375
        %v8377 = vpop.f32.mrf.mxu0
        %8378 = vmatprep.mubr.bf16.mxu0 0
        %8379 = vmatmul.mubr.bf16.gmra.mxu0 %v8175
        %v8380 = vpop.f32.mrf.mxu0
        %v8381 = vadd.f32 0.0, %v8380
        %v8382 = vpop.f32.mrf.mxu0
        %v8383 = vpop.f32.mrf.mxu0
        %v8384 = vadd.f32 0.0, %v8383
        %v8385 = vpop.f32.mrf.mxu0
        %8386 = vmatprep.mubr.bf16.mxu0 0
        %8387 = vmatmul.mubr.bf16.gmra.mxu0 %v8176
        %v8388 = vpop.f32.mrf.mxu0
        %v8389 = vadd.f32 0.0, %v8388
        %v8390 = vpop.f32.mrf.mxu0
        %v8391 = vpop.f32.mrf.mxu0
        %v8392 = vadd.f32 0.0, %v8391
        %v8393 = vpop.f32.mrf.mxu0
        %8394 = vmatprep.mubr.bf16.mxu0 0
        %8395 = vmatmul.mubr.bf16.gmra.mxu0 %v8177
        %v8396 = vpop.f32.mrf.mxu0
        %v8397 = vadd.f32 0.0, %v8396
        %v8398 = vpop.f32.mrf.mxu0
        %v8399 = vpop.f32.mrf.mxu0
        %v8400 = vadd.f32 0.0, %v8399
        %v8401 = vpop.f32.mrf.mxu0
        %8402 = vdwg.mxu0
        %v8403 = vadd.f32 %v8016, %v8277
        %v8404 = vadd.f32 %v8017, %v8280
        %v8405 = vadd.f32 %v8018, %v8285
        %v8406 = vadd.f32 %v8019, %v8288
        %v8407 = vadd.f32 %v8020, %v8293
        %v8408 = vadd.f32 %v8021, %v8296
        %v8409 = vadd.f32 %v8022, %v8301
        %v8410 = vadd.f32 %v8023, %v8304
        %v8411 = vadd.f32 %v8024, %v8309
        %v8412 = vadd.f32 %v8025, %v8312
        %v8413 = vadd.f32 %v8026, %v8317
        %v8414 = vadd.f32 %v8027, %v8320
        %v8415 = vadd.f32 %v8028, %v8325
        %v8416 = vadd.f32 %v8029, %v8328
        %v8417 = vadd.f32 %v8030, %v8333
        %v8418 = vadd.f32 %v8031, %v8336
        %v8419 = vadd.f32 %v8032, %v8341
        %v8420 = vadd.f32 %v8033, %v8344
        %v8421 = vadd.f32 %v8034, %v8349
        %v8422 = vadd.f32 %v8035, %v8352
        %v8423 = vadd.f32 %v8036, %v8357
        %v8424 = vadd.f32 %v8037, %v8360
        %v8425 = vadd.f32 %v8038, %v8365
        %v8426 = vadd.f32 %v8039, %v8368
        %v8427 = vadd.f32 %v8040, %v8373
        %v8428 = vadd.f32 %v8041, %v8376
        %v8429 = vadd.f32 %v8042, %v8381
        %v8430 = vadd.f32 %v8043, %v8384
        %v8431 = vadd.f32 %v8044, %v8389
        %v8432 = vadd.f32 %v8045, %v8392
        %v8433 = vadd.f32 %v8046, %v8397
        %v8434 = vadd.f32 %v8047, %v8400
        %v8435 = vld [vmem:[%s8048] sm:$0xf]
        %v8436 = vld [vmem:[%s8048 + $0x4] sm:$0xf]
        %v8437 = vld [vmem:[%s8048 + $0x8] sm:$0x1]
        %v8438 = vld [vmem:[%s8048 + $0xc] sm:$0xf]
        %v8439 = vld [vmem:[%s8048 + $0x10] sm:$0xf]
        %v8440 = vld [vmem:[%s8048 + $0x14] sm:$0x1]
        %v8441 = vld [vmem:[%s8048 + $0x18] sm:$0xf]
        %v8442 = vld [vmem:[%s8048 + $0x1c] sm:$0xf]
        %v8443 = vld [vmem:[%s8048 + $0x20] sm:$0x1]
        %v8444 = vld [vmem:[%s8048 + $0x24] sm:$0xf]
        %v8445 = vld [vmem:[%s8048 + $0x28] sm:$0xf]
        %v8446 = vld [vmem:[%s8048 + $0x2c] sm:$0x1]
        %v8447 = vld [vmem:[%s8048 + $0x30] sm:$0xf]
        %v8448 = vld [vmem:[%s8048 + $0x34] sm:$0xf]
        %v8449 = vld [vmem:[%s8048 + $0x38] sm:$0x1]
        %v8450 = vld [vmem:[%s8048 + $0x3c] sm:$0xf]
        %v8451 = vld [vmem:[%s8048 + $0x40] sm:$0xf]
        %v8452 = vld [vmem:[%s8048 + $0x44] sm:$0x1]
        %v8453 = vld [vmem:[%s8048 + $0x48] sm:$0xf]
        %v8454 = vld [vmem:[%s8048 + $0x4c] sm:$0xf]
        %v8455 = vld [vmem:[%s8048 + $0x50] sm:$0x1]
        %v8456 = vld [vmem:[%s8048 + $0x54] sm:$0xf]
        %v8457 = vld [vmem:[%s8048 + $0x58] sm:$0xf]
        %v8458 = vld [vmem:[%s8048 + $0x5c] sm:$0x1]
        %v8459 = vld [vmem:[%s8048 + $0x60] sm:$0xf]
        %v8460 = vld [vmem:[%s8048 + $0x64] sm:$0xf]
        %v8461 = vld [vmem:[%s8048 + $0x68] sm:$0x1]
        %v8462 = vld [vmem:[%s8048 + $0x6c] sm:$0xf]
        %v8463 = vld [vmem:[%s8048 + $0x70] sm:$0xf]
        %v8464 = vld [vmem:[%s8048 + $0x74] sm:$0x1]
        %v8465 = vld [vmem:[%s8048 + $0x78] sm:$0xf]
        %v8466 = vld [vmem:[%s8048 + $0x7c] sm:$0xf]
        %v8467 = vld [vmem:[%s8048 + $0x80] sm:$0x1]
        %v8468 = vld [vmem:[%s8048 + $0x84] sm:$0xf]
        %v8469 = vld [vmem:[%s8048 + $0x88] sm:$0xf]
        %v8470 = vld [vmem:[%s8048 + $0x8c] sm:$0x1]
        %v8471 = vld [vmem:[%s8048 + $0x90] sm:$0xf]
        %v8472 = vld [vmem:[%s8048 + $0x94] sm:$0xf]
        %v8473 = vld [vmem:[%s8048 + $0x98] sm:$0x1]
        %v8474 = vld [vmem:[%s8048 + $0x9c] sm:$0xf]
        %v8475 = vld [vmem:[%s8048 + $0xa0] sm:$0xf]
        %v8476 = vld [vmem:[%s8048 + $0xa4] sm:$0x1]
        %v8477 = vld [vmem:[%s8048 + $0xa8] sm:$0xf]
        %v8478 = vld [vmem:[%s8048 + $0xac] sm:$0xf]
        %v8479 = vld [vmem:[%s8048 + $0xb0] sm:$0x1]
        %v8480 = vld [vmem:[%s8048 + $0xb4] sm:$0xf]
        %v8481 = vld [vmem:[%s8048 + $0xb8] sm:$0xf]
        %v8482 = vld [vmem:[%s8048 + $0xbc] sm:$0x1]
        %v8484 = vshrl.u32 %v8435, 16
        %v8486 = vrot.slane %v8484, 4
        %v8487 = vshll.u32 %v8435, 16
        %v8489 = vrot.slane %v8487, 5
        %v8490 = vor.u32 %v8486, %v8489
        %v8491 = vrot.slane %v8490, 4
        %v8493 = vshll.u32 %v8436, 16
        %v8495 = vrot.slane %v8493, 5
        %v8496 = vsel %vm4944, %v8491, %v8495
        %v8497 = vshrl.u32 %v8436, 16
        %v8499 = vrot.slane %v8497, 4
        %v8500 = vor.u32 %v8499, %v8495
        %v8501 = vrot.slane %v8500, 4
        %v8503 = vshll.u32 %v8437, 16
        %v8505 = vrot.slane %v8503, 5
        %v8506 = vsel %vm4944, %v8501, %v8505
        %v8508 = vshrl.u32 %v8438, 16
        %v8510 = vrot.slane %v8508, 4
        %v8511 = vshll.u32 %v8438, 16
        %v8513 = vrot.slane %v8511, 5
        %v8514 = vor.u32 %v8510, %v8513
        %v8515 = vrot.slane %v8514, 4
        %v8517 = vshll.u32 %v8439, 16
        %v8519 = vrot.slane %v8517, 5
        %v8520 = vsel %vm4944, %v8515, %v8519
        %v8521 = vshrl.u32 %v8439, 16
        %v8523 = vrot.slane %v8521, 4
        %v8524 = vor.u32 %v8523, %v8519
        %v8525 = vrot.slane %v8524, 4
        %v8527 = vshll.u32 %v8440, 16
        %v8529 = vrot.slane %v8527, 5
        %v8530 = vsel %vm4944, %v8525, %v8529
        %v8532 = vshrl.u32 %v8441, 16
        %v8534 = vrot.slane %v8532, 4
        %v8535 = vshll.u32 %v8441, 16
        %v8537 = vrot.slane %v8535, 5
        %v8538 = vor.u32 %v8534, %v8537
        %v8539 = vrot.slane %v8538, 4
        %v8541 = vshll.u32 %v8442, 16
        %v8543 = vrot.slane %v8541, 5
        %v8544 = vsel %vm4944, %v8539, %v8543
        %v8545 = vshrl.u32 %v8442, 16
        %v8547 = vrot.slane %v8545, 4
        %v8548 = vor.u32 %v8547, %v8543
        %v8549 = vrot.slane %v8548, 4
        %v8551 = vshll.u32 %v8443, 16
        %v8553 = vrot.slane %v8551, 5
        %v8554 = vsel %vm4944, %v8549, %v8553
        %v8556 = vshrl.u32 %v8444, 16
        %v8558 = vrot.slane %v8556, 4
        %v8559 = vshll.u32 %v8444, 16
        %v8561 = vrot.slane %v8559, 5
        %v8562 = vor.u32 %v8558, %v8561
        %v8563 = vrot.slane %v8562, 4
        %v8565 = vshll.u32 %v8445, 16
        %v8567 = vrot.slane %v8565, 5
        %v8568 = vsel %vm4944, %v8563, %v8567
        %v8569 = vshrl.u32 %v8445, 16
        %v8571 = vrot.slane %v8569, 4
        %v8572 = vor.u32 %v8571, %v8567
        %v8573 = vrot.slane %v8572, 4
        %v8575 = vshll.u32 %v8446, 16
        %v8577 = vrot.slane %v8575, 5
        %v8578 = vsel %vm4944, %v8573, %v8577
        %v8580 = vshrl.u32 %v8447, 16
        %v8582 = vrot.slane %v8580, 4
        %v8583 = vshll.u32 %v8447, 16
        %v8585 = vrot.slane %v8583, 5
        %v8586 = vor.u32 %v8582, %v8585
        %v8587 = vrot.slane %v8586, 4
        %v8589 = vshll.u32 %v8448, 16
        %v8591 = vrot.slane %v8589, 5
        %v8592 = vsel %vm4944, %v8587, %v8591
        %v8593 = vshrl.u32 %v8448, 16
        %v8595 = vrot.slane %v8593, 4
        %v8596 = vor.u32 %v8595, %v8591
        %v8597 = vrot.slane %v8596, 4
        %v8599 = vshll.u32 %v8449, 16
        %v8601 = vrot.slane %v8599, 5
        %v8602 = vsel %vm4944, %v8597, %v8601
        %v8604 = vshrl.u32 %v8450, 16
        %v8606 = vrot.slane %v8604, 4
        %v8607 = vshll.u32 %v8450, 16
        %v8609 = vrot.slane %v8607, 5
        %v8610 = vor.u32 %v8606, %v8609
        %v8611 = vrot.slane %v8610, 4
        %v8613 = vshll.u32 %v8451, 16
        %v8615 = vrot.slane %v8613, 5
        %v8616 = vsel %vm4944, %v8611, %v8615
        %v8617 = vshrl.u32 %v8451, 16
        %v8619 = vrot.slane %v8617, 4
        %v8620 = vor.u32 %v8619, %v8615
        %v8621 = vrot.slane %v8620, 4
        %v8623 = vshll.u32 %v8452, 16
        %v8625 = vrot.slane %v8623, 5
        %v8626 = vsel %vm4944, %v8621, %v8625
        %v8628 = vshrl.u32 %v8453, 16
        %v8630 = vrot.slane %v8628, 4
        %v8631 = vshll.u32 %v8453, 16
        %v8633 = vrot.slane %v8631, 5
        %v8634 = vor.u32 %v8630, %v8633
        %v8635 = vrot.slane %v8634, 4
        %v8637 = vshll.u32 %v8454, 16
        %v8639 = vrot.slane %v8637, 5
        %v8640 = vsel %vm4944, %v8635, %v8639
        %v8641 = vshrl.u32 %v8454, 16
        %v8643 = vrot.slane %v8641, 4
        %v8644 = vor.u32 %v8643, %v8639
        %v8645 = vrot.slane %v8644, 4
        %v8647 = vshll.u32 %v8455, 16
        %v8649 = vrot.slane %v8647, 5
        %v8650 = vsel %vm4944, %v8645, %v8649
        %v8652 = vshrl.u32 %v8456, 16
        %v8654 = vrot.slane %v8652, 4
        %v8655 = vshll.u32 %v8456, 16
        %v8657 = vrot.slane %v8655, 5
        %v8658 = vor.u32 %v8654, %v8657
        %v8659 = vrot.slane %v8658, 4
        %v8661 = vshll.u32 %v8457, 16
        %v8663 = vrot.slane %v8661, 5
        %v8664 = vsel %vm4944, %v8659, %v8663
        %v8665 = vshrl.u32 %v8457, 16
        %v8667 = vrot.slane %v8665, 4
        %v8668 = vor.u32 %v8667, %v8663
        %v8669 = vrot.slane %v8668, 4
        %v8671 = vshll.u32 %v8458, 16
        %v8673 = vrot.slane %v8671, 5
        %v8674 = vsel %vm4944, %v8669, %v8673
        %v8676 = vshrl.u32 %v8459, 16
        %v8678 = vrot.slane %v8676, 4
        %v8679 = vshll.u32 %v8459, 16
        %v8681 = vrot.slane %v8679, 5
        %v8682 = vor.u32 %v8678, %v8681
        %v8683 = vrot.slane %v8682, 4
        %v8685 = vshll.u32 %v8460, 16
        %v8687 = vrot.slane %v8685, 5
        %v8688 = vsel %vm4944, %v8683, %v8687
        %v8689 = vshrl.u32 %v8460, 16
        %v8691 = vrot.slane %v8689, 4
        %v8692 = vor.u32 %v8691, %v8687
        %v8693 = vrot.slane %v8692, 4
        %v8695 = vshll.u32 %v8461, 16
        %v8697 = vrot.slane %v8695, 5
        %v8698 = vsel %vm4944, %v8693, %v8697
        %v8700 = vshrl.u32 %v8462, 16
        %v8702 = vrot.slane %v8700, 4
        %v8703 = vshll.u32 %v8462, 16
        %v8705 = vrot.slane %v8703, 5
        %v8706 = vor.u32 %v8702, %v8705
        %v8707 = vrot.slane %v8706, 4
        %v8709 = vshll.u32 %v8463, 16
        %v8711 = vrot.slane %v8709, 5
        %v8712 = vsel %vm4944, %v8707, %v8711
        %v8713 = vshrl.u32 %v8463, 16
        %v8715 = vrot.slane %v8713, 4
        %v8716 = vor.u32 %v8715, %v8711
        %v8717 = vrot.slane %v8716, 4
        %v8719 = vshll.u32 %v8464, 16
        %v8721 = vrot.slane %v8719, 5
        %v8722 = vsel %vm4944, %v8717, %v8721
        %v8724 = vshrl.u32 %v8465, 16
        %v8726 = vrot.slane %v8724, 4
        %v8727 = vshll.u32 %v8465, 16
        %v8729 = vrot.slane %v8727, 5
        %v8730 = vor.u32 %v8726, %v8729
        %v8731 = vrot.slane %v8730, 4
        %v8733 = vshll.u32 %v8466, 16
        %v8735 = vrot.slane %v8733, 5
        %v8736 = vsel %vm4944, %v8731, %v8735
        %v8737 = vshrl.u32 %v8466, 16
        %v8739 = vrot.slane %v8737, 4
        %v8740 = vor.u32 %v8739, %v8735
        %v8741 = vrot.slane %v8740, 4
        %v8743 = vshll.u32 %v8467, 16
        %v8745 = vrot.slane %v8743, 5
        %v8746 = vsel %vm4944, %v8741, %v8745
        %v8748 = vshrl.u32 %v8468, 16
        %v8750 = vrot.slane %v8748, 4
        %v8751 = vshll.u32 %v8468, 16
        %v8753 = vrot.slane %v8751, 5
        %v8754 = vor.u32 %v8750, %v8753
        %v8755 = vrot.slane %v8754, 4
        %v8757 = vshll.u32 %v8469, 16
        %v8759 = vrot.slane %v8757, 5
        %v8760 = vsel %vm4944, %v8755, %v8759
        %v8761 = vshrl.u32 %v8469, 16
        %v8763 = vrot.slane %v8761, 4
        %v8764 = vor.u32 %v8763, %v8759
        %v8765 = vrot.slane %v8764, 4
        %v8767 = vshll.u32 %v8470, 16
        %v8769 = vrot.slane %v8767, 5
        %v8770 = vsel %vm4944, %v8765, %v8769
        %v8772 = vshrl.u32 %v8471, 16
        %v8774 = vrot.slane %v8772, 4
        %v8775 = vshll.u32 %v8471, 16
        %v8777 = vrot.slane %v8775, 5
        %v8778 = vor.u32 %v8774, %v8777
        %v8779 = vrot.slane %v8778, 4
        %v8781 = vshll.u32 %v8472, 16
        %v8783 = vrot.slane %v8781, 5
        %v8784 = vsel %vm4944, %v8779, %v8783
        %v8785 = vshrl.u32 %v8472, 16
        %v8787 = vrot.slane %v8785, 4
        %v8788 = vor.u32 %v8787, %v8783
        %v8789 = vrot.slane %v8788, 4
        %v8791 = vshll.u32 %v8473, 16
        %v8793 = vrot.slane %v8791, 5
        %v8794 = vsel %vm4944, %v8789, %v8793
        %v8796 = vshrl.u32 %v8474, 16
        %v8798 = vrot.slane %v8796, 4
        %v8799 = vshll.u32 %v8474, 16
        %v8801 = vrot.slane %v8799, 5
        %v8802 = vor.u32 %v8798, %v8801
        %v8803 = vrot.slane %v8802, 4
        %v8805 = vshll.u32 %v8475, 16
        %v8807 = vrot.slane %v8805, 5
        %v8808 = vsel %vm4944, %v8803, %v8807
        %v8809 = vshrl.u32 %v8475, 16
        %v8811 = vrot.slane %v8809, 4
        %v8812 = vor.u32 %v8811, %v8807
        %v8813 = vrot.slane %v8812, 4
        %v8815 = vshll.u32 %v8476, 16
        %v8817 = vrot.slane %v8815, 5
        %v8818 = vsel %vm4944, %v8813, %v8817
        %v8820 = vshrl.u32 %v8477, 16
        %v8822 = vrot.slane %v8820, 4
        %v8823 = vshll.u32 %v8477, 16
        %v8825 = vrot.slane %v8823, 5
        %v8826 = vor.u32 %v8822, %v8825
        %v8827 = vrot.slane %v8826, 4
        %v8829 = vshll.u32 %v8478, 16
        %v8831 = vrot.slane %v8829, 5
        %v8832 = vsel %vm4944, %v8827, %v8831
        %v8833 = vshrl.u32 %v8478, 16
        %v8835 = vrot.slane %v8833, 4
        %v8836 = vor.u32 %v8835, %v8831
        %v8837 = vrot.slane %v8836, 4
        %v8839 = vshll.u32 %v8479, 16
        %v8841 = vrot.slane %v8839, 5
        %v8842 = vsel %vm4944, %v8837, %v8841
        %v8844 = vshrl.u32 %v8480, 16
        %v8846 = vrot.slane %v8844, 4
        %v8847 = vshll.u32 %v8480, 16
        %v8849 = vrot.slane %v8847, 5
        %v8850 = vor.u32 %v8846, %v8849
        %v8851 = vrot.slane %v8850, 4
        %v8853 = vshll.u32 %v8481, 16
        %v8855 = vrot.slane %v8853, 5
        %v8856 = vsel %vm4944, %v8851, %v8855
        %v8857 = vshrl.u32 %v8481, 16
        %v8859 = vrot.slane %v8857, 4
        %v8860 = vor.u32 %v8859, %v8855
        %v8861 = vrot.slane %v8860, 4
        %v8863 = vshll.u32 %v8482, 16
        %v8865 = vrot.slane %v8863, 5
        %v8866 = vsel %vm4944, %v8861, %v8865
        %s8867 = scalar_lea.vmem %s4, 448
        %v8868 = vld [vmem:[%s8867] sm:$0xf]
        %v8869 = vld [vmem:[%s8867 + $0x4] sm:$0xf]
        %v8870 = vld [vmem:[%s8867 + $0x8] sm:$0xf]
        %v8871 = vld [vmem:[%s8867 + $0xc] sm:$0xf]
        %v8872 = vld [vmem:[%s8867 + $0x10] sm:$0xf]
        %v8873 = vld [vmem:[%s8867 + $0x14] sm:$0xf]
        %v8874 = vld [vmem:[%s8867 + $0x18] sm:$0xf]
        %v8875 = vld [vmem:[%s8867 + $0x1c] sm:$0xf]
        %v8876 = vld [vmem:[%s8867 + $0x20] sm:$0xf]
        %v8877 = vld [vmem:[%s8867 + $0x24] sm:$0xf]
        %v8878 = vld [vmem:[%s8867 + $0x28] sm:$0xf]
        %v8879 = vld [vmem:[%s8867 + $0x2c] sm:$0xf]
        %v8880 = vld [vmem:[%s8867 + $0x30] sm:$0xf]
        %v8881 = vld [vmem:[%s8867 + $0x34] sm:$0xf]
        %v8882 = vld [vmem:[%s8867 + $0x38] sm:$0xf]
        %v8883 = vld [vmem:[%s8867 + $0x3c] sm:$0xf]
        %v8884 = vunpack.c.l.b16 %v8496
        %v8885 = vunpack.c.l.b16 %v8506
        %v8886 = vunpack.c.l.b16 %v8520
        %v8887 = vunpack.c.l.b16 %v8530
        %v8888 = vunpack.c.l.b16 %v8544
        %v8889 = vunpack.c.l.b16 %v8554
        %v8890 = vunpack.c.l.b16 %v8568
        %v8891 = vunpack.c.l.b16 %v8578
        %v8892 = vunpack.c.l.b16 %v8592
        %v8893 = vunpack.c.l.b16 %v8602
        %v8894 = vunpack.c.l.b16 %v8616
        %v8895 = vunpack.c.l.b16 %v8626
        %v8896 = vunpack.c.l.b16 %v8640
        %v8897 = vunpack.c.l.b16 %v8650
        %v8898 = vunpack.c.l.b16 %v8664
        %v8899 = vunpack.c.l.b16 %v8674
        %v8900 = vunpack.c.l.b16 %v8688
        %v8901 = vunpack.c.l.b16 %v8698
        %v8902 = vunpack.c.l.b16 %v8712
        %v8903 = vunpack.c.l.b16 %v8722
        %v8904 = vunpack.c.l.b16 %v8736
        %v8905 = vunpack.c.l.b16 %v8746
        %v8906 = vunpack.c.l.b16 %v8760
        %v8907 = vunpack.c.l.b16 %v8770
        %v8908 = vunpack.c.l.b16 %v8784
        %v8909 = vunpack.c.l.b16 %v8794
        %v8910 = vunpack.c.l.b16 %v8808
        %v8911 = vunpack.c.l.b16 %v8818
        %v8912 = vunpack.c.l.b16 %v8832
        %v8913 = vunpack.c.l.b16 %v8842
        %v8914 = vunpack.c.l.b16 %v8856
        %v8915 = vunpack.c.l.b16 %v8866
        %v8916 = vpack.c.b16 %v8885, %v8884
        %v8917 = vpack.c.b16 %v8887, %v8886
        %v8918 = vpack.c.b16 %v8889, %v8888
        %v8919 = vpack.c.b16 %v8891, %v8890
        %v8920 = vpack.c.b16 %v8893, %v8892
        %v8921 = vpack.c.b16 %v8895, %v8894
        %v8922 = vpack.c.b16 %v8897, %v8896
        %v8923 = vpack.c.b16 %v8899, %v8898
        %v8924 = vpack.c.b16 %v8901, %v8900
        %v8925 = vpack.c.b16 %v8903, %v8902
        %v8926 = vpack.c.b16 %v8905, %v8904
        %v8927 = vpack.c.b16 %v8907, %v8906
        %v8928 = vpack.c.b16 %v8909, %v8908
        %v8929 = vpack.c.b16 %v8911, %v8910
        %v8930 = vpack.c.b16 %v8913, %v8912
        %v8931 = vpack.c.b16 %v8915, %v8914
        %v8964 = vunpack.c.l.b16 %v8868
        %v8965 = vunpack.c.l.b16 %v8869
        %v8966 = vunpack.c.l.b16 %v8870
        %v8967 = vunpack.c.l.b16 %v8871
        %v8968 = vunpack.c.l.b16 %v8872
        %v8969 = vunpack.c.l.b16 %v8873
        %v8970 = vunpack.c.l.b16 %v8874
        %v8971 = vunpack.c.l.b16 %v8875
        %v8972 = vunpack.c.l.b16 %v8876
        %v8973 = vunpack.c.l.b16 %v8877
        %v8974 = vunpack.c.l.b16 %v8878
        %v8975 = vunpack.c.l.b16 %v8879
        %v8976 = vunpack.c.l.b16 %v8880
        %v8977 = vunpack.c.l.b16 %v8881
        %v8978 = vunpack.c.l.b16 %v8882
        %v8979 = vunpack.c.l.b16 %v8883
        %v8980 = vpack.c.b16 %v8965, %v8964
        %v8981 = vpack.c.b16 %v8967, %v8966
        %v8982 = vpack.c.b16 %v8969, %v8968
        %v8983 = vpack.c.b16 %v8971, %v8970
        %v8984 = vpack.c.b16 %v8973, %v8972
        %v8985 = vpack.c.b16 %v8975, %v8974
        %v8986 = vpack.c.b16 %v8977, %v8976
        %v8987 = vpack.c.b16 %v8979, %v8978
        %8996 = vmatprep.subr.bf16.mxu0 0
        %8997 = vmatpush1.bf16.msra.mxu0 %v8987
        %8998 = vmatprep.subr.bf16.mxu0 0
        %8999 = vmatpush1.bf16.msra.mxu0 %v8986
        %9000 = vmatprep.subr.bf16.mxu0 0
        %9001 = vmatpush1.bf16.msra.mxu0 %v8985
        %9002 = vmatprep.subr.bf16.mxu0 0
        %9003 = vmatpush1.bf16.msra.mxu0 %v8984
        %9004 = vmatprep.subr.bf16.mxu0 0
        %9005 = vmatpush1.bf16.msra.mxu0 %v8983
        %9006 = vmatprep.subr.bf16.mxu0 0
        %9007 = vmatpush1.bf16.msra.mxu0 %v8982
        %9008 = vmatprep.subr.bf16.mxu0 0
        %9009 = vmatpush1.bf16.msra.mxu0 %v8981
        %9010 = vmatprep.subr.bf16.mxu0 0
        %9011 = vmatpush1.bf16.msra.mxu0 %v8980
        %9012 = vmatprep.subr.bf16.mxu0 0
        %9013 = vmatpush2.bf16.msra.mxu0 0
        %9014 = vmatprep.subr.bf16.mxu0 0
        %9015 = vmatpush2.bf16.msra.mxu0 0
        %9016 = vmatprep.subr.bf16.mxu0 0
        %9017 = vmatpush2.bf16.msra.mxu0 0
        %9018 = vmatprep.subr.bf16.mxu0 0
        %9019 = vmatpush2.bf16.msra.mxu0 0
        %9020 = vmatprep.subr.bf16.mxu0 0
        %9021 = vmatpush2.bf16.msra.mxu0 0
        %9022 = vmatprep.subr.bf16.mxu0 0
        %9023 = vmatpush2.bf16.msra.mxu0 0
        %9024 = vmatprep.subr.bf16.mxu0 0
        %9025 = vmatpush2.bf16.msra.mxu0 0
        %9026 = vmatprep.subr.bf16.mxu0 0
        %9027 = vmatpush2.bf16.msra.mxu0 0
        %9028 = vmatprep.mubr.bf16.mxu0 0
        %9029 = vmatmul.mubr.bf16.gmra.mxu0 %v8916
        %v9030 = vpop.f32.mrf.mxu0
        %v9031 = vadd.f32 0.0, %v9030
        %v9032 = vpop.f32.mrf.mxu0
        %v9033 = vpop.f32.mrf.mxu0
        %v9034 = vadd.f32 0.0, %v9033
        %v9035 = vpop.f32.mrf.mxu0
        %9036 = vmatprep.mubr.bf16.mxu0 0
        %9037 = vmatmul.mubr.bf16.gmra.mxu0 %v8917
        %v9038 = vpop.f32.mrf.mxu0
        %v9039 = vadd.f32 0.0, %v9038
        %v9040 = vpop.f32.mrf.mxu0
        %v9041 = vpop.f32.mrf.mxu0
        %v9042 = vadd.f32 0.0, %v9041
        %v9043 = vpop.f32.mrf.mxu0
        %9044 = vmatprep.mubr.bf16.mxu0 0
        %9045 = vmatmul.mubr.bf16.gmra.mxu0 %v8918
        %v9046 = vpop.f32.mrf.mxu0
        %v9047 = vadd.f32 0.0, %v9046
        %v9048 = vpop.f32.mrf.mxu0
        %v9049 = vpop.f32.mrf.mxu0
        %v9050 = vadd.f32 0.0, %v9049
        %v9051 = vpop.f32.mrf.mxu0
        %9052 = vmatprep.mubr.bf16.mxu0 0
        %9053 = vmatmul.mubr.bf16.gmra.mxu0 %v8919
        %v9054 = vpop.f32.mrf.mxu0
        %v9055 = vadd.f32 0.0, %v9054
        %v9056 = vpop.f32.mrf.mxu0
        %v9057 = vpop.f32.mrf.mxu0
        %v9058 = vadd.f32 0.0, %v9057
        %v9059 = vpop.f32.mrf.mxu0
        %9060 = vmatprep.mubr.bf16.mxu0 0
        %9061 = vmatmul.mubr.bf16.gmra.mxu0 %v8920
        %v9062 = vpop.f32.mrf.mxu0
        %v9063 = vadd.f32 0.0, %v9062
        %v9064 = vpop.f32.mrf.mxu0
        %v9065 = vpop.f32.mrf.mxu0
        %v9066 = vadd.f32 0.0, %v9065
        %v9067 = vpop.f32.mrf.mxu0
        %9068 = vmatprep.mubr.bf16.mxu0 0
        %9069 = vmatmul.mubr.bf16.gmra.mxu0 %v8921
        %v9070 = vpop.f32.mrf.mxu0
        %v9071 = vadd.f32 0.0, %v9070
        %v9072 = vpop.f32.mrf.mxu0
        %v9073 = vpop.f32.mrf.mxu0
        %v9074 = vadd.f32 0.0, %v9073
        %v9075 = vpop.f32.mrf.mxu0
        %9076 = vmatprep.mubr.bf16.mxu0 0
        %9077 = vmatmul.mubr.bf16.gmra.mxu0 %v8922
        %v9078 = vpop.f32.mrf.mxu0
        %v9079 = vadd.f32 0.0, %v9078
        %v9080 = vpop.f32.mrf.mxu0
        %v9081 = vpop.f32.mrf.mxu0
        %v9082 = vadd.f32 0.0, %v9081
        %v9083 = vpop.f32.mrf.mxu0
        %9084 = vmatprep.mubr.bf16.mxu0 0
        %9085 = vmatmul.mubr.bf16.gmra.mxu0 %v8923
        %v9086 = vpop.f32.mrf.mxu0
        %v9087 = vadd.f32 0.0, %v9086
        %v9088 = vpop.f32.mrf.mxu0
        %v9089 = vpop.f32.mrf.mxu0
        %v9090 = vadd.f32 0.0, %v9089
        %v9091 = vpop.f32.mrf.mxu0
        %9092 = vmatprep.mubr.bf16.mxu0 0
        %9093 = vmatmul.mubr.bf16.gmra.mxu0 %v8924
        %v9094 = vpop.f32.mrf.mxu0
        %v9095 = vadd.f32 0.0, %v9094
        %v9096 = vpop.f32.mrf.mxu0
        %v9097 = vpop.f32.mrf.mxu0
        %v9098 = vadd.f32 0.0, %v9097
        %v9099 = vpop.f32.mrf.mxu0
        %9100 = vmatprep.mubr.bf16.mxu0 0
        %9101 = vmatmul.mubr.bf16.gmra.mxu0 %v8925
        %v9102 = vpop.f32.mrf.mxu0
        %v9103 = vadd.f32 0.0, %v9102
        %v9104 = vpop.f32.mrf.mxu0
        %v9105 = vpop.f32.mrf.mxu0
        %v9106 = vadd.f32 0.0, %v9105
        %v9107 = vpop.f32.mrf.mxu0
        %9108 = vmatprep.mubr.bf16.mxu0 0
        %9109 = vmatmul.mubr.bf16.gmra.mxu0 %v8926
        %v9110 = vpop.f32.mrf.mxu0
        %v9111 = vadd.f32 0.0, %v9110
        %v9112 = vpop.f32.mrf.mxu0
        %v9113 = vpop.f32.mrf.mxu0
        %v9114 = vadd.f32 0.0, %v9113
        %v9115 = vpop.f32.mrf.mxu0
        %9116 = vmatprep.mubr.bf16.mxu0 0
        %9117 = vmatmul.mubr.bf16.gmra.mxu0 %v8927
        %v9118 = vpop.f32.mrf.mxu0
        %v9119 = vadd.f32 0.0, %v9118
        %v9120 = vpop.f32.mrf.mxu0
        %v9121 = vpop.f32.mrf.mxu0
        %v9122 = vadd.f32 0.0, %v9121
        %v9123 = vpop.f32.mrf.mxu0
        %9124 = vmatprep.mubr.bf16.mxu0 0
        %9125 = vmatmul.mubr.bf16.gmra.mxu0 %v8928
        %v9126 = vpop.f32.mrf.mxu0
        %v9127 = vadd.f32 0.0, %v9126
        %v9128 = vpop.f32.mrf.mxu0
        %v9129 = vpop.f32.mrf.mxu0
        %v9130 = vadd.f32 0.0, %v9129
        %v9131 = vpop.f32.mrf.mxu0
        %9132 = vmatprep.mubr.bf16.mxu0 0
        %9133 = vmatmul.mubr.bf16.gmra.mxu0 %v8929
        %v9134 = vpop.f32.mrf.mxu0
        %v9135 = vadd.f32 0.0, %v9134
        %v9136 = vpop.f32.mrf.mxu0
        %v9137 = vpop.f32.mrf.mxu0
        %v9138 = vadd.f32 0.0, %v9137
        %v9139 = vpop.f32.mrf.mxu0
        %9140 = vmatprep.mubr.bf16.mxu0 0
        %9141 = vmatmul.mubr.bf16.gmra.mxu0 %v8930
        %v9142 = vpop.f32.mrf.mxu0
        %v9143 = vadd.f32 0.0, %v9142
        %v9144 = vpop.f32.mrf.mxu0
        %v9145 = vpop.f32.mrf.mxu0
        %v9146 = vadd.f32 0.0, %v9145
        %v9147 = vpop.f32.mrf.mxu0
        %9148 = vmatprep.mubr.bf16.mxu0 0
        %9149 = vmatmul.mubr.bf16.gmra.mxu0 %v8931
        %v9150 = vpop.f32.mrf.mxu0
        %v9151 = vadd.f32 0.0, %v9150
        %v9152 = vpop.f32.mrf.mxu0
        %v9153 = vpop.f32.mrf.mxu0
        %v9154 = vadd.f32 0.0, %v9153
        %v9155 = vpop.f32.mrf.mxu0
        %9156 = vdwg.mxu0
        %v9157 = vadd.f32 %v8403, %v9031
        %v9158 = vadd.f32 %v8404, %v9034
        %v9159 = vadd.f32 %v8405, %v9039
        %v9160 = vadd.f32 %v8406, %v9042
        %v9161 = vadd.f32 %v8407, %v9047
        %v9162 = vadd.f32 %v8408, %v9050
        %v9163 = vadd.f32 %v8409, %v9055
        %v9164 = vadd.f32 %v8410, %v9058
        %v9165 = vadd.f32 %v8411, %v9063
        %v9166 = vadd.f32 %v8412, %v9066
        %v9167 = vadd.f32 %v8413, %v9071
        %v9168 = vadd.f32 %v8414, %v9074
        %v9169 = vadd.f32 %v8415, %v9079
        %v9170 = vadd.f32 %v8416, %v9082
        %v9171 = vadd.f32 %v8417, %v9087
        %v9172 = vadd.f32 %v8418, %v9090
        %v9173 = vadd.f32 %v8419, %v9095
        %v9174 = vadd.f32 %v8420, %v9098
        %v9175 = vadd.f32 %v8421, %v9103
        %v9176 = vadd.f32 %v8422, %v9106
        %v9177 = vadd.f32 %v8423, %v9111
        %v9178 = vadd.f32 %v8424, %v9114
        %v9179 = vadd.f32 %v8425, %v9119
        %v9180 = vadd.f32 %v8426, %v9122
        %v9181 = vadd.f32 %v8427, %v9127
        %v9182 = vadd.f32 %v8428, %v9130
        %v9183 = vadd.f32 %v8429, %v9135
        %v9184 = vadd.f32 %v8430, %v9138
        %v9185 = vadd.f32 %v8431, %v9143
        %v9186 = vadd.f32 %v8432, %v9146
        %v9187 = vadd.f32 %v8433, %v9151
        %v9188 = vadd.f32 %v8434, %v9154
        %v9189 = vld [vmem:[%s8048] sm:$0xe]
        %v9190 = vld [vmem:[%s8048 + $0xc] sm:$0xe]
        %v9191 = vld [vmem:[%s8048 + $0x18] sm:$0xe]
        %v9192 = vld [vmem:[%s8048 + $0x24] sm:$0xe]
        %v9193 = vld [vmem:[%s8048 + $0x30] sm:$0xe]
        %v9194 = vld [vmem:[%s8048 + $0x3c] sm:$0xe]
        %v9195 = vld [vmem:[%s8048 + $0x48] sm:$0xe]
        %v9196 = vld [vmem:[%s8048 + $0x54] sm:$0xe]
        %v9197 = vld [vmem:[%s8048 + $0x60] sm:$0xe]
        %v9198 = vld [vmem:[%s8048 + $0x6c] sm:$0xe]
        %v9199 = vld [vmem:[%s8048 + $0x78] sm:$0xe]
        %v9200 = vld [vmem:[%s8048 + $0x84] sm:$0xe]
        %v9201 = vld [vmem:[%s8048 + $0x90] sm:$0xe]
        %v9202 = vld [vmem:[%s8048 + $0x9c] sm:$0xe]
        %v9203 = vld [vmem:[%s8048 + $0xa8] sm:$0xe]
        %v9204 = vld [vmem:[%s8048 + $0xb4] sm:$0xe]
        %v9253 = vrot.slane %v9189, 5
        %v9254 = vrot.slane %v9253, 4
        %v9255 = vrot.slane %v8436, 5
        %v9256 = vsel %vm5974, %v9254, %v9255
        %v9257 = vrot.slane %v9255, 4
        %v9258 = vrot.slane %v8437, 5
        %v9259 = vsel %vm5974, %v9257, %v9258
        %v9260 = vrot.slane %v9190, 5
        %v9261 = vrot.slane %v9260, 4
        %v9262 = vrot.slane %v8439, 5
        %v9263 = vsel %vm5974, %v9261, %v9262
        %v9264 = vrot.slane %v9262, 4
        %v9265 = vrot.slane %v8440, 5
        %v9266 = vsel %vm5974, %v9264, %v9265
        %v9267 = vrot.slane %v9191, 5
        %v9268 = vrot.slane %v9267, 4
        %v9269 = vrot.slane %v8442, 5
        %v9270 = vsel %vm5974, %v9268, %v9269
        %v9271 = vrot.slane %v9269, 4
        %v9272 = vrot.slane %v8443, 5
        %v9273 = vsel %vm5974, %v9271, %v9272
        %v9274 = vrot.slane %v9192, 5
        %v9275 = vrot.slane %v9274, 4
        %v9276 = vrot.slane %v8445, 5
        %v9277 = vsel %vm5974, %v9275, %v9276
        %v9278 = vrot.slane %v9276, 4
        %v9279 = vrot.slane %v8446, 5
        %v9280 = vsel %vm5974, %v9278, %v9279
        %v9281 = vrot.slane %v9193, 5
        %v9282 = vrot.slane %v9281, 4
        %v9283 = vrot.slane %v8448, 5
        %v9284 = vsel %vm5974, %v9282, %v9283
        %v9285 = vrot.slane %v9283, 4
        %v9286 = vrot.slane %v8449, 5
        %v9287 = vsel %vm5974, %v9285, %v9286
        %v9288 = vrot.slane %v9194, 5
        %v9289 = vrot.slane %v9288, 4
        %v9290 = vrot.slane %v8451, 5
        %v9291 = vsel %vm5974, %v9289, %v9290
        %v9292 = vrot.slane %v9290, 4
        %v9293 = vrot.slane %v8452, 5
        %v9294 = vsel %vm5974, %v9292, %v9293
        %v9295 = vrot.slane %v9195, 5
        %v9296 = vrot.slane %v9295, 4
        %v9297 = vrot.slane %v8454, 5
        %v9298 = vsel %vm5974, %v9296, %v9297
        %v9299 = vrot.slane %v9297, 4
        %v9300 = vrot.slane %v8455, 5
        %v9301 = vsel %vm5974, %v9299, %v9300
        %v9302 = vrot.slane %v9196, 5
        %v9303 = vrot.slane %v9302, 4
        %v9304 = vrot.slane %v8457, 5
        %v9305 = vsel %vm5974, %v9303, %v9304
        %v9306 = vrot.slane %v9304, 4
        %v9307 = vrot.slane %v8458, 5
        %v9308 = vsel %vm5974, %v9306, %v9307
        %v9309 = vrot.slane %v9197, 5
        %v9310 = vrot.slane %v9309, 4
        %v9311 = vrot.slane %v8460, 5
        %v9312 = vsel %vm5974, %v9310, %v9311
        %v9313 = vrot.slane %v9311, 4
        %v9314 = vrot.slane %v8461, 5
        %v9315 = vsel %vm5974, %v9313, %v9314
        %v9316 = vrot.slane %v9198, 5
        %v9317 = vrot.slane %v9316, 4
        %v9318 = vrot.slane %v8463, 5
        %v9319 = vsel %vm5974, %v9317, %v9318
        %v9320 = vrot.slane %v9318, 4
        %v9321 = vrot.slane %v8464, 5
        %v9322 = vsel %vm5974, %v9320, %v9321
        %v9323 = vrot.slane %v9199, 5
        %v9324 = vrot.slane %v9323, 4
        %v9325 = vrot.slane %v8466, 5
        %v9326 = vsel %vm5974, %v9324, %v9325
        %v9327 = vrot.slane %v9325, 4
        %v9328 = vrot.slane %v8467, 5
        %v9329 = vsel %vm5974, %v9327, %v9328
        %v9330 = vrot.slane %v9200, 5
        %v9331 = vrot.slane %v9330, 4
        %v9332 = vrot.slane %v8469, 5
        %v9333 = vsel %vm5974, %v9331, %v9332
        %v9334 = vrot.slane %v9332, 4
        %v9335 = vrot.slane %v8470, 5
        %v9336 = vsel %vm5974, %v9334, %v9335
        %v9337 = vrot.slane %v9201, 5
        %v9338 = vrot.slane %v9337, 4
        %v9339 = vrot.slane %v8472, 5
        %v9340 = vsel %vm5974, %v9338, %v9339
        %v9341 = vrot.slane %v9339, 4
        %v9342 = vrot.slane %v8473, 5
        %v9343 = vsel %vm5974, %v9341, %v9342
        %v9344 = vrot.slane %v9202, 5
        %v9345 = vrot.slane %v9344, 4
        %v9346 = vrot.slane %v8475, 5
        %v9347 = vsel %vm5974, %v9345, %v9346
        %v9348 = vrot.slane %v9346, 4
        %v9349 = vrot.slane %v8476, 5
        %v9350 = vsel %vm5974, %v9348, %v9349
        %v9351 = vrot.slane %v9203, 5
        %v9352 = vrot.slane %v9351, 4
        %v9353 = vrot.slane %v8478, 5
        %v9354 = vsel %vm5974, %v9352, %v9353
        %v9355 = vrot.slane %v9353, 4
        %v9356 = vrot.slane %v8479, 5
        %v9357 = vsel %vm5974, %v9355, %v9356
        %v9358 = vrot.slane %v9204, 5
        %v9359 = vrot.slane %v9358, 4
        %v9360 = vrot.slane %v8481, 5
        %v9361 = vsel %vm5974, %v9359, %v9360
        %v9362 = vrot.slane %v9360, 4
        %v9363 = vrot.slane %v8482, 5
        %v9364 = vsel %vm5974, %v9362, %v9363
        %s9365 = scalar_lea.vmem %s4, 512
        %v9366 = vld [vmem:[%s9365] sm:$0xf]
        %v9367 = vld [vmem:[%s9365 + $0x4] sm:$0xf]
        %v9368 = vld [vmem:[%s9365 + $0x8] sm:$0xf]
        %v9369 = vld [vmem:[%s9365 + $0xc] sm:$0xf]
        %v9370 = vld [vmem:[%s9365 + $0x10] sm:$0xf]
        %v9371 = vld [vmem:[%s9365 + $0x14] sm:$0xf]
        %v9372 = vld [vmem:[%s9365 + $0x18] sm:$0xf]
        %v9373 = vld [vmem:[%s9365 + $0x1c] sm:$0xf]
        %v9374 = vld [vmem:[%s9365 + $0x20] sm:$0xf]
        %v9375 = vld [vmem:[%s9365 + $0x24] sm:$0xf]
        %v9376 = vld [vmem:[%s9365 + $0x28] sm:$0xf]
        %v9377 = vld [vmem:[%s9365 + $0x2c] sm:$0xf]
        %v9378 = vld [vmem:[%s9365 + $0x30] sm:$0xf]
        %v9379 = vld [vmem:[%s9365 + $0x34] sm:$0xf]
        %v9380 = vld [vmem:[%s9365 + $0x38] sm:$0xf]
        %v9381 = vld [vmem:[%s9365 + $0x3c] sm:$0xf]
        %v9382 = vunpack.c.l.b16 %v9256
        %v9383 = vunpack.c.l.b16 %v9259
        %v9384 = vunpack.c.l.b16 %v9263
        %v9385 = vunpack.c.l.b16 %v9266
        %v9386 = vunpack.c.l.b16 %v9270
        %v9387 = vunpack.c.l.b16 %v9273
        %v9388 = vunpack.c.l.b16 %v9277
        %v9389 = vunpack.c.l.b16 %v9280
        %v9390 = vunpack.c.l.b16 %v9284
        %v9391 = vunpack.c.l.b16 %v9287
        %v9392 = vunpack.c.l.b16 %v9291
        %v9393 = vunpack.c.l.b16 %v9294
        %v9394 = vunpack.c.l.b16 %v9298
        %v9395 = vunpack.c.l.b16 %v9301
        %v9396 = vunpack.c.l.b16 %v9305
        %v9397 = vunpack.c.l.b16 %v9308
        %v9398 = vunpack.c.l.b16 %v9312
        %v9399 = vunpack.c.l.b16 %v9315
        %v9400 = vunpack.c.l.b16 %v9319
        %v9401 = vunpack.c.l.b16 %v9322
        %v9402 = vunpack.c.l.b16 %v9326
        %v9403 = vunpack.c.l.b16 %v9329
        %v9404 = vunpack.c.l.b16 %v9333
        %v9405 = vunpack.c.l.b16 %v9336
        %v9406 = vunpack.c.l.b16 %v9340
        %v9407 = vunpack.c.l.b16 %v9343
        %v9408 = vunpack.c.l.b16 %v9347
        %v9409 = vunpack.c.l.b16 %v9350
        %v9410 = vunpack.c.l.b16 %v9354
        %v9411 = vunpack.c.l.b16 %v9357
        %v9412 = vunpack.c.l.b16 %v9361
        %v9413 = vunpack.c.l.b16 %v9364
        %v9414 = vpack.c.b16 %v9383, %v9382
        %v9415 = vpack.c.b16 %v9385, %v9384
        %v9416 = vpack.c.b16 %v9387, %v9386
        %v9417 = vpack.c.b16 %v9389, %v9388
        %v9418 = vpack.c.b16 %v9391, %v9390
        %v9419 = vpack.c.b16 %v9393, %v9392
        %v9420 = vpack.c.b16 %v9395, %v9394
        %v9421 = vpack.c.b16 %v9397, %v9396
        %v9422 = vpack.c.b16 %v9399, %v9398
        %v9423 = vpack.c.b16 %v9401, %v9400
        %v9424 = vpack.c.b16 %v9403, %v9402
        %v9425 = vpack.c.b16 %v9405, %v9404
        %v9426 = vpack.c.b16 %v9407, %v9406
        %v9427 = vpack.c.b16 %v9409, %v9408
        %v9428 = vpack.c.b16 %v9411, %v9410
        %v9429 = vpack.c.b16 %v9413, %v9412
        %v9462 = vunpack.c.l.b16 %v9366
        %v9463 = vunpack.c.l.b16 %v9367
        %v9464 = vunpack.c.l.b16 %v9368
        %v9465 = vunpack.c.l.b16 %v9369
        %v9466 = vunpack.c.l.b16 %v9370
        %v9467 = vunpack.c.l.b16 %v9371
        %v9468 = vunpack.c.l.b16 %v9372
        %v9469 = vunpack.c.l.b16 %v9373
        %v9470 = vunpack.c.l.b16 %v9374
        %v9471 = vunpack.c.l.b16 %v9375
        %v9472 = vunpack.c.l.b16 %v9376
        %v9473 = vunpack.c.l.b16 %v9377
        %v9474 = vunpack.c.l.b16 %v9378
        %v9475 = vunpack.c.l.b16 %v9379
        %v9476 = vunpack.c.l.b16 %v9380
        %v9477 = vunpack.c.l.b16 %v9381
        %v9478 = vpack.c.b16 %v9463, %v9462
        %v9479 = vpack.c.b16 %v9465, %v9464
        %v9480 = vpack.c.b16 %v9467, %v9466
        %v9481 = vpack.c.b16 %v9469, %v9468
        %v9482 = vpack.c.b16 %v9471, %v9470
        %v9483 = vpack.c.b16 %v9473, %v9472
        %v9484 = vpack.c.b16 %v9475, %v9474
        %v9485 = vpack.c.b16 %v9477, %v9476
        %9494 = vmatprep.subr.bf16.mxu0 0
        %9495 = vmatpush1.bf16.msra.mxu0 %v9485
        %9496 = vmatprep.subr.bf16.mxu0 0
        %9497 = vmatpush1.bf16.msra.mxu0 %v9484
        %9498 = vmatprep.subr.bf16.mxu0 0
        %9499 = vmatpush1.bf16.msra.mxu0 %v9483
        %9500 = vmatprep.subr.bf16.mxu0 0
        %9501 = vmatpush1.bf16.msra.mxu0 %v9482
        %9502 = vmatprep.subr.bf16.mxu0 0
        %9503 = vmatpush1.bf16.msra.mxu0 %v9481
        %9504 = vmatprep.subr.bf16.mxu0 0
        %9505 = vmatpush1.bf16.msra.mxu0 %v9480
        %9506 = vmatprep.subr.bf16.mxu0 0
        %9507 = vmatpush1.bf16.msra.mxu0 %v9479
        %9508 = vmatprep.subr.bf16.mxu0 0
        %9509 = vmatpush1.bf16.msra.mxu0 %v9478
        %9510 = vmatprep.subr.bf16.mxu0 0
        %9511 = vmatpush2.bf16.msra.mxu0 0
        %9512 = vmatprep.subr.bf16.mxu0 0
        %9513 = vmatpush2.bf16.msra.mxu0 0
        %9514 = vmatprep.subr.bf16.mxu0 0
        %9515 = vmatpush2.bf16.msra.mxu0 0
        %9516 = vmatprep.subr.bf16.mxu0 0
        %9517 = vmatpush2.bf16.msra.mxu0 0
        %9518 = vmatprep.subr.bf16.mxu0 0
        %9519 = vmatpush2.bf16.msra.mxu0 0
        %9520 = vmatprep.subr.bf16.mxu0 0
        %9521 = vmatpush2.bf16.msra.mxu0 0
        %9522 = vmatprep.subr.bf16.mxu0 0
        %9523 = vmatpush2.bf16.msra.mxu0 0
        %9524 = vmatprep.subr.bf16.mxu0 0
        %9525 = vmatpush2.bf16.msra.mxu0 0
        %9526 = vmatprep.mubr.bf16.mxu0 0
        %9527 = vmatmul.mubr.bf16.gmra.mxu0 %v9414
        %v9528 = vpop.f32.mrf.mxu0
        %v9529 = vadd.f32 0.0, %v9528
        %v9530 = vpop.f32.mrf.mxu0
        %v9531 = vpop.f32.mrf.mxu0
        %v9532 = vadd.f32 0.0, %v9531
        %v9533 = vpop.f32.mrf.mxu0
        %9534 = vmatprep.mubr.bf16.mxu0 0
        %9535 = vmatmul.mubr.bf16.gmra.mxu0 %v9415
        %v9536 = vpop.f32.mrf.mxu0
        %v9537 = vadd.f32 0.0, %v9536
        %v9538 = vpop.f32.mrf.mxu0
        %v9539 = vpop.f32.mrf.mxu0
        %v9540 = vadd.f32 0.0, %v9539
        %v9541 = vpop.f32.mrf.mxu0
        %9542 = vmatprep.mubr.bf16.mxu0 0
        %9543 = vmatmul.mubr.bf16.gmra.mxu0 %v9416
        %v9544 = vpop.f32.mrf.mxu0
        %v9545 = vadd.f32 0.0, %v9544
        %v9546 = vpop.f32.mrf.mxu0
        %v9547 = vpop.f32.mrf.mxu0
        %v9548 = vadd.f32 0.0, %v9547
        %v9549 = vpop.f32.mrf.mxu0
        %9550 = vmatprep.mubr.bf16.mxu0 0
        %9551 = vmatmul.mubr.bf16.gmra.mxu0 %v9417
        %v9552 = vpop.f32.mrf.mxu0
        %v9553 = vadd.f32 0.0, %v9552
        %v9554 = vpop.f32.mrf.mxu0
        %v9555 = vpop.f32.mrf.mxu0
        %v9556 = vadd.f32 0.0, %v9555
        %v9557 = vpop.f32.mrf.mxu0
        %9558 = vmatprep.mubr.bf16.mxu0 0
        %9559 = vmatmul.mubr.bf16.gmra.mxu0 %v9418
        %v9560 = vpop.f32.mrf.mxu0
        %v9561 = vadd.f32 0.0, %v9560
        %v9562 = vpop.f32.mrf.mxu0
        %v9563 = vpop.f32.mrf.mxu0
        %v9564 = vadd.f32 0.0, %v9563
        %v9565 = vpop.f32.mrf.mxu0
        %9566 = vmatprep.mubr.bf16.mxu0 0
        %9567 = vmatmul.mubr.bf16.gmra.mxu0 %v9419
        %v9568 = vpop.f32.mrf.mxu0
        %v9569 = vadd.f32 0.0, %v9568
        %v9570 = vpop.f32.mrf.mxu0
        %v9571 = vpop.f32.mrf.mxu0
        %v9572 = vadd.f32 0.0, %v9571
        %v9573 = vpop.f32.mrf.mxu0
        %9574 = vmatprep.mubr.bf16.mxu0 0
        %9575 = vmatmul.mubr.bf16.gmra.mxu0 %v9420
        %v9576 = vpop.f32.mrf.mxu0
        %v9577 = vadd.f32 0.0, %v9576
        %v9578 = vpop.f32.mrf.mxu0
        %v9579 = vpop.f32.mrf.mxu0
        %v9580 = vadd.f32 0.0, %v9579
        %v9581 = vpop.f32.mrf.mxu0
        %9582 = vmatprep.mubr.bf16.mxu0 0
        %9583 = vmatmul.mubr.bf16.gmra.mxu0 %v9421
        %v9584 = vpop.f32.mrf.mxu0
        %v9585 = vadd.f32 0.0, %v9584
        %v9586 = vpop.f32.mrf.mxu0
        %v9587 = vpop.f32.mrf.mxu0
        %v9588 = vadd.f32 0.0, %v9587
        %v9589 = vpop.f32.mrf.mxu0
        %9590 = vmatprep.mubr.bf16.mxu0 0
        %9591 = vmatmul.mubr.bf16.gmra.mxu0 %v9422
        %v9592 = vpop.f32.mrf.mxu0
        %v9593 = vadd.f32 0.0, %v9592
        %v9594 = vpop.f32.mrf.mxu0
        %v9595 = vpop.f32.mrf.mxu0
        %v9596 = vadd.f32 0.0, %v9595
        %v9597 = vpop.f32.mrf.mxu0
        %9598 = vmatprep.mubr.bf16.mxu0 0
        %9599 = vmatmul.mubr.bf16.gmra.mxu0 %v9423
        %v9600 = vpop.f32.mrf.mxu0
        %v9601 = vadd.f32 0.0, %v9600
        %v9602 = vpop.f32.mrf.mxu0
        %v9603 = vpop.f32.mrf.mxu0
        %v9604 = vadd.f32 0.0, %v9603
        %v9605 = vpop.f32.mrf.mxu0
        %9606 = vmatprep.mubr.bf16.mxu0 0
        %9607 = vmatmul.mubr.bf16.gmra.mxu0 %v9424
        %v9608 = vpop.f32.mrf.mxu0
        %v9609 = vadd.f32 0.0, %v9608
        %v9610 = vpop.f32.mrf.mxu0
        %v9611 = vpop.f32.mrf.mxu0
        %v9612 = vadd.f32 0.0, %v9611
        %v9613 = vpop.f32.mrf.mxu0
        %9614 = vmatprep.mubr.bf16.mxu0 0
        %9615 = vmatmul.mubr.bf16.gmra.mxu0 %v9425
        %v9616 = vpop.f32.mrf.mxu0
        %v9617 = vadd.f32 0.0, %v9616
        %v9618 = vpop.f32.mrf.mxu0
        %v9619 = vpop.f32.mrf.mxu0
        %v9620 = vadd.f32 0.0, %v9619
        %v9621 = vpop.f32.mrf.mxu0
        %9622 = vmatprep.mubr.bf16.mxu0 0
        %9623 = vmatmul.mubr.bf16.gmra.mxu0 %v9426
        %v9624 = vpop.f32.mrf.mxu0
        %v9625 = vadd.f32 0.0, %v9624
        %v9626 = vpop.f32.mrf.mxu0
        %v9627 = vpop.f32.mrf.mxu0
        %v9628 = vadd.f32 0.0, %v9627
        %v9629 = vpop.f32.mrf.mxu0
        %9630 = vmatprep.mubr.bf16.mxu0 0
        %9631 = vmatmul.mubr.bf16.gmra.mxu0 %v9427
        %v9632 = vpop.f32.mrf.mxu0
        %v9633 = vadd.f32 0.0, %v9632
        %v9634 = vpop.f32.mrf.mxu0
        %v9635 = vpop.f32.mrf.mxu0
        %v9636 = vadd.f32 0.0, %v9635
        %v9637 = vpop.f32.mrf.mxu0
        %9638 = vmatprep.mubr.bf16.mxu0 0
        %9639 = vmatmul.mubr.bf16.gmra.mxu0 %v9428
        %v9640 = vpop.f32.mrf.mxu0
        %v9641 = vadd.f32 0.0, %v9640
        %v9642 = vpop.f32.mrf.mxu0
        %v9643 = vpop.f32.mrf.mxu0
        %v9644 = vadd.f32 0.0, %v9643
        %v9645 = vpop.f32.mrf.mxu0
        %9646 = vmatprep.mubr.bf16.mxu0 0
        %9647 = vmatmul.mubr.bf16.gmra.mxu0 %v9429
        %v9648 = vpop.f32.mrf.mxu0
        %v9649 = vadd.f32 0.0, %v9648
        %v9650 = vpop.f32.mrf.mxu0
        %v9651 = vpop.f32.mrf.mxu0
        %v9652 = vadd.f32 0.0, %v9651
        %v9653 = vpop.f32.mrf.mxu0
        %9654 = vdwg.mxu0
        %v9655 = vadd.f32 %v9157, %v9529
        %v9656 = vadd.f32 %v9158, %v9532
        %v9657 = vadd.f32 %v9159, %v9537
        %v9658 = vadd.f32 %v9160, %v9540
        %v9659 = vadd.f32 %v9161, %v9545
        %v9660 = vadd.f32 %v9162, %v9548
        %v9661 = vadd.f32 %v9163, %v9553
        %v9662 = vadd.f32 %v9164, %v9556
        %v9663 = vadd.f32 %v9165, %v9561
        %v9664 = vadd.f32 %v9166, %v9564
        %v9665 = vadd.f32 %v9167, %v9569
        %v9666 = vadd.f32 %v9168, %v9572
        %v9667 = vadd.f32 %v9169, %v9577
        %v9668 = vadd.f32 %v9170, %v9580
        %v9669 = vadd.f32 %v9171, %v9585
        %v9670 = vadd.f32 %v9172, %v9588
        %v9671 = vadd.f32 %v9173, %v9593
        %v9672 = vadd.f32 %v9174, %v9596
        %v9673 = vadd.f32 %v9175, %v9601
        %v9674 = vadd.f32 %v9176, %v9604
        %v9675 = vadd.f32 %v9177, %v9609
        %v9676 = vadd.f32 %v9178, %v9612
        %v9677 = vadd.f32 %v9179, %v9617
        %v9678 = vadd.f32 %v9180, %v9620
        %v9679 = vadd.f32 %v9181, %v9625
        %v9680 = vadd.f32 %v9182, %v9628
        %v9681 = vadd.f32 %v9183, %v9633
        %v9682 = vadd.f32 %v9184, %v9636
        %v9683 = vadd.f32 %v9185, %v9641
        %v9684 = vadd.f32 %v9186, %v9644
        %v9685 = vadd.f32 %v9187, %v9649
        %v9686 = vadd.f32 %v9188, %v9652
        %v9688 = vlaneseq
        %v9689 = vshrl.u32 %v9688, 7
        %v9690 = vsub.s32 0, %v9689
        %v9691 = vrot.slane %v295, %v9690
        %v9693 = vmul.f32 %v9655, %v9691
        %v9694 = vmul.f32 %v9656, %v9691
        %v9695 = vmul.f32 %v9657, %v9691
        %v9696 = vmul.f32 %v9658, %v9691
        %v9697 = vmul.f32 %v9659, %v9691
        %v9698 = vmul.f32 %v9660, %v9691
        %v9699 = vmul.f32 %v9661, %v9691
        %v9700 = vmul.f32 %v9662, %v9691
        %v9701 = vmul.f32 %v9663, %v9691
        %v9702 = vmul.f32 %v9664, %v9691
        %v9703 = vmul.f32 %v9665, %v9691
        %v9704 = vmul.f32 %v9666, %v9691
        %v9705 = vmul.f32 %v9667, %v9691
        %v9706 = vmul.f32 %v9668, %v9691
        %v9707 = vmul.f32 %v9669, %v9691
        %v9708 = vmul.f32 %v9670, %v9691
        %v9709 = vmul.f32 %v9671, %v9691
        %v9710 = vmul.f32 %v9672, %v9691
        %v9711 = vmul.f32 %v9673, %v9691
        %v9712 = vmul.f32 %v9674, %v9691
        %v9713 = vmul.f32 %v9675, %v9691
        %v9714 = vmul.f32 %v9676, %v9691
        %v9715 = vmul.f32 %v9677, %v9691
        %v9716 = vmul.f32 %v9678, %v9691
        %v9717 = vmul.f32 %v9679, %v9691
        %v9718 = vmul.f32 %v9680, %v9691
        %v9719 = vmul.f32 %v9681, %v9691
        %v9720 = vmul.f32 %v9682, %v9691
        %v9721 = vmul.f32 %v9683, %v9691
        %v9722 = vmul.f32 %v9684, %v9691
        %v9723 = vmul.f32 %v9685, %v9691
        %v9724 = vmul.f32 %v9686, %v9691
        %v9726 = vlaneseq
        %v9727 = vshrl.u32 %v9726, 7
        %v9728 = vsub.s32 0, %v9727
        %v9729 = vrot.slane %v296, %v9728
        %v9731 = vadd.f32 %v9693, %v9729
        %v9732 = vadd.f32 %v9694, %v9729
        %v9733 = vadd.f32 %v9695, %v9729
        %v9734 = vadd.f32 %v9696, %v9729
        %v9735 = vadd.f32 %v9697, %v9729
        %v9736 = vadd.f32 %v9698, %v9729
        %v9737 = vadd.f32 %v9699, %v9729
        %v9738 = vadd.f32 %v9700, %v9729
        %v9739 = vadd.f32 %v9701, %v9729
        %v9740 = vadd.f32 %v9702, %v9729
        %v9741 = vadd.f32 %v9703, %v9729
        %v9742 = vadd.f32 %v9704, %v9729
        %v9743 = vadd.f32 %v9705, %v9729
        %v9744 = vadd.f32 %v9706, %v9729
        %v9745 = vadd.f32 %v9707, %v9729
        %v9746 = vadd.f32 %v9708, %v9729
        %v9747 = vadd.f32 %v9709, %v9729
        %v9748 = vadd.f32 %v9710, %v9729
        %v9749 = vadd.f32 %v9711, %v9729
        %v9750 = vadd.f32 %v9712, %v9729
        %v9751 = vadd.f32 %v9713, %v9729
        %v9752 = vadd.f32 %v9714, %v9729
        %v9753 = vadd.f32 %v9715, %v9729
        %v9754 = vadd.f32 %v9716, %v9729
        %v9755 = vadd.f32 %v9717, %v9729
        %v9756 = vadd.f32 %v9718, %v9729
        %v9757 = vadd.f32 %v9719, %v9729
        %v9758 = vadd.f32 %v9720, %v9729
        %v9759 = vadd.f32 %v9721, %v9729
        %v9760 = vadd.f32 %v9722, %v9729
        %v9761 = vadd.f32 %v9723, %v9729
        %v9762 = vadd.f32 %v9724, %v9729
        %v9763 = vmax.f32 %v9731, 0.0
        %v9764 = vmax.f32 %v9732, 0.0
        %v9765 = vmax.f32 %v9733, 0.0
        %v9766 = vmax.f32 %v9734, 0.0
        %v9767 = vmax.f32 %v9735, 0.0
        %v9768 = vmax.f32 %v9736, 0.0
        %v9769 = vmax.f32 %v9737, 0.0
        %v9770 = vmax.f32 %v9738, 0.0
        %v9771 = vmax.f32 %v9739, 0.0
        %v9772 = vmax.f32 %v9740, 0.0
        %v9773 = vmax.f32 %v9741, 0.0
        %v9774 = vmax.f32 %v9742, 0.0
        %v9775 = vmax.f32 %v9743, 0.0
        %v9776 = vmax.f32 %v9744, 0.0
        %v9777 = vmax.f32 %v9745, 0.0
        %v9778 = vmax.f32 %v9746, 0.0
        %v9779 = vmax.f32 %v9747, 0.0
        %v9780 = vmax.f32 %v9748, 0.0
        %v9781 = vmax.f32 %v9749, 0.0
        %v9782 = vmax.f32 %v9750, 0.0
        %v9783 = vmax.f32 %v9751, 0.0
        %v9784 = vmax.f32 %v9752, 0.0
        %v9785 = vmax.f32 %v9753, 0.0
        %v9786 = vmax.f32 %v9754, 0.0
        %v9787 = vmax.f32 %v9755, 0.0
        %v9788 = vmax.f32 %v9756, 0.0
        %v9789 = vmax.f32 %v9757, 0.0
        %v9790 = vmax.f32 %v9758, 0.0
        %v9791 = vmax.f32 %v9759, 0.0
        %v9792 = vmax.f32 %v9760, 0.0
        %v9793 = vmax.f32 %v9761, 0.0
        %v9794 = vmax.f32 %v9762, 0.0
        %v9795 = vpack.c.bf16 %v9764, %v9763
        %v9796 = vpack.c.bf16 %v9766, %v9765
        %v9797 = vpack.c.bf16 %v9768, %v9767
        %v9798 = vpack.c.bf16 %v9770, %v9769
        %v9799 = vpack.c.bf16 %v9772, %v9771
        %v9800 = vpack.c.bf16 %v9774, %v9773
        %v9801 = vpack.c.bf16 %v9776, %v9775
        %v9802 = vpack.c.bf16 %v9778, %v9777
        %v9803 = vpack.c.bf16 %v9780, %v9779
        %v9804 = vpack.c.bf16 %v9782, %v9781
        %v9805 = vpack.c.bf16 %v9784, %v9783
        %v9806 = vpack.c.bf16 %v9786, %v9785
        %v9807 = vpack.c.bf16 %v9788, %v9787
        %v9808 = vpack.c.bf16 %v9790, %v9789
        %v9809 = vpack.c.bf16 %v9792, %v9791
        %v9810 = vpack.c.bf16 %v9794, %v9793
        %v9827 = vunpack.c.l.b16 %v9795
        %v9828 = vunpack.c.h.b16 %v9795
        %v9829 = vunpack.c.l.b16 %v9796
        %v9830 = vunpack.c.h.b16 %v9796
        %v9831 = vunpack.c.l.b16 %v9797
        %v9832 = vunpack.c.h.b16 %v9797
        %v9833 = vunpack.c.l.b16 %v9798
        %v9834 = vunpack.c.h.b16 %v9798
        %v9835 = vunpack.c.l.b16 %v9799
        %v9836 = vunpack.c.h.b16 %v9799
        %v9837 = vunpack.c.l.b16 %v9800
        %v9838 = vunpack.c.h.b16 %v9800
        %v9839 = vunpack.c.l.b16 %v9801
        %v9840 = vunpack.c.h.b16 %v9801
        %v9841 = vunpack.c.l.b16 %v9802
        %v9842 = vunpack.c.h.b16 %v9802
        %v9843 = vunpack.c.l.b16 %v9803
        %v9844 = vunpack.c.h.b16 %v9803
        %v9845 = vunpack.c.l.b16 %v9804
        %v9846 = vunpack.c.h.b16 %v9804
        %v9847 = vunpack.c.l.b16 %v9805
        %v9848 = vunpack.c.h.b16 %v9805
        %v9849 = vunpack.c.l.b16 %v9806
        %v9850 = vunpack.c.h.b16 %v9806
        %v9851 = vunpack.c.l.b16 %v9807
        %v9852 = vunpack.c.h.b16 %v9807
        %v9853 = vunpack.c.l.b16 %v9808
        %v9854 = vunpack.c.h.b16 %v9808
        %v9855 = vunpack.c.l.b16 %v9809
        %v9856 = vunpack.c.h.b16 %v9809
        %v9857 = vunpack.c.l.b16 %v9810
        %v9858 = vunpack.c.h.b16 %v9810
        %v9859 = vpack.c.b16 %v9827, %v9827
        %v9860 = vpack.c.b16 %v9828, %v9828
        %v9861 = vpack.c.b16 %v9829, %v9829
        %v9862 = vpack.c.b16 %v9830, %v9830
        %v9863 = vpack.c.b16 %v9831, %v9831
        %v9864 = vpack.c.b16 %v9832, %v9832
        %v9865 = vpack.c.b16 %v9833, %v9833
        %v9866 = vpack.c.b16 %v9834, %v9834
        %v9867 = vpack.c.b16 %v9835, %v9835
        %v9868 = vpack.c.b16 %v9836, %v9836
        %v9869 = vpack.c.b16 %v9837, %v9837
        %v9870 = vpack.c.b16 %v9838, %v9838
        %v9871 = vpack.c.b16 %v9839, %v9839
        %v9872 = vpack.c.b16 %v9840, %v9840
        %v9873 = vpack.c.b16 %v9841, %v9841
        %v9874 = vpack.c.b16 %v9842, %v9842
        %v9875 = vpack.c.b16 %v9843, %v9843
        %v9876 = vpack.c.b16 %v9844, %v9844
        %v9877 = vpack.c.b16 %v9845, %v9845
        %v9878 = vpack.c.b16 %v9846, %v9846
        %v9879 = vpack.c.b16 %v9847, %v9847
        %v9880 = vpack.c.b16 %v9848, %v9848
        %v9881 = vpack.c.b16 %v9849, %v9849
        %v9882 = vpack.c.b16 %v9850, %v9850
        %v9883 = vpack.c.b16 %v9851, %v9851
        %v9884 = vpack.c.b16 %v9852, %v9852
        %v9885 = vpack.c.b16 %v9853, %v9853
        %v9886 = vpack.c.b16 %v9854, %v9854
        %v9887 = vpack.c.b16 %v9855, %v9855
        %v9888 = vpack.c.b16 %v9856, %v9856
        %v9889 = vpack.c.b16 %v9857, %v9857
        %v9890 = vpack.c.b16 %v9858, %v9858
        %9923 = vst [vmem:[%s285] sm:$0xf] %v9859
        %9924 = vst [vmem:[%s285 + $0x4] sm:$0xf] %v9860
        %9925 = vst [vmem:[%s285 + $0x8] sm:$0xf] %v9861
        %9926 = vst [vmem:[%s285 + $0xc] sm:$0xf] %v9862
        %9927 = vst [vmem:[%s285 + $0x10] sm:$0xf] %v9863
        %9928 = vst [vmem:[%s285 + $0x14] sm:$0xf] %v9864
        %9929 = vst [vmem:[%s285 + $0x18] sm:$0xf] %v9865
        %9930 = vst [vmem:[%s285 + $0x1c] sm:$0xf] %v9866
        %9931 = vst [vmem:[%s285 + $0x20] sm:$0xf] %v9867
        %9932 = vst [vmem:[%s285 + $0x24] sm:$0xf] %v9868
        %9933 = vst [vmem:[%s285 + $0x28] sm:$0xf] %v9869
        %9934 = vst [vmem:[%s285 + $0x2c] sm:$0xf] %v9870
        %9935 = vst [vmem:[%s285 + $0x30] sm:$0xf] %v9871
        %9936 = vst [vmem:[%s285 + $0x34] sm:$0xf] %v9872
        %9937 = vst [vmem:[%s285 + $0x38] sm:$0xf] %v9873
        %9938 = vst [vmem:[%s285 + $0x3c] sm:$0xf] %v9874
        %9939 = vst [vmem:[%s285 + $0x40] sm:$0xf] %v9875
        %9940 = vst [vmem:[%s285 + $0x44] sm:$0xf] %v9876
        %9941 = vst [vmem:[%s285 + $0x48] sm:$0xf] %v9877
        %9942 = vst [vmem:[%s285 + $0x4c] sm:$0xf] %v9878
        %9943 = vst [vmem:[%s285 + $0x50] sm:$0xf] %v9879
        %9944 = vst [vmem:[%s285 + $0x54] sm:$0xf] %v9880
        %9945 = vst [vmem:[%s285 + $0x58] sm:$0xf] %v9881
        %9946 = vst [vmem:[%s285 + $0x5c] sm:$0xf] %v9882
        %9947 = vst [vmem:[%s285 + $0x60] sm:$0xf] %v9883
        %9948 = vst [vmem:[%s285 + $0x64] sm:$0xf] %v9884
        %9949 = vst [vmem:[%s285 + $0x68] sm:$0xf] %v9885
        %9950 = vst [vmem:[%s285 + $0x6c] sm:$0xf] %v9886
        %9951 = vst [vmem:[%s285 + $0x70] sm:$0xf] %v9887
        %9952 = vst [vmem:[%s285 + $0x74] sm:$0xf] %v9888
        %9953 = vst [vmem:[%s285 + $0x78] sm:$0xf] %v9889
        %9954 = vst [vmem:[%s285 + $0x7c] sm:$0xf] %v9890
        %s9955 = sand.u32 %s195, 1
        %s9956 = scalar_lea.sflag [#allocation4], %s9955
        %s9957 = sand.u32 %s195, 1
        %s9958 = smul.addr %s9957, 128
        %s9959 = scalar_lea.vmem [#allocation3], %s9958
        // Predicated region
        $region57: #{tpu_custom_call.1} parent=47 // pred_check
          %p9960 = pneg %p205
        $region58: #{tpu_custom_call.1} parent=47 // pred_check_branch
          %9962 = sbr.rel (%p9960) target = $region60
        $region59: #{tpu_custom_call.1} parent=47 // pred_region
          %s9963 = smul.u32 16, %s26
          %s9965 = ssub.s32 2048, 2048
          %9966 = vsyncadd %s9956, %s9965
          %s9967 = smul.addr %s9963, 2
          %s9968 = smul.addr %s25, 32
          %s9969 = sadd.s32 %s9967, %s9968
          %s9970 = smul.addr %s9969, 64
          %s9971 = scalar_lea.hbm %s7, %s9970
          %s9972 = sshll.u32 %s9959, 4
          %s9973 = int_to_ptr.vmem [resolvable:$true] %s9972
          %9978 = dma.vmem_to_hbm [thread:$0]  %s9973, 2048, %s9971, %s9956, 64, 64, 4
        $region60: #{tpu_custom_call.1} parent=47 // pred_fallthru
          _
      $region48: #{tpu_custom_call.1} parent=5 // pred_fallthru
        _
      %p9979 = scmp.le.s32.totalorder 2, %s16
      // Predicated region
      $region61: #{tpu_custom_call.1} parent=5 // pred_check
        %p9980 = pneg %p9979
      $region62: #{tpu_custom_call.1} parent=5 // pred_check_branch
        %9982 = sbr.rel (%p9980) target = $region64
      $region63: #{tpu_custom_call.1} parent=5 // pred_region
        %s9983 = ssub.s32 %s16, 2
        // Predicated region
        $region65: #{tpu_custom_call.1} parent=63 // pred_check
          %p9984 = pneg %p211
        $region66: #{tpu_custom_call.1} parent=63 // pred_check_branch
          %9986 = sbr.rel (%p9984) target = $region68
        $region67: #{tpu_custom_call.1} parent=63 // pred_region
          %s9987 = sand.u32 %s196, 1
          %s9988 = scalar_lea.sflag [#allocation4], %s9987
          %s9989 = sand.u32 %s196, 1
          %s9990 = smul.addr %s9989, 128
          %s9991 = scalar_lea.vmem [#allocation3], %s9990
          %9992 = dma.done %s9988, 2048
        $region68: #{tpu_custom_call.1} parent=63 // pred_fallthru
          _
      $region64: #{tpu_custom_call.1} parent=5 // pred_fallthru
        _
    $region6: #{tpu_custom_call.1} parent=1 // loop_footer
      %s20 = sadd.s32 1, %s16
    $region7: #{tpu_custom_call.1} parent=1 // loop_footer_branch
      %15 = sbr.rel target = $region3
    $region8: #{tpu_custom_call.1} parent=1 // loop_exit
      _
    %9993 = vsyncpa [#allocation4], 1
    %s9994 = scalar_lea.sflag [#allocation4], 1
    %9995 = vsyncpa %s9994, 1

</llo_original>
